<compile_context>
chip_gen: v7x
topology: tpu7x:2x2x1
jax: 0.10.0
libtpu: 0.0.40
codegen_flags: <defaults>
</compile_context>

<pallas_src>
import numpy as np

import jax
import jax.numpy as jnp
from jax import lax
from jax.experimental import pallas as pl
from jax.experimental.pallas import tpu as pltpu


# ---------------------- geometry constants (MNIST 28x28) ----------------------
_WP1, _MV1, _V1 = 32, 892, 859      # conv1: 32x32 padded input, 28x28 valid conv
_WP2, _MV2, _V2 = 18, 248, 229      # conv2: 18x18 padded input, 14x14 valid conv
_OFFS1 = [kh * _WP1 + kw for kh in range(5) for kw in range(5)]
_OFFS2 = [kh * _WP2 + kw for kh in range(5) for kw in range(5)]
_MAX_BATCH_TILE = 8


# ------------------------------- fused kernel --------------------------------

def _net_kernel(x_ref, w1_ref, b1_ref, p1_ref, w2_ref, b2_ref, p2_ref,
                w3_ref, b3_ref, w4_ref, b4_ref, o_ref, flat_ref):
    """Whole Net forward for one batch tile, fully resident in VMEM.

    x_ref  : (BT, 1024)     zero-padded 32x32 images, flattened
    w1_ref : (16, 25)       conv1 taps, column = kh*5+kw
    b1_ref : (16, 1)
    p1_ref : (859, 324)     pool-1 selection matrix (conv2 zero-pad baked in)
    w2_ref : (32, 400)      conv2 weights, column = (kh*5+kw)*16 + cin
    b2_ref : (32, 1)
    p2_ref : (229, 49)      pool-2 selection matrix
    w3_ref : (32, 49, 128)  fc1 weight, channel-blocked (c, hw, n)
    b3_ref : (1, 128)
    w4_ref : (128, 10)      fc2 weight
    b4_ref : (1, 10)
    o_ref  : (BT, 10)
    flat_ref: VMEM scratch (BT, 32, 49)
    """
    bt = x_ref.shape[0]
    x_all = x_ref[...]                                           # (BT, 1024)

    for b in range(bt):                                          # unrolled tile
        xi = x_all[b:b + 1, :]                                   # (1, 1024)

        # conv1: 25-row im2col -> one (16,25)@(25,892) MXU matmul + bias + ReLU
        cols1 = jnp.concatenate([xi[:, t:t + _MV1] for t in _OFFS1], axis=0)
        a1 = jnp.dot(w1_ref[...], cols1, preferred_element_type=jnp.float32)
        a1 = jnp.maximum(a1 + b1_ref[...], 0.0)                  # (16, 892)

        # 2x2/2 max-pool: shifted maxes + one lane-dense selection matmul that
        # also bakes in conv2's zero padding -> x2 is conv2's padded input.
        hm1 = jnp.maximum(a1[:, :-1], a1[:, 1:])                 # (16, 891)
        vm1 = jnp.maximum(hm1[:, :_V1], hm1[:, _WP1:_WP1 + _V1])  # (16, 859)
        x2 = jnp.dot(vm1, p1_ref[...],
                     preferred_element_type=jnp.float32)         # (16, 324)

        # conv2: tap-major im2col -> one (32,400)@(400,248) MXU matmul
        cols2 = jnp.concatenate([x2[:, t:t + _MV2] for t in _OFFS2], axis=0)
        a2 = jnp.dot(w2_ref[...], cols2, preferred_element_type=jnp.float32)
        a2 = jnp.maximum(a2 + b2_ref[...], 0.0)                  # (32, 248)

        hm2 = jnp.maximum(a2[:, :-1], a2[:, 1:])                 # (32, 247)
        vm2 = jnp.maximum(hm2[:, :_V2], hm2[:, _WP2:_WP2 + _V2])  # (32, 229)
        flat_ref[b] = jnp.dot(vm2, p2_ref[...],
                              preferred_element_type=jnp.float32)  # (32, 49)

    # FC head for the whole batch tile. fc1 weight is channel-blocked so the
    # PyTorch NCHW flatten needs no in-kernel reshape:
    #   h = sum_c flat[:, c, :] @ w3[c]
    flat = flat_ref[...]                                         # (BT, 32, 49)
    h = jnp.dot(flat[:, 0, :], w3_ref[0], preferred_element_type=jnp.float32)
    for c in range(1, 32):
        h = h + jnp.dot(flat[:, c, :], w3_ref[c],
                        preferred_element_type=jnp.float32)      # (BT, 128)
    h = jnp.maximum(h + b3_ref[...], 0.0)
    out = jnp.dot(h, w4_ref[...], preferred_element_type=jnp.float32) + b4_ref[...]
    o_ref[...] = out.astype(o_ref.dtype)


# -------------------------------- wrapper -------------------------------------

def _fused_net(xp, prep, bt):
    bp = xp.shape[0]
    c2 = lambda g: (0, 0)
    c3 = lambda g: (0, 0, 0)
    return pl.pallas_call(
        _net_kernel,
        out_shape=jax.ShapeDtypeStruct((bp, 10), jnp.float32),
        grid=(bp // bt,),
        in_specs=[
            pl.BlockSpec((bt, _WP1 * _WP1), lambda g: (g, 0)),   # images
            pl.BlockSpec((16, 25), c2),                          # conv1 w
            pl.BlockSpec((16, 1), c2),                           # conv1 b
            pl.BlockSpec((_V1, 18 * 18), c2),                    # pool-1 select
            pl.BlockSpec((32, 400), c2),                         # conv2 w
            pl.BlockSpec((32, 1), c2),                           # conv2 b
            pl.BlockSpec((_V2, 49), c2),                         # pool-2 select
            pl.BlockSpec((32, 49, 128), c3),                     # fc1 w (blocked)
            pl.BlockSpec((1, 128), c2),                          # fc1 b
            pl.BlockSpec((128, 10), c2),                         # fc2 w
            pl.BlockSpec((1, 10), c2),                           # fc2 b
        ],
        out_specs=pl.BlockSpec((bt, 10), lambda g: (g, 0)),
        scratch_shapes=[pltpu.VMEM((bt, 32, 49), jnp.float32)],
        compiler_params=pltpu.CompilerParams(
            dimension_semantics=("parallel",)),
    )(xp, prep["w1"], prep["b1"], prep["p1"], prep["w2"], prep["b2"],
      prep["p2"], prep["w3"], prep["b3"], prep["w4"], prep["b4"])


# ------------------------ one-time weight re-layout ---------------------------

def _pool_select_matrix(hp, out_pad, out_wp):
    """0/1 matrix mapping the shifted-max vector vm (length V) to the pooled,
    optionally re-zero-padded, flattened output (length out_hp*out_wp)."""
    wp = hp
    ho = (hp - 4) // 2
    mv = hp * wp - (4 * wp + 4)
    v = mv - 1 - wp
    out_hp = ho + 2 * out_pad
    p = np.zeros((v, out_hp * out_wp), np.float32)
    for r in range(ho):
        for c in range(ho):
            p[2 * r * wp + 2 * c, (r + out_pad) * out_wp + (c + out_pad)] = 1.0
    return jnp.asarray(p)


def prepare_params(params):
    """Run once, outside the jitted forward."""
    conv2_w = jnp.transpose(params["conv2_w"], (0, 2, 3, 1)).reshape(32, 400)
    fc1_w = jnp.transpose(params["fc1_w"]).reshape(32, 49, 128)
    # TODO(synk): optionally cast MXU weights to bf16 on v6e/v7x once validated
    # against the 1e-3 tolerance; kept f32 here for exactness.
    return {
        "w1": params["conv1_w"].reshape(16, 25).astype(jnp.float32),
        "b1": params["conv1_b"].reshape(16, 1).astype(jnp.float32),
        "p1": _pool_select_matrix(_WP1, out_pad=2, out_wp=18),      # (859, 324)
        "w2": conv2_w.astype(jnp.float32),
        "b2": params["conv2_b"].reshape(32, 1).astype(jnp.float32),
        "p2": _pool_select_matrix(_WP2, out_pad=0, out_wp=7),       # (229, 49)
        "w3": fc1_w.astype(jnp.float32),
        "b3": params["fc1_b"].reshape(1, 128).astype(jnp.float32),
        "w4": jnp.transpose(params["fc2_w"]).astype(jnp.float32),
        "b4": params["fc2_b"].reshape(1, 10).astype(jnp.float32),
    }


# --------------------------------- forward ------------------------------------

@jax.jit
def net_forward(x_nchw, prep):
    b = x_nchw.shape[0]
    bt = min(b, _MAX_BATCH_TILE)
    bp = ((b + bt - 1) // bt) * bt
    x = x_nchw.reshape(b, 28, 28).astype(jnp.float32)
    if bp != b:                                   # pad batch to a tile multiple
        x = jnp.pad(x, ((0, bp - b), (0, 0), (0, 0)))
    xp = jnp.pad(x, ((0, 0), (2, 2), (2, 2))).reshape(bp, _WP1 * _WP1)
    return _fused_net(xp, prep, bt)[:b]


# ----------------------------- pure-JAX reference -----------------------------

def ref_forward(x, params):
    def conv_blk(z, w, b):
        z = lax.conv_general_dilated(z, w, (1, 1), ((2, 2), (2, 2)),
                                     dimension_numbers=("NCHW", "OIHW", "NCHW"))
        z = jnp.maximum(z + b[None, :, None, None], 0.0)
        return lax.reduce_window(z, -jnp.inf, lax.max,
                                 (1, 1, 2, 2), (1, 1, 2, 2), "VALID")

    y = conv_blk(x.astype(jnp.float32), params["conv1_w"], params["conv1_b"])
    y = conv_blk(y, params["conv2_w"], params["conv2_b"])
    flat = y.reshape(y.shape[0], -1)
    h = jnp.maximum(flat @ params["fc1_w"].T + params["fc1_b"], 0.0)
    return h @ params["fc2_w"].T + params["fc2_b"]


# ----------------------------------- main --------------------------------------

if __name__ == "__main__":
    key = jax.random.PRNGKey(0)
    kx, k1, k2, k3, k4, k5, k6, k7, k8 = jax.random.split(key, 9)

    # MNIST-shaped input (spatial 28 is required by the 32*7*7 flatten).
    x = jax.random.normal(kx, (2, 1, 28, 28), dtype=jnp.float32)

    s = 0.05
    params = {
        "conv1_w": s * jax.random.normal(k1, (16, 1, 5, 5), dtype=jnp.float32),
        "conv1_b": s * jax.random.normal(k2, (16,), dtype=jnp.float32),
        "conv2_w": s * jax.random.normal(k3, (32, 16, 5, 5), dtype=jnp.float32),
        "conv2_b": s * jax.random.normal(k4, (32,), dtype=jnp.float32),
        "fc1_w": s * jax.random.normal(k5, (128, 32 * 7 * 7), dtype=jnp.float32),
        "fc1_b": s * jax.random.normal(k6, (128,), dtype=jnp.float32),
        "fc2_w": s * jax.random.normal(k7, (10, 128), dtype=jnp.float32),
        "fc2_b": s * jax.random.normal(k8, (10,), dtype=jnp.float32),
    }

    prep = prepare_params(params)          # one-time weight / selection relayout

    out = jax.block_until_ready(net_forward(x, prep))
    assert out.shape == (2, 10) and out.dtype == jnp.float32

    ref = jax.block_until_ready(ref_forward(x, params))
    assert jnp.allclose(out, ref, rtol=1e-3, atol=1e-3), (
        f"mismatch: max abs err {jnp.max(jnp.abs(out - ref))}")

    print("KERNEL_OK")
</pallas_src>

<mosaic_0001>
module attributes {stable_mosaic.version = 11 : i64} {
  func.func @_net_kernel(%arg0: i32, %arg1: memref<2x1024xf32, #tpu.memory_space<vmem>>, %arg2: memref<16x25xf32, #tpu.memory_space<vmem>>, %arg3: memref<16x1xf32, #tpu.memory_space<vmem>>, %arg4: memref<859x324xf32, #tpu.memory_space<vmem>>, %arg5: memref<32x400xf32, #tpu.memory_space<vmem>>, %arg6: memref<32x1xf32, #tpu.memory_space<vmem>>, %arg7: memref<229x49xf32, #tpu.memory_space<vmem>>, %arg8: memref<32x49x128xf32, #tpu.memory_space<vmem>>, %arg9: memref<1x128xf32, #tpu.memory_space<vmem>>, %arg10: memref<128x10xf32, #tpu.memory_space<vmem>>, %arg11: memref<1x10xf32, #tpu.memory_space<vmem>>, %arg12: memref<2x10xf32, #tpu.memory_space<vmem>>, %arg13: memref<2x32x49xf32, #tpu.memory_space<vmem>>) attributes {dimension_semantics = [#tpu.dimension_semantics<parallel>], iteration_bounds = array<i64: 1>, scalar_prefetch = 0 : i64, scratch_operands = 1 : i64, tpu.core_type = #tpu.core_type<tc>, window_params = [{transform_indices = @transform_0, window_bounds = array<i64: 2, 1024>}, {pipeline_mode = #tpu.pipeline_mode<synchronous>, transform_indices = @transform_1, window_bounds = array<i64: 16, 25>}, {pipeline_mode = #tpu.pipeline_mode<synchronous>, transform_indices = @transform_2, window_bounds = array<i64: 16, 1>}, {pipeline_mode = #tpu.pipeline_mode<synchronous>, transform_indices = @transform_3, window_bounds = array<i64: 859, 324>}, {pipeline_mode = #tpu.pipeline_mode<synchronous>, transform_indices = @transform_4, window_bounds = array<i64: 32, 400>}, {pipeline_mode = #tpu.pipeline_mode<synchronous>, transform_indices = @transform_5, window_bounds = array<i64: 32, 1>}, {pipeline_mode = #tpu.pipeline_mode<synchronous>, transform_indices = @transform_6, window_bounds = array<i64: 229, 49>}, {pipeline_mode = #tpu.pipeline_mode<synchronous>, transform_indices = @transform_7, window_bounds = array<i64: 32, 49, 128>}, {pipeline_mode = #tpu.pipeline_mode<synchronous>, transform_indices = @transform_8, window_bounds = array<i64: 1, 128>}, {pipeline_mode = #tpu.pipeline_mode<synchronous>, transform_indices = @transform_9, window_bounds = array<i64: 128, 10>}, {pipeline_mode = #tpu.pipeline_mode<synchronous>, transform_indices = @transform_10, window_bounds = array<i64: 1, 10>}, {transform_indices = @transform_11, window_bounds = array<i64: 2, 10>}]} {
    %c0 = arith.constant 0 : index
    %c0_0 = arith.constant 0 : index
    %0 = vector.load %arg1[%c0, %c0_0] : memref<2x1024xf32, #tpu.memory_space<vmem>>, vector<2x1024xf32>
    %1 = vector.extract_strided_slice %0 {offsets = [0, 0], sizes = [1, 1024], strides = [1, 1]} : vector<2x1024xf32> to vector<1x1024xf32>
    %2 = vector.extract_strided_slice %1 {offsets = [0, 0], sizes = [1, 892], strides = [1, 1]} : vector<1x1024xf32> to vector<1x892xf32>
    %3 = vector.extract_strided_slice %1 {offsets = [0, 1], sizes = [1, 892], strides = [1, 1]} : vector<1x1024xf32> to vector<1x892xf32>
    %4 = vector.extract_strided_slice %1 {offsets = [0, 2], sizes = [1, 892], strides = [1, 1]} : vector<1x1024xf32> to vector<1x892xf32>
    %5 = vector.extract_strided_slice %1 {offsets = [0, 3], sizes = [1, 892], strides = [1, 1]} : vector<1x1024xf32> to vector<1x892xf32>
    %6 = vector.extract_strided_slice %1 {offsets = [0, 4], sizes = [1, 892], strides = [1, 1]} : vector<1x1024xf32> to vector<1x892xf32>
    %7 = vector.extract_strided_slice %1 {offsets = [0, 32], sizes = [1, 892], strides = [1, 1]} : vector<1x1024xf32> to vector<1x892xf32>
    %8 = vector.extract_strided_slice %1 {offsets = [0, 33], sizes = [1, 892], strides = [1, 1]} : vector<1x1024xf32> to vector<1x892xf32>
    %9 = vector.extract_strided_slice %1 {offsets = [0, 34], sizes = [1, 892], strides = [1, 1]} : vector<1x1024xf32> to vector<1x892xf32>
    %10 = vector.extract_strided_slice %1 {offsets = [0, 35], sizes = [1, 892], strides = [1, 1]} : vector<1x1024xf32> to vector<1x892xf32>
    %11 = vector.extract_strided_slice %1 {offsets = [0, 36], sizes = [1, 892], strides = [1, 1]} : vector<1x1024xf32> to vector<1x892xf32>
    %12 = vector.extract_strided_slice %1 {offsets = [0, 64], sizes = [1, 892], strides = [1, 1]} : vector<1x1024xf32> to vector<1x892xf32>
    %13 = vector.extract_strided_slice %1 {offsets = [0, 65], sizes = [1, 892], strides = [1, 1]} : vector<1x1024xf32> to vector<1x892xf32>
    %14 = vector.extract_strided_slice %1 {offsets = [0, 66], sizes = [1, 892], strides = [1, 1]} : vector<1x1024xf32> to vector<1x892xf32>
    %15 = vector.extract_strided_slice %1 {offsets = [0, 67], sizes = [1, 892], strides = [1, 1]} : vector<1x1024xf32> to vector<1x892xf32>
    %16 = vector.extract_strided_slice %1 {offsets = [0, 68], sizes = [1, 892], strides = [1, 1]} : vector<1x1024xf32> to vector<1x892xf32>
    %17 = vector.extract_strided_slice %1 {offsets = [0, 96], sizes = [1, 892], strides = [1, 1]} : vector<1x1024xf32> to vector<1x892xf32>
    %18 = vector.extract_strided_slice %1 {offsets = [0, 97], sizes = [1, 892], strides = [1, 1]} : vector<1x1024xf32> to vector<1x892xf32>
    %19 = vector.extract_strided_slice %1 {offsets = [0, 98], sizes = [1, 892], strides = [1, 1]} : vector<1x1024xf32> to vector<1x892xf32>
    %20 = vector.extract_strided_slice %1 {offsets = [0, 99], sizes = [1, 892], strides = [1, 1]} : vector<1x1024xf32> to vector<1x892xf32>
    %21 = vector.extract_strided_slice %1 {offsets = [0, 100], sizes = [1, 892], strides = [1, 1]} : vector<1x1024xf32> to vector<1x892xf32>
    %22 = vector.extract_strided_slice %1 {offsets = [0, 128], sizes = [1, 892], strides = [1, 1]} : vector<1x1024xf32> to vector<1x892xf32>
    %23 = vector.extract_strided_slice %1 {offsets = [0, 129], sizes = [1, 892], strides = [1, 1]} : vector<1x1024xf32> to vector<1x892xf32>
    %24 = vector.extract_strided_slice %1 {offsets = [0, 130], sizes = [1, 892], strides = [1, 1]} : vector<1x1024xf32> to vector<1x892xf32>
    %25 = vector.extract_strided_slice %1 {offsets = [0, 131], sizes = [1, 892], strides = [1, 1]} : vector<1x1024xf32> to vector<1x892xf32>
    %26 = vector.extract_strided_slice %1 {offsets = [0, 132], sizes = [1, 892], strides = [1, 1]} : vector<1x1024xf32> to vector<1x892xf32>
    %27 = tpu.concatenate %2, %3, %4, %5, %6, %7, %8, %9, %10, %11, %12, %13, %14, %15, %16, %17 in 0 : vector<1x892xf32>, vector<1x892xf32>, vector<1x892xf32>, vector<1x892xf32>, vector<1x892xf32>, vector<1x892xf32>, vector<1x892xf32>, vector<1x892xf32>, vector<1x892xf32>, vector<1x892xf32>, vector<1x892xf32>, vector<1x892xf32>, vector<1x892xf32>, vector<1x892xf32>, vector<1x892xf32>, vector<1x892xf32> -> vector<16x892xf32>
    %28 = tpu.concatenate %18, %19, %20, %21, %22, %23, %24, %25, %26 in 0 : vector<1x892xf32>, vector<1x892xf32>, vector<1x892xf32>, vector<1x892xf32>, vector<1x892xf32>, vector<1x892xf32>, vector<1x892xf32>, vector<1x892xf32>, vector<1x892xf32> -> vector<9x892xf32>
    %29 = tpu.concatenate %27, %28 in 0 : vector<16x892xf32>, vector<9x892xf32> -> vector<25x892xf32>
    %c0_1 = arith.constant 0 : index
    %c0_2 = arith.constant 0 : index
    %30 = vector.load %arg2[%c0_1, %c0_2] : memref<16x25xf32, #tpu.memory_space<vmem>>, vector<16x25xf32>
    %cst = arith.constant dense<0.000000e+00> : vector<16x892xf32>
    %31 = tpu.matmul %30, %29, %cst {dimension_numbers = #tpu.dot_dimension_numbers<[1], [0], [0], [1], [0, 0, 1, 1], [], []>} : vector<16x25xf32>, vector<25x892xf32>, vector<16x892xf32> -> vector<16x892xf32>
    %c0_3 = arith.constant 0 : index
    %c0_4 = arith.constant 0 : index
    %32 = vector.load %arg3[%c0_3, %c0_4] : memref<16x1xf32, #tpu.memory_space<vmem>>, vector<16x1xf32>
    %33 = vector.broadcast %32 : vector<16x1xf32> to vector<16x892xf32>
    %34 = arith.addf %31, %33 : vector<16x892xf32>
    %cst_5 = arith.constant 0.000000e+00 : f32
    %35 = vector.broadcast %cst_5 : f32 to vector<16x892xf32>
    %36 = arith.maximumf %34, %35 : vector<16x892xf32>
    %37 = vector.extract_strided_slice %36 {offsets = [0, 0], sizes = [16, 891], strides = [1, 1]} : vector<16x892xf32> to vector<16x891xf32>
    %38 = vector.extract_strided_slice %36 {offsets = [0, 1], sizes = [16, 891], strides = [1, 1]} : vector<16x892xf32> to vector<16x891xf32>
    %39 = arith.maximumf %37, %38 : vector<16x891xf32>
    %40 = vector.extract_strided_slice %39 {offsets = [0, 0], sizes = [16, 859], strides = [1, 1]} : vector<16x891xf32> to vector<16x859xf32>
    %41 = vector.extract_strided_slice %39 {offsets = [0, 32], sizes = [16, 859], strides = [1, 1]} : vector<16x891xf32> to vector<16x859xf32>
    %42 = arith.maximumf %40, %41 : vector<16x859xf32>
    %c0_6 = arith.constant 0 : index
    %c0_7 = arith.constant 0 : index
    %43 = vector.load %arg4[%c0_6, %c0_7] : memref<859x324xf32, #tpu.memory_space<vmem>>, vector<859x324xf32>
    %cst_8 = arith.constant dense<0.000000e+00> : vector<16x324xf32>
    %44 = tpu.matmul %42, %43, %cst_8 {dimension_numbers = #tpu.dot_dimension_numbers<[1], [0], [0], [1], [0, 0, 1, 1], [], []>} : vector<16x859xf32>, vector<859x324xf32>, vector<16x324xf32> -> vector<16x324xf32>
    %45 = vector.extract_strided_slice %44 {offsets = [0, 0], sizes = [16, 248], strides = [1, 1]} : vector<16x324xf32> to vector<16x248xf32>
    %46 = vector.extract_strided_slice %44 {offsets = [0, 1], sizes = [16, 248], strides = [1, 1]} : vector<16x324xf32> to vector<16x248xf32>
    %47 = vector.extract_strided_slice %44 {offsets = [0, 2], sizes = [16, 248], strides = [1, 1]} : vector<16x324xf32> to vector<16x248xf32>
    %48 = vector.extract_strided_slice %44 {offsets = [0, 3], sizes = [16, 248], strides = [1, 1]} : vector<16x324xf32> to vector<16x248xf32>
    %49 = vector.extract_strided_slice %44 {offsets = [0, 4], sizes = [16, 248], strides = [1, 1]} : vector<16x324xf32> to vector<16x248xf32>
    %50 = vector.extract_strided_slice %44 {offsets = [0, 18], sizes = [16, 248], strides = [1, 1]} : vector<16x324xf32> to vector<16x248xf32>
    %51 = vector.extract_strided_slice %44 {offsets = [0, 19], sizes = [16, 248], strides = [1, 1]} : vector<16x324xf32> to vector<16x248xf32>
    %52 = vector.extract_strided_slice %44 {offsets = [0, 20], sizes = [16, 248], strides = [1, 1]} : vector<16x324xf32> to vector<16x248xf32>
    %53 = vector.extract_strided_slice %44 {offsets = [0, 21], sizes = [16, 248], strides = [1, 1]} : vector<16x324xf32> to vector<16x248xf32>
    %54 = vector.extract_strided_slice %44 {offsets = [0, 22], sizes = [16, 248], strides = [1, 1]} : vector<16x324xf32> to vector<16x248xf32>
    %55 = vector.extract_strided_slice %44 {offsets = [0, 36], sizes = [16, 248], strides = [1, 1]} : vector<16x324xf32> to vector<16x248xf32>
    %56 = vector.extract_strided_slice %44 {offsets = [0, 37], sizes = [16, 248], strides = [1, 1]} : vector<16x324xf32> to vector<16x248xf32>
    %57 = vector.extract_strided_slice %44 {offsets = [0, 38], sizes = [16, 248], strides = [1, 1]} : vector<16x324xf32> to vector<16x248xf32>
    %58 = vector.extract_strided_slice %44 {offsets = [0, 39], sizes = [16, 248], strides = [1, 1]} : vector<16x324xf32> to vector<16x248xf32>
    %59 = vector.extract_strided_slice %44 {offsets = [0, 40], sizes = [16, 248], strides = [1, 1]} : vector<16x324xf32> to vector<16x248xf32>
    %60 = vector.extract_strided_slice %44 {offsets = [0, 54], sizes = [16, 248], strides = [1, 1]} : vector<16x324xf32> to vector<16x248xf32>
    %61 = vector.extract_strided_slice %44 {offsets = [0, 55], sizes = [16, 248], strides = [1, 1]} : vector<16x324xf32> to vector<16x248xf32>
    %62 = vector.extract_strided_slice %44 {offsets = [0, 56], sizes = [16, 248], strides = [1, 1]} : vector<16x324xf32> to vector<16x248xf32>
    %63 = vector.extract_strided_slice %44 {offsets = [0, 57], sizes = [16, 248], strides = [1, 1]} : vector<16x324xf32> to vector<16x248xf32>
    %64 = vector.extract_strided_slice %44 {offsets = [0, 58], sizes = [16, 248], strides = [1, 1]} : vector<16x324xf32> to vector<16x248xf32>
    %65 = vector.extract_strided_slice %44 {offsets = [0, 72], sizes = [16, 248], strides = [1, 1]} : vector<16x324xf32> to vector<16x248xf32>
    %66 = vector.extract_strided_slice %44 {offsets = [0, 73], sizes = [16, 248], strides = [1, 1]} : vector<16x324xf32> to vector<16x248xf32>
    %67 = vector.extract_strided_slice %44 {offsets = [0, 74], sizes = [16, 248], strides = [1, 1]} : vector<16x324xf32> to vector<16x248xf32>
    %68 = vector.extract_strided_slice %44 {offsets = [0, 75], sizes = [16, 248], strides = [1, 1]} : vector<16x324xf32> to vector<16x248xf32>
    %69 = vector.extract_strided_slice %44 {offsets = [0, 76], sizes = [16, 248], strides = [1, 1]} : vector<16x324xf32> to vector<16x248xf32>
    %70 = tpu.concatenate %45, %46, %47, %48, %49, %50, %51, %52, %53, %54, %55, %56, %57, %58, %59, %60 in 0 : vector<16x248xf32>, vector<16x248xf32>, vector<16x248xf32>, vector<16x248xf32>, vector<16x248xf32>, vector<16x248xf32>, vector<16x248xf32>, vector<16x248xf32>, vector<16x248xf32>, vector<16x248xf32>, vector<16x248xf32>, vector<16x248xf32>, vector<16x248xf32>, vector<16x248xf32>, vector<16x248xf32>, vector<16x248xf32> -> vector<256x248xf32>
    %71 = tpu.concatenate %61, %62, %63, %64, %65, %66, %67, %68, %69 in 0 : vector<16x248xf32>, vector<16x248xf32>, vector<16x248xf32>, vector<16x248xf32>, vector<16x248xf32>, vector<16x248xf32>, vector<16x248xf32>, vector<16x248xf32>, vector<16x248xf32> -> vector<144x248xf32>
    %72 = tpu.concatenate %70, %71 in 0 : vector<256x248xf32>, vector<144x248xf32> -> vector<400x248xf32>
    %c0_9 = arith.constant 0 : index
    %c0_10 = arith.constant 0 : index
    %73 = vector.load %arg5[%c0_9, %c0_10] : memref<32x400xf32, #tpu.memory_space<vmem>>, vector<32x400xf32>
    %cst_11 = arith.constant dense<0.000000e+00> : vector<32x248xf32>
    %74 = tpu.matmul %73, %72, %cst_11 {dimension_numbers = #tpu.dot_dimension_numbers<[1], [0], [0], [1], [0, 0, 1, 1], [], []>} : vector<32x400xf32>, vector<400x248xf32>, vector<32x248xf32> -> vector<32x248xf32>
    %c0_12 = arith.constant 0 : index
    %c0_13 = arith.constant 0 : index
    %75 = vector.load %arg6[%c0_12, %c0_13] : memref<32x1xf32, #tpu.memory_space<vmem>>, vector<32x1xf32>
    %76 = vector.broadcast %75 : vector<32x1xf32> to vector<32x248xf32>
    %77 = arith.addf %74, %76 : vector<32x248xf32>
    %cst_14 = arith.constant 0.000000e+00 : f32
    %78 = vector.broadcast %cst_14 : f32 to vector<32x248xf32>
    %79 = arith.maximumf %77, %78 : vector<32x248xf32>
    %80 = vector.extract_strided_slice %79 {offsets = [0, 0], sizes = [32, 247], strides = [1, 1]} : vector<32x248xf32> to vector<32x247xf32>
    %81 = vector.extract_strided_slice %79 {offsets = [0, 1], sizes = [32, 247], strides = [1, 1]} : vector<32x248xf32> to vector<32x247xf32>
    %82 = arith.maximumf %80, %81 : vector<32x247xf32>
    %83 = vector.extract_strided_slice %82 {offsets = [0, 0], sizes = [32, 229], strides = [1, 1]} : vector<32x247xf32> to vector<32x229xf32>
    %84 = vector.extract_strided_slice %82 {offsets = [0, 18], sizes = [32, 229], strides = [1, 1]} : vector<32x247xf32> to vector<32x229xf32>
    %85 = arith.maximumf %83, %84 : vector<32x229xf32>
    %c0_15 = arith.constant 0 : index
    %c0_16 = arith.constant 0 : index
    %86 = vector.load %arg7[%c0_15, %c0_16] : memref<229x49xf32, #tpu.memory_space<vmem>>, vector<229x49xf32>
    %cst_17 = arith.constant dense<0.000000e+00> : vector<32x49xf32>
    %87 = tpu.matmul %85, %86, %cst_17 {dimension_numbers = #tpu.dot_dimension_numbers<[1], [0], [0], [1], [0, 0, 1, 1], [], []>} : vector<32x229xf32>, vector<229x49xf32>, vector<32x49xf32> -> vector<32x49xf32>
    %c0_18 = arith.constant 0 : index
    %c0_19 = arith.constant 0 : index
    %c0_20 = arith.constant 0 : index
    %88 = vector.load %arg13[%c0_18, %c0_19, %c0_20] : memref<2x32x49xf32, #tpu.memory_space<vmem>>, vector<1x32x49xf32>
    %89 = vector.shape_cast %88 : vector<1x32x49xf32> to vector<32x49xf32>
    %90 = vector.shape_cast %87 : vector<32x49xf32> to vector<1x32x49xf32>
    tpu.vector_store %arg13[%c0_18, %c0_19, %c0_20], %90 {strides = array<i32>} : memref<2x32x49xf32, #tpu.memory_space<vmem>>, vector<1x32x49xf32>,
    %91 = vector.extract_strided_slice %0 {offsets = [1, 0], sizes = [1, 1024], strides = [1, 1]} : vector<2x1024xf32> to vector<1x1024xf32>
    %92 = vector.extract_strided_slice %91 {offsets = [0, 0], sizes = [1, 892], strides = [1, 1]} : vector<1x1024xf32> to vector<1x892xf32>
    %93 = vector.extract_strided_slice %91 {offsets = [0, 1], sizes = [1, 892], strides = [1, 1]} : vector<1x1024xf32> to vector<1x892xf32>
    %94 = vector.extract_strided_slice %91 {offsets = [0, 2], sizes = [1, 892], strides = [1, 1]} : vector<1x1024xf32> to vector<1x892xf32>
    %95 = vector.extract_strided_slice %91 {offsets = [0, 3], sizes = [1, 892], strides = [1, 1]} : vector<1x1024xf32> to vector<1x892xf32>
    %96 = vector.extract_strided_slice %91 {offsets = [0, 4], sizes = [1, 892], strides = [1, 1]} : vector<1x1024xf32> to vector<1x892xf32>
    %97 = vector.extract_strided_slice %91 {offsets = [0, 32], sizes = [1, 892], strides = [1, 1]} : vector<1x1024xf32> to vector<1x892xf32>
    %98 = vector.extract_strided_slice %91 {offsets = [0, 33], sizes = [1, 892], strides = [1, 1]} : vector<1x1024xf32> to vector<1x892xf32>
    %99 = vector.extract_strided_slice %91 {offsets = [0, 34], sizes = [1, 892], strides = [1, 1]} : vector<1x1024xf32> to vector<1x892xf32>
    %100 = vector.extract_strided_slice %91 {offsets = [0, 35], sizes = [1, 892], strides = [1, 1]} : vector<1x1024xf32> to vector<1x892xf32>
    %101 = vector.extract_strided_slice %91 {offsets = [0, 36], sizes = [1, 892], strides = [1, 1]} : vector<1x1024xf32> to vector<1x892xf32>
    %102 = vector.extract_strided_slice %91 {offsets = [0, 64], sizes = [1, 892], strides = [1, 1]} : vector<1x1024xf32> to vector<1x892xf32>
    %103 = vector.extract_strided_slice %91 {offsets = [0, 65], sizes = [1, 892], strides = [1, 1]} : vector<1x1024xf32> to vector<1x892xf32>
    %104 = vector.extract_strided_slice %91 {offsets = [0, 66], sizes = [1, 892], strides = [1, 1]} : vector<1x1024xf32> to vector<1x892xf32>
    %105 = vector.extract_strided_slice %91 {offsets = [0, 67], sizes = [1, 892], strides = [1, 1]} : vector<1x1024xf32> to vector<1x892xf32>
    %106 = vector.extract_strided_slice %91 {offsets = [0, 68], sizes = [1, 892], strides = [1, 1]} : vector<1x1024xf32> to vector<1x892xf32>
    %107 = vector.extract_strided_slice %91 {offsets = [0, 96], sizes = [1, 892], strides = [1, 1]} : vector<1x1024xf32> to vector<1x892xf32>
    %108 = vector.extract_strided_slice %91 {offsets = [0, 97], sizes = [1, 892], strides = [1, 1]} : vector<1x1024xf32> to vector<1x892xf32>
    %109 = vector.extract_strided_slice %91 {offsets = [0, 98], sizes = [1, 892], strides = [1, 1]} : vector<1x1024xf32> to vector<1x892xf32>
    %110 = vector.extract_strided_slice %91 {offsets = [0, 99], sizes = [1, 892], strides = [1, 1]} : vector<1x1024xf32> to vector<1x892xf32>
    %111 = vector.extract_strided_slice %91 {offsets = [0, 100], sizes = [1, 892], strides = [1, 1]} : vector<1x1024xf32> to vector<1x892xf32>
    %112 = vector.extract_strided_slice %91 {offsets = [0, 128], sizes = [1, 892], strides = [1, 1]} : vector<1x1024xf32> to vector<1x892xf32>
    %113 = vector.extract_strided_slice %91 {offsets = [0, 129], sizes = [1, 892], strides = [1, 1]} : vector<1x1024xf32> to vector<1x892xf32>
    %114 = vector.extract_strided_slice %91 {offsets = [0, 130], sizes = [1, 892], strides = [1, 1]} : vector<1x1024xf32> to vector<1x892xf32>
    %115 = vector.extract_strided_slice %91 {offsets = [0, 131], sizes = [1, 892], strides = [1, 1]} : vector<1x1024xf32> to vector<1x892xf32>
    %116 = vector.extract_strided_slice %91 {offsets = [0, 132], sizes = [1, 892], strides = [1, 1]} : vector<1x1024xf32> to vector<1x892xf32>
    %117 = tpu.concatenate %92, %93, %94, %95, %96, %97, %98, %99, %100, %101, %102, %103, %104, %105, %106, %107 in 0 : vector<1x892xf32>, vector<1x892xf32>, vector<1x892xf32>, vector<1x892xf32>, vector<1x892xf32>, vector<1x892xf32>, vector<1x892xf32>, vector<1x892xf32>, vector<1x892xf32>, vector<1x892xf32>, vector<1x892xf32>, vector<1x892xf32>, vector<1x892xf32>, vector<1x892xf32>, vector<1x892xf32>, vector<1x892xf32> -> vector<16x892xf32>
    %118 = tpu.concatenate %108, %109, %110, %111, %112, %113, %114, %115, %116 in 0 : vector<1x892xf32>, vector<1x892xf32>, vector<1x892xf32>, vector<1x892xf32>, vector<1x892xf32>, vector<1x892xf32>, vector<1x892xf32>, vector<1x892xf32>, vector<1x892xf32> -> vector<9x892xf32>
    %119 = tpu.concatenate %117, %118 in 0 : vector<16x892xf32>, vector<9x892xf32> -> vector<25x892xf32>
    %c0_21 = arith.constant 0 : index
    %c0_22 = arith.constant 0 : index
    %120 = vector.load %arg2[%c0_21, %c0_22] : memref<16x25xf32, #tpu.memory_space<vmem>>, vector<16x25xf32>
    %cst_23 = arith.constant dense<0.000000e+00> : vector<16x892xf32>
    %121 = tpu.matmul %120, %119, %cst_23 {dimension_numbers = #tpu.dot_dimension_numbers<[1], [0], [0], [1], [0, 0, 1, 1], [], []>} : vector<16x25xf32>, vector<25x892xf32>, vector<16x892xf32> -> vector<16x892xf32>
    %c0_24 = arith.constant 0 : index
    %c0_25 = arith.constant 0 : index
    %122 = vector.load %arg3[%c0_24, %c0_25] : memref<16x1xf32, #tpu.memory_space<vmem>>, vector<16x1xf32>
    %123 = vector.broadcast %122 : vector<16x1xf32> to vector<16x892xf32>
    %124 = arith.addf %121, %123 : vector<16x892xf32>
    %cst_26 = arith.constant 0.000000e+00 : f32
    %125 = vector.broadcast %cst_26 : f32 to vector<16x892xf32>
    %126 = arith.maximumf %124, %125 : vector<16x892xf32>
    %127 = vector.extract_strided_slice %126 {offsets = [0, 0], sizes = [16, 891], strides = [1, 1]} : vector<16x892xf32> to vector<16x891xf32>
    %128 = vector.extract_strided_slice %126 {offsets = [0, 1], sizes = [16, 891], strides = [1, 1]} : vector<16x892xf32> to vector<16x891xf32>
    %129 = arith.maximumf %127, %128 : vector<16x891xf32>
    %130 = vector.extract_strided_slice %129 {offsets = [0, 0], sizes = [16, 859], strides = [1, 1]} : vector<16x891xf32> to vector<16x859xf32>
    %131 = vector.extract_strided_slice %129 {offsets = [0, 32], sizes = [16, 859], strides = [1, 1]} : vector<16x891xf32> to vector<16x859xf32>
    %132 = arith.maximumf %130, %131 : vector<16x859xf32>
    %c0_27 = arith.constant 0 : index
    %c0_28 = arith.constant 0 : index
    %133 = vector.load %arg4[%c0_27, %c0_28] : memref<859x324xf32, #tpu.memory_space<vmem>>, vector<859x324xf32>
    %cst_29 = arith.constant dense<0.000000e+00> : vector<16x324xf32>
    %134 = tpu.matmul %132, %133, %cst_29 {dimension_numbers = #tpu.dot_dimension_numbers<[1], [0], [0], [1], [0, 0, 1, 1], [], []>} : vector<16x859xf32>, vector<859x324xf32>, vector<16x324xf32> -> vector<16x324xf32>
    %135 = vector.extract_strided_slice %134 {offsets = [0, 0], sizes = [16, 248], strides = [1, 1]} : vector<16x324xf32> to vector<16x248xf32>
    %136 = vector.extract_strided_slice %134 {offsets = [0, 1], sizes = [16, 248], strides = [1, 1]} : vector<16x324xf32> to vector<16x248xf32>
    %137 = vector.extract_strided_slice %134 {offsets = [0, 2], sizes = [16, 248], strides = [1, 1]} : vector<16x324xf32> to vector<16x248xf32>
    %138 = vector.extract_strided_slice %134 {offsets = [0, 3], sizes = [16, 248], strides = [1, 1]} : vector<16x324xf32> to vector<16x248xf32>
    %139 = vector.extract_strided_slice %134 {offsets = [0, 4], sizes = [16, 248], strides = [1, 1]} : vector<16x324xf32> to vector<16x248xf32>
    %140 = vector.extract_strided_slice %134 {offsets = [0, 18], sizes = [16, 248], strides = [1, 1]} : vector<16x324xf32> to vector<16x248xf32>
    %141 = vector.extract_strided_slice %134 {offsets = [0, 19], sizes = [16, 248], strides = [1, 1]} : vector<16x324xf32> to vector<16x248xf32>
    %142 = vector.extract_strided_slice %134 {offsets = [0, 20], sizes = [16, 248], strides = [1, 1]} : vector<16x324xf32> to vector<16x248xf32>
    %143 = vector.extract_strided_slice %134 {offsets = [0, 21], sizes = [16, 248], strides = [1, 1]} : vector<16x324xf32> to vector<16x248xf32>
    %144 = vector.extract_strided_slice %134 {offsets = [0, 22], sizes = [16, 248], strides = [1, 1]} : vector<16x324xf32> to vector<16x248xf32>
    %145 = vector.extract_strided_slice %134 {offsets = [0, 36], sizes = [16, 248], strides = [1, 1]} : vector<16x324xf32> to vector<16x248xf32>
    %146 = vector.extract_strided_slice %134 {offsets = [0, 37], sizes = [16, 248], strides = [1, 1]} : vector<16x324xf32> to vector<16x248xf32>
    %147 = vector.extract_strided_slice %134 {offsets = [0, 38], sizes = [16, 248], strides = [1, 1]} : vector<16x324xf32> to vector<16x248xf32>
    %148 = vector.extract_strided_slice %134 {offsets = [0, 39], sizes = [16, 248], strides = [1, 1]} : vector<16x324xf32> to vector<16x248xf32>
    %149 = vector.extract_strided_slice %134 {offsets = [0, 40], sizes = [16, 248], strides = [1, 1]} : vector<16x324xf32> to vector<16x248xf32>
    %150 = vector.extract_strided_slice %134 {offsets = [0, 54], sizes = [16, 248], strides = [1, 1]} : vector<16x324xf32> to vector<16x248xf32>
    %151 = vector.extract_strided_slice %134 {offsets = [0, 55], sizes = [16, 248], strides = [1, 1]} : vector<16x324xf32> to vector<16x248xf32>
    %152 = vector.extract_strided_slice %134 {offsets = [0, 56], sizes = [16, 248], strides = [1, 1]} : vector<16x324xf32> to vector<16x248xf32>
    %153 = vector.extract_strided_slice %134 {offsets = [0, 57], sizes = [16, 248], strides = [1, 1]} : vector<16x324xf32> to vector<16x248xf32>
    %154 = vector.extract_strided_slice %134 {offsets = [0, 58], sizes = [16, 248], strides = [1, 1]} : vector<16x324xf32> to vector<16x248xf32>
    %155 = vector.extract_strided_slice %134 {offsets = [0, 72], sizes = [16, 248], strides = [1, 1]} : vector<16x324xf32> to vector<16x248xf32>
    %156 = vector.extract_strided_slice %134 {offsets = [0, 73], sizes = [16, 248], strides = [1, 1]} : vector<16x324xf32> to vector<16x248xf32>
    %157 = vector.extract_strided_slice %134 {offsets = [0, 74], sizes = [16, 248], strides = [1, 1]} : vector<16x324xf32> to vector<16x248xf32>
    %158 = vector.extract_strided_slice %134 {offsets = [0, 75], sizes = [16, 248], strides = [1, 1]} : vector<16x324xf32> to vector<16x248xf32>
    %159 = vector.extract_strided_slice %134 {offsets = [0, 76], sizes = [16, 248], strides = [1, 1]} : vector<16x324xf32> to vector<16x248xf32>
    %160 = tpu.concatenate %135, %136, %137, %138, %139, %140, %141, %142, %143, %144, %145, %146, %147, %148, %149, %150 in 0 : vector<16x248xf32>, vector<16x248xf32>, vector<16x248xf32>, vector<16x248xf32>, vector<16x248xf32>, vector<16x248xf32>, vector<16x248xf32>, vector<16x248xf32>, vector<16x248xf32>, vector<16x248xf32>, vector<16x248xf32>, vector<16x248xf32>, vector<16x248xf32>, vector<16x248xf32>, vector<16x248xf32>, vector<16x248xf32> -> vector<256x248xf32>
    %161 = tpu.concatenate %151, %152, %153, %154, %155, %156, %157, %158, %159 in 0 : vector<16x248xf32>, vector<16x248xf32>, vector<16x248xf32>, vector<16x248xf32>, vector<16x248xf32>, vector<16x248xf32>, vector<16x248xf32>, vector<16x248xf32>, vector<16x248xf32> -> vector<144x248xf32>
    %162 = tpu.concatenate %160, %161 in 0 : vector<256x248xf32>, vector<144x248xf32> -> vector<400x248xf32>
    %c0_30 = arith.constant 0 : index
    %c0_31 = arith.constant 0 : index
    %163 = vector.load %arg5[%c0_30, %c0_31] : memref<32x400xf32, #tpu.memory_space<vmem>>, vector<32x400xf32>
    %cst_32 = arith.constant dense<0.000000e+00> : vector<32x248xf32>
    %164 = tpu.matmul %163, %162, %cst_32 {dimension_numbers = #tpu.dot_dimension_numbers<[1], [0], [0], [1], [0, 0, 1, 1], [], []>} : vector<32x400xf32>, vector<400x248xf32>, vector<32x248xf32> -> vector<32x248xf32>
    %c0_33 = arith.constant 0 : index
    %c0_34 = arith.constant 0 : index
    %165 = vector.load %arg6[%c0_33, %c0_34] : memref<32x1xf32, #tpu.memory_space<vmem>>, vector<32x1xf32>
    %166 = vector.broadcast %165 : vector<32x1xf32> to vector<32x248xf32>
    %167 = arith.addf %164, %166 : vector<32x248xf32>
    %cst_35 = arith.constant 0.000000e+00 : f32
    %168 = vector.broadcast %cst_35 : f32 to vector<32x248xf32>
    %169 = arith.maximumf %167, %168 : vector<32x248xf32>
    %170 = vector.extract_strided_slice %169 {offsets = [0, 0], sizes = [32, 247], strides = [1, 1]} : vector<32x248xf32> to vector<32x247xf32>
    %171 = vector.extract_strided_slice %169 {offsets = [0, 1], sizes = [32, 247], strides = [1, 1]} : vector<32x248xf32> to vector<32x247xf32>
    %172 = arith.maximumf %170, %171 : vector<32x247xf32>
    %173 = vector.extract_strided_slice %172 {offsets = [0, 0], sizes = [32, 229], strides = [1, 1]} : vector<32x247xf32> to vector<32x229xf32>
    %174 = vector.extract_strided_slice %172 {offsets = [0, 18], sizes = [32, 229], strides = [1, 1]} : vector<32x247xf32> to vector<32x229xf32>
    %175 = arith.maximumf %173, %174 : vector<32x229xf32>
    %c0_36 = arith.constant 0 : index
    %c0_37 = arith.constant 0 : index
    %176 = vector.load %arg7[%c0_36, %c0_37] : memref<229x49xf32, #tpu.memory_space<vmem>>, vector<229x49xf32>
    %cst_38 = arith.constant dense<0.000000e+00> : vector<32x49xf32>
    %177 = tpu.matmul %175, %176, %cst_38 {dimension_numbers = #tpu.dot_dimension_numbers<[1], [0], [0], [1], [0, 0, 1, 1], [], []>} : vector<32x229xf32>, vector<229x49xf32>, vector<32x49xf32> -> vector<32x49xf32>
    %c1 = arith.constant 1 : index
    %c0_39 = arith.constant 0 : index
    %c0_40 = arith.constant 0 : index
    %178 = vector.load %arg13[%c1, %c0_39, %c0_40] : memref<2x32x49xf32, #tpu.memory_space<vmem>>, vector<1x32x49xf32>
    %179 = vector.shape_cast %178 : vector<1x32x49xf32> to vector<32x49xf32>
    %180 = vector.shape_cast %177 : vector<32x49xf32> to vector<1x32x49xf32>
    tpu.vector_store %arg13[%c1, %c0_39, %c0_40], %180 {strides = array<i32>} : memref<2x32x49xf32, #tpu.memory_space<vmem>>, vector<1x32x49xf32>,
    %c0_41 = arith.constant 0 : index
    %c0_42 = arith.constant 0 : index
    %c0_43 = arith.constant 0 : index
    %181 = vector.load %arg13[%c0_41, %c0_42, %c0_43] : memref<2x32x49xf32, #tpu.memory_space<vmem>>, vector<2x32x49xf32>
    %182 = vector.extract_strided_slice %181 {offsets = [0, 0, 0], sizes = [2, 1, 49], strides = [1, 1, 1]} : vector<2x32x49xf32> to vector<2x1x49xf32>
    %183 = vector.shape_cast %182 : vector<2x1x49xf32> to vector<2x49xf32>
    %c0_44 = arith.constant 0 : index
    %c0_45 = arith.constant 0 : index
    %c0_46 = arith.constant 0 : index
    %184 = vector.load %arg8[%c0_44, %c0_45, %c0_46] : memref<32x49x128xf32, #tpu.memory_space<vmem>>, vector<1x49x128xf32>
    %185 = vector.shape_cast %184 : vector<1x49x128xf32> to vector<49x128xf32>
    %cst_47 = arith.constant dense<0.000000e+00> : vector<2x128xf32>
    %186 = tpu.matmul %183, %185, %cst_47 {dimension_numbers = #tpu.dot_dimension_numbers<[1], [0], [0], [1], [0, 0, 1, 1], [], []>} : vector<2x49xf32>, vector<49x128xf32>, vector<2x128xf32> -> vector<2x128xf32>
    %187 = vector.extract_strided_slice %181 {offsets = [0, 1, 0], sizes = [2, 1, 49], strides = [1, 1, 1]} : vector<2x32x49xf32> to vector<2x1x49xf32>
    %188 = vector.shape_cast %187 : vector<2x1x49xf32> to vector<2x49xf32>
    %c1_48 = arith.constant 1 : index
    %c0_49 = arith.constant 0 : index
    %c0_50 = arith.constant 0 : index
    %189 = vector.load %arg8[%c1_48, %c0_49, %c0_50] : memref<32x49x128xf32, #tpu.memory_space<vmem>>, vector<1x49x128xf32>
    %190 = vector.shape_cast %189 : vector<1x49x128xf32> to vector<49x128xf32>
    %cst_51 = arith.constant dense<0.000000e+00> : vector<2x128xf32>
    %191 = tpu.matmul %188, %190, %cst_51 {dimension_numbers = #tpu.dot_dimension_numbers<[1], [0], [0], [1], [0, 0, 1, 1], [], []>} : vector<2x49xf32>, vector<49x128xf32>, vector<2x128xf32> -> vector<2x128xf32>
    %192 = arith.addf %186, %191 : vector<2x128xf32>
    %193 = vector.extract_strided_slice %181 {offsets = [0, 2, 0], sizes = [2, 1, 49], strides = [1, 1, 1]} : vector<2x32x49xf32> to vector<2x1x49xf32>
    %194 = vector.shape_cast %193 : vector<2x1x49xf32> to vector<2x49xf32>
    %c2 = arith.constant 2 : index
    %c0_52 = arith.constant 0 : index
    %c0_53 = arith.constant 0 : index
    %195 = vector.load %arg8[%c2, %c0_52, %c0_53] : memref<32x49x128xf32, #tpu.memory_space<vmem>>, vector<1x49x128xf32>
    %196 = vector.shape_cast %195 : vector<1x49x128xf32> to vector<49x128xf32>
    %cst_54 = arith.constant dense<0.000000e+00> : vector<2x128xf32>
    %197 = tpu.matmul %194, %196, %cst_54 {dimension_numbers = #tpu.dot_dimension_numbers<[1], [0], [0], [1], [0, 0, 1, 1], [], []>} : vector<2x49xf32>, vector<49x128xf32>, vector<2x128xf32> -> vector<2x128xf32>
    %198 = arith.addf %192, %197 : vector<2x128xf32>
    %199 = vector.extract_strided_slice %181 {offsets = [0, 3, 0], sizes = [2, 1, 49], strides = [1, 1, 1]} : vector<2x32x49xf32> to vector<2x1x49xf32>
    %200 = vector.shape_cast %199 : vector<2x1x49xf32> to vector<2x49xf32>
    %c3 = arith.constant 3 : index
    %c0_55 = arith.constant 0 : index
    %c0_56 = arith.constant 0 : index
    %201 = vector.load %arg8[%c3, %c0_55, %c0_56] : memref<32x49x128xf32, #tpu.memory_space<vmem>>, vector<1x49x128xf32>
    %202 = vector.shape_cast %201 : vector<1x49x128xf32> to vector<49x128xf32>
    %cst_57 = arith.constant dense<0.000000e+00> : vector<2x128xf32>
    %203 = tpu.matmul %200, %202, %cst_57 {dimension_numbers = #tpu.dot_dimension_numbers<[1], [0], [0], [1], [0, 0, 1, 1], [], []>} : vector<2x49xf32>, vector<49x128xf32>, vector<2x128xf32> -> vector<2x128xf32>
    %204 = arith.addf %198, %203 : vector<2x128xf32>
    %205 = vector.extract_strided_slice %181 {offsets = [0, 4, 0], sizes = [2, 1, 49], strides = [1, 1, 1]} : vector<2x32x49xf32> to vector<2x1x49xf32>
    %206 = vector.shape_cast %205 : vector<2x1x49xf32> to vector<2x49xf32>
    %c4 = arith.constant 4 : index
    %c0_58 = arith.constant 0 : index
    %c0_59 = arith.constant 0 : index
    %207 = vector.load %arg8[%c4, %c0_58, %c0_59] : memref<32x49x128xf32, #tpu.memory_space<vmem>>, vector<1x49x128xf32>
    %208 = vector.shape_cast %207 : vector<1x49x128xf32> to vector<49x128xf32>
    %cst_60 = arith.constant dense<0.000000e+00> : vector<2x128xf32>
    %209 = tpu.matmul %206, %208, %cst_60 {dimension_numbers = #tpu.dot_dimension_numbers<[1], [0], [0], [1], [0, 0, 1, 1], [], []>} : vector<2x49xf32>, vector<49x128xf32>, vector<2x128xf32> -> vector<2x128xf32>
    %210 = arith.addf %204, %209 : vector<2x128xf32>
    %211 = vector.extract_strided_slice %181 {offsets = [0, 5, 0], sizes = [2, 1, 49], strides = [1, 1, 1]} : vector<2x32x49xf32> to vector<2x1x49xf32>
    %212 = vector.shape_cast %211 : vector<2x1x49xf32> to vector<2x49xf32>
    %c5 = arith.constant 5 : index
    %c0_61 = arith.constant 0 : index
    %c0_62 = arith.constant 0 : index
    %213 = vector.load %arg8[%c5, %c0_61, %c0_62] : memref<32x49x128xf32, #tpu.memory_space<vmem>>, vector<1x49x128xf32>
    %214 = vector.shape_cast %213 : vector<1x49x128xf32> to vector<49x128xf32>
    %cst_63 = arith.constant dense<0.000000e+00> : vector<2x128xf32>
    %215 = tpu.matmul %212, %214, %cst_63 {dimension_numbers = #tpu.dot_dimension_numbers<[1], [0], [0], [1], [0, 0, 1, 1], [], []>} : vector<2x49xf32>, vector<49x128xf32>, vector<2x128xf32> -> vector<2x128xf32>
    %216 = arith.addf %210, %215 : vector<2x128xf32>
    %217 = vector.extract_strided_slice %181 {offsets = [0, 6, 0], sizes = [2, 1, 49], strides = [1, 1, 1]} : vector<2x32x49xf32> to vector<2x1x49xf32>
    %218 = vector.shape_cast %217 : vector<2x1x49xf32> to vector<2x49xf32>
    %c6 = arith.constant 6 : index
    %c0_64 = arith.constant 0 : index
    %c0_65 = arith.constant 0 : index
    %219 = vector.load %arg8[%c6, %c0_64, %c0_65] : memref<32x49x128xf32, #tpu.memory_space<vmem>>, vector<1x49x128xf32>
    %220 = vector.shape_cast %219 : vector<1x49x128xf32> to vector<49x128xf32>
    %cst_66 = arith.constant dense<0.000000e+00> : vector<2x128xf32>
    %221 = tpu.matmul %218, %220, %cst_66 {dimension_numbers = #tpu.dot_dimension_numbers<[1], [0], [0], [1], [0, 0, 1, 1], [], []>} : vector<2x49xf32>, vector<49x128xf32>, vector<2x128xf32> -> vector<2x128xf32>
    %222 = arith.addf %216, %221 : vector<2x128xf32>
    %223 = vector.extract_strided_slice %181 {offsets = [0, 7, 0], sizes = [2, 1, 49], strides = [1, 1, 1]} : vector<2x32x49xf32> to vector<2x1x49xf32>
    %224 = vector.shape_cast %223 : vector<2x1x49xf32> to vector<2x49xf32>
    %c7 = arith.constant 7 : index
    %c0_67 = arith.constant 0 : index
    %c0_68 = arith.constant 0 : index
    %225 = vector.load %arg8[%c7, %c0_67, %c0_68] : memref<32x49x128xf32, #tpu.memory_space<vmem>>, vector<1x49x128xf32>
    %226 = vector.shape_cast %225 : vector<1x49x128xf32> to vector<49x128xf32>
    %cst_69 = arith.constant dense<0.000000e+00> : vector<2x128xf32>
    %227 = tpu.matmul %224, %226, %cst_69 {dimension_numbers = #tpu.dot_dimension_numbers<[1], [0], [0], [1], [0, 0, 1, 1], [], []>} : vector<2x49xf32>, vector<49x128xf32>, vector<2x128xf32> -> vector<2x128xf32>
    %228 = arith.addf %222, %227 : vector<2x128xf32>
    %229 = vector.extract_strided_slice %181 {offsets = [0, 8, 0], sizes = [2, 1, 49], strides = [1, 1, 1]} : vector<2x32x49xf32> to vector<2x1x49xf32>
    %230 = vector.shape_cast %229 : vector<2x1x49xf32> to vector<2x49xf32>
    %c8 = arith.constant 8 : index
    %c0_70 = arith.constant 0 : index
    %c0_71 = arith.constant 0 : index
    %231 = vector.load %arg8[%c8, %c0_70, %c0_71] : memref<32x49x128xf32, #tpu.memory_space<vmem>>, vector<1x49x128xf32>
    %232 = vector.shape_cast %231 : vector<1x49x128xf32> to vector<49x128xf32>
    %cst_72 = arith.constant dense<0.000000e+00> : vector<2x128xf32>
    %233 = tpu.matmul %230, %232, %cst_72 {dimension_numbers = #tpu.dot_dimension_numbers<[1], [0], [0], [1], [0, 0, 1, 1], [], []>} : vector<2x49xf32>, vector<49x128xf32>, vector<2x128xf32> -> vector<2x128xf32>
    %234 = arith.addf %228, %233 : vector<2x128xf32>
    %235 = vector.extract_strided_slice %181 {offsets = [0, 9, 0], sizes = [2, 1, 49], strides = [1, 1, 1]} : vector<2x32x49xf32> to vector<2x1x49xf32>
    %236 = vector.shape_cast %235 : vector<2x1x49xf32> to vector<2x49xf32>
    %c9 = arith.constant 9 : index
    %c0_73 = arith.constant 0 : index
    %c0_74 = arith.constant 0 : index
    %237 = vector.load %arg8[%c9, %c0_73, %c0_74] : memref<32x49x128xf32, #tpu.memory_space<vmem>>, vector<1x49x128xf32>
    %238 = vector.shape_cast %237 : vector<1x49x128xf32> to vector<49x128xf32>
    %cst_75 = arith.constant dense<0.000000e+00> : vector<2x128xf32>
    %239 = tpu.matmul %236, %238, %cst_75 {dimension_numbers = #tpu.dot_dimension_numbers<[1], [0], [0], [1], [0, 0, 1, 1], [], []>} : vector<2x49xf32>, vector<49x128xf32>, vector<2x128xf32> -> vector<2x128xf32>
    %240 = arith.addf %234, %239 : vector<2x128xf32>
    %241 = vector.extract_strided_slice %181 {offsets = [0, 10, 0], sizes = [2, 1, 49], strides = [1, 1, 1]} : vector<2x32x49xf32> to vector<2x1x49xf32>
    %242 = vector.shape_cast %241 : vector<2x1x49xf32> to vector<2x49xf32>
    %c10 = arith.constant 10 : index
    %c0_76 = arith.constant 0 : index
    %c0_77 = arith.constant 0 : index
    %243 = vector.load %arg8[%c10, %c0_76, %c0_77] : memref<32x49x128xf32, #tpu.memory_space<vmem>>, vector<1x49x128xf32>
    %244 = vector.shape_cast %243 : vector<1x49x128xf32> to vector<49x128xf32>
    %cst_78 = arith.constant dense<0.000000e+00> : vector<2x128xf32>
    %245 = tpu.matmul %242, %244, %cst_78 {dimension_numbers = #tpu.dot_dimension_numbers<[1], [0], [0], [1], [0, 0, 1, 1], [], []>} : vector<2x49xf32>, vector<49x128xf32>, vector<2x128xf32> -> vector<2x128xf32>
    %246 = arith.addf %240, %245 : vector<2x128xf32>
    %247 = vector.extract_strided_slice %181 {offsets = [0, 11, 0], sizes = [2, 1, 49], strides = [1, 1, 1]} : vector<2x32x49xf32> to vector<2x1x49xf32>
    %248 = vector.shape_cast %247 : vector<2x1x49xf32> to vector<2x49xf32>
    %c11 = arith.constant 11 : index
    %c0_79 = arith.constant 0 : index
    %c0_80 = arith.constant 0 : index
    %249 = vector.load %arg8[%c11, %c0_79, %c0_80] : memref<32x49x128xf32, #tpu.memory_space<vmem>>, vector<1x49x128xf32>
    %250 = vector.shape_cast %249 : vector<1x49x128xf32> to vector<49x128xf32>
    %cst_81 = arith.constant dense<0.000000e+00> : vector<2x128xf32>
    %251 = tpu.matmul %248, %250, %cst_81 {dimension_numbers = #tpu.dot_dimension_numbers<[1], [0], [0], [1], [0, 0, 1, 1], [], []>} : vector<2x49xf32>, vector<49x128xf32>, vector<2x128xf32> -> vector<2x128xf32>
    %252 = arith.addf %246, %251 : vector<2x128xf32>
    %253 = vector.extract_strided_slice %181 {offsets = [0, 12, 0], sizes = [2, 1, 49], strides = [1, 1, 1]} : vector<2x32x49xf32> to vector<2x1x49xf32>
    %254 = vector.shape_cast %253 : vector<2x1x49xf32> to vector<2x49xf32>
    %c12 = arith.constant 12 : index
    %c0_82 = arith.constant 0 : index
    %c0_83 = arith.constant 0 : index
    %255 = vector.load %arg8[%c12, %c0_82, %c0_83] : memref<32x49x128xf32, #tpu.memory_space<vmem>>, vector<1x49x128xf32>
    %256 = vector.shape_cast %255 : vector<1x49x128xf32> to vector<49x128xf32>
    %cst_84 = arith.constant dense<0.000000e+00> : vector<2x128xf32>
    %257 = tpu.matmul %254, %256, %cst_84 {dimension_numbers = #tpu.dot_dimension_numbers<[1], [0], [0], [1], [0, 0, 1, 1], [], []>} : vector<2x49xf32>, vector<49x128xf32>, vector<2x128xf32> -> vector<2x128xf32>
    %258 = arith.addf %252, %257 : vector<2x128xf32>
    %259 = vector.extract_strided_slice %181 {offsets = [0, 13, 0], sizes = [2, 1, 49], strides = [1, 1, 1]} : vector<2x32x49xf32> to vector<2x1x49xf32>
    %260 = vector.shape_cast %259 : vector<2x1x49xf32> to vector<2x49xf32>
    %c13 = arith.constant 13 : index
    %c0_85 = arith.constant 0 : index
    %c0_86 = arith.constant 0 : index
    %261 = vector.load %arg8[%c13, %c0_85, %c0_86] : memref<32x49x128xf32, #tpu.memory_space<vmem>>, vector<1x49x128xf32>
    %262 = vector.shape_cast %261 : vector<1x49x128xf32> to vector<49x128xf32>
    %cst_87 = arith.constant dense<0.000000e+00> : vector<2x128xf32>
    %263 = tpu.matmul %260, %262, %cst_87 {dimension_numbers = #tpu.dot_dimension_numbers<[1], [0], [0], [1], [0, 0, 1, 1], [], []>} : vector<2x49xf32>, vector<49x128xf32>, vector<2x128xf32> -> vector<2x128xf32>
    %264 = arith.addf %258, %263 : vector<2x128xf32>
    %265 = vector.extract_strided_slice %181 {offsets = [0, 14, 0], sizes = [2, 1, 49], strides = [1, 1, 1]} : vector<2x32x49xf32> to vector<2x1x49xf32>
    %266 = vector.shape_cast %265 : vector<2x1x49xf32> to vector<2x49xf32>
    %c14 = arith.constant 14 : index
    %c0_88 = arith.constant 0 : index
    %c0_89 = arith.constant 0 : index
    %267 = vector.load %arg8[%c14, %c0_88, %c0_89] : memref<32x49x128xf32, #tpu.memory_space<vmem>>, vector<1x49x128xf32>
    %268 = vector.shape_cast %267 : vector<1x49x128xf32> to vector<49x128xf32>
    %cst_90 = arith.constant dense<0.000000e+00> : vector<2x128xf32>
    %269 = tpu.matmul %266, %268, %cst_90 {dimension_numbers = #tpu.dot_dimension_numbers<[1], [0], [0], [1], [0, 0, 1, 1], [], []>} : vector<2x49xf32>, vector<49x128xf32>, vector<2x128xf32> -> vector<2x128xf32>
    %270 = arith.addf %264, %269 : vector<2x128xf32>
    %271 = vector.extract_strided_slice %181 {offsets = [0, 15, 0], sizes = [2, 1, 49], strides = [1, 1, 1]} : vector<2x32x49xf32> to vector<2x1x49xf32>
    %272 = vector.shape_cast %271 : vector<2x1x49xf32> to vector<2x49xf32>
    %c15 = arith.constant 15 : index
    %c0_91 = arith.constant 0 : index
    %c0_92 = arith.constant 0 : index
    %273 = vector.load %arg8[%c15, %c0_91, %c0_92] : memref<32x49x128xf32, #tpu.memory_space<vmem>>, vector<1x49x128xf32>
    %274 = vector.shape_cast %273 : vector<1x49x128xf32> to vector<49x128xf32>
    %cst_93 = arith.constant dense<0.000000e+00> : vector<2x128xf32>
    %275 = tpu.matmul %272, %274, %cst_93 {dimension_numbers = #tpu.dot_dimension_numbers<[1], [0], [0], [1], [0, 0, 1, 1], [], []>} : vector<2x49xf32>, vector<49x128xf32>, vector<2x128xf32> -> vector<2x128xf32>
    %276 = arith.addf %270, %275 : vector<2x128xf32>
    %277 = vector.extract_strided_slice %181 {offsets = [0, 16, 0], sizes = [2, 1, 49], strides = [1, 1, 1]} : vector<2x32x49xf32> to vector<2x1x49xf32>
    %278 = vector.shape_cast %277 : vector<2x1x49xf32> to vector<2x49xf32>
    %c16 = arith.constant 16 : index
    %c0_94 = arith.constant 0 : index
    %c0_95 = arith.constant 0 : index
    %279 = vector.load %arg8[%c16, %c0_94, %c0_95] : memref<32x49x128xf32, #tpu.memory_space<vmem>>, vector<1x49x128xf32>
    %280 = vector.shape_cast %279 : vector<1x49x128xf32> to vector<49x128xf32>
    %cst_96 = arith.constant dense<0.000000e+00> : vector<2x128xf32>
    %281 = tpu.matmul %278, %280, %cst_96 {dimension_numbers = #tpu.dot_dimension_numbers<[1], [0], [0], [1], [0, 0, 1, 1], [], []>} : vector<2x49xf32>, vector<49x128xf32>, vector<2x128xf32> -> vector<2x128xf32>
    %282 = arith.addf %276, %281 : vector<2x128xf32>
    %283 = vector.extract_strided_slice %181 {offsets = [0, 17, 0], sizes = [2, 1, 49], strides = [1, 1, 1]} : vector<2x32x49xf32> to vector<2x1x49xf32>
    %284 = vector.shape_cast %283 : vector<2x1x49xf32> to vector<2x49xf32>
    %c17 = arith.constant 17 : index
    %c0_97 = arith.constant 0 : index
    %c0_98 = arith.constant 0 : index
    %285 = vector.load %arg8[%c17, %c0_97, %c0_98] : memref<32x49x128xf32, #tpu.memory_space<vmem>>, vector<1x49x128xf32>
    %286 = vector.shape_cast %285 : vector<1x49x128xf32> to vector<49x128xf32>
    %cst_99 = arith.constant dense<0.000000e+00> : vector<2x128xf32>
    %287 = tpu.matmul %284, %286, %cst_99 {dimension_numbers = #tpu.dot_dimension_numbers<[1], [0], [0], [1], [0, 0, 1, 1], [], []>} : vector<2x49xf32>, vector<49x128xf32>, vector<2x128xf32> -> vector<2x128xf32>
    %288 = arith.addf %282, %287 : vector<2x128xf32>
    %289 = vector.extract_strided_slice %181 {offsets = [0, 18, 0], sizes = [2, 1, 49], strides = [1, 1, 1]} : vector<2x32x49xf32> to vector<2x1x49xf32>
    %290 = vector.shape_cast %289 : vector<2x1x49xf32> to vector<2x49xf32>
    %c18 = arith.constant 18 : index
    %c0_100 = arith.constant 0 : index
    %c0_101 = arith.constant 0 : index
    %291 = vector.load %arg8[%c18, %c0_100, %c0_101] : memref<32x49x128xf32, #tpu.memory_space<vmem>>, vector<1x49x128xf32>
    %292 = vector.shape_cast %291 : vector<1x49x128xf32> to vector<49x128xf32>
    %cst_102 = arith.constant dense<0.000000e+00> : vector<2x128xf32>
    %293 = tpu.matmul %290, %292, %cst_102 {dimension_numbers = #tpu.dot_dimension_numbers<[1], [0], [0], [1], [0, 0, 1, 1], [], []>} : vector<2x49xf32>, vector<49x128xf32>, vector<2x128xf32> -> vector<2x128xf32>
    %294 = arith.addf %288, %293 : vector<2x128xf32>
    %295 = vector.extract_strided_slice %181 {offsets = [0, 19, 0], sizes = [2, 1, 49], strides = [1, 1, 1]} : vector<2x32x49xf32> to vector<2x1x49xf32>
    %296 = vector.shape_cast %295 : vector<2x1x49xf32> to vector<2x49xf32>
    %c19 = arith.constant 19 : index
    %c0_103 = arith.constant 0 : index
    %c0_104 = arith.constant 0 : index
    %297 = vector.load %arg8[%c19, %c0_103, %c0_104] : memref<32x49x128xf32, #tpu.memory_space<vmem>>, vector<1x49x128xf32>
    %298 = vector.shape_cast %297 : vector<1x49x128xf32> to vector<49x128xf32>
    %cst_105 = arith.constant dense<0.000000e+00> : vector<2x128xf32>
    %299 = tpu.matmul %296, %298, %cst_105 {dimension_numbers = #tpu.dot_dimension_numbers<[1], [0], [0], [1], [0, 0, 1, 1], [], []>} : vector<2x49xf32>, vector<49x128xf32>, vector<2x128xf32> -> vector<2x128xf32>
    %300 = arith.addf %294, %299 : vector<2x128xf32>
    %301 = vector.extract_strided_slice %181 {offsets = [0, 20, 0], sizes = [2, 1, 49], strides = [1, 1, 1]} : vector<2x32x49xf32> to vector<2x1x49xf32>
    %302 = vector.shape_cast %301 : vector<2x1x49xf32> to vector<2x49xf32>
    %c20 = arith.constant 20 : index
    %c0_106 = arith.constant 0 : index
    %c0_107 = arith.constant 0 : index
    %303 = vector.load %arg8[%c20, %c0_106, %c0_107] : memref<32x49x128xf32, #tpu.memory_space<vmem>>, vector<1x49x128xf32>
    %304 = vector.shape_cast %303 : vector<1x49x128xf32> to vector<49x128xf32>
    %cst_108 = arith.constant dense<0.000000e+00> : vector<2x128xf32>
    %305 = tpu.matmul %302, %304, %cst_108 {dimension_numbers = #tpu.dot_dimension_numbers<[1], [0], [0], [1], [0, 0, 1, 1], [], []>} : vector<2x49xf32>, vector<49x128xf32>, vector<2x128xf32> -> vector<2x128xf32>
    %306 = arith.addf %300, %305 : vector<2x128xf32>
    %307 = vector.extract_strided_slice %181 {offsets = [0, 21, 0], sizes = [2, 1, 49], strides = [1, 1, 1]} : vector<2x32x49xf32> to vector<2x1x49xf32>
    %308 = vector.shape_cast %307 : vector<2x1x49xf32> to vector<2x49xf32>
    %c21 = arith.constant 21 : index
    %c0_109 = arith.constant 0 : index
    %c0_110 = arith.constant 0 : index
    %309 = vector.load %arg8[%c21, %c0_109, %c0_110] : memref<32x49x128xf32, #tpu.memory_space<vmem>>, vector<1x49x128xf32>
    %310 = vector.shape_cast %309 : vector<1x49x128xf32> to vector<49x128xf32>
    %cst_111 = arith.constant dense<0.000000e+00> : vector<2x128xf32>
    %311 = tpu.matmul %308, %310, %cst_111 {dimension_numbers = #tpu.dot_dimension_numbers<[1], [0], [0], [1], [0, 0, 1, 1], [], []>} : vector<2x49xf32>, vector<49x128xf32>, vector<2x128xf32> -> vector<2x128xf32>
    %312 = arith.addf %306, %311 : vector<2x128xf32>
    %313 = vector.extract_strided_slice %181 {offsets = [0, 22, 0], sizes = [2, 1, 49], strides = [1, 1, 1]} : vector<2x32x49xf32> to vector<2x1x49xf32>
    %314 = vector.shape_cast %313 : vector<2x1x49xf32> to vector<2x49xf32>
    %c22 = arith.constant 22 : index
    %c0_112 = arith.constant 0 : index
    %c0_113 = arith.constant 0 : index
    %315 = vector.load %arg8[%c22, %c0_112, %c0_113] : memref<32x49x128xf32, #tpu.memory_space<vmem>>, vector<1x49x128xf32>
    %316 = vector.shape_cast %315 : vector<1x49x128xf32> to vector<49x128xf32>
    %cst_114 = arith.constant dense<0.000000e+00> : vector<2x128xf32>
    %317 = tpu.matmul %314, %316, %cst_114 {dimension_numbers = #tpu.dot_dimension_numbers<[1], [0], [0], [1], [0, 0, 1, 1], [], []>} : vector<2x49xf32>, vector<49x128xf32>, vector<2x128xf32> -> vector<2x128xf32>
    %318 = arith.addf %312, %317 : vector<2x128xf32>
    %319 = vector.extract_strided_slice %181 {offsets = [0, 23, 0], sizes = [2, 1, 49], strides = [1, 1, 1]} : vector<2x32x49xf32> to vector<2x1x49xf32>
    %320 = vector.shape_cast %319 : vector<2x1x49xf32> to vector<2x49xf32>
    %c23 = arith.constant 23 : index
    %c0_115 = arith.constant 0 : index
    %c0_116 = arith.constant 0 : index
    %321 = vector.load %arg8[%c23, %c0_115, %c0_116] : memref<32x49x128xf32, #tpu.memory_space<vmem>>, vector<1x49x128xf32>
    %322 = vector.shape_cast %321 : vector<1x49x128xf32> to vector<49x128xf32>
    %cst_117 = arith.constant dense<0.000000e+00> : vector<2x128xf32>
    %323 = tpu.matmul %320, %322, %cst_117 {dimension_numbers = #tpu.dot_dimension_numbers<[1], [0], [0], [1], [0, 0, 1, 1], [], []>} : vector<2x49xf32>, vector<49x128xf32>, vector<2x128xf32> -> vector<2x128xf32>
    %324 = arith.addf %318, %323 : vector<2x128xf32>
    %325 = vector.extract_strided_slice %181 {offsets = [0, 24, 0], sizes = [2, 1, 49], strides = [1, 1, 1]} : vector<2x32x49xf32> to vector<2x1x49xf32>
    %326 = vector.shape_cast %325 : vector<2x1x49xf32> to vector<2x49xf32>
    %c24 = arith.constant 24 : index
    %c0_118 = arith.constant 0 : index
    %c0_119 = arith.constant 0 : index
    %327 = vector.load %arg8[%c24, %c0_118, %c0_119] : memref<32x49x128xf32, #tpu.memory_space<vmem>>, vector<1x49x128xf32>
    %328 = vector.shape_cast %327 : vector<1x49x128xf32> to vector<49x128xf32>
    %cst_120 = arith.constant dense<0.000000e+00> : vector<2x128xf32>
    %329 = tpu.matmul %326, %328, %cst_120 {dimension_numbers = #tpu.dot_dimension_numbers<[1], [0], [0], [1], [0, 0, 1, 1], [], []>} : vector<2x49xf32>, vector<49x128xf32>, vector<2x128xf32> -> vector<2x128xf32>
    %330 = arith.addf %324, %329 : vector<2x128xf32>
    %331 = vector.extract_strided_slice %181 {offsets = [0, 25, 0], sizes = [2, 1, 49], strides = [1, 1, 1]} : vector<2x32x49xf32> to vector<2x1x49xf32>
    %332 = vector.shape_cast %331 : vector<2x1x49xf32> to vector<2x49xf32>
    %c25 = arith.constant 25 : index
    %c0_121 = arith.constant 0 : index
    %c0_122 = arith.constant 0 : index
    %333 = vector.load %arg8[%c25, %c0_121, %c0_122] : memref<32x49x128xf32, #tpu.memory_space<vmem>>, vector<1x49x128xf32>
    %334 = vector.shape_cast %333 : vector<1x49x128xf32> to vector<49x128xf32>
    %cst_123 = arith.constant dense<0.000000e+00> : vector<2x128xf32>
    %335 = tpu.matmul %332, %334, %cst_123 {dimension_numbers = #tpu.dot_dimension_numbers<[1], [0], [0], [1], [0, 0, 1, 1], [], []>} : vector<2x49xf32>, vector<49x128xf32>, vector<2x128xf32> -> vector<2x128xf32>
    %336 = arith.addf %330, %335 : vector<2x128xf32>
    %337 = vector.extract_strided_slice %181 {offsets = [0, 26, 0], sizes = [2, 1, 49], strides = [1, 1, 1]} : vector<2x32x49xf32> to vector<2x1x49xf32>
    %338 = vector.shape_cast %337 : vector<2x1x49xf32> to vector<2x49xf32>
    %c26 = arith.constant 26 : index
    %c0_124 = arith.constant 0 : index
    %c0_125 = arith.constant 0 : index
    %339 = vector.load %arg8[%c26, %c0_124, %c0_125] : memref<32x49x128xf32, #tpu.memory_space<vmem>>, vector<1x49x128xf32>
    %340 = vector.shape_cast %339 : vector<1x49x128xf32> to vector<49x128xf32>
    %cst_126 = arith.constant dense<0.000000e+00> : vector<2x128xf32>
    %341 = tpu.matmul %338, %340, %cst_126 {dimension_numbers = #tpu.dot_dimension_numbers<[1], [0], [0], [1], [0, 0, 1, 1], [], []>} : vector<2x49xf32>, vector<49x128xf32>, vector<2x128xf32> -> vector<2x128xf32>
    %342 = arith.addf %336, %341 : vector<2x128xf32>
    %343 = vector.extract_strided_slice %181 {offsets = [0, 27, 0], sizes = [2, 1, 49], strides = [1, 1, 1]} : vector<2x32x49xf32> to vector<2x1x49xf32>
    %344 = vector.shape_cast %343 : vector<2x1x49xf32> to vector<2x49xf32>
    %c27 = arith.constant 27 : index
    %c0_127 = arith.constant 0 : index
    %c0_128 = arith.constant 0 : index
    %345 = vector.load %arg8[%c27, %c0_127, %c0_128] : memref<32x49x128xf32, #tpu.memory_space<vmem>>, vector<1x49x128xf32>
    %346 = vector.shape_cast %345 : vector<1x49x128xf32> to vector<49x128xf32>
    %cst_129 = arith.constant dense<0.000000e+00> : vector<2x128xf32>
    %347 = tpu.matmul %344, %346, %cst_129 {dimension_numbers = #tpu.dot_dimension_numbers<[1], [0], [0], [1], [0, 0, 1, 1], [], []>} : vector<2x49xf32>, vector<49x128xf32>, vector<2x128xf32> -> vector<2x128xf32>
    %348 = arith.addf %342, %347 : vector<2x128xf32>
    %349 = vector.extract_strided_slice %181 {offsets = [0, 28, 0], sizes = [2, 1, 49], strides = [1, 1, 1]} : vector<2x32x49xf32> to vector<2x1x49xf32>
    %350 = vector.shape_cast %349 : vector<2x1x49xf32> to vector<2x49xf32>
    %c28 = arith.constant 28 : index
    %c0_130 = arith.constant 0 : index
    %c0_131 = arith.constant 0 : index
    %351 = vector.load %arg8[%c28, %c0_130, %c0_131] : memref<32x49x128xf32, #tpu.memory_space<vmem>>, vector<1x49x128xf32>
    %352 = vector.shape_cast %351 : vector<1x49x128xf32> to vector<49x128xf32>
    %cst_132 = arith.constant dense<0.000000e+00> : vector<2x128xf32>
    %353 = tpu.matmul %350, %352, %cst_132 {dimension_numbers = #tpu.dot_dimension_numbers<[1], [0], [0], [1], [0, 0, 1, 1], [], []>} : vector<2x49xf32>, vector<49x128xf32>, vector<2x128xf32> -> vector<2x128xf32>
    %354 = arith.addf %348, %353 : vector<2x128xf32>
    %355 = vector.extract_strided_slice %181 {offsets = [0, 29, 0], sizes = [2, 1, 49], strides = [1, 1, 1]} : vector<2x32x49xf32> to vector<2x1x49xf32>
    %356 = vector.shape_cast %355 : vector<2x1x49xf32> to vector<2x49xf32>
    %c29 = arith.constant 29 : index
    %c0_133 = arith.constant 0 : index
    %c0_134 = arith.constant 0 : index
    %357 = vector.load %arg8[%c29, %c0_133, %c0_134] : memref<32x49x128xf32, #tpu.memory_space<vmem>>, vector<1x49x128xf32>
    %358 = vector.shape_cast %357 : vector<1x49x128xf32> to vector<49x128xf32>
    %cst_135 = arith.constant dense<0.000000e+00> : vector<2x128xf32>
    %359 = tpu.matmul %356, %358, %cst_135 {dimension_numbers = #tpu.dot_dimension_numbers<[1], [0], [0], [1], [0, 0, 1, 1], [], []>} : vector<2x49xf32>, vector<49x128xf32>, vector<2x128xf32> -> vector<2x128xf32>
    %360 = arith.addf %354, %359 : vector<2x128xf32>
    %361 = vector.extract_strided_slice %181 {offsets = [0, 30, 0], sizes = [2, 1, 49], strides = [1, 1, 1]} : vector<2x32x49xf32> to vector<2x1x49xf32>
    %362 = vector.shape_cast %361 : vector<2x1x49xf32> to vector<2x49xf32>
    %c30 = arith.constant 30 : index
    %c0_136 = arith.constant 0 : index
    %c0_137 = arith.constant 0 : index
    %363 = vector.load %arg8[%c30, %c0_136, %c0_137] : memref<32x49x128xf32, #tpu.memory_space<vmem>>, vector<1x49x128xf32>
    %364 = vector.shape_cast %363 : vector<1x49x128xf32> to vector<49x128xf32>
    %cst_138 = arith.constant dense<0.000000e+00> : vector<2x128xf32>
    %365 = tpu.matmul %362, %364, %cst_138 {dimension_numbers = #tpu.dot_dimension_numbers<[1], [0], [0], [1], [0, 0, 1, 1], [], []>} : vector<2x49xf32>, vector<49x128xf32>, vector<2x128xf32> -> vector<2x128xf32>
    %366 = arith.addf %360, %365 : vector<2x128xf32>
    %367 = vector.extract_strided_slice %181 {offsets = [0, 31, 0], sizes = [2, 1, 49], strides = [1, 1, 1]} : vector<2x32x49xf32> to vector<2x1x49xf32>
    %368 = vector.shape_cast %367 : vector<2x1x49xf32> to vector<2x49xf32>
    %c31 = arith.constant 31 : index
    %c0_139 = arith.constant 0 : index
    %c0_140 = arith.constant 0 : index
    %369 = vector.load %arg8[%c31, %c0_139, %c0_140] : memref<32x49x128xf32, #tpu.memory_space<vmem>>, vector<1x49x128xf32>
    %370 = vector.shape_cast %369 : vector<1x49x128xf32> to vector<49x128xf32>
    %cst_141 = arith.constant dense<0.000000e+00> : vector<2x128xf32>
    %371 = tpu.matmul %368, %370, %cst_141 {dimension_numbers = #tpu.dot_dimension_numbers<[1], [0], [0], [1], [0, 0, 1, 1], [], []>} : vector<2x49xf32>, vector<49x128xf32>, vector<2x128xf32> -> vector<2x128xf32>
    %372 = arith.addf %366, %371 : vector<2x128xf32>
    %c0_142 = arith.constant 0 : index
    %c0_143 = arith.constant 0 : index
    %373 = vector.load %arg9[%c0_142, %c0_143] : memref<1x128xf32, #tpu.memory_space<vmem>>, vector<1x128xf32>
    %374 = vector.broadcast %373 : vector<1x128xf32> to vector<2x128xf32>
    %375 = arith.addf %372, %374 : vector<2x128xf32>
    %cst_144 = arith.constant 0.000000e+00 : f32
    %376 = vector.broadcast %cst_144 : f32 to vector<2x128xf32>
    %377 = arith.maximumf %375, %376 : vector<2x128xf32>
    %c0_145 = arith.constant 0 : index
    %c0_146 = arith.constant 0 : index
    %378 = vector.load %arg10[%c0_145, %c0_146] : memref<128x10xf32, #tpu.memory_space<vmem>>, vector<128x10xf32>
    %cst_147 = arith.constant dense<0.000000e+00> : vector<2x10xf32>
    %379 = tpu.matmul %377, %378, %cst_147 {dimension_numbers = #tpu.dot_dimension_numbers<[1], [0], [0], [1], [0, 0, 1, 1], [], []>} : vector<2x128xf32>, vector<128x10xf32>, vector<2x10xf32> -> vector<2x10xf32>
    %c0_148 = arith.constant 0 : index
    %c0_149 = arith.constant 0 : index
    %380 = vector.load %arg11[%c0_148, %c0_149] : memref<1x10xf32, #tpu.memory_space<vmem>>, vector<1x10xf32>
    %381 = vector.broadcast %380 : vector<1x10xf32> to vector<2x10xf32>
    %382 = arith.addf %379, %381 : vector<2x10xf32>
    %c0_150 = arith.constant 0 : index
    %c0_151 = arith.constant 0 : index
    %383 = vector.load %arg12[%c0_150, %c0_151] : memref<2x10xf32, #tpu.memory_space<vmem>>, vector<2x10xf32>
    tpu.vector_store %arg12[%c0_150, %c0_151], %382 {strides = array<i32>} : memref<2x10xf32, #tpu.memory_space<vmem>>, vector<2x10xf32>,
    return
  }
  func.func @transform_0(%arg0: i32) -> (i32, i32) {
    %c0_i32 = arith.constant 0 : i32
    %c0_i32_0 = arith.constant 0 : i32
    return %arg0, %c0_i32 : i32, i32
  }
  func.func @transform_1(%arg0: i32) -> (i32, i32) {
    %c0_i32 = arith.constant 0 : i32
    %c0_i32_0 = arith.constant 0 : i32
    %c0_i32_1 = arith.constant 0 : i32
    return %c0_i32, %c0_i32_0 : i32, i32
  }
  func.func @transform_2(%arg0: i32) -> (i32, i32) {
    %c0_i32 = arith.constant 0 : i32
    %c0_i32_0 = arith.constant 0 : i32
    %c0_i32_1 = arith.constant 0 : i32
    return %c0_i32, %c0_i32_0 : i32, i32
  }
  func.func @transform_3(%arg0: i32) -> (i32, i32) {
    %c0_i32 = arith.constant 0 : i32
    %c0_i32_0 = arith.constant 0 : i32
    %c0_i32_1 = arith.constant 0 : i32
    return %c0_i32, %c0_i32_0 : i32, i32
  }
  func.func @transform_4(%arg0: i32) -> (i32, i32) {
    %c0_i32 = arith.constant 0 : i32
    %c0_i32_0 = arith.constant 0 : i32
    %c0_i32_1 = arith.constant 0 : i32
    return %c0_i32, %c0_i32_0 : i32, i32
  }
  func.func @transform_5(%arg0: i32) -> (i32, i32) {
    %c0_i32 = arith.constant 0 : i32
    %c0_i32_0 = arith.constant 0 : i32
    %c0_i32_1 = arith.constant 0 : i32
    return %c0_i32, %c0_i32_0 : i32, i32
  }
  func.func @transform_6(%arg0: i32) -> (i32, i32) {
    %c0_i32 = arith.constant 0 : i32
    %c0_i32_0 = arith.constant 0 : i32
    %c0_i32_1 = arith.constant 0 : i32
    return %c0_i32, %c0_i32_0 : i32, i32
  }
  func.func @transform_7(%arg0: i32) -> (i32, i32, i32) {
    %c0_i32 = arith.constant 0 : i32
    %c0_i32_0 = arith.constant 0 : i32
    %c0_i32_1 = arith.constant 0 : i32
    %c0_i32_2 = arith.constant 0 : i32
    return %c0_i32, %c0_i32_0, %c0_i32_1 : i32, i32, i32
  }
  func.func @transform_8(%arg0: i32) -> (i32, i32) {
    %c0_i32 = arith.constant 0 : i32
    %c0_i32_0 = arith.constant 0 : i32
    %c0_i32_1 = arith.constant 0 : i32
    return %c0_i32, %c0_i32_0 : i32, i32
  }
  func.func @transform_9(%arg0: i32) -> (i32, i32) {
    %c0_i32 = arith.constant 0 : i32
    %c0_i32_0 = arith.constant 0 : i32
    %c0_i32_1 = arith.constant 0 : i32
    return %c0_i32, %c0_i32_0 : i32, i32
  }
  func.func @transform_10(%arg0: i32) -> (i32, i32) {
    %c0_i32 = arith.constant 0 : i32
    %c0_i32_0 = arith.constant 0 : i32
    %c0_i32_1 = arith.constant 0 : i32
    return %c0_i32, %c0_i32_0 : i32, i32
  }
  func.func @transform_11(%arg0: i32) -> (i32, i32) {
    %c0_i32 = arith.constant 0 : i32
    %c0_i32_0 = arith.constant 0 : i32
    return %arg0, %c0_i32 : i32, i32
  }
}

</mosaic_0001>

<llo_original>
// kernel: net_forward.1
$region0: #{net_forward.1}
  #allocation0 [shape = 'u32[]', space=smem, size = 0x4, offset = 0x4, fixed_abs, tag = 'smem constant byte address 0x4 - core index']
  #allocation1 [shape = 'u32[144,128]{1,0:T(1,128)}', space=vmem, size = 0x12000, scoped, tag = 'internal scratch']
  #allocation2 [shape = 'f32[2,32,49]{2,1,0:T(8,128)}', space=vmem, size = 0x8000, scoped, tag = 'scratch operand']
  %s0 = inlined_call_operand.vmem [shape: f32[2,1024], index: 0, kind: input, shape index: {}]
  %s1 = inlined_call_operand.vmem [shape: f32[16,25], index: 1, kind: input, shape index: {}]
  %s2 = inlined_call_operand.vmem [shape: f32[16,1], index: 2, kind: input, shape index: {}]
  %s3 = inlined_call_operand.vmem [shape: f32[859,324], index: 3, kind: input, shape index: {}]
  %s4 = inlined_call_operand.vmem [shape: f32[32,400], index: 4, kind: input, shape index: {}]
  %s5 = inlined_call_operand.vmem [shape: f32[32,1], index: 5, kind: input, shape index: {}]
  %s6 = inlined_call_operand.vmem [shape: f32[229,49], index: 6, kind: input, shape index: {}]
  %s7 = inlined_call_operand.vmem [shape: f32[32,49,128], index: 7, kind: input, shape index: {}]
  %s8 = inlined_call_operand.vmem [shape: f32[1,128], index: 8, kind: input, shape index: {}]
  %s9 = inlined_call_operand.vmem [shape: f32[128,10], index: 9, kind: input, shape index: {}]
  %s10 = inlined_call_operand.vmem [shape: f32[1,10], index: 10, kind: input, shape index: {}]
  %s11 = inlined_call_operand.hbm [shape: f32[2,10], index: 11, kind: output, shape index: {}]
  %s12 = sld [smem:[#allocation0]]
  $region54: #{net_forward.1} parent=0
    _
  %s14 = ssub.s32 1, %s12
  %s15 = scalar_select 0, %s14, %s12
  $region1: #{net_forward.1} parent=0
    #allocation3 [shape = 'u8[1024]{0}', space=vmem, size = 0x400, scoped, tag = 'output window, operand 0, single buffered']
    #allocation4 [shape = 's32[1]{0}', space=sflag, size = 0x4, scoped, tag = 'scoped memory for net_forward.1']
    %16 = vsyncpa [#allocation4], 0
    // Predicated region
    $region2: #{net_forward.1} parent=1 // pred_check
      _
    $region3: #{net_forward.1} parent=1 // pred_check_branch
      %18 = sbr.rel (0) target = $region5
    $region4: #{net_forward.1} parent=1 // pred_region
      _
    $region5: #{net_forward.1} parent=1 // pred_fallthru
      _
    // Predicated region
    $region6: #{net_forward.1} parent=1 // pred_check
      _
    $region7: #{net_forward.1} parent=1 // pred_check_branch
      %20 = sbr.rel (0) target = $region9
    $region8: #{net_forward.1} parent=1 // pred_region
      _
    $region9: #{net_forward.1} parent=1 // pred_fallthru
      _
    // Predicated region
    $region10: #{net_forward.1} parent=1 // pred_check
      _
    $region11: #{net_forward.1} parent=1 // pred_check_branch
      %22 = sbr.rel (0) target = $region13
    $region12: #{net_forward.1} parent=1 // pred_region
      _
    $region13: #{net_forward.1} parent=1 // pred_fallthru
      _
    // Predicated region
    $region14: #{net_forward.1} parent=1 // pred_check
      _
    $region15: #{net_forward.1} parent=1 // pred_check_branch
      %24 = sbr.rel (0) target = $region17
    $region16: #{net_forward.1} parent=1 // pred_region
      _
    $region17: #{net_forward.1} parent=1 // pred_fallthru
      _
    // Predicated region
    $region18: #{net_forward.1} parent=1 // pred_check
      _
    $region19: #{net_forward.1} parent=1 // pred_check_branch
      %26 = sbr.rel (0) target = $region21
    $region20: #{net_forward.1} parent=1 // pred_region
      _
    $region21: #{net_forward.1} parent=1 // pred_fallthru
      _
    // Predicated region
    $region22: #{net_forward.1} parent=1 // pred_check
      _
    $region23: #{net_forward.1} parent=1 // pred_check_branch
      %28 = sbr.rel (0) target = $region25
    $region24: #{net_forward.1} parent=1 // pred_region
      _
    $region25: #{net_forward.1} parent=1 // pred_fallthru
      _
    // Predicated region
    $region26: #{net_forward.1} parent=1 // pred_check
      _
    $region27: #{net_forward.1} parent=1 // pred_check_branch
      %30 = sbr.rel (0) target = $region29
    $region28: #{net_forward.1} parent=1 // pred_region
      _
    $region29: #{net_forward.1} parent=1 // pred_fallthru
      _
    // Predicated region
    $region30: #{net_forward.1} parent=1 // pred_check
      _
    $region31: #{net_forward.1} parent=1 // pred_check_branch
      %32 = sbr.rel (0) target = $region33
    $region32: #{net_forward.1} parent=1 // pred_region
      _
    $region33: #{net_forward.1} parent=1 // pred_fallthru
      _
    // Predicated region
    $region34: #{net_forward.1} parent=1 // pred_check
      _
    $region35: #{net_forward.1} parent=1 // pred_check_branch
      %34 = sbr.rel (0) target = $region37
    $region36: #{net_forward.1} parent=1 // pred_region
      _
    $region37: #{net_forward.1} parent=1 // pred_fallthru
      _
    // Predicated region
    $region38: #{net_forward.1} parent=1 // pred_check
      _
    $region39: #{net_forward.1} parent=1 // pred_check_branch
      %36 = sbr.rel (0) target = $region41
    $region40: #{net_forward.1} parent=1 // pred_region
      _
    $region41: #{net_forward.1} parent=1 // pred_fallthru
      _
    // Predicated region
    $region42: #{net_forward.1} parent=1 // pred_check
      _
    $region43: #{net_forward.1} parent=1 // pred_check_branch
      %38 = sbr.rel (0) target = $region45
    $region44: #{net_forward.1} parent=1 // pred_region
      _
    $region45: #{net_forward.1} parent=1 // pred_fallthru
      _
    %v39 = vld [vmem:[%s0] sm:$0xff]
    %v40 = vld [vmem:[%s0 + $0x8] sm:$0xff]
    %v43 = vlaneseq
    %v44 = vshrl.u32 %v43, 7
    %v45 = vsub.s32 0, %v44
    %v46 = vrot.slane %v39, %v45
    %v47 = vlaneseq
    %v48 = vshrl.u32 %v47, 7
    %v49 = vsub.s32 2, %v48
    %v50 = vrot.slane %v39, %v49
    %v51 = vlaneseq
    %v52 = vshrl.u32 %v51, 7
    %v53 = vsub.s32 4, %v52
    %v54 = vrot.slane %v39, %v53
    %v55 = vlaneseq
    %v56 = vshrl.u32 %v55, 7
    %v57 = vsub.s32 6, %v56
    %v58 = vrot.slane %v39, %v57
    %v59 = vlaneseq
    %v60 = vshrl.u32 %v59, 7
    %v61 = vsub.s32 0, %v60
    %v62 = vrot.slane %v40, %v61
    %v63 = vlaneseq
    %v64 = vshrl.u32 %v63, 7
    %v65 = vsub.s32 2, %v64
    %v66 = vrot.slane %v40, %v65
    %v67 = vlaneseq
    %v68 = vshrl.u32 %v67, 7
    %v69 = vsub.s32 4, %v68
    %v70 = vrot.slane %v40, %v69
    %78 = vrot.lane.b32.xlu0 %v46, 127
    %v79 = vpop.permute.xlu0 %78
    %80 = vrot.lane.b32.xlu0 %v50, 127
    %v81 = vpop.permute.xlu0 %80
    %82 = vrot.lane.b32.xlu0 %v54, 127
    %v83 = vpop.permute.xlu0 %82
    %84 = vrot.lane.b32.xlu0 %v58, 127
    %v85 = vpop.permute.xlu0 %84
    %86 = vrot.lane.b32.xlu0 %v62, 127
    %v87 = vpop.permute.xlu0 %86
    %88 = vrot.lane.b32.xlu0 %v66, 127
    %v89 = vpop.permute.xlu0 %88
    %90 = vrot.lane.b32.xlu0 %v70, 127
    %v91 = vpop.permute.xlu0 %90
    %vm92 = vcmask 1039360
    %v93 = vsel %vm92, %v79, %v81
    %v94 = vsel %vm92, %v81, %v83
    %v95 = vsel %vm92, %v83, %v85
    %v96 = vsel %vm92, %v85, %v87
    %v97 = vsel %vm92, %v87, %v89
    %v98 = vsel %vm92, %v89, %v91
    %106 = vrot.lane.b32.xlu0 %v46, 126
    %v107 = vpop.permute.xlu0 %106
    %108 = vrot.lane.b32.xlu0 %v50, 126
    %v109 = vpop.permute.xlu0 %108
    %110 = vrot.lane.b32.xlu0 %v54, 126
    %v111 = vpop.permute.xlu0 %110
    %112 = vrot.lane.b32.xlu0 %v58, 126
    %v113 = vpop.permute.xlu0 %112
    %114 = vrot.lane.b32.xlu0 %v62, 126
    %v115 = vpop.permute.xlu0 %114
    %116 = vrot.lane.b32.xlu0 %v66, 126
    %v117 = vpop.permute.xlu0 %116
    %118 = vrot.lane.b32.xlu0 %v70, 126
    %v119 = vpop.permute.xlu0 %118
    %vm120 = vcmask 1031168
    %v121 = vsel %vm120, %v107, %v109
    %v122 = vsel %vm120, %v109, %v111
    %v123 = vsel %vm120, %v111, %v113
    %v124 = vsel %vm120, %v113, %v115
    %v125 = vsel %vm120, %v115, %v117
    %v126 = vsel %vm120, %v117, %v119
    %134 = vrot.lane.b32.xlu0 %v46, 125
    %v135 = vpop.permute.xlu0 %134
    %136 = vrot.lane.b32.xlu0 %v50, 125
    %v137 = vpop.permute.xlu0 %136
    %138 = vrot.lane.b32.xlu0 %v54, 125
    %v139 = vpop.permute.xlu0 %138
    %140 = vrot.lane.b32.xlu0 %v58, 125
    %v141 = vpop.permute.xlu0 %140
    %142 = vrot.lane.b32.xlu0 %v62, 125
    %v143 = vpop.permute.xlu0 %142
    %144 = vrot.lane.b32.xlu0 %v66, 125
    %v145 = vpop.permute.xlu0 %144
    %146 = vrot.lane.b32.xlu0 %v70, 125
    %v147 = vpop.permute.xlu0 %146
    %vm148 = vcmask 1022976
    %v149 = vsel %vm148, %v135, %v137
    %v150 = vsel %vm148, %v137, %v139
    %v151 = vsel %vm148, %v139, %v141
    %v152 = vsel %vm148, %v141, %v143
    %v153 = vsel %vm148, %v143, %v145
    %v154 = vsel %vm148, %v145, %v147
    %162 = vrot.lane.b32.xlu0 %v46, 124
    %v163 = vpop.permute.xlu0 %162
    %164 = vrot.lane.b32.xlu0 %v50, 124
    %v165 = vpop.permute.xlu0 %164
    %166 = vrot.lane.b32.xlu0 %v54, 124
    %v167 = vpop.permute.xlu0 %166
    %168 = vrot.lane.b32.xlu0 %v58, 124
    %v169 = vpop.permute.xlu0 %168
    %170 = vrot.lane.b32.xlu0 %v62, 124
    %v171 = vpop.permute.xlu0 %170
    %172 = vrot.lane.b32.xlu0 %v66, 124
    %v173 = vpop.permute.xlu0 %172
    %174 = vrot.lane.b32.xlu0 %v70, 124
    %v175 = vpop.permute.xlu0 %174
    %vm176 = vcmask 1014784
    %v177 = vsel %vm176, %v163, %v165
    %v178 = vsel %vm176, %v165, %v167
    %v179 = vsel %vm176, %v167, %v169
    %v180 = vsel %vm176, %v169, %v171
    %v181 = vsel %vm176, %v171, %v173
    %v182 = vsel %vm176, %v173, %v175
    %v190 = vlaneseq
    %v191 = vshrl.u32 %v190, 7
    %v192 = vsub.s32 6, %v191
    %v193 = vrot.slane %v40, %v192
    %194 = vrot.lane.b32.xlu0 %v46, 96
    %v195 = vpop.permute.xlu0 %194
    %196 = vrot.lane.b32.xlu0 %v50, 96
    %v197 = vpop.permute.xlu0 %196
    %198 = vrot.lane.b32.xlu0 %v54, 96
    %v199 = vpop.permute.xlu0 %198
    %200 = vrot.lane.b32.xlu0 %v58, 96
    %v201 = vpop.permute.xlu0 %200
    %202 = vrot.lane.b32.xlu0 %v62, 96
    %v203 = vpop.permute.xlu0 %202
    %204 = vrot.lane.b32.xlu0 %v66, 96
    %v205 = vpop.permute.xlu0 %204
    %206 = vrot.lane.b32.xlu0 %v70, 96
    %v207 = vpop.permute.xlu0 %206
    %208 = vrot.lane.b32.xlu0 %v193, 96
    %v209 = vpop.permute.xlu0 %208
    %vm210 = vcmask 785408
    %v211 = vsel %vm210, %v195, %v197
    %v212 = vsel %vm210, %v197, %v199
    %v213 = vsel %vm210, %v199, %v201
    %v214 = vsel %vm210, %v201, %v203
    %v215 = vsel %vm210, %v203, %v205
    %v216 = vsel %vm210, %v205, %v207
    %v217 = vsel %vm210, %v207, %v209
    %225 = vrot.lane.b32.xlu0 %v46, 95
    %v226 = vpop.permute.xlu0 %225
    %227 = vrot.lane.b32.xlu0 %v50, 95
    %v228 = vpop.permute.xlu0 %227
    %229 = vrot.lane.b32.xlu0 %v54, 95
    %v230 = vpop.permute.xlu0 %229
    %231 = vrot.lane.b32.xlu0 %v58, 95
    %v232 = vpop.permute.xlu0 %231
    %233 = vrot.lane.b32.xlu0 %v62, 95
    %v234 = vpop.permute.xlu0 %233
    %235 = vrot.lane.b32.xlu0 %v66, 95
    %v236 = vpop.permute.xlu0 %235
    %237 = vrot.lane.b32.xlu0 %v70, 95
    %v238 = vpop.permute.xlu0 %237
    %239 = vrot.lane.b32.xlu0 %v193, 95
    %v240 = vpop.permute.xlu0 %239
    %vm241 = vcmask 777216
    %v242 = vsel %vm241, %v226, %v228
    %v243 = vsel %vm241, %v228, %v230
    %v244 = vsel %vm241, %v230, %v232
    %v245 = vsel %vm241, %v232, %v234
    %v246 = vsel %vm241, %v234, %v236
    %v247 = vsel %vm241, %v236, %v238
    %v248 = vsel %vm241, %v238, %v240
    %256 = vrot.lane.b32.xlu0 %v46, 94
    %v257 = vpop.permute.xlu0 %256
    %258 = vrot.lane.b32.xlu0 %v50, 94
    %v259 = vpop.permute.xlu0 %258
    %260 = vrot.lane.b32.xlu0 %v54, 94
    %v261 = vpop.permute.xlu0 %260
    %262 = vrot.lane.b32.xlu0 %v58, 94
    %v263 = vpop.permute.xlu0 %262
    %264 = vrot.lane.b32.xlu0 %v62, 94
    %v265 = vpop.permute.xlu0 %264
    %266 = vrot.lane.b32.xlu0 %v66, 94
    %v267 = vpop.permute.xlu0 %266
    %268 = vrot.lane.b32.xlu0 %v70, 94
    %v269 = vpop.permute.xlu0 %268
    %270 = vrot.lane.b32.xlu0 %v193, 94
    %v271 = vpop.permute.xlu0 %270
    %vm272 = vcmask 769024
    %v273 = vsel %vm272, %v257, %v259
    %v274 = vsel %vm272, %v259, %v261
    %v275 = vsel %vm272, %v261, %v263
    %v276 = vsel %vm272, %v263, %v265
    %v277 = vsel %vm272, %v265, %v267
    %v278 = vsel %vm272, %v267, %v269
    %v279 = vsel %vm272, %v269, %v271
    %287 = vrot.lane.b32.xlu0 %v46, 93
    %v288 = vpop.permute.xlu0 %287
    %289 = vrot.lane.b32.xlu0 %v50, 93
    %v290 = vpop.permute.xlu0 %289
    %291 = vrot.lane.b32.xlu0 %v54, 93
    %v292 = vpop.permute.xlu0 %291
    %293 = vrot.lane.b32.xlu0 %v58, 93
    %v294 = vpop.permute.xlu0 %293
    %295 = vrot.lane.b32.xlu0 %v62, 93
    %v296 = vpop.permute.xlu0 %295
    %297 = vrot.lane.b32.xlu0 %v66, 93
    %v298 = vpop.permute.xlu0 %297
    %299 = vrot.lane.b32.xlu0 %v70, 93
    %v300 = vpop.permute.xlu0 %299
    %301 = vrot.lane.b32.xlu0 %v193, 93
    %v302 = vpop.permute.xlu0 %301
    %vm303 = vcmask 760832
    %v304 = vsel %vm303, %v288, %v290
    %v305 = vsel %vm303, %v290, %v292
    %v306 = vsel %vm303, %v292, %v294
    %v307 = vsel %vm303, %v294, %v296
    %v308 = vsel %vm303, %v296, %v298
    %v309 = vsel %vm303, %v298, %v300
    %v310 = vsel %vm303, %v300, %v302
    %318 = vrot.lane.b32.xlu0 %v46, 92
    %v319 = vpop.permute.xlu0 %318
    %320 = vrot.lane.b32.xlu0 %v50, 92
    %v321 = vpop.permute.xlu0 %320
    %322 = vrot.lane.b32.xlu0 %v54, 92
    %v323 = vpop.permute.xlu0 %322
    %324 = vrot.lane.b32.xlu0 %v58, 92
    %v325 = vpop.permute.xlu0 %324
    %326 = vrot.lane.b32.xlu0 %v62, 92
    %v327 = vpop.permute.xlu0 %326
    %328 = vrot.lane.b32.xlu0 %v66, 92
    %v329 = vpop.permute.xlu0 %328
    %330 = vrot.lane.b32.xlu0 %v70, 92
    %v331 = vpop.permute.xlu0 %330
    %332 = vrot.lane.b32.xlu0 %v193, 92
    %v333 = vpop.permute.xlu0 %332
    %vm334 = vcmask 752640
    %v335 = vsel %vm334, %v319, %v321
    %v336 = vsel %vm334, %v321, %v323
    %v337 = vsel %vm334, %v323, %v325
    %v338 = vsel %vm334, %v325, %v327
    %v339 = vsel %vm334, %v327, %v329
    %v340 = vsel %vm334, %v329, %v331
    %v341 = vsel %vm334, %v331, %v333
    %349 = vrot.lane.b32.xlu0 %v46, 64
    %v350 = vpop.permute.xlu0 %349
    %351 = vrot.lane.b32.xlu0 %v50, 64
    %v352 = vpop.permute.xlu0 %351
    %353 = vrot.lane.b32.xlu0 %v54, 64
    %v354 = vpop.permute.xlu0 %353
    %355 = vrot.lane.b32.xlu0 %v58, 64
    %v356 = vpop.permute.xlu0 %355
    %357 = vrot.lane.b32.xlu0 %v62, 64
    %v358 = vpop.permute.xlu0 %357
    %359 = vrot.lane.b32.xlu0 %v66, 64
    %v360 = vpop.permute.xlu0 %359
    %361 = vrot.lane.b32.xlu0 %v70, 64
    %v362 = vpop.permute.xlu0 %361
    %363 = vrot.lane.b32.xlu0 %v193, 64
    %v364 = vpop.permute.xlu0 %363
    %vm365 = vcmask 523264
    %v366 = vsel %vm365, %v350, %v352
    %v367 = vsel %vm365, %v352, %v354
    %v368 = vsel %vm365, %v354, %v356
    %v369 = vsel %vm365, %v356, %v358
    %v370 = vsel %vm365, %v358, %v360
    %v371 = vsel %vm365, %v360, %v362
    %v372 = vsel %vm365, %v362, %v364
    %380 = vrot.lane.b32.xlu0 %v46, 63
    %v381 = vpop.permute.xlu0 %380
    %382 = vrot.lane.b32.xlu0 %v50, 63
    %v383 = vpop.permute.xlu0 %382
    %384 = vrot.lane.b32.xlu0 %v54, 63
    %v385 = vpop.permute.xlu0 %384
    %386 = vrot.lane.b32.xlu0 %v58, 63
    %v387 = vpop.permute.xlu0 %386
    %388 = vrot.lane.b32.xlu0 %v62, 63
    %v389 = vpop.permute.xlu0 %388
    %390 = vrot.lane.b32.xlu0 %v66, 63
    %v391 = vpop.permute.xlu0 %390
    %392 = vrot.lane.b32.xlu0 %v70, 63
    %v393 = vpop.permute.xlu0 %392
    %394 = vrot.lane.b32.xlu0 %v193, 63
    %v395 = vpop.permute.xlu0 %394
    %vm396 = vcmask 515072
    %v397 = vsel %vm396, %v381, %v383
    %v398 = vsel %vm396, %v383, %v385
    %v399 = vsel %vm396, %v385, %v387
    %v400 = vsel %vm396, %v387, %v389
    %v401 = vsel %vm396, %v389, %v391
    %v402 = vsel %vm396, %v391, %v393
    %v403 = vsel %vm396, %v393, %v395
    %411 = vrot.lane.b32.xlu0 %v46, 62
    %v412 = vpop.permute.xlu0 %411
    %413 = vrot.lane.b32.xlu0 %v50, 62
    %v414 = vpop.permute.xlu0 %413
    %415 = vrot.lane.b32.xlu0 %v54, 62
    %v416 = vpop.permute.xlu0 %415
    %417 = vrot.lane.b32.xlu0 %v58, 62
    %v418 = vpop.permute.xlu0 %417
    %419 = vrot.lane.b32.xlu0 %v62, 62
    %v420 = vpop.permute.xlu0 %419
    %421 = vrot.lane.b32.xlu0 %v66, 62
    %v422 = vpop.permute.xlu0 %421
    %423 = vrot.lane.b32.xlu0 %v70, 62
    %v424 = vpop.permute.xlu0 %423
    %425 = vrot.lane.b32.xlu0 %v193, 62
    %v426 = vpop.permute.xlu0 %425
    %vm427 = vcmask 506880
    %v428 = vsel %vm427, %v412, %v414
    %v429 = vsel %vm427, %v414, %v416
    %v430 = vsel %vm427, %v416, %v418
    %v431 = vsel %vm427, %v418, %v420
    %v432 = vsel %vm427, %v420, %v422
    %v433 = vsel %vm427, %v422, %v424
    %v434 = vsel %vm427, %v424, %v426
    %442 = vrot.lane.b32.xlu0 %v46, 61
    %v443 = vpop.permute.xlu0 %442
    %444 = vrot.lane.b32.xlu0 %v50, 61
    %v445 = vpop.permute.xlu0 %444
    %446 = vrot.lane.b32.xlu0 %v54, 61
    %v447 = vpop.permute.xlu0 %446
    %448 = vrot.lane.b32.xlu0 %v58, 61
    %v449 = vpop.permute.xlu0 %448
    %450 = vrot.lane.b32.xlu0 %v62, 61
    %v451 = vpop.permute.xlu0 %450
    %452 = vrot.lane.b32.xlu0 %v66, 61
    %v453 = vpop.permute.xlu0 %452
    %454 = vrot.lane.b32.xlu0 %v70, 61
    %v455 = vpop.permute.xlu0 %454
    %456 = vrot.lane.b32.xlu0 %v193, 61
    %v457 = vpop.permute.xlu0 %456
    %vm458 = vcmask 498688
    %v459 = vsel %vm458, %v443, %v445
    %v460 = vsel %vm458, %v445, %v447
    %v461 = vsel %vm458, %v447, %v449
    %v462 = vsel %vm458, %v449, %v451
    %v463 = vsel %vm458, %v451, %v453
    %v464 = vsel %vm458, %v453, %v455
    %v465 = vsel %vm458, %v455, %v457
    %473 = vrot.lane.b32.xlu0 %v46, 60
    %v474 = vpop.permute.xlu0 %473
    %475 = vrot.lane.b32.xlu0 %v50, 60
    %v476 = vpop.permute.xlu0 %475
    %477 = vrot.lane.b32.xlu0 %v54, 60
    %v478 = vpop.permute.xlu0 %477
    %479 = vrot.lane.b32.xlu0 %v58, 60
    %v480 = vpop.permute.xlu0 %479
    %481 = vrot.lane.b32.xlu0 %v62, 60
    %v482 = vpop.permute.xlu0 %481
    %483 = vrot.lane.b32.xlu0 %v66, 60
    %v484 = vpop.permute.xlu0 %483
    %485 = vrot.lane.b32.xlu0 %v70, 60
    %v486 = vpop.permute.xlu0 %485
    %487 = vrot.lane.b32.xlu0 %v193, 60
    %v488 = vpop.permute.xlu0 %487
    %vm489 = vcmask 490496
    %v490 = vsel %vm489, %v474, %v476
    %v491 = vsel %vm489, %v476, %v478
    %v492 = vsel %vm489, %v478, %v480
    %v493 = vsel %vm489, %v480, %v482
    %v494 = vsel %vm489, %v482, %v484
    %v495 = vsel %vm489, %v484, %v486
    %v496 = vsel %vm489, %v486, %v488
    %504 = vrot.lane.b32.xlu0 %v46, 32
    %v505 = vpop.permute.xlu0 %504
    %506 = vrot.lane.b32.xlu0 %v50, 32
    %v507 = vpop.permute.xlu0 %506
    %508 = vrot.lane.b32.xlu0 %v54, 32
    %v509 = vpop.permute.xlu0 %508
    %510 = vrot.lane.b32.xlu0 %v58, 32
    %v511 = vpop.permute.xlu0 %510
    %512 = vrot.lane.b32.xlu0 %v62, 32
    %v513 = vpop.permute.xlu0 %512
    %514 = vrot.lane.b32.xlu0 %v66, 32
    %v515 = vpop.permute.xlu0 %514
    %516 = vrot.lane.b32.xlu0 %v70, 32
    %v517 = vpop.permute.xlu0 %516
    %518 = vrot.lane.b32.xlu0 %v193, 32
    %v519 = vpop.permute.xlu0 %518
    %vm520 = vcmask 261120
    %v521 = vsel %vm520, %v505, %v507
    %v522 = vsel %vm520, %v507, %v509
    %v523 = vsel %vm520, %v509, %v511
    %v524 = vsel %vm520, %v511, %v513
    %v525 = vsel %vm520, %v513, %v515
    %v526 = vsel %vm520, %v515, %v517
    %v527 = vsel %vm520, %v517, %v519
    %vm535 = vcmask 1040384
    %v536 = vsel %vm535, %v46, %v93
    %v537 = vsel %vm535, %v50, %v94
    %v538 = vsel %vm535, %v54, %v95
    %v539 = vsel %vm535, %v58, %v96
    %v540 = vsel %vm535, %v62, %v97
    %v541 = vsel %vm535, %v66, %v98
    %v542 = vsel %vm535, %v70, %v91
    %vm543 = vcmask 1041408
    %v544 = vsel %vm543, %v536, %v121
    %v545 = vsel %vm543, %v537, %v122
    %v546 = vsel %vm543, %v538, %v123
    %v547 = vsel %vm543, %v539, %v124
    %v548 = vsel %vm543, %v540, %v125
    %v549 = vsel %vm543, %v541, %v126
    %v550 = vsel %vm543, %v542, %v119
    %vm551 = vcmask 1042432
    %v552 = vsel %vm551, %v544, %v149
    %v553 = vsel %vm551, %v545, %v150
    %v554 = vsel %vm551, %v546, %v151
    %v555 = vsel %vm551, %v547, %v152
    %v556 = vsel %vm551, %v548, %v153
    %v557 = vsel %vm551, %v549, %v154
    %v558 = vsel %vm551, %v550, %v147
    %vm559 = vcmask 1043456
    %v560 = vsel %vm559, %v552, %v177
    %v561 = vsel %vm559, %v553, %v178
    %v562 = vsel %vm559, %v554, %v179
    %v563 = vsel %vm559, %v555, %v180
    %v564 = vsel %vm559, %v556, %v181
    %v565 = vsel %vm559, %v557, %v182
    %v566 = vsel %vm559, %v558, %v175
    %vm567 = vcmask 1044480
    %v568 = vsel %vm567, %v560, %v211
    %v569 = vsel %vm567, %v561, %v212
    %v570 = vsel %vm567, %v562, %v213
    %v571 = vsel %vm567, %v563, %v214
    %v572 = vsel %vm567, %v564, %v215
    %v573 = vsel %vm567, %v565, %v216
    %v574 = vsel %vm567, %v566, %v217
    %vm575 = vcmask 1045504
    %v576 = vsel %vm575, %v568, %v242
    %v577 = vsel %vm575, %v569, %v243
    %v578 = vsel %vm575, %v570, %v244
    %v579 = vsel %vm575, %v571, %v245
    %v580 = vsel %vm575, %v572, %v246
    %v581 = vsel %vm575, %v573, %v247
    %v582 = vsel %vm575, %v574, %v248
    %vm583 = vcmask 1046528
    %v584 = vsel %vm583, %v576, %v273
    %v585 = vsel %vm583, %v577, %v274
    %v586 = vsel %vm583, %v578, %v275
    %v587 = vsel %vm583, %v579, %v276
    %v588 = vsel %vm583, %v580, %v277
    %v589 = vsel %vm583, %v581, %v278
    %v590 = vsel %vm583, %v582, %v279
    %v591 = vsel %vm535, %v304, %v335
    %v592 = vsel %vm535, %v305, %v336
    %v593 = vsel %vm535, %v306, %v337
    %v594 = vsel %vm535, %v307, %v338
    %v595 = vsel %vm535, %v308, %v339
    %v596 = vsel %vm535, %v309, %v340
    %v597 = vsel %vm535, %v310, %v341
    %v598 = vsel %vm543, %v591, %v366
    %v599 = vsel %vm543, %v592, %v367
    %v600 = vsel %vm543, %v593, %v368
    %v601 = vsel %vm543, %v594, %v369
    %v602 = vsel %vm543, %v595, %v370
    %v603 = vsel %vm543, %v596, %v371
    %v604 = vsel %vm543, %v597, %v372
    %v605 = vsel %vm551, %v598, %v397
    %v606 = vsel %vm551, %v599, %v398
    %v607 = vsel %vm551, %v600, %v399
    %v608 = vsel %vm551, %v601, %v400
    %v609 = vsel %vm551, %v602, %v401
    %v610 = vsel %vm551, %v603, %v402
    %v611 = vsel %vm551, %v604, %v403
    %v612 = vsel %vm559, %v605, %v428
    %v613 = vsel %vm559, %v606, %v429
    %v614 = vsel %vm559, %v607, %v430
    %v615 = vsel %vm559, %v608, %v431
    %v616 = vsel %vm559, %v609, %v432
    %v617 = vsel %vm559, %v610, %v433
    %v618 = vsel %vm559, %v611, %v434
    %v619 = vsel %vm567, %v612, %v459
    %v620 = vsel %vm567, %v613, %v460
    %v621 = vsel %vm567, %v614, %v461
    %v622 = vsel %vm567, %v615, %v462
    %v623 = vsel %vm567, %v616, %v463
    %v624 = vsel %vm567, %v617, %v464
    %v625 = vsel %vm567, %v618, %v465
    %v626 = vsel %vm575, %v619, %v490
    %v627 = vsel %vm575, %v620, %v491
    %v628 = vsel %vm575, %v621, %v492
    %v629 = vsel %vm575, %v622, %v493
    %v630 = vsel %vm575, %v623, %v494
    %v631 = vsel %vm575, %v624, %v495
    %v632 = vsel %vm575, %v625, %v496
    %v633 = vsel %vm583, %v626, %v521
    %v634 = vsel %vm583, %v627, %v522
    %v635 = vsel %vm583, %v628, %v523
    %v636 = vsel %vm583, %v629, %v524
    %v637 = vsel %vm583, %v630, %v525
    %v638 = vsel %vm583, %v631, %v526
    %v639 = vsel %vm583, %v632, %v527
    %641 = vrot.lane.b32.xlu0 %v193, 127
    %v642 = vpop.permute.xlu0 %641
    %v643 = vsel %vm92, %v91, %v642
    %646 = vrot.lane.b32.xlu0 %v193, 126
    %v647 = vpop.permute.xlu0 %646
    %v648 = vsel %vm120, %v119, %v647
    %651 = vrot.lane.b32.xlu0 %v193, 125
    %v652 = vpop.permute.xlu0 %651
    %v653 = vsel %vm148, %v147, %v652
    %656 = vrot.lane.b32.xlu0 %v50, 97
    %v657 = vpop.permute.xlu0 %656
    %658 = vrot.lane.b32.xlu0 %v54, 97
    %v659 = vpop.permute.xlu0 %658
    %660 = vrot.lane.b32.xlu0 %v58, 97
    %v661 = vpop.permute.xlu0 %660
    %662 = vrot.lane.b32.xlu0 %v62, 97
    %v663 = vpop.permute.xlu0 %662
    %664 = vrot.lane.b32.xlu0 %v66, 97
    %v665 = vpop.permute.xlu0 %664
    %666 = vrot.lane.b32.xlu0 %v70, 97
    %v667 = vpop.permute.xlu0 %666
    %668 = vrot.lane.b32.xlu0 %v193, 97
    %v669 = vpop.permute.xlu0 %668
    %vm670 = vcmask 793600
    %v671 = vsel %vm670, %v657, %v659
    %v672 = vsel %vm670, %v659, %v661
    %v673 = vsel %vm670, %v661, %v663
    %v674 = vsel %vm670, %v663, %v665
    %v675 = vsel %vm670, %v665, %v667
    %v676 = vsel %vm670, %v667, %v669
    %v691 = vsel %vm535, %v70, %v643
    %v692 = vsel %vm535, %v193, %v642
    %v693 = vsel %vm543, %v691, %v648
    %v694 = vsel %vm543, %v692, %v647
    %v695 = vsel %vm551, %v693, %v653
    %v696 = vsel %vm551, %v694, %v652
    %v697 = vsel %vm559, %v552, %v657
    %v698 = vsel %vm559, %v553, %v671
    %v699 = vsel %vm559, %v554, %v672
    %v700 = vsel %vm559, %v555, %v673
    %v701 = vsel %vm559, %v556, %v674
    %v702 = vsel %vm559, %v557, %v675
    %v703 = vsel %vm559, %v695, %v676
    %v704 = vsel %vm559, %v696, %v669
    %v705 = vsel %vm567, %v697, %v197
    %v706 = vsel %vm567, %v698, %v212
    %v707 = vsel %vm567, %v699, %v213
    %v708 = vsel %vm567, %v700, %v214
    %v709 = vsel %vm567, %v701, %v215
    %v710 = vsel %vm567, %v702, %v216
    %v711 = vsel %vm567, %v703, %v217
    %v712 = vsel %vm567, %v704, %v209
    %v713 = vsel %vm575, %v705, %v228
    %v714 = vsel %vm575, %v706, %v243
    %v715 = vsel %vm575, %v707, %v244
    %v716 = vsel %vm575, %v708, %v245
    %v717 = vsel %vm575, %v709, %v246
    %v718 = vsel %vm575, %v710, %v247
    %v719 = vsel %vm575, %v711, %v248
    %v720 = vsel %vm575, %v712, %v240
    %v721 = vsel %vm583, %v713, %v259
    %v722 = vsel %vm583, %v714, %v274
    %v723 = vsel %vm583, %v715, %v275
    %v724 = vsel %vm583, %v716, %v276
    %v725 = vsel %vm583, %v717, %v277
    %v726 = vsel %vm583, %v718, %v278
    %v727 = vsel %vm583, %v719, %v279
    %v728 = vsel %vm583, %v720, %v271
    %737 = vrot.lane.b32.xlu0 %v721, 31
    %v738 = vpop.permute.xlu0 %737
    %739 = vrot.lane.b32.xlu0 %v722, 31
    %v740 = vpop.permute.xlu0 %739
    %741 = vrot.lane.b32.xlu0 %v723, 31
    %v742 = vpop.permute.xlu0 %741
    %743 = vrot.lane.b32.xlu0 %v724, 31
    %v744 = vpop.permute.xlu0 %743
    %745 = vrot.lane.b32.xlu0 %v725, 31
    %v746 = vpop.permute.xlu0 %745
    %747 = vrot.lane.b32.xlu0 %v726, 31
    %v748 = vpop.permute.xlu0 %747
    %749 = vrot.lane.b32.xlu0 %v727, 31
    %v750 = vpop.permute.xlu0 %749
    %751 = vrot.lane.b32.xlu0 %v728, 31
    %v752 = vpop.permute.xlu0 %751
    %753 = vrot.lane.b32.xlu0 %v290, 31
    %v754 = vpop.permute.xlu0 %753
    %755 = vrot.lane.b32.xlu0 %v305, 31
    %v756 = vpop.permute.xlu0 %755
    %757 = vrot.lane.b32.xlu0 %v306, 31
    %v758 = vpop.permute.xlu0 %757
    %759 = vrot.lane.b32.xlu0 %v307, 31
    %v760 = vpop.permute.xlu0 %759
    %761 = vrot.lane.b32.xlu0 %v308, 31
    %v762 = vpop.permute.xlu0 %761
    %763 = vrot.lane.b32.xlu0 %v309, 31
    %v764 = vpop.permute.xlu0 %763
    %765 = vrot.lane.b32.xlu0 %v310, 31
    %v766 = vpop.permute.xlu0 %765
    %767 = vrot.lane.b32.xlu0 %v302, 31
    %v768 = vpop.permute.xlu0 %767
    %vm769 = vcmask 252928
    %v770 = vsel %vm769, %v738, %v740
    %v771 = vsel %vm769, %v740, %v742
    %v772 = vsel %vm769, %v742, %v744
    %v773 = vsel %vm769, %v744, %v746
    %v774 = vsel %vm769, %v746, %v748
    %v775 = vsel %vm769, %v748, %v750
    %v776 = vsel %vm769, %v750, %v752
    %v777 = vsel %vm769, %v754, %v756
    %v778 = vsel %vm769, %v756, %v758
    %v779 = vsel %vm769, %v758, %v760
    %v780 = vsel %vm769, %v760, %v762
    %v781 = vsel %vm769, %v762, %v764
    %v782 = vsel %vm769, %v764, %v766
    %v783 = vsel %vm769, %v766, %v768
    %v791 = vld [vmem:[%s1] sm:$0xff]
    %v792 = vld [vmem:[%s1 + $0x8] sm:$0xff]
    %v793 = vld [vmem:[%s2] sm:$0xff]
    %v794 = vld [vmem:[%s2 + $0x8] sm:$0xff]
    %796 = vset.pattern.permute.xlu0 0
    %797 = vperm.xlu0 %796, %v793
    %v798 = vpop.permute.xlu0 %797
    %801 = vset.pattern.permute.xlu0 0
    %802 = vperm.xlu0 %801, %v794
    %v803 = vpop.permute.xlu0 %802
    %vm805 = vcmask 203776
    %v807 = vsel %vm805, %v791, 0
    %v810 = vsel %vm805, %v792, 0
    %v812 = vsel %vm535, %v777, 0
    %v814 = vsel %vm535, %v778, 0
    %v816 = vsel %vm535, %v779, 0
    %v818 = vsel %vm535, %v780, 0
    %v820 = vsel %vm535, %v781, 0
    %v822 = vsel %vm535, %v782, 0
    %v824 = vsel %vm535, %v783, 0
    %826 = vmatprep.subr.mxu0 %v585
    %827 = vmatpush1.msra.mxu0 %v584
    %828 = vmatprep.subr.mxu0 %v634
    %829 = vmatpush1.msra.mxu0 %v633
    %830 = vmatprep.subr.mxu0 %v771
    %831 = vmatpush1.msra.mxu0 %v770
    %832 = vmatprep.subr.mxu0 %v814
    %833 = vmatpush1.msra.mxu0 %v812
    %834 = vmatprep.subr.mxu0 0.0
    %835 = vmatpush1.msra.mxu0 0.0
    %836 = vmatprep.subr.mxu0 0.0
    %837 = vmatpush1.msra.mxu0 0.0
    %838 = vmatprep.subr.mxu0 0.0
    %839 = vmatpush1.msra.mxu0 0.0
    %840 = vmatprep.subr.mxu0 0.0
    %841 = vmatpush1.msra.mxu0 0.0
    %842 = vmatprep.subr.mxu0 0.0
    %843 = vmatpush1.msra.mxu0 0.0
    %844 = vmatprep.subr.mxu0 0.0
    %845 = vmatpush1.msra.mxu0 0.0
    %846 = vmatprep.subr.mxu0 0.0
    %847 = vmatpush1.msra.mxu0 0.0
    %848 = vmatprep.subr.mxu0 0.0
    %849 = vmatpush1.msra.mxu0 0.0
    %850 = vmatprep.subr.mxu0 0.0
    %851 = vmatpush1.msra.mxu0 0.0
    %852 = vmatprep.subr.mxu0 0.0
    %853 = vmatpush1.msra.mxu0 0.0
    %854 = vmatprep.subr.mxu0 0.0
    %855 = vmatpush1.msra.mxu0 0.0
    %856 = vmatprep.subr.mxu0 0.0
    %857 = vmatpush1.msra.mxu0 0.0
    %858 = vmatprep.subr.mxu0 0.0
    %859 = vmatpush1.msra.mxu0 0.0
    %860 = vmatprep.subr.mxu0 0.0
    %861 = vmatpush1.msra.mxu0 0.0
    %862 = vmatprep.subr.mxu0 0.0
    %863 = vmatpush1.msra.mxu0 0.0
    %864 = vmatprep.subr.mxu0 0.0
    %865 = vmatpush1.msra.mxu0 0.0
    %866 = vmatprep.subr.mxu0 0.0
    %867 = vmatpush1.msra.mxu0 0.0
    %868 = vmatprep.subr.mxu0 0.0
    %869 = vmatpush1.msra.mxu0 0.0
    %870 = vmatprep.subr.mxu0 0.0
    %871 = vmatpush1.msra.mxu0 0.0
    %872 = vmatprep.subr.mxu0 0.0
    %873 = vmatpush1.msra.mxu0 0.0
    %874 = vmatprep.subr.mxu0 0.0
    %875 = vmatpush1.msra.mxu0 0.0
    %876 = vmatprep.subr.mxu0 0.0
    %877 = vmatpush1.msra.mxu0 0.0
    %878 = vmatprep.subr.mxu0 0.0
    %879 = vmatpush1.msra.mxu0 0.0
    %880 = vmatprep.subr.mxu0 0.0
    %881 = vmatpush1.msra.mxu0 0.0
    %882 = vmatprep.subr.mxu0 0.0
    %883 = vmatpush1.msra.mxu0 0.0
    %884 = vmatprep.subr.mxu0 0.0
    %885 = vmatpush1.msra.mxu0 0.0
    %886 = vmatprep.subr.mxu0 0.0
    %887 = vmatpush1.msra.mxu0 0.0
    %888 = vmatprep.subr.mxu0 0.0
    %889 = vmatpush1.msra.mxu0 0.0
    %890 = vmatprep.mubr.f32.mxu0 0.0
    %891 = vmatmul.mubr.f32.gmra.mrb[0].mxu0 %v807
    %v892 = vpop.f32.mrb[0].mxu0
    %v893 = vadd.f32 %v798, %v892
    %v894 = vpop.f32.mrb[0].mxu0
    %v895 = vadd.f32 %v798, %v894
    %896 = vmatprep.mubr.f32.mxu0 0.0
    %897 = vmatmul.mubr.f32.gmra.mrb[0].mxu0 %v810
    %v898 = vpop.f32.mrb[0].mxu0
    %v899 = vadd.f32 %v803, %v898
    %v900 = vpop.f32.mrb[0].mxu0
    %v901 = vadd.f32 %v803, %v900
    %902 = vdwg.mxu0
    %903 = vmatprep.subr.mxu0 %v587
    %904 = vmatpush1.msra.mxu0 %v586
    %905 = vmatprep.subr.mxu0 %v636
    %906 = vmatpush1.msra.mxu0 %v635
    %907 = vmatprep.subr.mxu0 %v773
    %908 = vmatpush1.msra.mxu0 %v772
    %909 = vmatprep.subr.mxu0 %v818
    %910 = vmatpush1.msra.mxu0 %v816
    %911 = vmatprep.subr.mxu0 0.0
    %912 = vmatpush1.msra.mxu0 0.0
    %913 = vmatprep.subr.mxu0 0.0
    %914 = vmatpush1.msra.mxu0 0.0
    %915 = vmatprep.subr.mxu0 0.0
    %916 = vmatpush1.msra.mxu0 0.0
    %917 = vmatprep.subr.mxu0 0.0
    %918 = vmatpush1.msra.mxu0 0.0
    %919 = vmatprep.subr.mxu0 0.0
    %920 = vmatpush1.msra.mxu0 0.0
    %921 = vmatprep.subr.mxu0 0.0
    %922 = vmatpush1.msra.mxu0 0.0
    %923 = vmatprep.subr.mxu0 0.0
    %924 = vmatpush1.msra.mxu0 0.0
    %925 = vmatprep.subr.mxu0 0.0
    %926 = vmatpush1.msra.mxu0 0.0
    %927 = vmatprep.subr.mxu0 0.0
    %928 = vmatpush1.msra.mxu0 0.0
    %929 = vmatprep.subr.mxu0 0.0
    %930 = vmatpush1.msra.mxu0 0.0
    %931 = vmatprep.subr.mxu0 0.0
    %932 = vmatpush1.msra.mxu0 0.0
    %933 = vmatprep.subr.mxu0 0.0
    %934 = vmatpush1.msra.mxu0 0.0
    %935 = vmatprep.subr.mxu0 0.0
    %936 = vmatpush1.msra.mxu0 0.0
    %937 = vmatprep.subr.mxu0 0.0
    %938 = vmatpush1.msra.mxu0 0.0
    %939 = vmatprep.subr.mxu0 0.0
    %940 = vmatpush1.msra.mxu0 0.0
    %941 = vmatprep.subr.mxu0 0.0
    %942 = vmatpush1.msra.mxu0 0.0
    %943 = vmatprep.subr.mxu0 0.0
    %944 = vmatpush1.msra.mxu0 0.0
    %945 = vmatprep.subr.mxu0 0.0
    %946 = vmatpush1.msra.mxu0 0.0
    %947 = vmatprep.subr.mxu0 0.0
    %948 = vmatpush1.msra.mxu0 0.0
    %949 = vmatprep.subr.mxu0 0.0
    %950 = vmatpush1.msra.mxu0 0.0
    %951 = vmatprep.subr.mxu0 0.0
    %952 = vmatpush1.msra.mxu0 0.0
    %953 = vmatprep.subr.mxu0 0.0
    %954 = vmatpush1.msra.mxu0 0.0
    %955 = vmatprep.subr.mxu0 0.0
    %956 = vmatpush1.msra.mxu0 0.0
    %957 = vmatprep.subr.mxu0 0.0
    %958 = vmatpush1.msra.mxu0 0.0
    %959 = vmatprep.subr.mxu0 0.0
    %960 = vmatpush1.msra.mxu0 0.0
    %961 = vmatprep.subr.mxu0 0.0
    %962 = vmatpush1.msra.mxu0 0.0
    %963 = vmatprep.subr.mxu0 0.0
    %964 = vmatpush1.msra.mxu0 0.0
    %965 = vmatprep.subr.mxu0 0.0
    %966 = vmatpush1.msra.mxu0 0.0
    %967 = vmatprep.mubr.f32.mxu0 0.0
    %968 = vmatmul.mubr.f32.gmra.mrb[0].mxu0 %v807
    %v969 = vpop.f32.mrb[0].mxu0
    %v970 = vadd.f32 %v798, %v969
    %v971 = vpop.f32.mrb[0].mxu0
    %v972 = vadd.f32 %v798, %v971
    %973 = vmatprep.mubr.f32.mxu0 0.0
    %974 = vmatmul.mubr.f32.gmra.mrb[0].mxu0 %v810
    %v975 = vpop.f32.mrb[0].mxu0
    %v976 = vadd.f32 %v803, %v975
    %v977 = vpop.f32.mrb[0].mxu0
    %v978 = vadd.f32 %v803, %v977
    %979 = vdwg.mxu0
    %980 = vmatprep.subr.mxu0 %v589
    %981 = vmatpush1.msra.mxu0 %v588
    %982 = vmatprep.subr.mxu0 %v638
    %983 = vmatpush1.msra.mxu0 %v637
    %984 = vmatprep.subr.mxu0 %v775
    %985 = vmatpush1.msra.mxu0 %v774
    %986 = vmatprep.subr.mxu0 %v822
    %987 = vmatpush1.msra.mxu0 %v820
    %988 = vmatprep.subr.mxu0 0.0
    %989 = vmatpush1.msra.mxu0 0.0
    %990 = vmatprep.subr.mxu0 0.0
    %991 = vmatpush1.msra.mxu0 0.0
    %992 = vmatprep.subr.mxu0 0.0
    %993 = vmatpush1.msra.mxu0 0.0
    %994 = vmatprep.subr.mxu0 0.0
    %995 = vmatpush1.msra.mxu0 0.0
    %996 = vmatprep.subr.mxu0 0.0
    %997 = vmatpush1.msra.mxu0 0.0
    %998 = vmatprep.subr.mxu0 0.0
    %999 = vmatpush1.msra.mxu0 0.0
    %1000 = vmatprep.subr.mxu0 0.0
    %1001 = vmatpush1.msra.mxu0 0.0
    %1002 = vmatprep.subr.mxu0 0.0
    %1003 = vmatpush1.msra.mxu0 0.0
    %1004 = vmatprep.subr.mxu0 0.0
    %1005 = vmatpush1.msra.mxu0 0.0
    %1006 = vmatprep.subr.mxu0 0.0
    %1007 = vmatpush1.msra.mxu0 0.0
    %1008 = vmatprep.subr.mxu0 0.0
    %1009 = vmatpush1.msra.mxu0 0.0
    %1010 = vmatprep.subr.mxu0 0.0
    %1011 = vmatpush1.msra.mxu0 0.0
    %1012 = vmatprep.subr.mxu0 0.0
    %1013 = vmatpush1.msra.mxu0 0.0
    %1014 = vmatprep.subr.mxu0 0.0
    %1015 = vmatpush1.msra.mxu0 0.0
    %1016 = vmatprep.subr.mxu0 0.0
    %1017 = vmatpush1.msra.mxu0 0.0
    %1018 = vmatprep.subr.mxu0 0.0
    %1019 = vmatpush1.msra.mxu0 0.0
    %1020 = vmatprep.subr.mxu0 0.0
    %1021 = vmatpush1.msra.mxu0 0.0
    %1022 = vmatprep.subr.mxu0 0.0
    %1023 = vmatpush1.msra.mxu0 0.0
    %1024 = vmatprep.subr.mxu0 0.0
    %1025 = vmatpush1.msra.mxu0 0.0
    %1026 = vmatprep.subr.mxu0 0.0
    %1027 = vmatpush1.msra.mxu0 0.0
    %1028 = vmatprep.subr.mxu0 0.0
    %1029 = vmatpush1.msra.mxu0 0.0
    %1030 = vmatprep.subr.mxu0 0.0
    %1031 = vmatpush1.msra.mxu0 0.0
    %1032 = vmatprep.subr.mxu0 0.0
    %1033 = vmatpush1.msra.mxu0 0.0
    %1034 = vmatprep.subr.mxu0 0.0
    %1035 = vmatpush1.msra.mxu0 0.0
    %1036 = vmatprep.subr.mxu0 0.0
    %1037 = vmatpush1.msra.mxu0 0.0
    %1038 = vmatprep.subr.mxu0 0.0
    %1039 = vmatpush1.msra.mxu0 0.0
    %1040 = vmatprep.subr.mxu0 0.0
    %1041 = vmatpush1.msra.mxu0 0.0
    %1042 = vmatprep.subr.mxu0 0.0
    %1043 = vmatpush1.msra.mxu0 0.0
    %1044 = vmatprep.mubr.f32.mxu0 0.0
    %1045 = vmatmul.mubr.f32.gmra.mrb[0].mxu0 %v807
    %v1046 = vpop.f32.mrb[0].mxu0
    %v1047 = vadd.f32 %v798, %v1046
    %v1048 = vpop.f32.mrb[0].mxu0
    %v1049 = vadd.f32 %v798, %v1048
    %1050 = vmatprep.mubr.f32.mxu0 0.0
    %1051 = vmatmul.mubr.f32.gmra.mrb[0].mxu0 %v810
    %v1052 = vpop.f32.mrb[0].mxu0
    %v1053 = vadd.f32 %v803, %v1052
    %v1054 = vpop.f32.mrb[0].mxu0
    %v1055 = vadd.f32 %v803, %v1054
    %1056 = vdwg.mxu0
    %1057 = vmatprep.subr.mxu0 0.0
    %1058 = vmatpush1.msra.mxu0 %v590
    %1059 = vmatprep.subr.mxu0 0.0
    %1060 = vmatpush1.msra.mxu0 %v639
    %1061 = vmatprep.subr.mxu0 0.0
    %1062 = vmatpush1.msra.mxu0 %v776
    %1063 = vmatprep.subr.mxu0 0.0
    %1064 = vmatpush1.msra.mxu0 %v824
    %1065 = vmatprep.subr.mxu0 0.0
    %1066 = vmatpush1.msra.mxu0 0.0
    %1067 = vmatprep.subr.mxu0 0.0
    %1068 = vmatpush1.msra.mxu0 0.0
    %1069 = vmatprep.subr.mxu0 0.0
    %1070 = vmatpush1.msra.mxu0 0.0
    %1071 = vmatprep.subr.mxu0 0.0
    %1072 = vmatpush1.msra.mxu0 0.0
    %1073 = vmatprep.subr.mxu0 0.0
    %1074 = vmatpush1.msra.mxu0 0.0
    %1075 = vmatprep.subr.mxu0 0.0
    %1076 = vmatpush1.msra.mxu0 0.0
    %1077 = vmatprep.subr.mxu0 0.0
    %1078 = vmatpush1.msra.mxu0 0.0
    %1079 = vmatprep.subr.mxu0 0.0
    %1080 = vmatpush1.msra.mxu0 0.0
    %1081 = vmatprep.subr.mxu0 0.0
    %1082 = vmatpush1.msra.mxu0 0.0
    %1083 = vmatprep.subr.mxu0 0.0
    %1084 = vmatpush1.msra.mxu0 0.0
    %1085 = vmatprep.subr.mxu0 0.0
    %1086 = vmatpush1.msra.mxu0 0.0
    %1087 = vmatprep.subr.mxu0 0.0
    %1088 = vmatpush1.msra.mxu0 0.0
    %1089 = vmatprep.subr.mxu0 0.0
    %1090 = vmatpush1.msra.mxu0 0.0
    %1091 = vmatprep.subr.mxu0 0.0
    %1092 = vmatpush1.msra.mxu0 0.0
    %1093 = vmatprep.subr.mxu0 0.0
    %1094 = vmatpush1.msra.mxu0 0.0
    %1095 = vmatprep.subr.mxu0 0.0
    %1096 = vmatpush1.msra.mxu0 0.0
    %1097 = vmatprep.subr.mxu0 0.0
    %1098 = vmatpush1.msra.mxu0 0.0
    %1099 = vmatprep.subr.mxu0 0.0
    %1100 = vmatpush1.msra.mxu0 0.0
    %1101 = vmatprep.subr.mxu0 0.0
    %1102 = vmatpush1.msra.mxu0 0.0
    %1103 = vmatprep.subr.mxu0 0.0
    %1104 = vmatpush1.msra.mxu0 0.0
    %1105 = vmatprep.subr.mxu0 0.0
    %1106 = vmatpush1.msra.mxu0 0.0
    %1107 = vmatprep.subr.mxu0 0.0
    %1108 = vmatpush1.msra.mxu0 0.0
    %1109 = vmatprep.subr.mxu0 0.0
    %1110 = vmatpush1.msra.mxu0 0.0
    %1111 = vmatprep.subr.mxu0 0.0
    %1112 = vmatpush1.msra.mxu0 0.0
    %1113 = vmatprep.subr.mxu0 0.0
    %1114 = vmatpush1.msra.mxu0 0.0
    %1115 = vmatprep.subr.mxu0 0.0
    %1116 = vmatpush1.msra.mxu0 0.0
    %1117 = vmatprep.subr.mxu0 0.0
    %1118 = vmatpush1.msra.mxu0 0.0
    %1119 = vmatprep.subr.mxu0 0.0
    %1120 = vmatpush1.msra.mxu0 0.0
    %1121 = vmatprep.mubr.f32.mxu0 0.0
    %1122 = vmatmul.mubr.f32.gmra.mrb[0].mxu0 %v807
    %v1123 = vpop.f32.mrb[0].mxu0
    %v1124 = vadd.f32 %v798, %v1123
    %v1125 = vpop.f32.mrb[0].mxu0
    %1126 = vmatprep.mubr.f32.mxu0 0.0
    %1127 = vmatmul.mubr.f32.gmra.mrb[0].mxu0 %v810
    %v1128 = vpop.f32.mrb[0].mxu0
    %v1129 = vadd.f32 %v803, %v1128
    %v1130 = vpop.f32.mrb[0].mxu0
    %1131 = vdwg.mxu0
    %v1132 = vmax.f32 %v893, 0.0
    %v1133 = vmax.f32 %v895, 0.0
    %v1134 = vmax.f32 %v970, 0.0
    %v1135 = vmax.f32 %v972, 0.0
    %v1136 = vmax.f32 %v1047, 0.0
    %v1137 = vmax.f32 %v1049, 0.0
    %v1138 = vmax.f32 %v1124, 0.0
    %v1139 = vmax.f32 %v899, 0.0
    %v1140 = vmax.f32 %v901, 0.0
    %v1141 = vmax.f32 %v976, 0.0
    %v1142 = vmax.f32 %v978, 0.0
    %v1143 = vmax.f32 %v1053, 0.0
    %v1144 = vmax.f32 %v1055, 0.0
    %v1145 = vmax.f32 %v1129, 0.0
    %1160 = vrot.lane.b32.xlu0 %v1132, 127
    %v1161 = vpop.permute.xlu0 %1160
    %1162 = vrot.lane.b32.xlu0 %v1133, 127
    %v1163 = vpop.permute.xlu0 %1162
    %1164 = vrot.lane.b32.xlu0 %v1134, 127
    %v1165 = vpop.permute.xlu0 %1164
    %1166 = vrot.lane.b32.xlu0 %v1135, 127
    %v1167 = vpop.permute.xlu0 %1166
    %1168 = vrot.lane.b32.xlu0 %v1136, 127
    %v1169 = vpop.permute.xlu0 %1168
    %1170 = vrot.lane.b32.xlu0 %v1137, 127
    %v1171 = vpop.permute.xlu0 %1170
    %1172 = vrot.lane.b32.xlu0 %v1138, 127
    %v1173 = vpop.permute.xlu0 %1172
    %1174 = vrot.lane.b32.xlu0 %v1139, 127
    %v1175 = vpop.permute.xlu0 %1174
    %1176 = vrot.lane.b32.xlu0 %v1140, 127
    %v1177 = vpop.permute.xlu0 %1176
    %1178 = vrot.lane.b32.xlu0 %v1141, 127
    %v1179 = vpop.permute.xlu0 %1178
    %1180 = vrot.lane.b32.xlu0 %v1142, 127
    %v1181 = vpop.permute.xlu0 %1180
    %1182 = vrot.lane.b32.xlu0 %v1143, 127
    %v1183 = vpop.permute.xlu0 %1182
    %1184 = vrot.lane.b32.xlu0 %v1144, 127
    %v1185 = vpop.permute.xlu0 %1184
    %1186 = vrot.lane.b32.xlu0 %v1145, 127
    %v1187 = vpop.permute.xlu0 %1186
    %v1188 = vsel %vm92, %v1161, %v1163
    %v1189 = vsel %vm92, %v1163, %v1165
    %v1190 = vsel %vm92, %v1165, %v1167
    %v1191 = vsel %vm92, %v1167, %v1169
    %v1192 = vsel %vm92, %v1169, %v1171
    %v1193 = vsel %vm92, %v1171, %v1173
    %v1194 = vsel %vm92, %v1175, %v1177
    %v1195 = vsel %vm92, %v1177, %v1179
    %v1196 = vsel %vm92, %v1179, %v1181
    %v1197 = vsel %vm92, %v1181, %v1183
    %v1198 = vsel %vm92, %v1183, %v1185
    %v1199 = vsel %vm92, %v1185, %v1187
    %v1214 = vmax.f32 %v1132, %v1188
    %v1215 = vmax.f32 %v1133, %v1189
    %v1216 = vmax.f32 %v1134, %v1190
    %v1217 = vmax.f32 %v1135, %v1191
    %v1218 = vmax.f32 %v1136, %v1192
    %v1219 = vmax.f32 %v1137, %v1193
    %v1220 = vmax.f32 %v1138, %v1173
    %v1221 = vmax.f32 %v1139, %v1194
    %v1222 = vmax.f32 %v1140, %v1195
    %v1223 = vmax.f32 %v1141, %v1196
    %v1224 = vmax.f32 %v1142, %v1197
    %v1225 = vmax.f32 %v1143, %v1198
    %v1226 = vmax.f32 %v1144, %v1199
    %v1227 = vmax.f32 %v1145, %v1187
    %1242 = vrot.lane.b32.xlu0 %v1214, 96
    %v1243 = vpop.permute.xlu0 %1242
    %1244 = vrot.lane.b32.xlu0 %v1215, 96
    %v1245 = vpop.permute.xlu0 %1244
    %1246 = vrot.lane.b32.xlu0 %v1216, 96
    %v1247 = vpop.permute.xlu0 %1246
    %1248 = vrot.lane.b32.xlu0 %v1217, 96
    %v1249 = vpop.permute.xlu0 %1248
    %1250 = vrot.lane.b32.xlu0 %v1218, 96
    %v1251 = vpop.permute.xlu0 %1250
    %1252 = vrot.lane.b32.xlu0 %v1219, 96
    %v1253 = vpop.permute.xlu0 %1252
    %1254 = vrot.lane.b32.xlu0 %v1220, 96
    %v1255 = vpop.permute.xlu0 %1254
    %1256 = vrot.lane.b32.xlu0 %v1221, 96
    %v1257 = vpop.permute.xlu0 %1256
    %1258 = vrot.lane.b32.xlu0 %v1222, 96
    %v1259 = vpop.permute.xlu0 %1258
    %1260 = vrot.lane.b32.xlu0 %v1223, 96
    %v1261 = vpop.permute.xlu0 %1260
    %1262 = vrot.lane.b32.xlu0 %v1224, 96
    %v1263 = vpop.permute.xlu0 %1262
    %1264 = vrot.lane.b32.xlu0 %v1225, 96
    %v1265 = vpop.permute.xlu0 %1264
    %1266 = vrot.lane.b32.xlu0 %v1226, 96
    %v1267 = vpop.permute.xlu0 %1266
    %1268 = vrot.lane.b32.xlu0 %v1227, 96
    %v1269 = vpop.permute.xlu0 %1268
    %v1270 = vsel %vm210, %v1243, %v1245
    %v1271 = vsel %vm210, %v1245, %v1247
    %v1272 = vsel %vm210, %v1247, %v1249
    %v1273 = vsel %vm210, %v1249, %v1251
    %v1274 = vsel %vm210, %v1251, %v1253
    %v1275 = vsel %vm210, %v1253, %v1255
    %v1276 = vsel %vm210, %v1257, %v1259
    %v1277 = vsel %vm210, %v1259, %v1261
    %v1278 = vsel %vm210, %v1261, %v1263
    %v1279 = vsel %vm210, %v1263, %v1265
    %v1280 = vsel %vm210, %v1265, %v1267
    %v1281 = vsel %vm210, %v1267, %v1269
    %v1296 = vmax.f32 %v1214, %v1270
    %v1297 = vmax.f32 %v1215, %v1271
    %v1298 = vmax.f32 %v1216, %v1272
    %v1299 = vmax.f32 %v1217, %v1273
    %v1300 = vmax.f32 %v1218, %v1274
    %v1301 = vmax.f32 %v1219, %v1275
    %v1302 = vmax.f32 %v1220, %v1255
    %v1303 = vmax.f32 %v1221, %v1276
    %v1304 = vmax.f32 %v1222, %v1277
    %v1305 = vmax.f32 %v1223, %v1278
    %v1306 = vmax.f32 %v1224, %v1279
    %v1307 = vmax.f32 %v1225, %v1280
    %v1308 = vmax.f32 %v1226, %v1281
    %v1309 = vmax.f32 %v1227, %v1269
    %v1310 = vld [vmem:[%s3] sm:$0xff]
    %v1311 = vld [vmem:[%s3 + $0x8] sm:$0xff]
    %v1312 = vld [vmem:[%s3 + $0x10] sm:$0xff]
    %v1313 = vld [vmem:[%s3 + $0x18] sm:$0xff]
    %v1314 = vld [vmem:[%s3 + $0x20] sm:$0xff]
    %v1315 = vld [vmem:[%s3 + $0x28] sm:$0xff]
    %v1316 = vld [vmem:[%s3 + $0x30] sm:$0xff]
    %v1317 = vld [vmem:[%s3 + $0x38] sm:$0xff]
    %v1318 = vld [vmem:[%s3 + $0x40] sm:$0xff]
    %v1319 = vld [vmem:[%s3 + $0x48] sm:$0xff]
    %v1320 = vld [vmem:[%s3 + $0x50] sm:$0xff]
    %v1321 = vld [vmem:[%s3 + $0x58] sm:$0xff]
    %v1322 = vld [vmem:[%s3 + $0x60] sm:$0xff]
    %v1323 = vld [vmem:[%s3 + $0x68] sm:$0xff]
    %v1324 = vld [vmem:[%s3 + $0x70] sm:$0xff]
    %v1325 = vld [vmem:[%s3 + $0x78] sm:$0xff]
    %v1326 = vld [vmem:[%s3 + $0x80] sm:$0xff]
    %v1327 = vld [vmem:[%s3 + $0x88] sm:$0xff]
    %v1328 = vld [vmem:[%s3 + $0x90] sm:$0xff]
    %v1329 = vld [vmem:[%s3 + $0x98] sm:$0xff]
    %v1330 = vld [vmem:[%s3 + $0xa0] sm:$0xff]
    %v1331 = vld [vmem:[%s3 + $0xa8] sm:$0xff]
    %v1332 = vld [vmem:[%s3 + $0xb0] sm:$0xff]
    %v1333 = vld [vmem:[%s3 + $0xb8] sm:$0xff]
    %v1334 = vld [vmem:[%s3 + $0xc0] sm:$0xff]
    %v1335 = vld [vmem:[%s3 + $0xc8] sm:$0xff]
    %v1336 = vld [vmem:[%s3 + $0xd0] sm:$0xff]
    %v1337 = vld [vmem:[%s3 + $0xd8] sm:$0xff]
    %v1338 = vld [vmem:[%s3 + $0xe0] sm:$0xff]
    %v1339 = vld [vmem:[%s3 + $0xe8] sm:$0xff]
    %v1340 = vld [vmem:[%s3 + $0xf0] sm:$0xff]
    %v1341 = vld [vmem:[%s3 + $0xf8] sm:$0xff]
    %v1342 = vld [vmem:[%s3 + $0x100] sm:$0xff]
    %v1343 = vld [vmem:[%s3 + $0x108] sm:$0xff]
    %v1344 = vld [vmem:[%s3 + $0x110] sm:$0xff]
    %v1345 = vld [vmem:[%s3 + $0x118] sm:$0xff]
    %v1346 = vld [vmem:[%s3 + $0x120] sm:$0xff]
    %v1347 = vld [vmem:[%s3 + $0x128] sm:$0xff]
    %v1348 = vld [vmem:[%s3 + $0x130] sm:$0xff]
    %v1349 = vld [vmem:[%s3 + $0x138] sm:$0xff]
    %v1350 = vld [vmem:[%s3 + $0x140] sm:$0xff]
    %v1351 = vld [vmem:[%s3 + $0x148] sm:$0xff]
    %v1352 = vld [vmem:[%s3 + $0x150] sm:$0xff]
    %v1353 = vld [vmem:[%s3 + $0x158] sm:$0xff]
    %v1354 = vld [vmem:[%s3 + $0x160] sm:$0xff]
    %v1355 = vld [vmem:[%s3 + $0x168] sm:$0xff]
    %v1356 = vld [vmem:[%s3 + $0x170] sm:$0xff]
    %v1357 = vld [vmem:[%s3 + $0x178] sm:$0xff]
    %v1358 = vld [vmem:[%s3 + $0x180] sm:$0xff]
    %v1359 = vld [vmem:[%s3 + $0x188] sm:$0xff]
    %v1360 = vld [vmem:[%s3 + $0x190] sm:$0xff]
    %v1361 = vld [vmem:[%s3 + $0x198] sm:$0xff]
    %v1362 = vld [vmem:[%s3 + $0x1a0] sm:$0xff]
    %v1363 = vld [vmem:[%s3 + $0x1a8] sm:$0xff]
    %v1364 = vld [vmem:[%s3 + $0x1b0] sm:$0xff]
    %v1365 = vld [vmem:[%s3 + $0x1b8] sm:$0xff]
    %v1366 = vld [vmem:[%s3 + $0x1c0] sm:$0xff]
    %v1367 = vld [vmem:[%s3 + $0x1c8] sm:$0xff]
    %v1368 = vld [vmem:[%s3 + $0x1d0] sm:$0xff]
    %v1369 = vld [vmem:[%s3 + $0x1d8] sm:$0xff]
    %v1370 = vld [vmem:[%s3 + $0x1e0] sm:$0xff]
    %v1371 = vld [vmem:[%s3 + $0x1e8] sm:$0xff]
    %v1372 = vld [vmem:[%s3 + $0x1f0] sm:$0xff]
    %v1373 = vld [vmem:[%s3 + $0x1f8] sm:$0xff]
    %v1374 = vld [vmem:[%s3 + $0x200] sm:$0xff]
    %v1375 = vld [vmem:[%s3 + $0x208] sm:$0xff]
    %v1376 = vld [vmem:[%s3 + $0x210] sm:$0xff]
    %v1377 = vld [vmem:[%s3 + $0x218] sm:$0xff]
    %v1378 = vld [vmem:[%s3 + $0x220] sm:$0xff]
    %v1379 = vld [vmem:[%s3 + $0x228] sm:$0xff]
    %v1380 = vld [vmem:[%s3 + $0x230] sm:$0xff]
    %v1381 = vld [vmem:[%s3 + $0x238] sm:$0xff]
    %v1382 = vld [vmem:[%s3 + $0x240] sm:$0xff]
    %v1383 = vld [vmem:[%s3 + $0x248] sm:$0xff]
    %v1384 = vld [vmem:[%s3 + $0x250] sm:$0xff]
    %v1385 = vld [vmem:[%s3 + $0x258] sm:$0xff]
    %v1386 = vld [vmem:[%s3 + $0x260] sm:$0xff]
    %v1387 = vld [vmem:[%s3 + $0x268] sm:$0xff]
    %v1388 = vld [vmem:[%s3 + $0x270] sm:$0xff]
    %v1389 = vld [vmem:[%s3 + $0x278] sm:$0xff]
    %v1390 = vld [vmem:[%s3 + $0x280] sm:$0xff]
    %v1391 = vld [vmem:[%s3 + $0x288] sm:$0xff]
    %v1392 = vld [vmem:[%s3 + $0x290] sm:$0xff]
    %v1393 = vld [vmem:[%s3 + $0x298] sm:$0xff]
    %v1394 = vld [vmem:[%s3 + $0x2a0] sm:$0xff]
    %v1395 = vld [vmem:[%s3 + $0x2a8] sm:$0xff]
    %v1396 = vld [vmem:[%s3 + $0x2b0] sm:$0xff]
    %v1397 = vld [vmem:[%s3 + $0x2b8] sm:$0xff]
    %v1398 = vld [vmem:[%s3 + $0x2c0] sm:$0xff]
    %v1399 = vld [vmem:[%s3 + $0x2c8] sm:$0xff]
    %v1400 = vld [vmem:[%s3 + $0x2d0] sm:$0xff]
    %v1401 = vld [vmem:[%s3 + $0x2d8] sm:$0xff]
    %v1402 = vld [vmem:[%s3 + $0x2e0] sm:$0xff]
    %v1403 = vld [vmem:[%s3 + $0x2e8] sm:$0xff]
    %v1404 = vld [vmem:[%s3 + $0x2f0] sm:$0xff]
    %v1405 = vld [vmem:[%s3 + $0x2f8] sm:$0xff]
    %v1406 = vld [vmem:[%s3 + $0x300] sm:$0xff]
    %v1407 = vld [vmem:[%s3 + $0x308] sm:$0xff]
    %v1408 = vld [vmem:[%s3 + $0x310] sm:$0xff]
    %v1409 = vld [vmem:[%s3 + $0x318] sm:$0xff]
    %v1410 = vld [vmem:[%s3 + $0x320] sm:$0xff]
    %v1411 = vld [vmem:[%s3 + $0x328] sm:$0xff]
    %v1412 = vld [vmem:[%s3 + $0x330] sm:$0xff]
    %v1413 = vld [vmem:[%s3 + $0x338] sm:$0xff]
    %v1414 = vld [vmem:[%s3 + $0x340] sm:$0xff]
    %v1415 = vld [vmem:[%s3 + $0x348] sm:$0xff]
    %v1416 = vld [vmem:[%s3 + $0x350] sm:$0xff]
    %v1417 = vld [vmem:[%s3 + $0x358] sm:$0xff]
    %v1418 = vld [vmem:[%s3 + $0x360] sm:$0xff]
    %v1419 = vld [vmem:[%s3 + $0x368] sm:$0xff]
    %v1420 = vld [vmem:[%s3 + $0x370] sm:$0xff]
    %v1421 = vld [vmem:[%s3 + $0x378] sm:$0xff]
    %v1422 = vld [vmem:[%s3 + $0x380] sm:$0xff]
    %v1423 = vld [vmem:[%s3 + $0x388] sm:$0xff]
    %v1424 = vld [vmem:[%s3 + $0x390] sm:$0xff]
    %v1425 = vld [vmem:[%s3 + $0x398] sm:$0xff]
    %v1426 = vld [vmem:[%s3 + $0x3a0] sm:$0xff]
    %v1427 = vld [vmem:[%s3 + $0x3a8] sm:$0xff]
    %v1428 = vld [vmem:[%s3 + $0x3b0] sm:$0xff]
    %v1429 = vld [vmem:[%s3 + $0x3b8] sm:$0xff]
    %v1430 = vld [vmem:[%s3 + $0x3c0] sm:$0xff]
    %v1431 = vld [vmem:[%s3 + $0x3c8] sm:$0xff]
    %v1432 = vld [vmem:[%s3 + $0x3d0] sm:$0xff]
    %v1433 = vld [vmem:[%s3 + $0x3d8] sm:$0xff]
    %v1434 = vld [vmem:[%s3 + $0x3e0] sm:$0xff]
    %v1435 = vld [vmem:[%s3 + $0x3e8] sm:$0xff]
    %v1436 = vld [vmem:[%s3 + $0x3f0] sm:$0xff]
    %v1437 = vld [vmem:[%s3 + $0x3f8] sm:$0xff]
    %v1438 = vld [vmem:[%s3 + $0x400] sm:$0xff]
    %v1439 = vld [vmem:[%s3 + $0x408] sm:$0xff]
    %v1440 = vld [vmem:[%s3 + $0x410] sm:$0xff]
    %v1441 = vld [vmem:[%s3 + $0x418] sm:$0xff]
    %v1442 = vld [vmem:[%s3 + $0x420] sm:$0xff]
    %v1443 = vld [vmem:[%s3 + $0x428] sm:$0xff]
    %v1444 = vld [vmem:[%s3 + $0x430] sm:$0xff]
    %v1445 = vld [vmem:[%s3 + $0x438] sm:$0xff]
    %v1446 = vld [vmem:[%s3 + $0x440] sm:$0xff]
    %v1447 = vld [vmem:[%s3 + $0x448] sm:$0xff]
    %v1448 = vld [vmem:[%s3 + $0x450] sm:$0xff]
    %v1449 = vld [vmem:[%s3 + $0x458] sm:$0xff]
    %v1450 = vld [vmem:[%s3 + $0x460] sm:$0xff]
    %v1451 = vld [vmem:[%s3 + $0x468] sm:$0xff]
    %v1452 = vld [vmem:[%s3 + $0x470] sm:$0xff]
    %v1453 = vld [vmem:[%s3 + $0x478] sm:$0xff]
    %v1454 = vld [vmem:[%s3 + $0x480] sm:$0xff]
    %v1455 = vld [vmem:[%s3 + $0x488] sm:$0xff]
    %v1456 = vld [vmem:[%s3 + $0x490] sm:$0xff]
    %v1457 = vld [vmem:[%s3 + $0x498] sm:$0xff]
    %v1458 = vld [vmem:[%s3 + $0x4a0] sm:$0xff]
    %v1459 = vld [vmem:[%s3 + $0x4a8] sm:$0xff]
    %v1460 = vld [vmem:[%s3 + $0x4b0] sm:$0xff]
    %v1461 = vld [vmem:[%s3 + $0x4b8] sm:$0xff]
    %v1462 = vld [vmem:[%s3 + $0x4c0] sm:$0xff]
    %v1463 = vld [vmem:[%s3 + $0x4c8] sm:$0xff]
    %v1464 = vld [vmem:[%s3 + $0x4d0] sm:$0xff]
    %v1465 = vld [vmem:[%s3 + $0x4d8] sm:$0xff]
    %v1466 = vld [vmem:[%s3 + $0x4e0] sm:$0xff]
    %v1467 = vld [vmem:[%s3 + $0x4e8] sm:$0xff]
    %v1468 = vld [vmem:[%s3 + $0x4f0] sm:$0xff]
    %v1469 = vld [vmem:[%s3 + $0x4f8] sm:$0xff]
    %v1470 = vld [vmem:[%s3 + $0x500] sm:$0xff]
    %v1471 = vld [vmem:[%s3 + $0x508] sm:$0xff]
    %v1472 = vld [vmem:[%s3 + $0x510] sm:$0xff]
    %v1473 = vld [vmem:[%s3 + $0x518] sm:$0xff]
    %v1474 = vld [vmem:[%s3 + $0x520] sm:$0xff]
    %v1475 = vld [vmem:[%s3 + $0x528] sm:$0xff]
    %v1476 = vld [vmem:[%s3 + $0x530] sm:$0xff]
    %v1477 = vld [vmem:[%s3 + $0x538] sm:$0xff]
    %v1478 = vld [vmem:[%s3 + $0x540] sm:$0xff]
    %v1479 = vld [vmem:[%s3 + $0x548] sm:$0xff]
    %v1480 = vld [vmem:[%s3 + $0x550] sm:$0xff]
    %v1481 = vld [vmem:[%s3 + $0x558] sm:$0xff]
    %v1482 = vld [vmem:[%s3 + $0x560] sm:$0xff]
    %v1483 = vld [vmem:[%s3 + $0x568] sm:$0xff]
    %v1484 = vld [vmem:[%s3 + $0x570] sm:$0xff]
    %v1485 = vld [vmem:[%s3 + $0x578] sm:$0xff]
    %v1486 = vld [vmem:[%s3 + $0x580] sm:$0xff]
    %v1487 = vld [vmem:[%s3 + $0x588] sm:$0xff]
    %v1488 = vld [vmem:[%s3 + $0x590] sm:$0xff]
    %v1489 = vld [vmem:[%s3 + $0x598] sm:$0xff]
    %v1490 = vld [vmem:[%s3 + $0x5a0] sm:$0xff]
    %v1491 = vld [vmem:[%s3 + $0x5a8] sm:$0xff]
    %v1492 = vld [vmem:[%s3 + $0x5b0] sm:$0xff]
    %v1493 = vld [vmem:[%s3 + $0x5b8] sm:$0xff]
    %v1494 = vld [vmem:[%s3 + $0x5c0] sm:$0xff]
    %v1495 = vld [vmem:[%s3 + $0x5c8] sm:$0xff]
    %v1496 = vld [vmem:[%s3 + $0x5d0] sm:$0xff]
    %v1497 = vld [vmem:[%s3 + $0x5d8] sm:$0xff]
    %v1498 = vld [vmem:[%s3 + $0x5e0] sm:$0xff]
    %v1499 = vld [vmem:[%s3 + $0x5e8] sm:$0xff]
    %v1500 = vld [vmem:[%s3 + $0x5f0] sm:$0xff]
    %v1501 = vld [vmem:[%s3 + $0x5f8] sm:$0xff]
    %v1502 = vld [vmem:[%s3 + $0x600] sm:$0xff]
    %v1503 = vld [vmem:[%s3 + $0x608] sm:$0xff]
    %v1504 = vld [vmem:[%s3 + $0x610] sm:$0xff]
    %v1505 = vld [vmem:[%s3 + $0x618] sm:$0xff]
    %v1506 = vld [vmem:[%s3 + $0x620] sm:$0xff]
    %v1507 = vld [vmem:[%s3 + $0x628] sm:$0xff]
    %v1508 = vld [vmem:[%s3 + $0x630] sm:$0xff]
    %v1509 = vld [vmem:[%s3 + $0x638] sm:$0xff]
    %v1510 = vld [vmem:[%s3 + $0x640] sm:$0xff]
    %v1511 = vld [vmem:[%s3 + $0x648] sm:$0xff]
    %v1512 = vld [vmem:[%s3 + $0x650] sm:$0xff]
    %v1513 = vld [vmem:[%s3 + $0x658] sm:$0xff]
    %v1514 = vld [vmem:[%s3 + $0x660] sm:$0xff]
    %v1515 = vld [vmem:[%s3 + $0x668] sm:$0xff]
    %v1516 = vld [vmem:[%s3 + $0x670] sm:$0xff]
    %v1517 = vld [vmem:[%s3 + $0x678] sm:$0xff]
    %v1518 = vld [vmem:[%s3 + $0x680] sm:$0xff]
    %v1519 = vld [vmem:[%s3 + $0x688] sm:$0xff]
    %v1520 = vld [vmem:[%s3 + $0x690] sm:$0xff]
    %v1521 = vld [vmem:[%s3 + $0x698] sm:$0xff]
    %v1522 = vld [vmem:[%s3 + $0x6a0] sm:$0xff]
    %v1523 = vld [vmem:[%s3 + $0x6a8] sm:$0xff]
    %v1524 = vld [vmem:[%s3 + $0x6b0] sm:$0xff]
    %v1525 = vld [vmem:[%s3 + $0x6b8] sm:$0xff]
    %v1526 = vld [vmem:[%s3 + $0x6c0] sm:$0xff]
    %v1527 = vld [vmem:[%s3 + $0x6c8] sm:$0xff]
    %v1528 = vld [vmem:[%s3 + $0x6d0] sm:$0xff]
    %v1529 = vld [vmem:[%s3 + $0x6d8] sm:$0xff]
    %v1530 = vld [vmem:[%s3 + $0x6e0] sm:$0xff]
    %v1531 = vld [vmem:[%s3 + $0x6e8] sm:$0xff]
    %v1532 = vld [vmem:[%s3 + $0x6f0] sm:$0xff]
    %v1533 = vld [vmem:[%s3 + $0x6f8] sm:$0xff]
    %v1534 = vld [vmem:[%s3 + $0x700] sm:$0xff]
    %v1535 = vld [vmem:[%s3 + $0x708] sm:$0xff]
    %v1536 = vld [vmem:[%s3 + $0x710] sm:$0xff]
    %v1537 = vld [vmem:[%s3 + $0x718] sm:$0xff]
    %v1538 = vld [vmem:[%s3 + $0x720] sm:$0xff]
    %v1539 = vld [vmem:[%s3 + $0x728] sm:$0xff]
    %v1540 = vld [vmem:[%s3 + $0x730] sm:$0xff]
    %v1541 = vld [vmem:[%s3 + $0x738] sm:$0xff]
    %v1542 = vld [vmem:[%s3 + $0x740] sm:$0xff]
    %v1543 = vld [vmem:[%s3 + $0x748] sm:$0xff]
    %v1544 = vld [vmem:[%s3 + $0x750] sm:$0xff]
    %v1545 = vld [vmem:[%s3 + $0x758] sm:$0xff]
    %v1546 = vld [vmem:[%s3 + $0x760] sm:$0xff]
    %v1547 = vld [vmem:[%s3 + $0x768] sm:$0xff]
    %v1548 = vld [vmem:[%s3 + $0x770] sm:$0xff]
    %v1549 = vld [vmem:[%s3 + $0x778] sm:$0xff]
    %v1550 = vld [vmem:[%s3 + $0x780] sm:$0xff]
    %v1551 = vld [vmem:[%s3 + $0x788] sm:$0xff]
    %v1552 = vld [vmem:[%s3 + $0x790] sm:$0xff]
    %v1553 = vld [vmem:[%s3 + $0x798] sm:$0xff]
    %v1554 = vld [vmem:[%s3 + $0x7a0] sm:$0xff]
    %v1555 = vld [vmem:[%s3 + $0x7a8] sm:$0xff]
    %v1556 = vld [vmem:[%s3 + $0x7b0] sm:$0xff]
    %v1557 = vld [vmem:[%s3 + $0x7b8] sm:$0xff]
    %v1558 = vld [vmem:[%s3 + $0x7c0] sm:$0xff]
    %v1559 = vld [vmem:[%s3 + $0x7c8] sm:$0xff]
    %v1560 = vld [vmem:[%s3 + $0x7d0] sm:$0xff]
    %v1561 = vld [vmem:[%s3 + $0x7d8] sm:$0xff]
    %v1562 = vld [vmem:[%s3 + $0x7e0] sm:$0xff]
    %v1563 = vld [vmem:[%s3 + $0x7e8] sm:$0xff]
    %v1564 = vld [vmem:[%s3 + $0x7f0] sm:$0xff]
    %v1565 = vld [vmem:[%s3 + $0x7f8] sm:$0xff]
    %v1566 = vld [vmem:[%s3 + $0x800] sm:$0xff]
    %v1567 = vld [vmem:[%s3 + $0x808] sm:$0xff]
    %v1568 = vld [vmem:[%s3 + $0x810] sm:$0xff]
    %v1569 = vld [vmem:[%s3 + $0x818] sm:$0xff]
    %v1570 = vld [vmem:[%s3 + $0x820] sm:$0xff]
    %v1571 = vld [vmem:[%s3 + $0x828] sm:$0xff]
    %v1572 = vld [vmem:[%s3 + $0x830] sm:$0xff]
    %v1573 = vld [vmem:[%s3 + $0x838] sm:$0xff]
    %v1574 = vld [vmem:[%s3 + $0x840] sm:$0xff]
    %v1575 = vld [vmem:[%s3 + $0x848] sm:$0xff]
    %v1576 = vld [vmem:[%s3 + $0x850] sm:$0xff]
    %v1577 = vld [vmem:[%s3 + $0x858] sm:$0xff]
    %v1578 = vld [vmem:[%s3 + $0x860] sm:$0xff]
    %v1579 = vld [vmem:[%s3 + $0x868] sm:$0xff]
    %v1580 = vld [vmem:[%s3 + $0x870] sm:$0xff]
    %v1581 = vld [vmem:[%s3 + $0x878] sm:$0xff]
    %v1582 = vld [vmem:[%s3 + $0x880] sm:$0xff]
    %v1583 = vld [vmem:[%s3 + $0x888] sm:$0xff]
    %v1584 = vld [vmem:[%s3 + $0x890] sm:$0xff]
    %v1585 = vld [vmem:[%s3 + $0x898] sm:$0xff]
    %v1586 = vld [vmem:[%s3 + $0x8a0] sm:$0xff]
    %v1587 = vld [vmem:[%s3 + $0x8a8] sm:$0xff]
    %v1588 = vld [vmem:[%s3 + $0x8b0] sm:$0xff]
    %v1589 = vld [vmem:[%s3 + $0x8b8] sm:$0xff]
    %v1590 = vld [vmem:[%s3 + $0x8c0] sm:$0xff]
    %v1591 = vld [vmem:[%s3 + $0x8c8] sm:$0xff]
    %v1592 = vld [vmem:[%s3 + $0x8d0] sm:$0xff]
    %v1593 = vld [vmem:[%s3 + $0x8d8] sm:$0xff]
    %v1594 = vld [vmem:[%s3 + $0x8e0] sm:$0xff]
    %v1595 = vld [vmem:[%s3 + $0x8e8] sm:$0xff]
    %v1596 = vld [vmem:[%s3 + $0x8f0] sm:$0xff]
    %v1597 = vld [vmem:[%s3 + $0x8f8] sm:$0xff]
    %v1598 = vld [vmem:[%s3 + $0x900] sm:$0xff]
    %v1599 = vld [vmem:[%s3 + $0x908] sm:$0xff]
    %v1600 = vld [vmem:[%s3 + $0x910] sm:$0xff]
    %v1601 = vld [vmem:[%s3 + $0x918] sm:$0xff]
    %v1602 = vld [vmem:[%s3 + $0x920] sm:$0xff]
    %v1603 = vld [vmem:[%s3 + $0x928] sm:$0xff]
    %v1604 = vld [vmem:[%s3 + $0x930] sm:$0xff]
    %v1605 = vld [vmem:[%s3 + $0x938] sm:$0xff]
    %v1606 = vld [vmem:[%s3 + $0x940] sm:$0xff]
    %v1607 = vld [vmem:[%s3 + $0x948] sm:$0xff]
    %v1608 = vld [vmem:[%s3 + $0x950] sm:$0xff]
    %v1609 = vld [vmem:[%s3 + $0x958] sm:$0xff]
    %v1610 = vld [vmem:[%s3 + $0x960] sm:$0xff]
    %v1611 = vld [vmem:[%s3 + $0x968] sm:$0xff]
    %v1612 = vld [vmem:[%s3 + $0x970] sm:$0xff]
    %v1613 = vld [vmem:[%s3 + $0x978] sm:$0xff]
    %v1614 = vld [vmem:[%s3 + $0x980] sm:$0xff]
    %v1615 = vld [vmem:[%s3 + $0x988] sm:$0xff]
    %v1616 = vld [vmem:[%s3 + $0x990] sm:$0xff]
    %v1617 = vld [vmem:[%s3 + $0x998] sm:$0xff]
    %v1618 = vld [vmem:[%s3 + $0x9a0] sm:$0xff]
    %v1619 = vld [vmem:[%s3 + $0x9a8] sm:$0xff]
    %v1620 = vld [vmem:[%s3 + $0x9b0] sm:$0xff]
    %v1621 = vld [vmem:[%s3 + $0x9b8] sm:$0xff]
    %v1622 = vld [vmem:[%s3 + $0x9c0] sm:$0xff]
    %v1623 = vld [vmem:[%s3 + $0x9c8] sm:$0xff]
    %v1624 = vld [vmem:[%s3 + $0x9d0] sm:$0xff]
    %v1625 = vld [vmem:[%s3 + $0x9d8] sm:$0xff]
    %v1626 = vld [vmem:[%s3 + $0x9e0] sm:$0xff]
    %v1627 = vld [vmem:[%s3 + $0x9e8] sm:$0xff]
    %v1628 = vld [vmem:[%s3 + $0x9f0] sm:$0xff]
    %v1629 = vld [vmem:[%s3 + $0x9f8] sm:$0xff]
    %v1630 = vld [vmem:[%s3 + $0xa00] sm:$0xff]
    %v1631 = vld [vmem:[%s3 + $0xa08] sm:$0x7]
    %v1632 = vld [vmem:[%s3 + $0xa10] sm:$0x7]
    %v1633 = vld [vmem:[%s3 + $0xa18] sm:$0x7]
    %vm1634 = vcmask 744448
    %v1636 = vsel %vm1634, %v1302, 0
    %v1639 = vsel %vm1634, %v1309, 0
    %v1642 = vsel %vm551, %v1631, 0
    %v1645 = vsel %vm551, %v1632, 0
    %v1648 = vsel %vm551, %v1633, 0
    %1650 = vmatprep.subr.mxu0 %v1311
    %1651 = vmatpush1.msra.mxu0 %v1310
    %1652 = vmatprep.subr.mxu0 %v1314
    %1653 = vmatpush1.msra.mxu0 %v1313
    %1654 = vmatprep.subr.mxu0 %v1317
    %1655 = vmatpush1.msra.mxu0 %v1316
    %1656 = vmatprep.subr.mxu0 %v1320
    %1657 = vmatpush1.msra.mxu0 %v1319
    %1658 = vmatprep.subr.mxu0 %v1323
    %1659 = vmatpush1.msra.mxu0 %v1322
    %1660 = vmatprep.subr.mxu0 %v1326
    %1661 = vmatpush1.msra.mxu0 %v1325
    %1662 = vmatprep.subr.mxu0 %v1329
    %1663 = vmatpush1.msra.mxu0 %v1328
    %1664 = vmatprep.subr.mxu0 %v1332
    %1665 = vmatpush1.msra.mxu0 %v1331
    %1666 = vmatprep.subr.mxu0 %v1335
    %1667 = vmatpush1.msra.mxu0 %v1334
    %1668 = vmatprep.subr.mxu0 %v1338
    %1669 = vmatpush1.msra.mxu0 %v1337
    %1670 = vmatprep.subr.mxu0 %v1341
    %1671 = vmatpush1.msra.mxu0 %v1340
    %1672 = vmatprep.subr.mxu0 %v1344
    %1673 = vmatpush1.msra.mxu0 %v1343
    %1674 = vmatprep.subr.mxu0 %v1347
    %1675 = vmatpush1.msra.mxu0 %v1346
    %1676 = vmatprep.subr.mxu0 %v1350
    %1677 = vmatpush1.msra.mxu0 %v1349
    %1678 = vmatprep.subr.mxu0 %v1353
    %1679 = vmatpush1.msra.mxu0 %v1352
    %1680 = vmatprep.subr.mxu0 %v1356
    %1681 = vmatpush1.msra.mxu0 %v1355
    %1682 = vmatprep.subr.mxu0 %v1359
    %1683 = vmatpush1.msra.mxu0 %v1358
    %1684 = vmatprep.subr.mxu0 %v1362
    %1685 = vmatpush1.msra.mxu0 %v1361
    %1686 = vmatprep.subr.mxu0 %v1365
    %1687 = vmatpush1.msra.mxu0 %v1364
    %1688 = vmatprep.subr.mxu0 %v1368
    %1689 = vmatpush1.msra.mxu0 %v1367
    %1690 = vmatprep.subr.mxu0 %v1371
    %1691 = vmatpush1.msra.mxu0 %v1370
    %1692 = vmatprep.subr.mxu0 %v1374
    %1693 = vmatpush1.msra.mxu0 %v1373
    %1694 = vmatprep.subr.mxu0 %v1377
    %1695 = vmatpush1.msra.mxu0 %v1376
    %1696 = vmatprep.subr.mxu0 %v1380
    %1697 = vmatpush1.msra.mxu0 %v1379
    %1698 = vmatprep.subr.mxu0 %v1383
    %1699 = vmatpush1.msra.mxu0 %v1382
    %1700 = vmatprep.subr.mxu0 %v1386
    %1701 = vmatpush1.msra.mxu0 %v1385
    %1702 = vmatprep.subr.mxu0 %v1389
    %1703 = vmatpush1.msra.mxu0 %v1388
    %1704 = vmatprep.subr.mxu0 %v1392
    %1705 = vmatpush1.msra.mxu0 %v1391
    %1706 = vmatprep.subr.mxu0 %v1395
    %1707 = vmatpush1.msra.mxu0 %v1394
    %1708 = vmatprep.subr.mxu0 %v1398
    %1709 = vmatpush1.msra.mxu0 %v1397
    %1710 = vmatprep.subr.mxu0 %v1401
    %1711 = vmatpush1.msra.mxu0 %v1400
    %1712 = vmatprep.subr.mxu0 %v1404
    %1713 = vmatpush1.msra.mxu0 %v1403
    %1714 = vmatprep.mubr.f32.mxu0 %v1297
    %1715 = vmatmul.mubr.f32.gmra.mrb[0].mxu0 %v1296
    %v1716 = vpop.f32.mrb[0].mxu0
    %v1717 = vadd.f32 0.0, %v1716
    %v1718 = vpop.f32.mrb[0].mxu0
    %v1719 = vadd.f32 0.0, %v1718
    %1720 = vmatprep.mubr.f32.mxu0 %v1304
    %1721 = vmatmul.mubr.f32.gmra.mrb[0].mxu0 %v1303
    %v1722 = vpop.f32.mrb[0].mxu0
    %v1723 = vadd.f32 0.0, %v1722
    %v1724 = vpop.f32.mrb[0].mxu0
    %v1725 = vadd.f32 0.0, %v1724
    %1726 = vdwg.mxu0
    %1727 = vmatprep.subr.mxu0 %v1407
    %1728 = vmatpush1.msra.mxu0 %v1406
    %1729 = vmatprep.subr.mxu0 %v1410
    %1730 = vmatpush1.msra.mxu0 %v1409
    %1731 = vmatprep.subr.mxu0 %v1413
    %1732 = vmatpush1.msra.mxu0 %v1412
    %1733 = vmatprep.subr.mxu0 %v1416
    %1734 = vmatpush1.msra.mxu0 %v1415
    %1735 = vmatprep.subr.mxu0 %v1419
    %1736 = vmatpush1.msra.mxu0 %v1418
    %1737 = vmatprep.subr.mxu0 %v1422
    %1738 = vmatpush1.msra.mxu0 %v1421
    %1739 = vmatprep.subr.mxu0 %v1425
    %1740 = vmatpush1.msra.mxu0 %v1424
    %1741 = vmatprep.subr.mxu0 %v1428
    %1742 = vmatpush1.msra.mxu0 %v1427
    %1743 = vmatprep.subr.mxu0 %v1431
    %1744 = vmatpush1.msra.mxu0 %v1430
    %1745 = vmatprep.subr.mxu0 %v1434
    %1746 = vmatpush1.msra.mxu0 %v1433
    %1747 = vmatprep.subr.mxu0 %v1437
    %1748 = vmatpush1.msra.mxu0 %v1436
    %1749 = vmatprep.subr.mxu0 %v1440
    %1750 = vmatpush1.msra.mxu0 %v1439
    %1751 = vmatprep.subr.mxu0 %v1443
    %1752 = vmatpush1.msra.mxu0 %v1442
    %1753 = vmatprep.subr.mxu0 %v1446
    %1754 = vmatpush1.msra.mxu0 %v1445
    %1755 = vmatprep.subr.mxu0 %v1449
    %1756 = vmatpush1.msra.mxu0 %v1448
    %1757 = vmatprep.subr.mxu0 %v1452
    %1758 = vmatpush1.msra.mxu0 %v1451
    %1759 = vmatprep.subr.mxu0 %v1455
    %1760 = vmatpush1.msra.mxu0 %v1454
    %1761 = vmatprep.subr.mxu0 %v1458
    %1762 = vmatpush1.msra.mxu0 %v1457
    %1763 = vmatprep.subr.mxu0 %v1461
    %1764 = vmatpush1.msra.mxu0 %v1460
    %1765 = vmatprep.subr.mxu0 %v1464
    %1766 = vmatpush1.msra.mxu0 %v1463
    %1767 = vmatprep.subr.mxu0 %v1467
    %1768 = vmatpush1.msra.mxu0 %v1466
    %1769 = vmatprep.subr.mxu0 %v1470
    %1770 = vmatpush1.msra.mxu0 %v1469
    %1771 = vmatprep.subr.mxu0 %v1473
    %1772 = vmatpush1.msra.mxu0 %v1472
    %1773 = vmatprep.subr.mxu0 %v1476
    %1774 = vmatpush1.msra.mxu0 %v1475
    %1775 = vmatprep.subr.mxu0 %v1479
    %1776 = vmatpush1.msra.mxu0 %v1478
    %1777 = vmatprep.subr.mxu0 %v1482
    %1778 = vmatpush1.msra.mxu0 %v1481
    %1779 = vmatprep.subr.mxu0 %v1485
    %1780 = vmatpush1.msra.mxu0 %v1484
    %1781 = vmatprep.subr.mxu0 %v1488
    %1782 = vmatpush1.msra.mxu0 %v1487
    %1783 = vmatprep.subr.mxu0 %v1491
    %1784 = vmatpush1.msra.mxu0 %v1490
    %1785 = vmatprep.subr.mxu0 %v1494
    %1786 = vmatpush1.msra.mxu0 %v1493
    %1787 = vmatprep.subr.mxu0 %v1497
    %1788 = vmatpush1.msra.mxu0 %v1496
    %1789 = vmatprep.subr.mxu0 %v1500
    %1790 = vmatpush1.msra.mxu0 %v1499
    %1791 = vmatprep.mubr.f32.mxu0 %v1299
    %1792 = vmatmul.mubr.f32.gmra.mrb[0].mxu0 %v1298
    %v1793 = vpop.f32.mrb[0].mxu0
    %v1794 = vadd.f32 %v1717, %v1793
    %v1795 = vpop.f32.mrb[0].mxu0
    %v1796 = vadd.f32 %v1719, %v1795
    %1797 = vmatprep.mubr.f32.mxu0 %v1306
    %1798 = vmatmul.mubr.f32.gmra.mrb[0].mxu0 %v1305
    %v1799 = vpop.f32.mrb[0].mxu0
    %v1800 = vadd.f32 %v1723, %v1799
    %v1801 = vpop.f32.mrb[0].mxu0
    %v1802 = vadd.f32 %v1725, %v1801
    %1803 = vdwg.mxu0
    %1804 = vmatprep.subr.mxu0 %v1503
    %1805 = vmatpush1.msra.mxu0 %v1502
    %1806 = vmatprep.subr.mxu0 %v1506
    %1807 = vmatpush1.msra.mxu0 %v1505
    %1808 = vmatprep.subr.mxu0 %v1509
    %1809 = vmatpush1.msra.mxu0 %v1508
    %1810 = vmatprep.subr.mxu0 %v1512
    %1811 = vmatpush1.msra.mxu0 %v1511
    %1812 = vmatprep.subr.mxu0 %v1515
    %1813 = vmatpush1.msra.mxu0 %v1514
    %1814 = vmatprep.subr.mxu0 %v1518
    %1815 = vmatpush1.msra.mxu0 %v1517
    %1816 = vmatprep.subr.mxu0 %v1521
    %1817 = vmatpush1.msra.mxu0 %v1520
    %1818 = vmatprep.subr.mxu0 %v1524
    %1819 = vmatpush1.msra.mxu0 %v1523
    %1820 = vmatprep.subr.mxu0 %v1527
    %1821 = vmatpush1.msra.mxu0 %v1526
    %1822 = vmatprep.subr.mxu0 %v1530
    %1823 = vmatpush1.msra.mxu0 %v1529
    %1824 = vmatprep.subr.mxu0 %v1533
    %1825 = vmatpush1.msra.mxu0 %v1532
    %1826 = vmatprep.subr.mxu0 %v1536
    %1827 = vmatpush1.msra.mxu0 %v1535
    %1828 = vmatprep.subr.mxu0 %v1539
    %1829 = vmatpush1.msra.mxu0 %v1538
    %1830 = vmatprep.subr.mxu0 %v1542
    %1831 = vmatpush1.msra.mxu0 %v1541
    %1832 = vmatprep.subr.mxu0 %v1545
    %1833 = vmatpush1.msra.mxu0 %v1544
    %1834 = vmatprep.subr.mxu0 %v1548
    %1835 = vmatpush1.msra.mxu0 %v1547
    %1836 = vmatprep.subr.mxu0 %v1551
    %1837 = vmatpush1.msra.mxu0 %v1550
    %1838 = vmatprep.subr.mxu0 %v1554
    %1839 = vmatpush1.msra.mxu0 %v1553
    %1840 = vmatprep.subr.mxu0 %v1557
    %1841 = vmatpush1.msra.mxu0 %v1556
    %1842 = vmatprep.subr.mxu0 %v1560
    %1843 = vmatpush1.msra.mxu0 %v1559
    %1844 = vmatprep.subr.mxu0 %v1563
    %1845 = vmatpush1.msra.mxu0 %v1562
    %1846 = vmatprep.subr.mxu0 %v1566
    %1847 = vmatpush1.msra.mxu0 %v1565
    %1848 = vmatprep.subr.mxu0 %v1569
    %1849 = vmatpush1.msra.mxu0 %v1568
    %1850 = vmatprep.subr.mxu0 %v1572
    %1851 = vmatpush1.msra.mxu0 %v1571
    %1852 = vmatprep.subr.mxu0 %v1575
    %1853 = vmatpush1.msra.mxu0 %v1574
    %1854 = vmatprep.subr.mxu0 %v1578
    %1855 = vmatpush1.msra.mxu0 %v1577
    %1856 = vmatprep.subr.mxu0 %v1581
    %1857 = vmatpush1.msra.mxu0 %v1580
    %1858 = vmatprep.subr.mxu0 %v1584
    %1859 = vmatpush1.msra.mxu0 %v1583
    %1860 = vmatprep.subr.mxu0 %v1587
    %1861 = vmatpush1.msra.mxu0 %v1586
    %1862 = vmatprep.subr.mxu0 %v1590
    %1863 = vmatpush1.msra.mxu0 %v1589
    %1864 = vmatprep.subr.mxu0 %v1593
    %1865 = vmatpush1.msra.mxu0 %v1592
    %1866 = vmatprep.subr.mxu0 %v1596
    %1867 = vmatpush1.msra.mxu0 %v1595
    %1868 = vmatprep.mubr.f32.mxu0 %v1301
    %1869 = vmatmul.mubr.f32.gmra.mrb[0].mxu0 %v1300
    %v1870 = vpop.f32.mrb[0].mxu0
    %v1871 = vadd.f32 %v1794, %v1870
    %v1872 = vpop.f32.mrb[0].mxu0
    %v1873 = vadd.f32 %v1796, %v1872
    %1874 = vmatprep.mubr.f32.mxu0 %v1308
    %1875 = vmatmul.mubr.f32.gmra.mrb[0].mxu0 %v1307
    %v1876 = vpop.f32.mrb[0].mxu0
    %v1877 = vadd.f32 %v1800, %v1876
    %v1878 = vpop.f32.mrb[0].mxu0
    %v1879 = vadd.f32 %v1802, %v1878
    %1880 = vdwg.mxu0
    %1881 = vmatprep.subr.mxu0 %v1599
    %1882 = vmatpush1.msra.mxu0 %v1598
    %1883 = vmatprep.subr.mxu0 %v1602
    %1884 = vmatpush1.msra.mxu0 %v1601
    %1885 = vmatprep.subr.mxu0 %v1605
    %1886 = vmatpush1.msra.mxu0 %v1604
    %1887 = vmatprep.subr.mxu0 %v1608
    %1888 = vmatpush1.msra.mxu0 %v1607
    %1889 = vmatprep.subr.mxu0 %v1611
    %1890 = vmatpush1.msra.mxu0 %v1610
    %1891 = vmatprep.subr.mxu0 %v1614
    %1892 = vmatpush1.msra.mxu0 %v1613
    %1893 = vmatprep.subr.mxu0 %v1617
    %1894 = vmatpush1.msra.mxu0 %v1616
    %1895 = vmatprep.subr.mxu0 %v1620
    %1896 = vmatpush1.msra.mxu0 %v1619
    %1897 = vmatprep.subr.mxu0 %v1623
    %1898 = vmatpush1.msra.mxu0 %v1622
    %1899 = vmatprep.subr.mxu0 %v1626
    %1900 = vmatpush1.msra.mxu0 %v1625
    %1901 = vmatprep.subr.mxu0 %v1629
    %1902 = vmatpush1.msra.mxu0 %v1628
    %1903 = vmatprep.subr.mxu0 %v1645
    %1904 = vmatpush1.msra.mxu0 %v1642
    %1905 = vmatprep.subr.mxu0 0.0
    %1906 = vmatpush1.msra.mxu0 0.0
    %1907 = vmatprep.subr.mxu0 0.0
    %1908 = vmatpush1.msra.mxu0 0.0
    %1909 = vmatprep.subr.mxu0 0.0
    %1910 = vmatpush1.msra.mxu0 0.0
    %1911 = vmatprep.subr.mxu0 0.0
    %1912 = vmatpush1.msra.mxu0 0.0
    %1913 = vmatprep.subr.mxu0 0.0
    %1914 = vmatpush1.msra.mxu0 0.0
    %1915 = vmatprep.subr.mxu0 0.0
    %1916 = vmatpush1.msra.mxu0 0.0
    %1917 = vmatprep.subr.mxu0 0.0
    %1918 = vmatpush1.msra.mxu0 0.0
    %1919 = vmatprep.subr.mxu0 0.0
    %1920 = vmatpush1.msra.mxu0 0.0
    %1921 = vmatprep.subr.mxu0 0.0
    %1922 = vmatpush1.msra.mxu0 0.0
    %1923 = vmatprep.subr.mxu0 0.0
    %1924 = vmatpush1.msra.mxu0 0.0
    %1925 = vmatprep.subr.mxu0 0.0
    %1926 = vmatpush1.msra.mxu0 0.0
    %1927 = vmatprep.subr.mxu0 0.0
    %1928 = vmatpush1.msra.mxu0 0.0
    %1929 = vmatprep.subr.mxu0 0.0
    %1930 = vmatpush1.msra.mxu0 0.0
    %1931 = vmatprep.subr.mxu0 0.0
    %1932 = vmatpush1.msra.mxu0 0.0
    %1933 = vmatprep.subr.mxu0 0.0
    %1934 = vmatpush1.msra.mxu0 0.0
    %1935 = vmatprep.subr.mxu0 0.0
    %1936 = vmatpush1.msra.mxu0 0.0
    %1937 = vmatprep.subr.mxu0 0.0
    %1938 = vmatpush1.msra.mxu0 0.0
    %1939 = vmatprep.subr.mxu0 0.0
    %1940 = vmatpush1.msra.mxu0 0.0
    %1941 = vmatprep.subr.mxu0 0.0
    %1942 = vmatpush1.msra.mxu0 0.0
    %1943 = vmatprep.subr.mxu0 0.0
    %1944 = vmatpush1.msra.mxu0 0.0
    %1945 = vmatprep.mubr.f32.mxu0 0.0
    %1946 = vmatmul.mubr.f32.gmra.mrb[0].mxu0 %v1636
    %v1947 = vpop.f32.mrb[0].mxu0
    %v1948 = vadd.f32 %v1871, %v1947
    %v1949 = vpop.f32.mrb[0].mxu0
    %v1950 = vadd.f32 %v1873, %v1949
    %1951 = vmatprep.mubr.f32.mxu0 0.0
    %1952 = vmatmul.mubr.f32.gmra.mrb[0].mxu0 %v1639
    %v1953 = vpop.f32.mrb[0].mxu0
    %v1954 = vadd.f32 %v1877, %v1953
    %v1955 = vpop.f32.mrb[0].mxu0
    %v1956 = vadd.f32 %v1879, %v1955
    %1957 = vdwg.mxu0
    %1958 = vmatprep.subr.mxu0 0.0
    %1959 = vmatpush1.msra.mxu0 %v1312
    %1960 = vmatprep.subr.mxu0 0.0
    %1961 = vmatpush1.msra.mxu0 %v1315
    %1962 = vmatprep.subr.mxu0 0.0
    %1963 = vmatpush1.msra.mxu0 %v1318
    %1964 = vmatprep.subr.mxu0 0.0
    %1965 = vmatpush1.msra.mxu0 %v1321
    %1966 = vmatprep.subr.mxu0 0.0
    %1967 = vmatpush1.msra.mxu0 %v1324
    %1968 = vmatprep.subr.mxu0 0.0
    %1969 = vmatpush1.msra.mxu0 %v1327
    %1970 = vmatprep.subr.mxu0 0.0
    %1971 = vmatpush1.msra.mxu0 %v1330
    %1972 = vmatprep.subr.mxu0 0.0
    %1973 = vmatpush1.msra.mxu0 %v1333
    %1974 = vmatprep.subr.mxu0 0.0
    %1975 = vmatpush1.msra.mxu0 %v1336
    %1976 = vmatprep.subr.mxu0 0.0
    %1977 = vmatpush1.msra.mxu0 %v1339
    %1978 = vmatprep.subr.mxu0 0.0
    %1979 = vmatpush1.msra.mxu0 %v1342
    %1980 = vmatprep.subr.mxu0 0.0
    %1981 = vmatpush1.msra.mxu0 %v1345
    %1982 = vmatprep.subr.mxu0 0.0
    %1983 = vmatpush1.msra.mxu0 %v1348
    %1984 = vmatprep.subr.mxu0 0.0
    %1985 = vmatpush1.msra.mxu0 %v1351
    %1986 = vmatprep.subr.mxu0 0.0
    %1987 = vmatpush1.msra.mxu0 %v1354
    %1988 = vmatprep.subr.mxu0 0.0
    %1989 = vmatpush1.msra.mxu0 %v1357
    %1990 = vmatprep.subr.mxu0 0.0
    %1991 = vmatpush1.msra.mxu0 %v1360
    %1992 = vmatprep.subr.mxu0 0.0
    %1993 = vmatpush1.msra.mxu0 %v1363
    %1994 = vmatprep.subr.mxu0 0.0
    %1995 = vmatpush1.msra.mxu0 %v1366
    %1996 = vmatprep.subr.mxu0 0.0
    %1997 = vmatpush1.msra.mxu0 %v1369
    %1998 = vmatprep.subr.mxu0 0.0
    %1999 = vmatpush1.msra.mxu0 %v1372
    %2000 = vmatprep.subr.mxu0 0.0
    %2001 = vmatpush1.msra.mxu0 %v1375
    %2002 = vmatprep.subr.mxu0 0.0
    %2003 = vmatpush1.msra.mxu0 %v1378
    %2004 = vmatprep.subr.mxu0 0.0
    %2005 = vmatpush1.msra.mxu0 %v1381
    %2006 = vmatprep.subr.mxu0 0.0
    %2007 = vmatpush1.msra.mxu0 %v1384
    %2008 = vmatprep.subr.mxu0 0.0
    %2009 = vmatpush1.msra.mxu0 %v1387
    %2010 = vmatprep.subr.mxu0 0.0
    %2011 = vmatpush1.msra.mxu0 %v1390
    %2012 = vmatprep.subr.mxu0 0.0
    %2013 = vmatpush1.msra.mxu0 %v1393
    %2014 = vmatprep.subr.mxu0 0.0
    %2015 = vmatpush1.msra.mxu0 %v1396
    %2016 = vmatprep.subr.mxu0 0.0
    %2017 = vmatpush1.msra.mxu0 %v1399
    %2018 = vmatprep.subr.mxu0 0.0
    %2019 = vmatpush1.msra.mxu0 %v1402
    %2020 = vmatprep.subr.mxu0 0.0
    %2021 = vmatpush1.msra.mxu0 %v1405
    %2022 = vmatprep.mubr.f32.mxu0 %v1297
    %2023 = vmatmul.mubr.f32.gmra.mrb[0].mxu0 %v1296
    %v2024 = vpop.f32.mrb[0].mxu0
    %v2025 = vadd.f32 0.0, %v2024
    %v2026 = vpop.f32.mrb[0].mxu0
    %2027 = vmatprep.mubr.f32.mxu0 %v1304
    %2028 = vmatmul.mubr.f32.gmra.mrb[0].mxu0 %v1303
    %v2029 = vpop.f32.mrb[0].mxu0
    %v2030 = vadd.f32 0.0, %v2029
    %v2031 = vpop.f32.mrb[0].mxu0
    %2032 = vdwg.mxu0
    %2033 = vmatprep.subr.mxu0 0.0
    %2034 = vmatpush1.msra.mxu0 %v1408
    %2035 = vmatprep.subr.mxu0 0.0
    %2036 = vmatpush1.msra.mxu0 %v1411
    %2037 = vmatprep.subr.mxu0 0.0
    %2038 = vmatpush1.msra.mxu0 %v1414
    %2039 = vmatprep.subr.mxu0 0.0
    %2040 = vmatpush1.msra.mxu0 %v1417
    %2041 = vmatprep.subr.mxu0 0.0
    %2042 = vmatpush1.msra.mxu0 %v1420
    %2043 = vmatprep.subr.mxu0 0.0
    %2044 = vmatpush1.msra.mxu0 %v1423
    %2045 = vmatprep.subr.mxu0 0.0
    %2046 = vmatpush1.msra.mxu0 %v1426
    %2047 = vmatprep.subr.mxu0 0.0
    %2048 = vmatpush1.msra.mxu0 %v1429
    %2049 = vmatprep.subr.mxu0 0.0
    %2050 = vmatpush1.msra.mxu0 %v1432
    %2051 = vmatprep.subr.mxu0 0.0
    %2052 = vmatpush1.msra.mxu0 %v1435
    %2053 = vmatprep.subr.mxu0 0.0
    %2054 = vmatpush1.msra.mxu0 %v1438
    %2055 = vmatprep.subr.mxu0 0.0
    %2056 = vmatpush1.msra.mxu0 %v1441
    %2057 = vmatprep.subr.mxu0 0.0
    %2058 = vmatpush1.msra.mxu0 %v1444
    %2059 = vmatprep.subr.mxu0 0.0
    %2060 = vmatpush1.msra.mxu0 %v1447
    %2061 = vmatprep.subr.mxu0 0.0
    %2062 = vmatpush1.msra.mxu0 %v1450
    %2063 = vmatprep.subr.mxu0 0.0
    %2064 = vmatpush1.msra.mxu0 %v1453
    %2065 = vmatprep.subr.mxu0 0.0
    %2066 = vmatpush1.msra.mxu0 %v1456
    %2067 = vmatprep.subr.mxu0 0.0
    %2068 = vmatpush1.msra.mxu0 %v1459
    %2069 = vmatprep.subr.mxu0 0.0
    %2070 = vmatpush1.msra.mxu0 %v1462
    %2071 = vmatprep.subr.mxu0 0.0
    %2072 = vmatpush1.msra.mxu0 %v1465
    %2073 = vmatprep.subr.mxu0 0.0
    %2074 = vmatpush1.msra.mxu0 %v1468
    %2075 = vmatprep.subr.mxu0 0.0
    %2076 = vmatpush1.msra.mxu0 %v1471
    %2077 = vmatprep.subr.mxu0 0.0
    %2078 = vmatpush1.msra.mxu0 %v1474
    %2079 = vmatprep.subr.mxu0 0.0
    %2080 = vmatpush1.msra.mxu0 %v1477
    %2081 = vmatprep.subr.mxu0 0.0
    %2082 = vmatpush1.msra.mxu0 %v1480
    %2083 = vmatprep.subr.mxu0 0.0
    %2084 = vmatpush1.msra.mxu0 %v1483
    %2085 = vmatprep.subr.mxu0 0.0
    %2086 = vmatpush1.msra.mxu0 %v1486
    %2087 = vmatprep.subr.mxu0 0.0
    %2088 = vmatpush1.msra.mxu0 %v1489
    %2089 = vmatprep.subr.mxu0 0.0
    %2090 = vmatpush1.msra.mxu0 %v1492
    %2091 = vmatprep.subr.mxu0 0.0
    %2092 = vmatpush1.msra.mxu0 %v1495
    %2093 = vmatprep.subr.mxu0 0.0
    %2094 = vmatpush1.msra.mxu0 %v1498
    %2095 = vmatprep.subr.mxu0 0.0
    %2096 = vmatpush1.msra.mxu0 %v1501
    %2097 = vmatprep.mubr.f32.mxu0 %v1299
    %2098 = vmatmul.mubr.f32.gmra.mrb[0].mxu0 %v1298
    %v2099 = vpop.f32.mrb[0].mxu0
    %v2100 = vadd.f32 %v2025, %v2099
    %v2101 = vpop.f32.mrb[0].mxu0
    %2102 = vmatprep.mubr.f32.mxu0 %v1306
    %2103 = vmatmul.mubr.f32.gmra.mrb[0].mxu0 %v1305
    %v2104 = vpop.f32.mrb[0].mxu0
    %v2105 = vadd.f32 %v2030, %v2104
    %v2106 = vpop.f32.mrb[0].mxu0
    %2107 = vdwg.mxu0
    %2108 = vmatprep.subr.mxu0 0.0
    %2109 = vmatpush1.msra.mxu0 %v1504
    %2110 = vmatprep.subr.mxu0 0.0
    %2111 = vmatpush1.msra.mxu0 %v1507
    %2112 = vmatprep.subr.mxu0 0.0
    %2113 = vmatpush1.msra.mxu0 %v1510
    %2114 = vmatprep.subr.mxu0 0.0
    %2115 = vmatpush1.msra.mxu0 %v1513
    %2116 = vmatprep.subr.mxu0 0.0
    %2117 = vmatpush1.msra.mxu0 %v1516
    %2118 = vmatprep.subr.mxu0 0.0
    %2119 = vmatpush1.msra.mxu0 %v1519
    %2120 = vmatprep.subr.mxu0 0.0
    %2121 = vmatpush1.msra.mxu0 %v1522
    %2122 = vmatprep.subr.mxu0 0.0
    %2123 = vmatpush1.msra.mxu0 %v1525
    %2124 = vmatprep.subr.mxu0 0.0
    %2125 = vmatpush1.msra.mxu0 %v1528
    %2126 = vmatprep.subr.mxu0 0.0
    %2127 = vmatpush1.msra.mxu0 %v1531
    %2128 = vmatprep.subr.mxu0 0.0
    %2129 = vmatpush1.msra.mxu0 %v1534
    %2130 = vmatprep.subr.mxu0 0.0
    %2131 = vmatpush1.msra.mxu0 %v1537
    %2132 = vmatprep.subr.mxu0 0.0
    %2133 = vmatpush1.msra.mxu0 %v1540
    %2134 = vmatprep.subr.mxu0 0.0
    %2135 = vmatpush1.msra.mxu0 %v1543
    %2136 = vmatprep.subr.mxu0 0.0
    %2137 = vmatpush1.msra.mxu0 %v1546
    %2138 = vmatprep.subr.mxu0 0.0
    %2139 = vmatpush1.msra.mxu0 %v1549
    %2140 = vmatprep.subr.mxu0 0.0
    %2141 = vmatpush1.msra.mxu0 %v1552
    %2142 = vmatprep.subr.mxu0 0.0
    %2143 = vmatpush1.msra.mxu0 %v1555
    %2144 = vmatprep.subr.mxu0 0.0
    %2145 = vmatpush1.msra.mxu0 %v1558
    %2146 = vmatprep.subr.mxu0 0.0
    %2147 = vmatpush1.msra.mxu0 %v1561
    %2148 = vmatprep.subr.mxu0 0.0
    %2149 = vmatpush1.msra.mxu0 %v1564
    %2150 = vmatprep.subr.mxu0 0.0
    %2151 = vmatpush1.msra.mxu0 %v1567
    %2152 = vmatprep.subr.mxu0 0.0
    %2153 = vmatpush1.msra.mxu0 %v1570
    %2154 = vmatprep.subr.mxu0 0.0
    %2155 = vmatpush1.msra.mxu0 %v1573
    %2156 = vmatprep.subr.mxu0 0.0
    %2157 = vmatpush1.msra.mxu0 %v1576
    %2158 = vmatprep.subr.mxu0 0.0
    %2159 = vmatpush1.msra.mxu0 %v1579
    %2160 = vmatprep.subr.mxu0 0.0
    %2161 = vmatpush1.msra.mxu0 %v1582
    %2162 = vmatprep.subr.mxu0 0.0
    %2163 = vmatpush1.msra.mxu0 %v1585
    %2164 = vmatprep.subr.mxu0 0.0
    %2165 = vmatpush1.msra.mxu0 %v1588
    %2166 = vmatprep.subr.mxu0 0.0
    %2167 = vmatpush1.msra.mxu0 %v1591
    %2168 = vmatprep.subr.mxu0 0.0
    %2169 = vmatpush1.msra.mxu0 %v1594
    %2170 = vmatprep.subr.mxu0 0.0
    %2171 = vmatpush1.msra.mxu0 %v1597
    %2172 = vmatprep.mubr.f32.mxu0 %v1301
    %2173 = vmatmul.mubr.f32.gmra.mrb[0].mxu0 %v1300
    %v2174 = vpop.f32.mrb[0].mxu0
    %v2175 = vadd.f32 %v2100, %v2174
    %v2176 = vpop.f32.mrb[0].mxu0
    %2177 = vmatprep.mubr.f32.mxu0 %v1308
    %2178 = vmatmul.mubr.f32.gmra.mrb[0].mxu0 %v1307
    %v2179 = vpop.f32.mrb[0].mxu0
    %v2180 = vadd.f32 %v2105, %v2179
    %v2181 = vpop.f32.mrb[0].mxu0
    %2182 = vdwg.mxu0
    %2183 = vmatprep.subr.mxu0 0.0
    %2184 = vmatpush1.msra.mxu0 %v1600
    %2185 = vmatprep.subr.mxu0 0.0
    %2186 = vmatpush1.msra.mxu0 %v1603
    %2187 = vmatprep.subr.mxu0 0.0
    %2188 = vmatpush1.msra.mxu0 %v1606
    %2189 = vmatprep.subr.mxu0 0.0
    %2190 = vmatpush1.msra.mxu0 %v1609
    %2191 = vmatprep.subr.mxu0 0.0
    %2192 = vmatpush1.msra.mxu0 %v1612
    %2193 = vmatprep.subr.mxu0 0.0
    %2194 = vmatpush1.msra.mxu0 %v1615
    %2195 = vmatprep.subr.mxu0 0.0
    %2196 = vmatpush1.msra.mxu0 %v1618
    %2197 = vmatprep.subr.mxu0 0.0
    %2198 = vmatpush1.msra.mxu0 %v1621
    %2199 = vmatprep.subr.mxu0 0.0
    %2200 = vmatpush1.msra.mxu0 %v1624
    %2201 = vmatprep.subr.mxu0 0.0
    %2202 = vmatpush1.msra.mxu0 %v1627
    %2203 = vmatprep.subr.mxu0 0.0
    %2204 = vmatpush1.msra.mxu0 %v1630
    %2205 = vmatprep.subr.mxu0 0.0
    %2206 = vmatpush1.msra.mxu0 %v1648
    %2207 = vmatprep.subr.mxu0 0.0
    %2208 = vmatpush1.msra.mxu0 0.0
    %2209 = vmatprep.subr.mxu0 0.0
    %2210 = vmatpush1.msra.mxu0 0.0
    %2211 = vmatprep.subr.mxu0 0.0
    %2212 = vmatpush1.msra.mxu0 0.0
    %2213 = vmatprep.subr.mxu0 0.0
    %2214 = vmatpush1.msra.mxu0 0.0
    %2215 = vmatprep.subr.mxu0 0.0
    %2216 = vmatpush1.msra.mxu0 0.0
    %2217 = vmatprep.subr.mxu0 0.0
    %2218 = vmatpush1.msra.mxu0 0.0
    %2219 = vmatprep.subr.mxu0 0.0
    %2220 = vmatpush1.msra.mxu0 0.0
    %2221 = vmatprep.subr.mxu0 0.0
    %2222 = vmatpush1.msra.mxu0 0.0
    %2223 = vmatprep.subr.mxu0 0.0
    %2224 = vmatpush1.msra.mxu0 0.0
    %2225 = vmatprep.subr.mxu0 0.0
    %2226 = vmatpush1.msra.mxu0 0.0
    %2227 = vmatprep.subr.mxu0 0.0
    %2228 = vmatpush1.msra.mxu0 0.0
    %2229 = vmatprep.subr.mxu0 0.0
    %2230 = vmatpush1.msra.mxu0 0.0
    %2231 = vmatprep.subr.mxu0 0.0
    %2232 = vmatpush1.msra.mxu0 0.0
    %2233 = vmatprep.subr.mxu0 0.0
    %2234 = vmatpush1.msra.mxu0 0.0
    %2235 = vmatprep.subr.mxu0 0.0
    %2236 = vmatpush1.msra.mxu0 0.0
    %2237 = vmatprep.subr.mxu0 0.0
    %2238 = vmatpush1.msra.mxu0 0.0
    %2239 = vmatprep.subr.mxu0 0.0
    %2240 = vmatpush1.msra.mxu0 0.0
    %2241 = vmatprep.subr.mxu0 0.0
    %2242 = vmatpush1.msra.mxu0 0.0
    %2243 = vmatprep.subr.mxu0 0.0
    %2244 = vmatpush1.msra.mxu0 0.0
    %2245 = vmatprep.subr.mxu0 0.0
    %2246 = vmatpush1.msra.mxu0 0.0
    %2247 = vmatprep.mubr.f32.mxu0 0.0
    %2248 = vmatmul.mubr.f32.gmra.mrb[0].mxu0 %v1636
    %v2249 = vpop.f32.mrb[0].mxu0
    %v2250 = vadd.f32 %v2175, %v2249
    %v2251 = vpop.f32.mrb[0].mxu0
    %2252 = vmatprep.mubr.f32.mxu0 0.0
    %2253 = vmatmul.mubr.f32.gmra.mrb[0].mxu0 %v1639
    %v2254 = vpop.f32.mrb[0].mxu0
    %v2255 = vadd.f32 %v2180, %v2254
    %v2256 = vpop.f32.mrb[0].mxu0
    %2257 = vdwg.mxu0
    %2262 = vrot.lane.b32.xlu0 %v1948, 127
    %v2263 = vpop.permute.xlu0 %2262
    %2264 = vrot.lane.b32.xlu0 %v1950, 127
    %v2265 = vpop.permute.xlu0 %2264
    %2266 = vrot.lane.b32.xlu0 %v1954, 127
    %v2267 = vpop.permute.xlu0 %2266
    %2268 = vrot.lane.b32.xlu0 %v1956, 127
    %v2269 = vpop.permute.xlu0 %2268
    %v2270 = vsel %vm92, %v2263, %v2265
    %v2271 = vsel %vm92, %v2267, %v2269
    %2276 = vrot.lane.b32.xlu0 %v1948, 126
    %v2277 = vpop.permute.xlu0 %2276
    %2278 = vrot.lane.b32.xlu0 %v1950, 126
    %v2279 = vpop.permute.xlu0 %2278
    %2280 = vrot.lane.b32.xlu0 %v1954, 126
    %v2281 = vpop.permute.xlu0 %2280
    %2282 = vrot.lane.b32.xlu0 %v1956, 126
    %v2283 = vpop.permute.xlu0 %2282
    %v2284 = vsel %vm120, %v2277, %v2279
    %v2285 = vsel %vm120, %v2281, %v2283
    %2290 = vrot.lane.b32.xlu0 %v1948, 125
    %v2291 = vpop.permute.xlu0 %2290
    %2292 = vrot.lane.b32.xlu0 %v1950, 125
    %v2293 = vpop.permute.xlu0 %2292
    %2294 = vrot.lane.b32.xlu0 %v1954, 125
    %v2295 = vpop.permute.xlu0 %2294
    %2296 = vrot.lane.b32.xlu0 %v1956, 125
    %v2297 = vpop.permute.xlu0 %2296
    %v2298 = vsel %vm148, %v2291, %v2293
    %v2299 = vsel %vm148, %v2295, %v2297
    %2304 = vrot.lane.b32.xlu0 %v1948, 124
    %v2305 = vpop.permute.xlu0 %2304
    %2306 = vrot.lane.b32.xlu0 %v1950, 124
    %v2307 = vpop.permute.xlu0 %2306
    %2308 = vrot.lane.b32.xlu0 %v1954, 124
    %v2309 = vpop.permute.xlu0 %2308
    %2310 = vrot.lane.b32.xlu0 %v1956, 124
    %v2311 = vpop.permute.xlu0 %2310
    %v2312 = vsel %vm176, %v2305, %v2307
    %v2313 = vsel %vm176, %v2309, %v2311
    %2320 = vrot.lane.b32.xlu0 %v1948, 110
    %v2321 = vpop.permute.xlu0 %2320
    %2322 = vrot.lane.b32.xlu0 %v1950, 110
    %v2323 = vpop.permute.xlu0 %2322
    %2324 = vrot.lane.b32.xlu0 %v2250, 110
    %v2325 = vpop.permute.xlu0 %2324
    %2326 = vrot.lane.b32.xlu0 %v1954, 110
    %v2327 = vpop.permute.xlu0 %2326
    %2328 = vrot.lane.b32.xlu0 %v1956, 110
    %v2329 = vpop.permute.xlu0 %2328
    %2330 = vrot.lane.b32.xlu0 %v2255, 110
    %v2331 = vpop.permute.xlu0 %2330
    %vm2332 = vcmask 900096
    %v2333 = vsel %vm2332, %v2321, %v2323
    %v2334 = vsel %vm2332, %v2323, %v2325
    %v2335 = vsel %vm2332, %v2327, %v2329
    %v2336 = vsel %vm2332, %v2329, %v2331
    %2341 = vrot.lane.b32.xlu0 %v1948, 109
    %v2342 = vpop.permute.xlu0 %2341
    %2343 = vrot.lane.b32.xlu0 %v1950, 109
    %v2344 = vpop.permute.xlu0 %2343
    %2345 = vrot.lane.b32.xlu0 %v2250, 109
    %v2346 = vpop.permute.xlu0 %2345
    %2347 = vrot.lane.b32.xlu0 %v1954, 109
    %v2348 = vpop.permute.xlu0 %2347
    %2349 = vrot.lane.b32.xlu0 %v1956, 109
    %v2350 = vpop.permute.xlu0 %2349
    %2351 = vrot.lane.b32.xlu0 %v2255, 109
    %v2352 = vpop.permute.xlu0 %2351
    %vm2353 = vcmask 891904
    %v2354 = vsel %vm2353, %v2342, %v2344
    %v2355 = vsel %vm2353, %v2344, %v2346
    %v2356 = vsel %vm2353, %v2348, %v2350
    %v2357 = vsel %vm2353, %v2350, %v2352
    %2362 = vrot.lane.b32.xlu0 %v1948, 108
    %v2363 = vpop.permute.xlu0 %2362
    %2364 = vrot.lane.b32.xlu0 %v1950, 108
    %v2365 = vpop.permute.xlu0 %2364
    %2366 = vrot.lane.b32.xlu0 %v2250, 108
    %v2367 = vpop.permute.xlu0 %2366
    %2368 = vrot.lane.b32.xlu0 %v1954, 108
    %v2369 = vpop.permute.xlu0 %2368
    %2370 = vrot.lane.b32.xlu0 %v1956, 108
    %v2371 = vpop.permute.xlu0 %2370
    %2372 = vrot.lane.b32.xlu0 %v2255, 108
    %v2373 = vpop.permute.xlu0 %2372
    %vm2374 = vcmask 883712
    %v2375 = vsel %vm2374, %v2363, %v2365
    %v2376 = vsel %vm2374, %v2365, %v2367
    %v2377 = vsel %vm2374, %v2369, %v2371
    %v2378 = vsel %vm2374, %v2371, %v2373
    %2383 = vrot.lane.b32.xlu0 %v1948, 107
    %v2384 = vpop.permute.xlu0 %2383
    %2385 = vrot.lane.b32.xlu0 %v1950, 107
    %v2386 = vpop.permute.xlu0 %2385
    %2387 = vrot.lane.b32.xlu0 %v2250, 107
    %v2388 = vpop.permute.xlu0 %2387
    %2389 = vrot.lane.b32.xlu0 %v1954, 107
    %v2390 = vpop.permute.xlu0 %2389
    %2391 = vrot.lane.b32.xlu0 %v1956, 107
    %v2392 = vpop.permute.xlu0 %2391
    %2393 = vrot.lane.b32.xlu0 %v2255, 107
    %v2394 = vpop.permute.xlu0 %2393
    %vm2395 = vcmask 875520
    %v2396 = vsel %vm2395, %v2384, %v2386
    %v2397 = vsel %vm2395, %v2386, %v2388
    %v2398 = vsel %vm2395, %v2390, %v2392
    %v2399 = vsel %vm2395, %v2392, %v2394
    %2404 = vrot.lane.b32.xlu0 %v1948, 106
    %v2405 = vpop.permute.xlu0 %2404
    %2406 = vrot.lane.b32.xlu0 %v1950, 106
    %v2407 = vpop.permute.xlu0 %2406
    %2408 = vrot.lane.b32.xlu0 %v2250, 106
    %v2409 = vpop.permute.xlu0 %2408
    %2410 = vrot.lane.b32.xlu0 %v1954, 106
    %v2411 = vpop.permute.xlu0 %2410
    %2412 = vrot.lane.b32.xlu0 %v1956, 106
    %v2413 = vpop.permute.xlu0 %2412
    %2414 = vrot.lane.b32.xlu0 %v2255, 106
    %v2415 = vpop.permute.xlu0 %2414
    %vm2416 = vcmask 867328
    %v2417 = vsel %vm2416, %v2405, %v2407
    %v2418 = vsel %vm2416, %v2407, %v2409
    %v2419 = vsel %vm2416, %v2411, %v2413
    %v2420 = vsel %vm2416, %v2413, %v2415
    %2425 = vrot.lane.b32.xlu0 %v1948, 92
    %v2426 = vpop.permute.xlu0 %2425
    %2427 = vrot.lane.b32.xlu0 %v1950, 92
    %v2428 = vpop.permute.xlu0 %2427
    %2429 = vrot.lane.b32.xlu0 %v2250, 92
    %v2430 = vpop.permute.xlu0 %2429
    %2431 = vrot.lane.b32.xlu0 %v1954, 92
    %v2432 = vpop.permute.xlu0 %2431
    %2433 = vrot.lane.b32.xlu0 %v1956, 92
    %v2434 = vpop.permute.xlu0 %2433
    %2435 = vrot.lane.b32.xlu0 %v2255, 92
    %v2436 = vpop.permute.xlu0 %2435
    %v2437 = vsel %vm334, %v2426, %v2428
    %v2438 = vsel %vm334, %v2428, %v2430
    %v2439 = vsel %vm334, %v2432, %v2434
    %v2440 = vsel %vm334, %v2434, %v2436
    %2445 = vrot.lane.b32.xlu0 %v1948, 91
    %v2446 = vpop.permute.xlu0 %2445
    %2447 = vrot.lane.b32.xlu0 %v1950, 91
    %v2448 = vpop.permute.xlu0 %2447
    %2449 = vrot.lane.b32.xlu0 %v2250, 91
    %v2450 = vpop.permute.xlu0 %2449
    %2451 = vrot.lane.b32.xlu0 %v1954, 91
    %v2452 = vpop.permute.xlu0 %2451
    %2453 = vrot.lane.b32.xlu0 %v1956, 91
    %v2454 = vpop.permute.xlu0 %2453
    %2455 = vrot.lane.b32.xlu0 %v2255, 91
    %v2456 = vpop.permute.xlu0 %2455
    %v2457 = vsel %vm1634, %v2446, %v2448
    %v2458 = vsel %vm1634, %v2448, %v2450
    %v2459 = vsel %vm1634, %v2452, %v2454
    %v2460 = vsel %vm1634, %v2454, %v2456
    %2465 = vrot.lane.b32.xlu0 %v1948, 90
    %v2466 = vpop.permute.xlu0 %2465
    %2467 = vrot.lane.b32.xlu0 %v1950, 90
    %v2468 = vpop.permute.xlu0 %2467
    %2469 = vrot.lane.b32.xlu0 %v2250, 90
    %v2470 = vpop.permute.xlu0 %2469
    %2471 = vrot.lane.b32.xlu0 %v1954, 90
    %v2472 = vpop.permute.xlu0 %2471
    %2473 = vrot.lane.b32.xlu0 %v1956, 90
    %v2474 = vpop.permute.xlu0 %2473
    %2475 = vrot.lane.b32.xlu0 %v2255, 90
    %v2476 = vpop.permute.xlu0 %2475
    %vm2477 = vcmask 736256
    %v2478 = vsel %vm2477, %v2466, %v2468
    %v2479 = vsel %vm2477, %v2468, %v2470
    %v2480 = vsel %vm2477, %v2472, %v2474
    %v2481 = vsel %vm2477, %v2474, %v2476
    %2486 = vrot.lane.b32.xlu0 %v1948, 89
    %v2487 = vpop.permute.xlu0 %2486
    %2488 = vrot.lane.b32.xlu0 %v1950, 89
    %v2489 = vpop.permute.xlu0 %2488
    %2490 = vrot.lane.b32.xlu0 %v2250, 89
    %v2491 = vpop.permute.xlu0 %2490
    %2492 = vrot.lane.b32.xlu0 %v1954, 89
    %v2493 = vpop.permute.xlu0 %2492
    %2494 = vrot.lane.b32.xlu0 %v1956, 89
    %v2495 = vpop.permute.xlu0 %2494
    %2496 = vrot.lane.b32.xlu0 %v2255, 89
    %v2497 = vpop.permute.xlu0 %2496
    %vm2498 = vcmask 728064
    %v2499 = vsel %vm2498, %v2487, %v2489
    %v2500 = vsel %vm2498, %v2489, %v2491
    %v2501 = vsel %vm2498, %v2493, %v2495
    %v2502 = vsel %vm2498, %v2495, %v2497
    %2507 = vrot.lane.b32.xlu0 %v1948, 88
    %v2508 = vpop.permute.xlu0 %2507
    %2509 = vrot.lane.b32.xlu0 %v1950, 88
    %v2510 = vpop.permute.xlu0 %2509
    %2511 = vrot.lane.b32.xlu0 %v2250, 88
    %v2512 = vpop.permute.xlu0 %2511
    %2513 = vrot.lane.b32.xlu0 %v1954, 88
    %v2514 = vpop.permute.xlu0 %2513
    %2515 = vrot.lane.b32.xlu0 %v1956, 88
    %v2516 = vpop.permute.xlu0 %2515
    %2517 = vrot.lane.b32.xlu0 %v2255, 88
    %v2518 = vpop.permute.xlu0 %2517
    %vm2519 = vcmask 719872
    %v2520 = vsel %vm2519, %v2508, %v2510
    %v2521 = vsel %vm2519, %v2510, %v2512
    %v2522 = vsel %vm2519, %v2514, %v2516
    %v2523 = vsel %vm2519, %v2516, %v2518
    %2528 = vrot.lane.b32.xlu0 %v1948, 74
    %v2529 = vpop.permute.xlu0 %2528
    %2530 = vrot.lane.b32.xlu0 %v1950, 74
    %v2531 = vpop.permute.xlu0 %2530
    %2532 = vrot.lane.b32.xlu0 %v2250, 74
    %v2533 = vpop.permute.xlu0 %2532
    %2534 = vrot.lane.b32.xlu0 %v1954, 74
    %v2535 = vpop.permute.xlu0 %2534
    %2536 = vrot.lane.b32.xlu0 %v1956, 74
    %v2537 = vpop.permute.xlu0 %2536
    %2538 = vrot.lane.b32.xlu0 %v2255, 74
    %v2539 = vpop.permute.xlu0 %2538
    %vm2540 = vcmask 605184
    %v2541 = vsel %vm2540, %v2529, %v2531
    %v2542 = vsel %vm2540, %v2531, %v2533
    %v2543 = vsel %vm2540, %v2535, %v2537
    %v2544 = vsel %vm2540, %v2537, %v2539
    %2549 = vrot.lane.b32.xlu0 %v2250, 127
    %v2550 = vpop.permute.xlu0 %2549
    %2551 = vrot.lane.b32.xlu0 %v2255, 127
    %v2552 = vpop.permute.xlu0 %2551
    %v2553 = vsel %vm92, %v2265, %v2550
    %v2554 = vsel %vm92, %v2269, %v2552
    %2555 = vrot.lane.b32.xlu0 %v2250, 126
    %v2556 = vpop.permute.xlu0 %2555
    %2557 = vrot.lane.b32.xlu0 %v2255, 126
    %v2558 = vpop.permute.xlu0 %2557
    %v2559 = vsel %vm120, %v2279, %v2556
    %v2560 = vsel %vm120, %v2283, %v2558
    %2561 = vrot.lane.b32.xlu0 %v2250, 125
    %v2562 = vpop.permute.xlu0 %2561
    %2563 = vrot.lane.b32.xlu0 %v2255, 125
    %v2564 = vpop.permute.xlu0 %2563
    %v2565 = vsel %vm148, %v2293, %v2562
    %v2566 = vsel %vm148, %v2297, %v2564
    %2567 = vrot.lane.b32.xlu0 %v1948, 111
    %v2568 = vpop.permute.xlu0 %2567
    %2569 = vrot.lane.b32.xlu0 %v1950, 111
    %v2570 = vpop.permute.xlu0 %2569
    %2571 = vrot.lane.b32.xlu0 %v2250, 111
    %v2572 = vpop.permute.xlu0 %2571
    %2573 = vrot.lane.b32.xlu0 %v1954, 111
    %v2574 = vpop.permute.xlu0 %2573
    %2575 = vrot.lane.b32.xlu0 %v1956, 111
    %v2576 = vpop.permute.xlu0 %2575
    %2577 = vrot.lane.b32.xlu0 %v2255, 111
    %v2578 = vpop.permute.xlu0 %2577
    %vm2579 = vcmask 908288
    %v2580 = vsel %vm2579, %v2568, %v2570
    %v2581 = vsel %vm2579, %v2570, %v2572
    %v2582 = vsel %vm2579, %v2574, %v2576
    %v2583 = vsel %vm2579, %v2576, %v2578
    %2584 = vrot.lane.b32.xlu0 %v1948, 73
    %v2585 = vpop.permute.xlu0 %2584
    %2586 = vrot.lane.b32.xlu0 %v1950, 73
    %v2587 = vpop.permute.xlu0 %2586
    %2588 = vrot.lane.b32.xlu0 %v2250, 73
    %v2589 = vpop.permute.xlu0 %2588
    %2590 = vrot.lane.b32.xlu0 %v1954, 73
    %v2591 = vpop.permute.xlu0 %2590
    %2592 = vrot.lane.b32.xlu0 %v1956, 73
    %v2593 = vpop.permute.xlu0 %2592
    %2594 = vrot.lane.b32.xlu0 %v2255, 73
    %v2595 = vpop.permute.xlu0 %2594
    %2596 = vrot.lane.b32.xlu0 %v2270, 73
    %v2597 = vpop.permute.xlu0 %2596
    %2598 = vrot.lane.b32.xlu0 %v2553, 73
    %v2599 = vpop.permute.xlu0 %2598
    %2600 = vrot.lane.b32.xlu0 %v2550, 73
    %v2601 = vpop.permute.xlu0 %2600
    %2602 = vrot.lane.b32.xlu0 %v2271, 73
    %v2603 = vpop.permute.xlu0 %2602
    %2604 = vrot.lane.b32.xlu0 %v2554, 73
    %v2605 = vpop.permute.xlu0 %2604
    %2606 = vrot.lane.b32.xlu0 %v2552, 73
    %v2607 = vpop.permute.xlu0 %2606
    %2608 = vrot.lane.b32.xlu0 %v2284, 73
    %v2609 = vpop.permute.xlu0 %2608
    %2610 = vrot.lane.b32.xlu0 %v2559, 73
    %v2611 = vpop.permute.xlu0 %2610
    %2612 = vrot.lane.b32.xlu0 %v2556, 73
    %v2613 = vpop.permute.xlu0 %2612
    %2614 = vrot.lane.b32.xlu0 %v2285, 73
    %v2615 = vpop.permute.xlu0 %2614
    %2616 = vrot.lane.b32.xlu0 %v2560, 73
    %v2617 = vpop.permute.xlu0 %2616
    %2618 = vrot.lane.b32.xlu0 %v2558, 73
    %v2619 = vpop.permute.xlu0 %2618
    %2620 = vrot.lane.b32.xlu0 %v2298, 73
    %v2621 = vpop.permute.xlu0 %2620
    %2622 = vrot.lane.b32.xlu0 %v2565, 73
    %v2623 = vpop.permute.xlu0 %2622
    %2624 = vrot.lane.b32.xlu0 %v2562, 73
    %v2625 = vpop.permute.xlu0 %2624
    %2626 = vrot.lane.b32.xlu0 %v2299, 73
    %v2627 = vpop.permute.xlu0 %2626
    %2628 = vrot.lane.b32.xlu0 %v2566, 73
    %v2629 = vpop.permute.xlu0 %2628
    %2630 = vrot.lane.b32.xlu0 %v2564, 73
    %v2631 = vpop.permute.xlu0 %2630
    %2632 = vrot.lane.b32.xlu0 %v2580, 73
    %v2633 = vpop.permute.xlu0 %2632
    %2634 = vrot.lane.b32.xlu0 %v2581, 73
    %v2635 = vpop.permute.xlu0 %2634
    %2636 = vrot.lane.b32.xlu0 %v2572, 73
    %v2637 = vpop.permute.xlu0 %2636
    %2638 = vrot.lane.b32.xlu0 %v2582, 73
    %v2639 = vpop.permute.xlu0 %2638
    %2640 = vrot.lane.b32.xlu0 %v2583, 73
    %v2641 = vpop.permute.xlu0 %2640
    %2642 = vrot.lane.b32.xlu0 %v2578, 73
    %v2643 = vpop.permute.xlu0 %2642
    %2644 = vrot.lane.b32.xlu0 %v2333, 73
    %v2645 = vpop.permute.xlu0 %2644
    %2646 = vrot.lane.b32.xlu0 %v2334, 73
    %v2647 = vpop.permute.xlu0 %2646
    %2648 = vrot.lane.b32.xlu0 %v2325, 73
    %v2649 = vpop.permute.xlu0 %2648
    %2650 = vrot.lane.b32.xlu0 %v2335, 73
    %v2651 = vpop.permute.xlu0 %2650
    %2652 = vrot.lane.b32.xlu0 %v2336, 73
    %v2653 = vpop.permute.xlu0 %2652
    %2654 = vrot.lane.b32.xlu0 %v2331, 73
    %v2655 = vpop.permute.xlu0 %2654
    %2656 = vrot.lane.b32.xlu0 %v2354, 73
    %v2657 = vpop.permute.xlu0 %2656
    %2658 = vrot.lane.b32.xlu0 %v2355, 73
    %v2659 = vpop.permute.xlu0 %2658
    %2660 = vrot.lane.b32.xlu0 %v2346, 73
    %v2661 = vpop.permute.xlu0 %2660
    %2662 = vrot.lane.b32.xlu0 %v2356, 73
    %v2663 = vpop.permute.xlu0 %2662
    %2664 = vrot.lane.b32.xlu0 %v2357, 73
    %v2665 = vpop.permute.xlu0 %2664
    %2666 = vrot.lane.b32.xlu0 %v2352, 73
    %v2667 = vpop.permute.xlu0 %2666
    %2668 = vrot.lane.b32.xlu0 %v2375, 73
    %v2669 = vpop.permute.xlu0 %2668
    %2670 = vrot.lane.b32.xlu0 %v2376, 73
    %v2671 = vpop.permute.xlu0 %2670
    %2672 = vrot.lane.b32.xlu0 %v2367, 73
    %v2673 = vpop.permute.xlu0 %2672
    %2674 = vrot.lane.b32.xlu0 %v2377, 73
    %v2675 = vpop.permute.xlu0 %2674
    %2676 = vrot.lane.b32.xlu0 %v2378, 73
    %v2677 = vpop.permute.xlu0 %2676
    %2678 = vrot.lane.b32.xlu0 %v2373, 73
    %v2679 = vpop.permute.xlu0 %2678
    %2680 = vrot.lane.b32.xlu0 %v2396, 73
    %v2681 = vpop.permute.xlu0 %2680
    %2682 = vrot.lane.b32.xlu0 %v2397, 73
    %v2683 = vpop.permute.xlu0 %2682
    %2684 = vrot.lane.b32.xlu0 %v2388, 73
    %v2685 = vpop.permute.xlu0 %2684
    %2686 = vrot.lane.b32.xlu0 %v2398, 73
    %v2687 = vpop.permute.xlu0 %2686
    %2688 = vrot.lane.b32.xlu0 %v2399, 73
    %v2689 = vpop.permute.xlu0 %2688
    %2690 = vrot.lane.b32.xlu0 %v2394, 73
    %v2691 = vpop.permute.xlu0 %2690
    %vm2692 = vcmask 596992
    %v2693 = vsel %vm2692, %v2585, %v2587
    %v2694 = vsel %vm2692, %v2587, %v2589
    %v2695 = vsel %vm2692, %v2591, %v2593
    %v2696 = vsel %vm2692, %v2593, %v2595
    %v2697 = vsel %vm2692, %v2597, %v2599
    %v2698 = vsel %vm2692, %v2599, %v2601
    %v2699 = vsel %vm2692, %v2603, %v2605
    %v2700 = vsel %vm2692, %v2605, %v2607
    %v2701 = vsel %vm2692, %v2609, %v2611
    %v2702 = vsel %vm2692, %v2611, %v2613
    %v2703 = vsel %vm2692, %v2615, %v2617
    %v2704 = vsel %vm2692, %v2617, %v2619
    %v2705 = vsel %vm2692, %v2621, %v2623
    %v2706 = vsel %vm2692, %v2623, %v2625
    %v2707 = vsel %vm2692, %v2627, %v2629
    %v2708 = vsel %vm2692, %v2629, %v2631
    %v2709 = vsel %vm2692, %v2633, %v2635
    %v2710 = vsel %vm2692, %v2635, %v2637
    %v2711 = vsel %vm2692, %v2639, %v2641
    %v2712 = vsel %vm2692, %v2641, %v2643
    %v2713 = vsel %vm2692, %v2645, %v2647
    %v2714 = vsel %vm2692, %v2647, %v2649
    %v2715 = vsel %vm2692, %v2651, %v2653
    %v2716 = vsel %vm2692, %v2653, %v2655
    %v2717 = vsel %vm2692, %v2657, %v2659
    %v2718 = vsel %vm2692, %v2659, %v2661
    %v2719 = vsel %vm2692, %v2663, %v2665
    %v2720 = vsel %vm2692, %v2665, %v2667
    %v2721 = vsel %vm2692, %v2669, %v2671
    %v2722 = vsel %vm2692, %v2671, %v2673
    %v2723 = vsel %vm2692, %v2675, %v2677
    %v2724 = vsel %vm2692, %v2677, %v2679
    %v2725 = vsel %vm2692, %v2681, %v2683
    %v2726 = vsel %vm2692, %v2683, %v2685
    %v2727 = vsel %vm2692, %v2687, %v2689
    %v2728 = vsel %vm2692, %v2689, %v2691
    %v2765 = vld [vmem:[%s4] sm:$0xff]
    %v2766 = vld [vmem:[%s4 + $0x8] sm:$0xff]
    %v2767 = vld [vmem:[%s4 + $0x10] sm:$0xff]
    %v2768 = vld [vmem:[%s4 + $0x18] sm:$0xff]
    %v2769 = vld [vmem:[%s4 + $0x20] sm:$0xff]
    %v2770 = vld [vmem:[%s4 + $0x28] sm:$0xff]
    %v2771 = vld [vmem:[%s4 + $0x30] sm:$0xff]
    %v2772 = vld [vmem:[%s4 + $0x38] sm:$0xff]
    %v2773 = vld [vmem:[%s4 + $0x40] sm:$0xff]
    %v2774 = vld [vmem:[%s4 + $0x48] sm:$0xff]
    %v2775 = vld [vmem:[%s4 + $0x50] sm:$0xff]
    %v2776 = vld [vmem:[%s4 + $0x58] sm:$0xff]
    %v2777 = vld [vmem:[%s4 + $0x60] sm:$0xff]
    %v2778 = vld [vmem:[%s4 + $0x68] sm:$0xff]
    %v2779 = vld [vmem:[%s4 + $0x70] sm:$0xff]
    %v2780 = vld [vmem:[%s4 + $0x78] sm:$0xff]
    %v2781 = vld [vmem:[%s5] sm:$0xff]
    %v2782 = vld [vmem:[%s5 + $0x8] sm:$0xff]
    %v2783 = vld [vmem:[%s5 + $0x10] sm:$0xff]
    %v2784 = vld [vmem:[%s5 + $0x18] sm:$0xff]
    %2786 = vset.pattern.permute.xlu0 0
    %2787 = vperm.xlu0 %2786, %v2781
    %v2788 = vpop.permute.xlu0 %2787
    %2791 = vset.pattern.permute.xlu0 0
    %2792 = vperm.xlu0 %2791, %v2782
    %v2793 = vpop.permute.xlu0 %2792
    %2796 = vset.pattern.permute.xlu0 0
    %2797 = vperm.xlu0 %2796, %v2783
    %v2798 = vpop.permute.xlu0 %2797
    %2801 = vset.pattern.permute.xlu0 0
    %2802 = vperm.xlu0 %2801, %v2784
    %v2803 = vpop.permute.xlu0 %2802
    %vm2805 = vcmask 130048
    %v2807 = vsel %vm2805, %v2768, 0
    %v2810 = vsel %vm2805, %v2772, 0
    %v2813 = vsel %vm2805, %v2776, 0
    %v2816 = vsel %vm2805, %v2780, 0
    %2818 = vmatprep.subr.mxu0 %v1950
    %2819 = vmatpush1.msra.mxu0 %v1948
    %2820 = vmatprep.subr.mxu0 %v1956
    %2821 = vmatpush1.msra.mxu0 %v1954
    %2822 = vmatprep.subr.mxu0 %v2265
    %2823 = vmatpush1.msra.mxu0 %v2270
    %2824 = vmatprep.subr.mxu0 %v2269
    %2825 = vmatpush1.msra.mxu0 %v2271
    %2826 = vmatprep.subr.mxu0 %v2279
    %2827 = vmatpush1.msra.mxu0 %v2284
    %2828 = vmatprep.subr.mxu0 %v2283
    %2829 = vmatpush1.msra.mxu0 %v2285
    %2830 = vmatprep.subr.mxu0 %v2293
    %2831 = vmatpush1.msra.mxu0 %v2298
    %2832 = vmatprep.subr.mxu0 %v2297
    %2833 = vmatpush1.msra.mxu0 %v2299
    %2834 = vmatprep.subr.mxu0 %v2307
    %2835 = vmatpush1.msra.mxu0 %v2312
    %2836 = vmatprep.subr.mxu0 %v2311
    %2837 = vmatpush1.msra.mxu0 %v2313
    %2838 = vmatprep.subr.mxu0 %v2334
    %2839 = vmatpush1.msra.mxu0 %v2333
    %2840 = vmatprep.subr.mxu0 %v2336
    %2841 = vmatpush1.msra.mxu0 %v2335
    %2842 = vmatprep.subr.mxu0 %v2355
    %2843 = vmatpush1.msra.mxu0 %v2354
    %2844 = vmatprep.subr.mxu0 %v2357
    %2845 = vmatpush1.msra.mxu0 %v2356
    %2846 = vmatprep.subr.mxu0 %v2376
    %2847 = vmatpush1.msra.mxu0 %v2375
    %2848 = vmatprep.subr.mxu0 %v2378
    %2849 = vmatpush1.msra.mxu0 %v2377
    %2850 = vmatprep.subr.mxu0 %v2397
    %2851 = vmatpush1.msra.mxu0 %v2396
    %2852 = vmatprep.subr.mxu0 %v2399
    %2853 = vmatpush1.msra.mxu0 %v2398
    %2854 = vmatprep.subr.mxu0 %v2418
    %2855 = vmatpush1.msra.mxu0 %v2417
    %2856 = vmatprep.subr.mxu0 %v2420
    %2857 = vmatpush1.msra.mxu0 %v2419
    %2858 = vmatprep.subr.mxu0 %v2438
    %2859 = vmatpush1.msra.mxu0 %v2437
    %2860 = vmatprep.subr.mxu0 %v2440
    %2861 = vmatpush1.msra.mxu0 %v2439
    %2862 = vmatprep.subr.mxu0 %v2458
    %2863 = vmatpush1.msra.mxu0 %v2457
    %2864 = vmatprep.subr.mxu0 %v2460
    %2865 = vmatpush1.msra.mxu0 %v2459
    %2866 = vmatprep.subr.mxu0 %v2479
    %2867 = vmatpush1.msra.mxu0 %v2478
    %2868 = vmatprep.subr.mxu0 %v2481
    %2869 = vmatpush1.msra.mxu0 %v2480
    %2870 = vmatprep.subr.mxu0 %v2500
    %2871 = vmatpush1.msra.mxu0 %v2499
    %2872 = vmatprep.subr.mxu0 %v2502
    %2873 = vmatpush1.msra.mxu0 %v2501
    %2874 = vmatprep.subr.mxu0 %v2521
    %2875 = vmatpush1.msra.mxu0 %v2520
    %2876 = vmatprep.subr.mxu0 %v2523
    %2877 = vmatpush1.msra.mxu0 %v2522
    %2878 = vmatprep.subr.mxu0 %v2542
    %2879 = vmatpush1.msra.mxu0 %v2541
    %2880 = vmatprep.subr.mxu0 %v2544
    %2881 = vmatpush1.msra.mxu0 %v2543
    %2882 = vmatprep.mubr.f32.mxu0 %v2766
    %2883 = vmatmul.mubr.f32.gmra.mrb[0].mxu0 %v2765
    %v2884 = vpop.f32.mrb[0].mxu0
    %v2885 = vadd.f32 %v2788, %v2884
    %v2886 = vpop.f32.mrb[0].mxu0
    %v2887 = vadd.f32 %v2788, %v2886
    %2888 = vmatprep.mubr.f32.mxu0 %v2770
    %2889 = vmatmul.mubr.f32.gmra.mrb[0].mxu0 %v2769
    %v2890 = vpop.f32.mrb[0].mxu0
    %v2891 = vadd.f32 %v2793, %v2890
    %v2892 = vpop.f32.mrb[0].mxu0
    %v2893 = vadd.f32 %v2793, %v2892
    %2894 = vmatprep.mubr.f32.mxu0 %v2774
    %2895 = vmatmul.mubr.f32.gmra.mrb[0].mxu0 %v2773
    %v2896 = vpop.f32.mrb[0].mxu0
    %v2897 = vadd.f32 %v2798, %v2896
    %v2898 = vpop.f32.mrb[0].mxu0
    %v2899 = vadd.f32 %v2798, %v2898
    %2900 = vmatprep.mubr.f32.mxu0 %v2778
    %2901 = vmatmul.mubr.f32.gmra.mrb[0].mxu0 %v2777
    %v2902 = vpop.f32.mrb[0].mxu0
    %v2903 = vadd.f32 %v2803, %v2902
    %v2904 = vpop.f32.mrb[0].mxu0
    %v2905 = vadd.f32 %v2803, %v2904
    %2906 = vdwg.mxu0
    %2907 = vmatprep.subr.mxu0 %v2694
    %2908 = vmatpush1.msra.mxu0 %v2693
    %2909 = vmatprep.subr.mxu0 %v2696
    %2910 = vmatpush1.msra.mxu0 %v2695
    %2911 = vmatprep.subr.mxu0 %v2698
    %2912 = vmatpush1.msra.mxu0 %v2697
    %2913 = vmatprep.subr.mxu0 %v2700
    %2914 = vmatpush1.msra.mxu0 %v2699
    %2915 = vmatprep.subr.mxu0 %v2702
    %2916 = vmatpush1.msra.mxu0 %v2701
    %2917 = vmatprep.subr.mxu0 %v2704
    %2918 = vmatpush1.msra.mxu0 %v2703
    %2919 = vmatprep.subr.mxu0 %v2706
    %2920 = vmatpush1.msra.mxu0 %v2705
    %2921 = vmatprep.subr.mxu0 %v2708
    %2922 = vmatpush1.msra.mxu0 %v2707
    %2923 = vmatprep.subr.mxu0 %v2710
    %2924 = vmatpush1.msra.mxu0 %v2709
    %2925 = vmatprep.subr.mxu0 %v2712
    %2926 = vmatpush1.msra.mxu0 %v2711
    %2927 = vmatprep.subr.mxu0 %v2714
    %2928 = vmatpush1.msra.mxu0 %v2713
    %2929 = vmatprep.subr.mxu0 %v2716
    %2930 = vmatpush1.msra.mxu0 %v2715
    %2931 = vmatprep.subr.mxu0 %v2718
    %2932 = vmatpush1.msra.mxu0 %v2717
    %2933 = vmatprep.subr.mxu0 %v2720
    %2934 = vmatpush1.msra.mxu0 %v2719
    %2935 = vmatprep.subr.mxu0 %v2722
    %2936 = vmatpush1.msra.mxu0 %v2721
    %2937 = vmatprep.subr.mxu0 %v2724
    %2938 = vmatpush1.msra.mxu0 %v2723
    %2939 = vmatprep.subr.mxu0 %v2726
    %2940 = vmatpush1.msra.mxu0 %v2725
    %2941 = vmatprep.subr.mxu0 %v2728
    %2942 = vmatpush1.msra.mxu0 %v2727
    %2943 = vmatprep.subr.mxu0 0.0
    %2944 = vmatpush1.msra.mxu0 0.0
    %2945 = vmatprep.subr.mxu0 0.0
    %2946 = vmatpush1.msra.mxu0 0.0
    %2947 = vmatprep.subr.mxu0 0.0
    %2948 = vmatpush1.msra.mxu0 0.0
    %2949 = vmatprep.subr.mxu0 0.0
    %2950 = vmatpush1.msra.mxu0 0.0
    %2951 = vmatprep.subr.mxu0 0.0
    %2952 = vmatpush1.msra.mxu0 0.0
    %2953 = vmatprep.subr.mxu0 0.0
    %2954 = vmatpush1.msra.mxu0 0.0
    %2955 = vmatprep.subr.mxu0 0.0
    %2956 = vmatpush1.msra.mxu0 0.0
    %2957 = vmatprep.subr.mxu0 0.0
    %2958 = vmatpush1.msra.mxu0 0.0
    %2959 = vmatprep.subr.mxu0 0.0
    %2960 = vmatpush1.msra.mxu0 0.0
    %2961 = vmatprep.subr.mxu0 0.0
    %2962 = vmatpush1.msra.mxu0 0.0
    %2963 = vmatprep.subr.mxu0 0.0
    %2964 = vmatpush1.msra.mxu0 0.0
    %2965 = vmatprep.subr.mxu0 0.0
    %2966 = vmatpush1.msra.mxu0 0.0
    %2967 = vmatprep.subr.mxu0 0.0
    %2968 = vmatpush1.msra.mxu0 0.0
    %2969 = vmatprep.subr.mxu0 0.0
    %2970 = vmatpush1.msra.mxu0 0.0
    %2971 = vmatprep.mubr.f32.mxu0 %v2807
    %2972 = vmatmul.mubr.f32.gmra.mrb[0].mxu0 %v2767
    %v2973 = vpop.f32.mrb[0].mxu0
    %v2974 = vadd.f32 %v2885, %v2973
    %v2975 = vpop.f32.mrb[0].mxu0
    %v2976 = vadd.f32 %v2887, %v2975
    %2977 = vmatprep.mubr.f32.mxu0 %v2810
    %2978 = vmatmul.mubr.f32.gmra.mrb[0].mxu0 %v2771
    %v2979 = vpop.f32.mrb[0].mxu0
    %v2980 = vadd.f32 %v2891, %v2979
    %v2981 = vpop.f32.mrb[0].mxu0
    %v2982 = vadd.f32 %v2893, %v2981
    %2983 = vmatprep.mubr.f32.mxu0 %v2813
    %2984 = vmatmul.mubr.f32.gmra.mrb[0].mxu0 %v2775
    %v2985 = vpop.f32.mrb[0].mxu0
    %v2986 = vadd.f32 %v2897, %v2985
    %v2987 = vpop.f32.mrb[0].mxu0
    %v2988 = vadd.f32 %v2899, %v2987
    %2989 = vmatprep.mubr.f32.mxu0 %v2816
    %2990 = vmatmul.mubr.f32.gmra.mrb[0].mxu0 %v2779
    %v2991 = vpop.f32.mrb[0].mxu0
    %v2992 = vadd.f32 %v2903, %v2991
    %v2993 = vpop.f32.mrb[0].mxu0
    %v2994 = vadd.f32 %v2905, %v2993
    %2995 = vdwg.mxu0
    %v2996 = vmax.f32 %v2974, 0.0
    %v2997 = vmax.f32 %v2976, 0.0
    %v2998 = vmax.f32 %v2980, 0.0
    %v2999 = vmax.f32 %v2982, 0.0
    %v3000 = vmax.f32 %v2986, 0.0
    %v3001 = vmax.f32 %v2988, 0.0
    %v3002 = vmax.f32 %v2992, 0.0
    %v3003 = vmax.f32 %v2994, 0.0
    %3012 = vrot.lane.b32.xlu0 %v2996, 127
    %v3013 = vpop.permute.xlu0 %3012
    %3014 = vrot.lane.b32.xlu0 %v2997, 127
    %v3015 = vpop.permute.xlu0 %3014
    %3016 = vrot.lane.b32.xlu0 %v2998, 127
    %v3017 = vpop.permute.xlu0 %3016
    %3018 = vrot.lane.b32.xlu0 %v2999, 127
    %v3019 = vpop.permute.xlu0 %3018
    %3020 = vrot.lane.b32.xlu0 %v3000, 127
    %v3021 = vpop.permute.xlu0 %3020
    %3022 = vrot.lane.b32.xlu0 %v3001, 127
    %v3023 = vpop.permute.xlu0 %3022
    %3024 = vrot.lane.b32.xlu0 %v3002, 127
    %v3025 = vpop.permute.xlu0 %3024
    %3026 = vrot.lane.b32.xlu0 %v3003, 127
    %v3027 = vpop.permute.xlu0 %3026
    %v3028 = vsel %vm92, %v3013, %v3015
    %v3029 = vsel %vm92, %v3017, %v3019
    %v3030 = vsel %vm92, %v3021, %v3023
    %v3031 = vsel %vm92, %v3025, %v3027
    %v3040 = vmax.f32 %v2996, %v3028
    %v3041 = vmax.f32 %v2997, %v3015
    %v3042 = vmax.f32 %v2998, %v3029
    %v3043 = vmax.f32 %v2999, %v3019
    %v3044 = vmax.f32 %v3000, %v3030
    %v3045 = vmax.f32 %v3001, %v3023
    %v3046 = vmax.f32 %v3002, %v3031
    %v3047 = vmax.f32 %v3003, %v3027
    %3056 = vrot.lane.b32.xlu0 %v3040, 110
    %v3057 = vpop.permute.xlu0 %3056
    %3058 = vrot.lane.b32.xlu0 %v3041, 110
    %v3059 = vpop.permute.xlu0 %3058
    %3060 = vrot.lane.b32.xlu0 %v3042, 110
    %v3061 = vpop.permute.xlu0 %3060
    %3062 = vrot.lane.b32.xlu0 %v3043, 110
    %v3063 = vpop.permute.xlu0 %3062
    %3064 = vrot.lane.b32.xlu0 %v3044, 110
    %v3065 = vpop.permute.xlu0 %3064
    %3066 = vrot.lane.b32.xlu0 %v3045, 110
    %v3067 = vpop.permute.xlu0 %3066
    %3068 = vrot.lane.b32.xlu0 %v3046, 110
    %v3069 = vpop.permute.xlu0 %3068
    %3070 = vrot.lane.b32.xlu0 %v3047, 110
    %v3071 = vpop.permute.xlu0 %3070
    %v3072 = vsel %vm2332, %v3057, %v3059
    %v3073 = vsel %vm2332, %v3061, %v3063
    %v3074 = vsel %vm2332, %v3065, %v3067
    %v3075 = vsel %vm2332, %v3069, %v3071
    %v3084 = vmax.f32 %v3040, %v3072
    %v3085 = vmax.f32 %v3041, %v3059
    %v3086 = vmax.f32 %v3042, %v3073
    %v3087 = vmax.f32 %v3043, %v3063
    %v3088 = vmax.f32 %v3044, %v3074
    %v3089 = vmax.f32 %v3045, %v3067
    %v3090 = vmax.f32 %v3046, %v3075
    %v3091 = vmax.f32 %v3047, %v3071
    %v3092 = vld [vmem:[%s6] sm:$0xff]
    %v3093 = vld [vmem:[%s6 + $0x8] sm:$0xff]
    %v3094 = vld [vmem:[%s6 + $0x10] sm:$0xff]
    %v3095 = vld [vmem:[%s6 + $0x18] sm:$0xff]
    %v3096 = vld [vmem:[%s6 + $0x20] sm:$0xff]
    %v3097 = vld [vmem:[%s6 + $0x28] sm:$0xff]
    %v3098 = vld [vmem:[%s6 + $0x30] sm:$0xff]
    %v3099 = vld [vmem:[%s6 + $0x38] sm:$0xff]
    %v3100 = vld [vmem:[%s6 + $0x40] sm:$0xff]
    %v3101 = vld [vmem:[%s6 + $0x48] sm:$0xff]
    %v3102 = vld [vmem:[%s6 + $0x50] sm:$0xff]
    %v3103 = vld [vmem:[%s6 + $0x58] sm:$0xff]
    %v3104 = vld [vmem:[%s6 + $0x60] sm:$0xff]
    %v3105 = vld [vmem:[%s6 + $0x68] sm:$0xff]
    %v3106 = vld [vmem:[%s6 + $0x70] sm:$0xff]
    %v3107 = vld [vmem:[%s6 + $0x78] sm:$0xff]
    %v3108 = vld [vmem:[%s6 + $0x80] sm:$0xff]
    %v3109 = vld [vmem:[%s6 + $0x88] sm:$0xff]
    %v3110 = vld [vmem:[%s6 + $0x90] sm:$0xff]
    %v3111 = vld [vmem:[%s6 + $0x98] sm:$0xff]
    %v3112 = vld [vmem:[%s6 + $0xa0] sm:$0xff]
    %v3113 = vld [vmem:[%s6 + $0xa8] sm:$0xff]
    %v3114 = vld [vmem:[%s6 + $0xb0] sm:$0xff]
    %v3115 = vld [vmem:[%s6 + $0xb8] sm:$0xff]
    %v3116 = vld [vmem:[%s6 + $0xc0] sm:$0xff]
    %v3117 = vld [vmem:[%s6 + $0xc8] sm:$0xff]
    %v3118 = vld [vmem:[%s6 + $0xd0] sm:$0xff]
    %v3119 = vld [vmem:[%s6 + $0xd8] sm:$0xff]
    %v3120 = vld [vmem:[%s6 + $0xe0] sm:$0x1f]
    %vm3121 = vcmask 826368
    %v3123 = vsel %vm3121, %v3085, 0
    %v3126 = vsel %vm3121, %v3087, 0
    %v3129 = vsel %vm3121, %v3089, 0
    %v3132 = vsel %vm3121, %v3091, 0
    %v3135 = vsel %vm567, %v3120, 0
    %3137 = vmatprep.subr.mxu0 0.0
    %3138 = vmatpush1.msra.mxu0 %v3092
    %3139 = vmatprep.subr.mxu0 0.0
    %3140 = vmatpush1.msra.mxu0 %v3093
    %3141 = vmatprep.subr.mxu0 0.0
    %3142 = vmatpush1.msra.mxu0 %v3094
    %3143 = vmatprep.subr.mxu0 0.0
    %3144 = vmatpush1.msra.mxu0 %v3095
    %3145 = vmatprep.subr.mxu0 0.0
    %3146 = vmatpush1.msra.mxu0 %v3096
    %3147 = vmatprep.subr.mxu0 0.0
    %3148 = vmatpush1.msra.mxu0 %v3097
    %3149 = vmatprep.subr.mxu0 0.0
    %3150 = vmatpush1.msra.mxu0 %v3098
    %3151 = vmatprep.subr.mxu0 0.0
    %3152 = vmatpush1.msra.mxu0 %v3099
    %3153 = vmatprep.subr.mxu0 0.0
    %3154 = vmatpush1.msra.mxu0 %v3100
    %3155 = vmatprep.subr.mxu0 0.0
    %3156 = vmatpush1.msra.mxu0 %v3101
    %3157 = vmatprep.subr.mxu0 0.0
    %3158 = vmatpush1.msra.mxu0 %v3102
    %3159 = vmatprep.subr.mxu0 0.0
    %3160 = vmatpush1.msra.mxu0 %v3103
    %3161 = vmatprep.subr.mxu0 0.0
    %3162 = vmatpush1.msra.mxu0 %v3104
    %3163 = vmatprep.subr.mxu0 0.0
    %3164 = vmatpush1.msra.mxu0 %v3105
    %3165 = vmatprep.subr.mxu0 0.0
    %3166 = vmatpush1.msra.mxu0 %v3106
    %3167 = vmatprep.subr.mxu0 0.0
    %3168 = vmatpush1.msra.mxu0 %v3107
    %3169 = vmatprep.subr.mxu0 0.0
    %3170 = vmatpush1.msra.mxu0 %v3108
    %3171 = vmatprep.subr.mxu0 0.0
    %3172 = vmatpush1.msra.mxu0 %v3109
    %3173 = vmatprep.subr.mxu0 0.0
    %3174 = vmatpush1.msra.mxu0 %v3110
    %3175 = vmatprep.subr.mxu0 0.0
    %3176 = vmatpush1.msra.mxu0 %v3111
    %3177 = vmatprep.subr.mxu0 0.0
    %3178 = vmatpush1.msra.mxu0 %v3112
    %3179 = vmatprep.subr.mxu0 0.0
    %3180 = vmatpush1.msra.mxu0 %v3113
    %3181 = vmatprep.subr.mxu0 0.0
    %3182 = vmatpush1.msra.mxu0 %v3114
    %3183 = vmatprep.subr.mxu0 0.0
    %3184 = vmatpush1.msra.mxu0 %v3115
    %3185 = vmatprep.subr.mxu0 0.0
    %3186 = vmatpush1.msra.mxu0 %v3116
    %3187 = vmatprep.subr.mxu0 0.0
    %3188 = vmatpush1.msra.mxu0 %v3117
    %3189 = vmatprep.subr.mxu0 0.0
    %3190 = vmatpush1.msra.mxu0 %v3118
    %3191 = vmatprep.subr.mxu0 0.0
    %3192 = vmatpush1.msra.mxu0 %v3119
    %3193 = vmatprep.subr.mxu0 0.0
    %3194 = vmatpush1.msra.mxu0 %v3135
    %3195 = vmatprep.subr.mxu0 0.0
    %3196 = vmatpush1.msra.mxu0 0.0
    %3197 = vmatprep.subr.mxu0 0.0
    %3198 = vmatpush1.msra.mxu0 0.0
    %3199 = vmatprep.subr.mxu0 0.0
    %3200 = vmatpush1.msra.mxu0 0.0
    %3201 = vmatprep.mubr.f32.mxu0 %v3123
    %3202 = vmatmul.mubr.f32.gmra.mrb[0].mxu0 %v3084
    %v3203 = vpop.f32.mrb[0].mxu0
    %v3204 = vadd.f32 0.0, %v3203
    %v3205 = vpop.f32.mrb[0].mxu0
    %3206 = vmatprep.mubr.f32.mxu0 %v3126
    %3207 = vmatmul.mubr.f32.gmra.mrb[0].mxu0 %v3086
    %v3208 = vpop.f32.mrb[0].mxu0
    %v3209 = vadd.f32 0.0, %v3208
    %v3210 = vpop.f32.mrb[0].mxu0
    %3211 = vmatprep.mubr.f32.mxu0 %v3129
    %3212 = vmatmul.mubr.f32.gmra.mrb[0].mxu0 %v3088
    %v3213 = vpop.f32.mrb[0].mxu0
    %v3214 = vadd.f32 0.0, %v3213
    %v3215 = vpop.f32.mrb[0].mxu0
    %3216 = vmatprep.mubr.f32.mxu0 %v3132
    %3217 = vmatmul.mubr.f32.gmra.mrb[0].mxu0 %v3090
    %v3218 = vpop.f32.mrb[0].mxu0
    %v3219 = vadd.f32 0.0, %v3218
    %v3220 = vpop.f32.mrb[0].mxu0
    %3221 = vdwg.mxu0
    %vm3222 = vcmask 400384
    %3223 = vst.msk [vmem:[#allocation2] sm:$0xff] %vm3222, %v3204
    %3224 = vst.msk [vmem:[#allocation2 + $0x8] sm:$0xff] %vm3222, %v3209
    %3225 = vst.msk [vmem:[#allocation2 + $0x10] sm:$0xff] %vm3222, %v3214
    %3226 = vst.msk [vmem:[#allocation2 + $0x18] sm:$0xff] %vm3222, %v3219
    %v3227 = vlaneseq
    %v3228 = vshrl.u32 %v3227, 7
    %v3229 = vsub.s32 1, %v3228
    %v3230 = vrot.slane %v39, %v3229
    %v3231 = vlaneseq
    %v3232 = vshrl.u32 %v3231, 7
    %v3233 = vsub.s32 3, %v3232
    %v3234 = vrot.slane %v39, %v3233
    %v3235 = vlaneseq
    %v3236 = vshrl.u32 %v3235, 7
    %v3237 = vsub.s32 5, %v3236
    %v3238 = vrot.slane %v39, %v3237
    %v3239 = vlaneseq
    %v3240 = vshrl.u32 %v3239, 7
    %v3241 = vsub.s32 7, %v3240
    %v3242 = vrot.slane %v39, %v3241
    %v3243 = vlaneseq
    %v3244 = vshrl.u32 %v3243, 7
    %v3245 = vsub.s32 1, %v3244
    %v3246 = vrot.slane %v40, %v3245
    %v3247 = vlaneseq
    %v3248 = vshrl.u32 %v3247, 7
    %v3249 = vsub.s32 3, %v3248
    %v3250 = vrot.slane %v40, %v3249
    %v3251 = vlaneseq
    %v3252 = vshrl.u32 %v3251, 7
    %v3253 = vsub.s32 5, %v3252
    %v3254 = vrot.slane %v40, %v3253
    %3262 = vrot.lane.b32.xlu0 %v3230, 127
    %v3263 = vpop.permute.xlu0 %3262
    %3264 = vrot.lane.b32.xlu0 %v3234, 127
    %v3265 = vpop.permute.xlu0 %3264
    %3266 = vrot.lane.b32.xlu0 %v3238, 127
    %v3267 = vpop.permute.xlu0 %3266
    %3268 = vrot.lane.b32.xlu0 %v3242, 127
    %v3269 = vpop.permute.xlu0 %3268
    %3270 = vrot.lane.b32.xlu0 %v3246, 127
    %v3271 = vpop.permute.xlu0 %3270
    %3272 = vrot.lane.b32.xlu0 %v3250, 127
    %v3273 = vpop.permute.xlu0 %3272
    %3274 = vrot.lane.b32.xlu0 %v3254, 127
    %v3275 = vpop.permute.xlu0 %3274
    %v3276 = vsel %vm92, %v3263, %v3265
    %v3277 = vsel %vm92, %v3265, %v3267
    %v3278 = vsel %vm92, %v3267, %v3269
    %v3279 = vsel %vm92, %v3269, %v3271
    %v3280 = vsel %vm92, %v3271, %v3273
    %v3281 = vsel %vm92, %v3273, %v3275
    %3289 = vrot.lane.b32.xlu0 %v3230, 126
    %v3290 = vpop.permute.xlu0 %3289
    %3291 = vrot.lane.b32.xlu0 %v3234, 126
    %v3292 = vpop.permute.xlu0 %3291
    %3293 = vrot.lane.b32.xlu0 %v3238, 126
    %v3294 = vpop.permute.xlu0 %3293
    %3295 = vrot.lane.b32.xlu0 %v3242, 126
    %v3296 = vpop.permute.xlu0 %3295
    %3297 = vrot.lane.b32.xlu0 %v3246, 126
    %v3298 = vpop.permute.xlu0 %3297
    %3299 = vrot.lane.b32.xlu0 %v3250, 126
    %v3300 = vpop.permute.xlu0 %3299
    %3301 = vrot.lane.b32.xlu0 %v3254, 126
    %v3302 = vpop.permute.xlu0 %3301
    %v3303 = vsel %vm120, %v3290, %v3292
    %v3304 = vsel %vm120, %v3292, %v3294
    %v3305 = vsel %vm120, %v3294, %v3296
    %v3306 = vsel %vm120, %v3296, %v3298
    %v3307 = vsel %vm120, %v3298, %v3300
    %v3308 = vsel %vm120, %v3300, %v3302
    %3316 = vrot.lane.b32.xlu0 %v3230, 125
    %v3317 = vpop.permute.xlu0 %3316
    %3318 = vrot.lane.b32.xlu0 %v3234, 125
    %v3319 = vpop.permute.xlu0 %3318
    %3320 = vrot.lane.b32.xlu0 %v3238, 125
    %v3321 = vpop.permute.xlu0 %3320
    %3322 = vrot.lane.b32.xlu0 %v3242, 125
    %v3323 = vpop.permute.xlu0 %3322
    %3324 = vrot.lane.b32.xlu0 %v3246, 125
    %v3325 = vpop.permute.xlu0 %3324
    %3326 = vrot.lane.b32.xlu0 %v3250, 125
    %v3327 = vpop.permute.xlu0 %3326
    %3328 = vrot.lane.b32.xlu0 %v3254, 125
    %v3329 = vpop.permute.xlu0 %3328
    %v3330 = vsel %vm148, %v3317, %v3319
    %v3331 = vsel %vm148, %v3319, %v3321
    %v3332 = vsel %vm148, %v3321, %v3323
    %v3333 = vsel %vm148, %v3323, %v3325
    %v3334 = vsel %vm148, %v3325, %v3327
    %v3335 = vsel %vm148, %v3327, %v3329
    %3343 = vrot.lane.b32.xlu0 %v3230, 124
    %v3344 = vpop.permute.xlu0 %3343
    %3345 = vrot.lane.b32.xlu0 %v3234, 124
    %v3346 = vpop.permute.xlu0 %3345
    %3347 = vrot.lane.b32.xlu0 %v3238, 124
    %v3348 = vpop.permute.xlu0 %3347
    %3349 = vrot.lane.b32.xlu0 %v3242, 124
    %v3350 = vpop.permute.xlu0 %3349
    %3351 = vrot.lane.b32.xlu0 %v3246, 124
    %v3352 = vpop.permute.xlu0 %3351
    %3353 = vrot.lane.b32.xlu0 %v3250, 124
    %v3354 = vpop.permute.xlu0 %3353
    %3355 = vrot.lane.b32.xlu0 %v3254, 124
    %v3356 = vpop.permute.xlu0 %3355
    %v3357 = vsel %vm176, %v3344, %v3346
    %v3358 = vsel %vm176, %v3346, %v3348
    %v3359 = vsel %vm176, %v3348, %v3350
    %v3360 = vsel %vm176, %v3350, %v3352
    %v3361 = vsel %vm176, %v3352, %v3354
    %v3362 = vsel %vm176, %v3354, %v3356
    %v3370 = vlaneseq
    %v3371 = vshrl.u32 %v3370, 7
    %v3372 = vsub.s32 7, %v3371
    %v3373 = vrot.slane %v40, %v3372
    %3374 = vrot.lane.b32.xlu0 %v3230, 96
    %v3375 = vpop.permute.xlu0 %3374
    %3376 = vrot.lane.b32.xlu0 %v3234, 96
    %v3377 = vpop.permute.xlu0 %3376
    %3378 = vrot.lane.b32.xlu0 %v3238, 96
    %v3379 = vpop.permute.xlu0 %3378
    %3380 = vrot.lane.b32.xlu0 %v3242, 96
    %v3381 = vpop.permute.xlu0 %3380
    %3382 = vrot.lane.b32.xlu0 %v3246, 96
    %v3383 = vpop.permute.xlu0 %3382
    %3384 = vrot.lane.b32.xlu0 %v3250, 96
    %v3385 = vpop.permute.xlu0 %3384
    %3386 = vrot.lane.b32.xlu0 %v3254, 96
    %v3387 = vpop.permute.xlu0 %3386
    %3388 = vrot.lane.b32.xlu0 %v3373, 96
    %v3389 = vpop.permute.xlu0 %3388
    %v3390 = vsel %vm210, %v3375, %v3377
    %v3391 = vsel %vm210, %v3377, %v3379
    %v3392 = vsel %vm210, %v3379, %v3381
    %v3393 = vsel %vm210, %v3381, %v3383
    %v3394 = vsel %vm210, %v3383, %v3385
    %v3395 = vsel %vm210, %v3385, %v3387
    %v3396 = vsel %vm210, %v3387, %v3389
    %3404 = vrot.lane.b32.xlu0 %v3230, 95
    %v3405 = vpop.permute.xlu0 %3404
    %3406 = vrot.lane.b32.xlu0 %v3234, 95
    %v3407 = vpop.permute.xlu0 %3406
    %3408 = vrot.lane.b32.xlu0 %v3238, 95
    %v3409 = vpop.permute.xlu0 %3408
    %3410 = vrot.lane.b32.xlu0 %v3242, 95
    %v3411 = vpop.permute.xlu0 %3410
    %3412 = vrot.lane.b32.xlu0 %v3246, 95
    %v3413 = vpop.permute.xlu0 %3412
    %3414 = vrot.lane.b32.xlu0 %v3250, 95
    %v3415 = vpop.permute.xlu0 %3414
    %3416 = vrot.lane.b32.xlu0 %v3254, 95
    %v3417 = vpop.permute.xlu0 %3416
    %3418 = vrot.lane.b32.xlu0 %v3373, 95
    %v3419 = vpop.permute.xlu0 %3418
    %v3420 = vsel %vm241, %v3405, %v3407
    %v3421 = vsel %vm241, %v3407, %v3409
    %v3422 = vsel %vm241, %v3409, %v3411
    %v3423 = vsel %vm241, %v3411, %v3413
    %v3424 = vsel %vm241, %v3413, %v3415
    %v3425 = vsel %vm241, %v3415, %v3417
    %v3426 = vsel %vm241, %v3417, %v3419
    %3434 = vrot.lane.b32.xlu0 %v3230, 94
    %v3435 = vpop.permute.xlu0 %3434
    %3436 = vrot.lane.b32.xlu0 %v3234, 94
    %v3437 = vpop.permute.xlu0 %3436
    %3438 = vrot.lane.b32.xlu0 %v3238, 94
    %v3439 = vpop.permute.xlu0 %3438
    %3440 = vrot.lane.b32.xlu0 %v3242, 94
    %v3441 = vpop.permute.xlu0 %3440
    %3442 = vrot.lane.b32.xlu0 %v3246, 94
    %v3443 = vpop.permute.xlu0 %3442
    %3444 = vrot.lane.b32.xlu0 %v3250, 94
    %v3445 = vpop.permute.xlu0 %3444
    %3446 = vrot.lane.b32.xlu0 %v3254, 94
    %v3447 = vpop.permute.xlu0 %3446
    %3448 = vrot.lane.b32.xlu0 %v3373, 94
    %v3449 = vpop.permute.xlu0 %3448
    %v3450 = vsel %vm272, %v3435, %v3437
    %v3451 = vsel %vm272, %v3437, %v3439
    %v3452 = vsel %vm272, %v3439, %v3441
    %v3453 = vsel %vm272, %v3441, %v3443
    %v3454 = vsel %vm272, %v3443, %v3445
    %v3455 = vsel %vm272, %v3445, %v3447
    %v3456 = vsel %vm272, %v3447, %v3449
    %3464 = vrot.lane.b32.xlu0 %v3230, 93
    %v3465 = vpop.permute.xlu0 %3464
    %3466 = vrot.lane.b32.xlu0 %v3234, 93
    %v3467 = vpop.permute.xlu0 %3466
    %3468 = vrot.lane.b32.xlu0 %v3238, 93
    %v3469 = vpop.permute.xlu0 %3468
    %3470 = vrot.lane.b32.xlu0 %v3242, 93
    %v3471 = vpop.permute.xlu0 %3470
    %3472 = vrot.lane.b32.xlu0 %v3246, 93
    %v3473 = vpop.permute.xlu0 %3472
    %3474 = vrot.lane.b32.xlu0 %v3250, 93
    %v3475 = vpop.permute.xlu0 %3474
    %3476 = vrot.lane.b32.xlu0 %v3254, 93
    %v3477 = vpop.permute.xlu0 %3476
    %3478 = vrot.lane.b32.xlu0 %v3373, 93
    %v3479 = vpop.permute.xlu0 %3478
    %v3480 = vsel %vm303, %v3465, %v3467
    %v3481 = vsel %vm303, %v3467, %v3469
    %v3482 = vsel %vm303, %v3469, %v3471
    %v3483 = vsel %vm303, %v3471, %v3473
    %v3484 = vsel %vm303, %v3473, %v3475
    %v3485 = vsel %vm303, %v3475, %v3477
    %v3486 = vsel %vm303, %v3477, %v3479
    %3494 = vrot.lane.b32.xlu0 %v3230, 92
    %v3495 = vpop.permute.xlu0 %3494
    %3496 = vrot.lane.b32.xlu0 %v3234, 92
    %v3497 = vpop.permute.xlu0 %3496
    %3498 = vrot.lane.b32.xlu0 %v3238, 92
    %v3499 = vpop.permute.xlu0 %3498
    %3500 = vrot.lane.b32.xlu0 %v3242, 92
    %v3501 = vpop.permute.xlu0 %3500
    %3502 = vrot.lane.b32.xlu0 %v3246, 92
    %v3503 = vpop.permute.xlu0 %3502
    %3504 = vrot.lane.b32.xlu0 %v3250, 92
    %v3505 = vpop.permute.xlu0 %3504
    %3506 = vrot.lane.b32.xlu0 %v3254, 92
    %v3507 = vpop.permute.xlu0 %3506
    %3508 = vrot.lane.b32.xlu0 %v3373, 92
    %v3509 = vpop.permute.xlu0 %3508
    %v3510 = vsel %vm334, %v3495, %v3497
    %v3511 = vsel %vm334, %v3497, %v3499
    %v3512 = vsel %vm334, %v3499, %v3501
    %v3513 = vsel %vm334, %v3501, %v3503
    %v3514 = vsel %vm334, %v3503, %v3505
    %v3515 = vsel %vm334, %v3505, %v3507
    %v3516 = vsel %vm334, %v3507, %v3509
    %3524 = vrot.lane.b32.xlu0 %v3230, 64
    %v3525 = vpop.permute.xlu0 %3524
    %3526 = vrot.lane.b32.xlu0 %v3234, 64
    %v3527 = vpop.permute.xlu0 %3526
    %3528 = vrot.lane.b32.xlu0 %v3238, 64
    %v3529 = vpop.permute.xlu0 %3528
    %3530 = vrot.lane.b32.xlu0 %v3242, 64
    %v3531 = vpop.permute.xlu0 %3530
    %3532 = vrot.lane.b32.xlu0 %v3246, 64
    %v3533 = vpop.permute.xlu0 %3532
    %3534 = vrot.lane.b32.xlu0 %v3250, 64
    %v3535 = vpop.permute.xlu0 %3534
    %3536 = vrot.lane.b32.xlu0 %v3254, 64
    %v3537 = vpop.permute.xlu0 %3536
    %3538 = vrot.lane.b32.xlu0 %v3373, 64
    %v3539 = vpop.permute.xlu0 %3538
    %v3540 = vsel %vm365, %v3525, %v3527
    %v3541 = vsel %vm365, %v3527, %v3529
    %v3542 = vsel %vm365, %v3529, %v3531
    %v3543 = vsel %vm365, %v3531, %v3533
    %v3544 = vsel %vm365, %v3533, %v3535
    %v3545 = vsel %vm365, %v3535, %v3537
    %v3546 = vsel %vm365, %v3537, %v3539
    %3554 = vrot.lane.b32.xlu0 %v3230, 63
    %v3555 = vpop.permute.xlu0 %3554
    %3556 = vrot.lane.b32.xlu0 %v3234, 63
    %v3557 = vpop.permute.xlu0 %3556
    %3558 = vrot.lane.b32.xlu0 %v3238, 63
    %v3559 = vpop.permute.xlu0 %3558
    %3560 = vrot.lane.b32.xlu0 %v3242, 63
    %v3561 = vpop.permute.xlu0 %3560
    %3562 = vrot.lane.b32.xlu0 %v3246, 63
    %v3563 = vpop.permute.xlu0 %3562
    %3564 = vrot.lane.b32.xlu0 %v3250, 63
    %v3565 = vpop.permute.xlu0 %3564
    %3566 = vrot.lane.b32.xlu0 %v3254, 63
    %v3567 = vpop.permute.xlu0 %3566
    %3568 = vrot.lane.b32.xlu0 %v3373, 63
    %v3569 = vpop.permute.xlu0 %3568
    %v3570 = vsel %vm396, %v3555, %v3557
    %v3571 = vsel %vm396, %v3557, %v3559
    %v3572 = vsel %vm396, %v3559, %v3561
    %v3573 = vsel %vm396, %v3561, %v3563
    %v3574 = vsel %vm396, %v3563, %v3565
    %v3575 = vsel %vm396, %v3565, %v3567
    %v3576 = vsel %vm396, %v3567, %v3569
    %3584 = vrot.lane.b32.xlu0 %v3230, 62
    %v3585 = vpop.permute.xlu0 %3584
    %3586 = vrot.lane.b32.xlu0 %v3234, 62
    %v3587 = vpop.permute.xlu0 %3586
    %3588 = vrot.lane.b32.xlu0 %v3238, 62
    %v3589 = vpop.permute.xlu0 %3588
    %3590 = vrot.lane.b32.xlu0 %v3242, 62
    %v3591 = vpop.permute.xlu0 %3590
    %3592 = vrot.lane.b32.xlu0 %v3246, 62
    %v3593 = vpop.permute.xlu0 %3592
    %3594 = vrot.lane.b32.xlu0 %v3250, 62
    %v3595 = vpop.permute.xlu0 %3594
    %3596 = vrot.lane.b32.xlu0 %v3254, 62
    %v3597 = vpop.permute.xlu0 %3596
    %3598 = vrot.lane.b32.xlu0 %v3373, 62
    %v3599 = vpop.permute.xlu0 %3598
    %v3600 = vsel %vm427, %v3585, %v3587
    %v3601 = vsel %vm427, %v3587, %v3589
    %v3602 = vsel %vm427, %v3589, %v3591
    %v3603 = vsel %vm427, %v3591, %v3593
    %v3604 = vsel %vm427, %v3593, %v3595
    %v3605 = vsel %vm427, %v3595, %v3597
    %v3606 = vsel %vm427, %v3597, %v3599
    %3614 = vrot.lane.b32.xlu0 %v3230, 61
    %v3615 = vpop.permute.xlu0 %3614
    %3616 = vrot.lane.b32.xlu0 %v3234, 61
    %v3617 = vpop.permute.xlu0 %3616
    %3618 = vrot.lane.b32.xlu0 %v3238, 61
    %v3619 = vpop.permute.xlu0 %3618
    %3620 = vrot.lane.b32.xlu0 %v3242, 61
    %v3621 = vpop.permute.xlu0 %3620
    %3622 = vrot.lane.b32.xlu0 %v3246, 61
    %v3623 = vpop.permute.xlu0 %3622
    %3624 = vrot.lane.b32.xlu0 %v3250, 61
    %v3625 = vpop.permute.xlu0 %3624
    %3626 = vrot.lane.b32.xlu0 %v3254, 61
    %v3627 = vpop.permute.xlu0 %3626
    %3628 = vrot.lane.b32.xlu0 %v3373, 61
    %v3629 = vpop.permute.xlu0 %3628
    %v3630 = vsel %vm458, %v3615, %v3617
    %v3631 = vsel %vm458, %v3617, %v3619
    %v3632 = vsel %vm458, %v3619, %v3621
    %v3633 = vsel %vm458, %v3621, %v3623
    %v3634 = vsel %vm458, %v3623, %v3625
    %v3635 = vsel %vm458, %v3625, %v3627
    %v3636 = vsel %vm458, %v3627, %v3629
    %3644 = vrot.lane.b32.xlu0 %v3230, 60
    %v3645 = vpop.permute.xlu0 %3644
    %3646 = vrot.lane.b32.xlu0 %v3234, 60
    %v3647 = vpop.permute.xlu0 %3646
    %3648 = vrot.lane.b32.xlu0 %v3238, 60
    %v3649 = vpop.permute.xlu0 %3648
    %3650 = vrot.lane.b32.xlu0 %v3242, 60
    %v3651 = vpop.permute.xlu0 %3650
    %3652 = vrot.lane.b32.xlu0 %v3246, 60
    %v3653 = vpop.permute.xlu0 %3652
    %3654 = vrot.lane.b32.xlu0 %v3250, 60
    %v3655 = vpop.permute.xlu0 %3654
    %3656 = vrot.lane.b32.xlu0 %v3254, 60
    %v3657 = vpop.permute.xlu0 %3656
    %3658 = vrot.lane.b32.xlu0 %v3373, 60
    %v3659 = vpop.permute.xlu0 %3658
    %v3660 = vsel %vm489, %v3645, %v3647
    %v3661 = vsel %vm489, %v3647, %v3649
    %v3662 = vsel %vm489, %v3649, %v3651
    %v3663 = vsel %vm489, %v3651, %v3653
    %v3664 = vsel %vm489, %v3653, %v3655
    %v3665 = vsel %vm489, %v3655, %v3657
    %v3666 = vsel %vm489, %v3657, %v3659
    %3674 = vrot.lane.b32.xlu0 %v3230, 32
    %v3675 = vpop.permute.xlu0 %3674
    %3676 = vrot.lane.b32.xlu0 %v3234, 32
    %v3677 = vpop.permute.xlu0 %3676
    %3678 = vrot.lane.b32.xlu0 %v3238, 32
    %v3679 = vpop.permute.xlu0 %3678
    %3680 = vrot.lane.b32.xlu0 %v3242, 32
    %v3681 = vpop.permute.xlu0 %3680
    %3682 = vrot.lane.b32.xlu0 %v3246, 32
    %v3683 = vpop.permute.xlu0 %3682
    %3684 = vrot.lane.b32.xlu0 %v3250, 32
    %v3685 = vpop.permute.xlu0 %3684
    %3686 = vrot.lane.b32.xlu0 %v3254, 32
    %v3687 = vpop.permute.xlu0 %3686
    %3688 = vrot.lane.b32.xlu0 %v3373, 32
    %v3689 = vpop.permute.xlu0 %3688
    %v3690 = vsel %vm520, %v3675, %v3677
    %v3691 = vsel %vm520, %v3677, %v3679
    %v3692 = vsel %vm520, %v3679, %v3681
    %v3693 = vsel %vm520, %v3681, %v3683
    %v3694 = vsel %vm520, %v3683, %v3685
    %v3695 = vsel %vm520, %v3685, %v3687
    %v3696 = vsel %vm520, %v3687, %v3689
    %v3704 = vsel %vm535, %v3230, %v3276
    %v3705 = vsel %vm535, %v3234, %v3277
    %v3706 = vsel %vm535, %v3238, %v3278
    %v3707 = vsel %vm535, %v3242, %v3279
    %v3708 = vsel %vm535, %v3246, %v3280
    %v3709 = vsel %vm535, %v3250, %v3281
    %v3710 = vsel %vm535, %v3254, %v3275
    %v3711 = vsel %vm543, %v3704, %v3303
    %v3712 = vsel %vm543, %v3705, %v3304
    %v3713 = vsel %vm543, %v3706, %v3305
    %v3714 = vsel %vm543, %v3707, %v3306
    %v3715 = vsel %vm543, %v3708, %v3307
    %v3716 = vsel %vm543, %v3709, %v3308
    %v3717 = vsel %vm543, %v3710, %v3302
    %v3718 = vsel %vm551, %v3711, %v3330
    %v3719 = vsel %vm551, %v3712, %v3331
    %v3720 = vsel %vm551, %v3713, %v3332
    %v3721 = vsel %vm551, %v3714, %v3333
    %v3722 = vsel %vm551, %v3715, %v3334
    %v3723 = vsel %vm551, %v3716, %v3335
    %v3724 = vsel %vm551, %v3717, %v3329
    %v3725 = vsel %vm559, %v3718, %v3357
    %v3726 = vsel %vm559, %v3719, %v3358
    %v3727 = vsel %vm559, %v3720, %v3359
    %v3728 = vsel %vm559, %v3721, %v3360
    %v3729 = vsel %vm559, %v3722, %v3361
    %v3730 = vsel %vm559, %v3723, %v3362
    %v3731 = vsel %vm559, %v3724, %v3356
    %v3732 = vsel %vm567, %v3725, %v3390
    %v3733 = vsel %vm567, %v3726, %v3391
    %v3734 = vsel %vm567, %v3727, %v3392
    %v3735 = vsel %vm567, %v3728, %v3393
    %v3736 = vsel %vm567, %v3729, %v3394
    %v3737 = vsel %vm567, %v3730, %v3395
    %v3738 = vsel %vm567, %v3731, %v3396
    %v3739 = vsel %vm575, %v3732, %v3420
    %v3740 = vsel %vm575, %v3733, %v3421
    %v3741 = vsel %vm575, %v3734, %v3422
    %v3742 = vsel %vm575, %v3735, %v3423
    %v3743 = vsel %vm575, %v3736, %v3424
    %v3744 = vsel %vm575, %v3737, %v3425
    %v3745 = vsel %vm575, %v3738, %v3426
    %v3746 = vsel %vm583, %v3739, %v3450
    %v3747 = vsel %vm583, %v3740, %v3451
    %v3748 = vsel %vm583, %v3741, %v3452
    %v3749 = vsel %vm583, %v3742, %v3453
    %v3750 = vsel %vm583, %v3743, %v3454
    %v3751 = vsel %vm583, %v3744, %v3455
    %v3752 = vsel %vm583, %v3745, %v3456
    %v3753 = vsel %vm535, %v3480, %v3510
    %v3754 = vsel %vm535, %v3481, %v3511
    %v3755 = vsel %vm535, %v3482, %v3512
    %v3756 = vsel %vm535, %v3483, %v3513
    %v3757 = vsel %vm535, %v3484, %v3514
    %v3758 = vsel %vm535, %v3485, %v3515
    %v3759 = vsel %vm535, %v3486, %v3516
    %v3760 = vsel %vm543, %v3753, %v3540
    %v3761 = vsel %vm543, %v3754, %v3541
    %v3762 = vsel %vm543, %v3755, %v3542
    %v3763 = vsel %vm543, %v3756, %v3543
    %v3764 = vsel %vm543, %v3757, %v3544
    %v3765 = vsel %vm543, %v3758, %v3545
    %v3766 = vsel %vm543, %v3759, %v3546
    %v3767 = vsel %vm551, %v3760, %v3570
    %v3768 = vsel %vm551, %v3761, %v3571
    %v3769 = vsel %vm551, %v3762, %v3572
    %v3770 = vsel %vm551, %v3763, %v3573
    %v3771 = vsel %vm551, %v3764, %v3574
    %v3772 = vsel %vm551, %v3765, %v3575
    %v3773 = vsel %vm551, %v3766, %v3576
    %v3774 = vsel %vm559, %v3767, %v3600
    %v3775 = vsel %vm559, %v3768, %v3601
    %v3776 = vsel %vm559, %v3769, %v3602
    %v3777 = vsel %vm559, %v3770, %v3603
    %v3778 = vsel %vm559, %v3771, %v3604
    %v3779 = vsel %vm559, %v3772, %v3605
    %v3780 = vsel %vm559, %v3773, %v3606
    %v3781 = vsel %vm567, %v3774, %v3630
    %v3782 = vsel %vm567, %v3775, %v3631
    %v3783 = vsel %vm567, %v3776, %v3632
    %v3784 = vsel %vm567, %v3777, %v3633
    %v3785 = vsel %vm567, %v3778, %v3634
    %v3786 = vsel %vm567, %v3779, %v3635
    %v3787 = vsel %vm567, %v3780, %v3636
    %v3788 = vsel %vm575, %v3781, %v3660
    %v3789 = vsel %vm575, %v3782, %v3661
    %v3790 = vsel %vm575, %v3783, %v3662
    %v3791 = vsel %vm575, %v3784, %v3663
    %v3792 = vsel %vm575, %v3785, %v3664
    %v3793 = vsel %vm575, %v3786, %v3665
    %v3794 = vsel %vm575, %v3787, %v3666
    %v3795 = vsel %vm583, %v3788, %v3690
    %v3796 = vsel %vm583, %v3789, %v3691
    %v3797 = vsel %vm583, %v3790, %v3692
    %v3798 = vsel %vm583, %v3791, %v3693
    %v3799 = vsel %vm583, %v3792, %v3694
    %v3800 = vsel %vm583, %v3793, %v3695
    %v3801 = vsel %vm583, %v3794, %v3696
    %3803 = vrot.lane.b32.xlu0 %v3373, 127
    %v3804 = vpop.permute.xlu0 %3803
    %v3805 = vsel %vm92, %v3275, %v3804
    %3808 = vrot.lane.b32.xlu0 %v3373, 126
    %v3809 = vpop.permute.xlu0 %3808
    %v3810 = vsel %vm120, %v3302, %v3809
    %3813 = vrot.lane.b32.xlu0 %v3373, 125
    %v3814 = vpop.permute.xlu0 %3813
    %v3815 = vsel %vm148, %v3329, %v3814
    %3818 = vrot.lane.b32.xlu0 %v3234, 97
    %v3819 = vpop.permute.xlu0 %3818
    %3820 = vrot.lane.b32.xlu0 %v3238, 97
    %v3821 = vpop.permute.xlu0 %3820
    %3822 = vrot.lane.b32.xlu0 %v3242, 97
    %v3823 = vpop.permute.xlu0 %3822
    %3824 = vrot.lane.b32.xlu0 %v3246, 97
    %v3825 = vpop.permute.xlu0 %3824
    %3826 = vrot.lane.b32.xlu0 %v3250, 97
    %v3827 = vpop.permute.xlu0 %3826
    %3828 = vrot.lane.b32.xlu0 %v3254, 97
    %v3829 = vpop.permute.xlu0 %3828
    %3830 = vrot.lane.b32.xlu0 %v3373, 97
    %v3831 = vpop.permute.xlu0 %3830
    %v3832 = vsel %vm670, %v3819, %v3821
    %v3833 = vsel %vm670, %v3821, %v3823
    %v3834 = vsel %vm670, %v3823, %v3825
    %v3835 = vsel %vm670, %v3825, %v3827
    %v3836 = vsel %vm670, %v3827, %v3829
    %v3837 = vsel %vm670, %v3829, %v3831
    %v3852 = vsel %vm535, %v3254, %v3805
    %v3853 = vsel %vm535, %v3373, %v3804
    %v3854 = vsel %vm543, %v3852, %v3810
    %v3855 = vsel %vm543, %v3853, %v3809
    %v3856 = vsel %vm551, %v3854, %v3815
    %v3857 = vsel %vm551, %v3855, %v3814
    %v3858 = vsel %vm559, %v3718, %v3819
    %v3859 = vsel %vm559, %v3719, %v3832
    %v3860 = vsel %vm559, %v3720, %v3833
    %v3861 = vsel %vm559, %v3721, %v3834
    %v3862 = vsel %vm559, %v3722, %v3835
    %v3863 = vsel %vm559, %v3723, %v3836
    %v3864 = vsel %vm559, %v3856, %v3837
    %v3865 = vsel %vm559, %v3857, %v3831
    %v3866 = vsel %vm567, %v3858, %v3377
    %v3867 = vsel %vm567, %v3859, %v3391
    %v3868 = vsel %vm567, %v3860, %v3392
    %v3869 = vsel %vm567, %v3861, %v3393
    %v3870 = vsel %vm567, %v3862, %v3394
    %v3871 = vsel %vm567, %v3863, %v3395
    %v3872 = vsel %vm567, %v3864, %v3396
    %v3873 = vsel %vm567, %v3865, %v3389
    %v3874 = vsel %vm575, %v3866, %v3407
    %v3875 = vsel %vm575, %v3867, %v3421
    %v3876 = vsel %vm575, %v3868, %v3422
    %v3877 = vsel %vm575, %v3869, %v3423
    %v3878 = vsel %vm575, %v3870, %v3424
    %v3879 = vsel %vm575, %v3871, %v3425
    %v3880 = vsel %vm575, %v3872, %v3426
    %v3881 = vsel %vm575, %v3873, %v3419
    %v3882 = vsel %vm583, %v3874, %v3437
    %v3883 = vsel %vm583, %v3875, %v3451
    %v3884 = vsel %vm583, %v3876, %v3452
    %v3885 = vsel %vm583, %v3877, %v3453
    %v3886 = vsel %vm583, %v3878, %v3454
    %v3887 = vsel %vm583, %v3879, %v3455
    %v3888 = vsel %vm583, %v3880, %v3456
    %v3889 = vsel %vm583, %v3881, %v3449
    %3898 = vrot.lane.b32.xlu0 %v3882, 31
    %v3899 = vpop.permute.xlu0 %3898
    %3900 = vrot.lane.b32.xlu0 %v3883, 31
    %v3901 = vpop.permute.xlu0 %3900
    %3902 = vrot.lane.b32.xlu0 %v3884, 31
    %v3903 = vpop.permute.xlu0 %3902
    %3904 = vrot.lane.b32.xlu0 %v3885, 31
    %v3905 = vpop.permute.xlu0 %3904
    %3906 = vrot.lane.b32.xlu0 %v3886, 31
    %v3907 = vpop.permute.xlu0 %3906
    %3908 = vrot.lane.b32.xlu0 %v3887, 31
    %v3909 = vpop.permute.xlu0 %3908
    %3910 = vrot.lane.b32.xlu0 %v3888, 31
    %v3911 = vpop.permute.xlu0 %3910
    %3912 = vrot.lane.b32.xlu0 %v3889, 31
    %v3913 = vpop.permute.xlu0 %3912
    %3914 = vrot.lane.b32.xlu0 %v3467, 31
    %v3915 = vpop.permute.xlu0 %3914
    %3916 = vrot.lane.b32.xlu0 %v3481, 31
    %v3917 = vpop.permute.xlu0 %3916
    %3918 = vrot.lane.b32.xlu0 %v3482, 31
    %v3919 = vpop.permute.xlu0 %3918
    %3920 = vrot.lane.b32.xlu0 %v3483, 31
    %v3921 = vpop.permute.xlu0 %3920
    %3922 = vrot.lane.b32.xlu0 %v3484, 31
    %v3923 = vpop.permute.xlu0 %3922
    %3924 = vrot.lane.b32.xlu0 %v3485, 31
    %v3925 = vpop.permute.xlu0 %3924
    %3926 = vrot.lane.b32.xlu0 %v3486, 31
    %v3927 = vpop.permute.xlu0 %3926
    %3928 = vrot.lane.b32.xlu0 %v3479, 31
    %v3929 = vpop.permute.xlu0 %3928
    %v3930 = vsel %vm769, %v3899, %v3901
    %v3931 = vsel %vm769, %v3901, %v3903
    %v3932 = vsel %vm769, %v3903, %v3905
    %v3933 = vsel %vm769, %v3905, %v3907
    %v3934 = vsel %vm769, %v3907, %v3909
    %v3935 = vsel %vm769, %v3909, %v3911
    %v3936 = vsel %vm769, %v3911, %v3913
    %v3937 = vsel %vm769, %v3915, %v3917
    %v3938 = vsel %vm769, %v3917, %v3919
    %v3939 = vsel %vm769, %v3919, %v3921
    %v3940 = vsel %vm769, %v3921, %v3923
    %v3941 = vsel %vm769, %v3923, %v3925
    %v3942 = vsel %vm769, %v3925, %v3927
    %v3943 = vsel %vm769, %v3927, %v3929
    %v3951 = vld [vmem:[%s1] sm:$0xff]
    %v3952 = vld [vmem:[%s1 + $0x8] sm:$0xff]
    %v3953 = vld [vmem:[%s2] sm:$0xff]
    %v3954 = vld [vmem:[%s2 + $0x8] sm:$0xff]
    %3956 = vset.pattern.permute.xlu0 0
    %3957 = vperm.xlu0 %3956, %v3953
    %v3958 = vpop.permute.xlu0 %3957
    %3961 = vset.pattern.permute.xlu0 0
    %3962 = vperm.xlu0 %3961, %v3954
    %v3963 = vpop.permute.xlu0 %3962
    %v3966 = vsel %vm805, %v3951, 0
    %v3969 = vsel %vm805, %v3952, 0
    %v3971 = vsel %vm535, %v3937, 0
    %v3973 = vsel %vm535, %v3938, 0
    %v3975 = vsel %vm535, %v3939, 0
    %v3977 = vsel %vm535, %v3940, 0
    %v3979 = vsel %vm535, %v3941, 0
    %v3981 = vsel %vm535, %v3942, 0
    %v3983 = vsel %vm535, %v3943, 0
    %3985 = vmatprep.subr.mxu0 %v3747
    %3986 = vmatpush1.msra.mxu0 %v3746
    %3987 = vmatprep.subr.mxu0 %v3796
    %3988 = vmatpush1.msra.mxu0 %v3795
    %3989 = vmatprep.subr.mxu0 %v3931
    %3990 = vmatpush1.msra.mxu0 %v3930
    %3991 = vmatprep.subr.mxu0 %v3973
    %3992 = vmatpush1.msra.mxu0 %v3971
    %3993 = vmatprep.subr.mxu0 0.0
    %3994 = vmatpush1.msra.mxu0 0.0
    %3995 = vmatprep.subr.mxu0 0.0
    %3996 = vmatpush1.msra.mxu0 0.0
    %3997 = vmatprep.subr.mxu0 0.0
    %3998 = vmatpush1.msra.mxu0 0.0
    %3999 = vmatprep.subr.mxu0 0.0
    %4000 = vmatpush1.msra.mxu0 0.0
    %4001 = vmatprep.subr.mxu0 0.0
    %4002 = vmatpush1.msra.mxu0 0.0
    %4003 = vmatprep.subr.mxu0 0.0
    %4004 = vmatpush1.msra.mxu0 0.0
    %4005 = vmatprep.subr.mxu0 0.0
    %4006 = vmatpush1.msra.mxu0 0.0
    %4007 = vmatprep.subr.mxu0 0.0
    %4008 = vmatpush1.msra.mxu0 0.0
    %4009 = vmatprep.subr.mxu0 0.0
    %4010 = vmatpush1.msra.mxu0 0.0
    %4011 = vmatprep.subr.mxu0 0.0
    %4012 = vmatpush1.msra.mxu0 0.0
    %4013 = vmatprep.subr.mxu0 0.0
    %4014 = vmatpush1.msra.mxu0 0.0
    %4015 = vmatprep.subr.mxu0 0.0
    %4016 = vmatpush1.msra.mxu0 0.0
    %4017 = vmatprep.subr.mxu0 0.0
    %4018 = vmatpush1.msra.mxu0 0.0
    %4019 = vmatprep.subr.mxu0 0.0
    %4020 = vmatpush1.msra.mxu0 0.0
    %4021 = vmatprep.subr.mxu0 0.0
    %4022 = vmatpush1.msra.mxu0 0.0
    %4023 = vmatprep.subr.mxu0 0.0
    %4024 = vmatpush1.msra.mxu0 0.0
    %4025 = vmatprep.subr.mxu0 0.0
    %4026 = vmatpush1.msra.mxu0 0.0
    %4027 = vmatprep.subr.mxu0 0.0
    %4028 = vmatpush1.msra.mxu0 0.0
    %4029 = vmatprep.subr.mxu0 0.0
    %4030 = vmatpush1.msra.mxu0 0.0
    %4031 = vmatprep.subr.mxu0 0.0
    %4032 = vmatpush1.msra.mxu0 0.0
    %4033 = vmatprep.subr.mxu0 0.0
    %4034 = vmatpush1.msra.mxu0 0.0
    %4035 = vmatprep.subr.mxu0 0.0
    %4036 = vmatpush1.msra.mxu0 0.0
    %4037 = vmatprep.subr.mxu0 0.0
    %4038 = vmatpush1.msra.mxu0 0.0
    %4039 = vmatprep.subr.mxu0 0.0
    %4040 = vmatpush1.msra.mxu0 0.0
    %4041 = vmatprep.subr.mxu0 0.0
    %4042 = vmatpush1.msra.mxu0 0.0
    %4043 = vmatprep.subr.mxu0 0.0
    %4044 = vmatpush1.msra.mxu0 0.0
    %4045 = vmatprep.subr.mxu0 0.0
    %4046 = vmatpush1.msra.mxu0 0.0
    %4047 = vmatprep.subr.mxu0 0.0
    %4048 = vmatpush1.msra.mxu0 0.0
    %4049 = vmatprep.mubr.f32.mxu0 0.0
    %4050 = vmatmul.mubr.f32.gmra.mrb[0].mxu0 %v3966
    %v4051 = vpop.f32.mrb[0].mxu0
    %v4052 = vadd.f32 %v3958, %v4051
    %v4053 = vpop.f32.mrb[0].mxu0
    %v4054 = vadd.f32 %v3958, %v4053
    %4055 = vmatprep.mubr.f32.mxu0 0.0
    %4056 = vmatmul.mubr.f32.gmra.mrb[0].mxu0 %v3969
    %v4057 = vpop.f32.mrb[0].mxu0
    %v4058 = vadd.f32 %v3963, %v4057
    %v4059 = vpop.f32.mrb[0].mxu0
    %v4060 = vadd.f32 %v3963, %v4059
    %4061 = vdwg.mxu0
    %4062 = vmatprep.subr.mxu0 %v3749
    %4063 = vmatpush1.msra.mxu0 %v3748
    %4064 = vmatprep.subr.mxu0 %v3798
    %4065 = vmatpush1.msra.mxu0 %v3797
    %4066 = vmatprep.subr.mxu0 %v3933
    %4067 = vmatpush1.msra.mxu0 %v3932
    %4068 = vmatprep.subr.mxu0 %v3977
    %4069 = vmatpush1.msra.mxu0 %v3975
    %4070 = vmatprep.subr.mxu0 0.0
    %4071 = vmatpush1.msra.mxu0 0.0
    %4072 = vmatprep.subr.mxu0 0.0
    %4073 = vmatpush1.msra.mxu0 0.0
    %4074 = vmatprep.subr.mxu0 0.0
    %4075 = vmatpush1.msra.mxu0 0.0
    %4076 = vmatprep.subr.mxu0 0.0
    %4077 = vmatpush1.msra.mxu0 0.0
    %4078 = vmatprep.subr.mxu0 0.0
    %4079 = vmatpush1.msra.mxu0 0.0
    %4080 = vmatprep.subr.mxu0 0.0
    %4081 = vmatpush1.msra.mxu0 0.0
    %4082 = vmatprep.subr.mxu0 0.0
    %4083 = vmatpush1.msra.mxu0 0.0
    %4084 = vmatprep.subr.mxu0 0.0
    %4085 = vmatpush1.msra.mxu0 0.0
    %4086 = vmatprep.subr.mxu0 0.0
    %4087 = vmatpush1.msra.mxu0 0.0
    %4088 = vmatprep.subr.mxu0 0.0
    %4089 = vmatpush1.msra.mxu0 0.0
    %4090 = vmatprep.subr.mxu0 0.0
    %4091 = vmatpush1.msra.mxu0 0.0
    %4092 = vmatprep.subr.mxu0 0.0
    %4093 = vmatpush1.msra.mxu0 0.0
    %4094 = vmatprep.subr.mxu0 0.0
    %4095 = vmatpush1.msra.mxu0 0.0
    %4096 = vmatprep.subr.mxu0 0.0
    %4097 = vmatpush1.msra.mxu0 0.0
    %4098 = vmatprep.subr.mxu0 0.0
    %4099 = vmatpush1.msra.mxu0 0.0
    %4100 = vmatprep.subr.mxu0 0.0
    %4101 = vmatpush1.msra.mxu0 0.0
    %4102 = vmatprep.subr.mxu0 0.0
    %4103 = vmatpush1.msra.mxu0 0.0
    %4104 = vmatprep.subr.mxu0 0.0
    %4105 = vmatpush1.msra.mxu0 0.0
    %4106 = vmatprep.subr.mxu0 0.0
    %4107 = vmatpush1.msra.mxu0 0.0
    %4108 = vmatprep.subr.mxu0 0.0
    %4109 = vmatpush1.msra.mxu0 0.0
    %4110 = vmatprep.subr.mxu0 0.0
    %4111 = vmatpush1.msra.mxu0 0.0
    %4112 = vmatprep.subr.mxu0 0.0
    %4113 = vmatpush1.msra.mxu0 0.0
    %4114 = vmatprep.subr.mxu0 0.0
    %4115 = vmatpush1.msra.mxu0 0.0
    %4116 = vmatprep.subr.mxu0 0.0
    %4117 = vmatpush1.msra.mxu0 0.0
    %4118 = vmatprep.subr.mxu0 0.0
    %4119 = vmatpush1.msra.mxu0 0.0
    %4120 = vmatprep.subr.mxu0 0.0
    %4121 = vmatpush1.msra.mxu0 0.0
    %4122 = vmatprep.subr.mxu0 0.0
    %4123 = vmatpush1.msra.mxu0 0.0
    %4124 = vmatprep.subr.mxu0 0.0
    %4125 = vmatpush1.msra.mxu0 0.0
    %4126 = vmatprep.mubr.f32.mxu0 0.0
    %4127 = vmatmul.mubr.f32.gmra.mrb[0].mxu0 %v3966
    %v4128 = vpop.f32.mrb[0].mxu0
    %v4129 = vadd.f32 %v3958, %v4128
    %v4130 = vpop.f32.mrb[0].mxu0
    %v4131 = vadd.f32 %v3958, %v4130
    %4132 = vmatprep.mubr.f32.mxu0 0.0
    %4133 = vmatmul.mubr.f32.gmra.mrb[0].mxu0 %v3969
    %v4134 = vpop.f32.mrb[0].mxu0
    %v4135 = vadd.f32 %v3963, %v4134
    %v4136 = vpop.f32.mrb[0].mxu0
    %v4137 = vadd.f32 %v3963, %v4136
    %4138 = vdwg.mxu0
    %4139 = vmatprep.subr.mxu0 %v3751
    %4140 = vmatpush1.msra.mxu0 %v3750
    %4141 = vmatprep.subr.mxu0 %v3800
    %4142 = vmatpush1.msra.mxu0 %v3799
    %4143 = vmatprep.subr.mxu0 %v3935
    %4144 = vmatpush1.msra.mxu0 %v3934
    %4145 = vmatprep.subr.mxu0 %v3981
    %4146 = vmatpush1.msra.mxu0 %v3979
    %4147 = vmatprep.subr.mxu0 0.0
    %4148 = vmatpush1.msra.mxu0 0.0
    %4149 = vmatprep.subr.mxu0 0.0
    %4150 = vmatpush1.msra.mxu0 0.0
    %4151 = vmatprep.subr.mxu0 0.0
    %4152 = vmatpush1.msra.mxu0 0.0
    %4153 = vmatprep.subr.mxu0 0.0
    %4154 = vmatpush1.msra.mxu0 0.0
    %4155 = vmatprep.subr.mxu0 0.0
    %4156 = vmatpush1.msra.mxu0 0.0
    %4157 = vmatprep.subr.mxu0 0.0
    %4158 = vmatpush1.msra.mxu0 0.0
    %4159 = vmatprep.subr.mxu0 0.0
    %4160 = vmatpush1.msra.mxu0 0.0
    %4161 = vmatprep.subr.mxu0 0.0
    %4162 = vmatpush1.msra.mxu0 0.0
    %4163 = vmatprep.subr.mxu0 0.0
    %4164 = vmatpush1.msra.mxu0 0.0
    %4165 = vmatprep.subr.mxu0 0.0
    %4166 = vmatpush1.msra.mxu0 0.0
    %4167 = vmatprep.subr.mxu0 0.0
    %4168 = vmatpush1.msra.mxu0 0.0
    %4169 = vmatprep.subr.mxu0 0.0
    %4170 = vmatpush1.msra.mxu0 0.0
    %4171 = vmatprep.subr.mxu0 0.0
    %4172 = vmatpush1.msra.mxu0 0.0
    %4173 = vmatprep.subr.mxu0 0.0
    %4174 = vmatpush1.msra.mxu0 0.0
    %4175 = vmatprep.subr.mxu0 0.0
    %4176 = vmatpush1.msra.mxu0 0.0
    %4177 = vmatprep.subr.mxu0 0.0
    %4178 = vmatpush1.msra.mxu0 0.0
    %4179 = vmatprep.subr.mxu0 0.0
    %4180 = vmatpush1.msra.mxu0 0.0
    %4181 = vmatprep.subr.mxu0 0.0
    %4182 = vmatpush1.msra.mxu0 0.0
    %4183 = vmatprep.subr.mxu0 0.0
    %4184 = vmatpush1.msra.mxu0 0.0
    %4185 = vmatprep.subr.mxu0 0.0
    %4186 = vmatpush1.msra.mxu0 0.0
    %4187 = vmatprep.subr.mxu0 0.0
    %4188 = vmatpush1.msra.mxu0 0.0
    %4189 = vmatprep.subr.mxu0 0.0
    %4190 = vmatpush1.msra.mxu0 0.0
    %4191 = vmatprep.subr.mxu0 0.0
    %4192 = vmatpush1.msra.mxu0 0.0
    %4193 = vmatprep.subr.mxu0 0.0
    %4194 = vmatpush1.msra.mxu0 0.0
    %4195 = vmatprep.subr.mxu0 0.0
    %4196 = vmatpush1.msra.mxu0 0.0
    %4197 = vmatprep.subr.mxu0 0.0
    %4198 = vmatpush1.msra.mxu0 0.0
    %4199 = vmatprep.subr.mxu0 0.0
    %4200 = vmatpush1.msra.mxu0 0.0
    %4201 = vmatprep.subr.mxu0 0.0
    %4202 = vmatpush1.msra.mxu0 0.0
    %4203 = vmatprep.mubr.f32.mxu0 0.0
    %4204 = vmatmul.mubr.f32.gmra.mrb[0].mxu0 %v3966
    %v4205 = vpop.f32.mrb[0].mxu0
    %v4206 = vadd.f32 %v3958, %v4205
    %v4207 = vpop.f32.mrb[0].mxu0
    %v4208 = vadd.f32 %v3958, %v4207
    %4209 = vmatprep.mubr.f32.mxu0 0.0
    %4210 = vmatmul.mubr.f32.gmra.mrb[0].mxu0 %v3969
    %v4211 = vpop.f32.mrb[0].mxu0
    %v4212 = vadd.f32 %v3963, %v4211
    %v4213 = vpop.f32.mrb[0].mxu0
    %v4214 = vadd.f32 %v3963, %v4213
    %4215 = vdwg.mxu0
    %4216 = vmatprep.subr.mxu0 0.0
    %4217 = vmatpush1.msra.mxu0 %v3752
    %4218 = vmatprep.subr.mxu0 0.0
    %4219 = vmatpush1.msra.mxu0 %v3801
    %4220 = vmatprep.subr.mxu0 0.0
    %4221 = vmatpush1.msra.mxu0 %v3936
    %4222 = vmatprep.subr.mxu0 0.0
    %4223 = vmatpush1.msra.mxu0 %v3983
    %4224 = vmatprep.subr.mxu0 0.0
    %4225 = vmatpush1.msra.mxu0 0.0
    %4226 = vmatprep.subr.mxu0 0.0
    %4227 = vmatpush1.msra.mxu0 0.0
    %4228 = vmatprep.subr.mxu0 0.0
    %4229 = vmatpush1.msra.mxu0 0.0
    %4230 = vmatprep.subr.mxu0 0.0
    %4231 = vmatpush1.msra.mxu0 0.0
    %4232 = vmatprep.subr.mxu0 0.0
    %4233 = vmatpush1.msra.mxu0 0.0
    %4234 = vmatprep.subr.mxu0 0.0
    %4235 = vmatpush1.msra.mxu0 0.0
    %4236 = vmatprep.subr.mxu0 0.0
    %4237 = vmatpush1.msra.mxu0 0.0
    %4238 = vmatprep.subr.mxu0 0.0
    %4239 = vmatpush1.msra.mxu0 0.0
    %4240 = vmatprep.subr.mxu0 0.0
    %4241 = vmatpush1.msra.mxu0 0.0
    %4242 = vmatprep.subr.mxu0 0.0
    %4243 = vmatpush1.msra.mxu0 0.0
    %4244 = vmatprep.subr.mxu0 0.0
    %4245 = vmatpush1.msra.mxu0 0.0
    %4246 = vmatprep.subr.mxu0 0.0
    %4247 = vmatpush1.msra.mxu0 0.0
    %4248 = vmatprep.subr.mxu0 0.0
    %4249 = vmatpush1.msra.mxu0 0.0
    %4250 = vmatprep.subr.mxu0 0.0
    %4251 = vmatpush1.msra.mxu0 0.0
    %4252 = vmatprep.subr.mxu0 0.0
    %4253 = vmatpush1.msra.mxu0 0.0
    %4254 = vmatprep.subr.mxu0 0.0
    %4255 = vmatpush1.msra.mxu0 0.0
    %4256 = vmatprep.subr.mxu0 0.0
    %4257 = vmatpush1.msra.mxu0 0.0
    %4258 = vmatprep.subr.mxu0 0.0
    %4259 = vmatpush1.msra.mxu0 0.0
    %4260 = vmatprep.subr.mxu0 0.0
    %4261 = vmatpush1.msra.mxu0 0.0
    %4262 = vmatprep.subr.mxu0 0.0
    %4263 = vmatpush1.msra.mxu0 0.0
    %4264 = vmatprep.subr.mxu0 0.0
    %4265 = vmatpush1.msra.mxu0 0.0
    %4266 = vmatprep.subr.mxu0 0.0
    %4267 = vmatpush1.msra.mxu0 0.0
    %4268 = vmatprep.subr.mxu0 0.0
    %4269 = vmatpush1.msra.mxu0 0.0
    %4270 = vmatprep.subr.mxu0 0.0
    %4271 = vmatpush1.msra.mxu0 0.0
    %4272 = vmatprep.subr.mxu0 0.0
    %4273 = vmatpush1.msra.mxu0 0.0
    %4274 = vmatprep.subr.mxu0 0.0
    %4275 = vmatpush1.msra.mxu0 0.0
    %4276 = vmatprep.subr.mxu0 0.0
    %4277 = vmatpush1.msra.mxu0 0.0
    %4278 = vmatprep.subr.mxu0 0.0
    %4279 = vmatpush1.msra.mxu0 0.0
    %4280 = vmatprep.mubr.f32.mxu0 0.0
    %4281 = vmatmul.mubr.f32.gmra.mrb[0].mxu0 %v3966
    %v4282 = vpop.f32.mrb[0].mxu0
    %v4283 = vadd.f32 %v3958, %v4282
    %v4284 = vpop.f32.mrb[0].mxu0
    %4285 = vmatprep.mubr.f32.mxu0 0.0
    %4286 = vmatmul.mubr.f32.gmra.mrb[0].mxu0 %v3969
    %v4287 = vpop.f32.mrb[0].mxu0
    %v4288 = vadd.f32 %v3963, %v4287
    %v4289 = vpop.f32.mrb[0].mxu0
    %4290 = vdwg.mxu0
    %v4291 = vmax.f32 %v4052, 0.0
    %v4292 = vmax.f32 %v4054, 0.0
    %v4293 = vmax.f32 %v4129, 0.0
    %v4294 = vmax.f32 %v4131, 0.0
    %v4295 = vmax.f32 %v4206, 0.0
    %v4296 = vmax.f32 %v4208, 0.0
    %v4297 = vmax.f32 %v4283, 0.0
    %v4298 = vmax.f32 %v4058, 0.0
    %v4299 = vmax.f32 %v4060, 0.0
    %v4300 = vmax.f32 %v4135, 0.0
    %v4301 = vmax.f32 %v4137, 0.0
    %v4302 = vmax.f32 %v4212, 0.0
    %v4303 = vmax.f32 %v4214, 0.0
    %v4304 = vmax.f32 %v4288, 0.0
    %4319 = vrot.lane.b32.xlu0 %v4291, 127
    %v4320 = vpop.permute.xlu0 %4319
    %4321 = vrot.lane.b32.xlu0 %v4292, 127
    %v4322 = vpop.permute.xlu0 %4321
    %4323 = vrot.lane.b32.xlu0 %v4293, 127
    %v4324 = vpop.permute.xlu0 %4323
    %4325 = vrot.lane.b32.xlu0 %v4294, 127
    %v4326 = vpop.permute.xlu0 %4325
    %4327 = vrot.lane.b32.xlu0 %v4295, 127
    %v4328 = vpop.permute.xlu0 %4327
    %4329 = vrot.lane.b32.xlu0 %v4296, 127
    %v4330 = vpop.permute.xlu0 %4329
    %4331 = vrot.lane.b32.xlu0 %v4297, 127
    %v4332 = vpop.permute.xlu0 %4331
    %4333 = vrot.lane.b32.xlu0 %v4298, 127
    %v4334 = vpop.permute.xlu0 %4333
    %4335 = vrot.lane.b32.xlu0 %v4299, 127
    %v4336 = vpop.permute.xlu0 %4335
    %4337 = vrot.lane.b32.xlu0 %v4300, 127
    %v4338 = vpop.permute.xlu0 %4337
    %4339 = vrot.lane.b32.xlu0 %v4301, 127
    %v4340 = vpop.permute.xlu0 %4339
    %4341 = vrot.lane.b32.xlu0 %v4302, 127
    %v4342 = vpop.permute.xlu0 %4341
    %4343 = vrot.lane.b32.xlu0 %v4303, 127
    %v4344 = vpop.permute.xlu0 %4343
    %4345 = vrot.lane.b32.xlu0 %v4304, 127
    %v4346 = vpop.permute.xlu0 %4345
    %v4347 = vsel %vm92, %v4320, %v4322
    %v4348 = vsel %vm92, %v4322, %v4324
    %v4349 = vsel %vm92, %v4324, %v4326
    %v4350 = vsel %vm92, %v4326, %v4328
    %v4351 = vsel %vm92, %v4328, %v4330
    %v4352 = vsel %vm92, %v4330, %v4332
    %v4353 = vsel %vm92, %v4334, %v4336
    %v4354 = vsel %vm92, %v4336, %v4338
    %v4355 = vsel %vm92, %v4338, %v4340
    %v4356 = vsel %vm92, %v4340, %v4342
    %v4357 = vsel %vm92, %v4342, %v4344
    %v4358 = vsel %vm92, %v4344, %v4346
    %v4373 = vmax.f32 %v4291, %v4347
    %v4374 = vmax.f32 %v4292, %v4348
    %v4375 = vmax.f32 %v4293, %v4349
    %v4376 = vmax.f32 %v4294, %v4350
    %v4377 = vmax.f32 %v4295, %v4351
    %v4378 = vmax.f32 %v4296, %v4352
    %v4379 = vmax.f32 %v4297, %v4332
    %v4380 = vmax.f32 %v4298, %v4353
    %v4381 = vmax.f32 %v4299, %v4354
    %v4382 = vmax.f32 %v4300, %v4355
    %v4383 = vmax.f32 %v4301, %v4356
    %v4384 = vmax.f32 %v4302, %v4357
    %v4385 = vmax.f32 %v4303, %v4358
    %v4386 = vmax.f32 %v4304, %v4346
    %4401 = vrot.lane.b32.xlu0 %v4373, 96
    %v4402 = vpop.permute.xlu0 %4401
    %4403 = vrot.lane.b32.xlu0 %v4374, 96
    %v4404 = vpop.permute.xlu0 %4403
    %4405 = vrot.lane.b32.xlu0 %v4375, 96
    %v4406 = vpop.permute.xlu0 %4405
    %4407 = vrot.lane.b32.xlu0 %v4376, 96
    %v4408 = vpop.permute.xlu0 %4407
    %4409 = vrot.lane.b32.xlu0 %v4377, 96
    %v4410 = vpop.permute.xlu0 %4409
    %4411 = vrot.lane.b32.xlu0 %v4378, 96
    %v4412 = vpop.permute.xlu0 %4411
    %4413 = vrot.lane.b32.xlu0 %v4379, 96
    %v4414 = vpop.permute.xlu0 %4413
    %4415 = vrot.lane.b32.xlu0 %v4380, 96
    %v4416 = vpop.permute.xlu0 %4415
    %4417 = vrot.lane.b32.xlu0 %v4381, 96
    %v4418 = vpop.permute.xlu0 %4417
    %4419 = vrot.lane.b32.xlu0 %v4382, 96
    %v4420 = vpop.permute.xlu0 %4419
    %4421 = vrot.lane.b32.xlu0 %v4383, 96
    %v4422 = vpop.permute.xlu0 %4421
    %4423 = vrot.lane.b32.xlu0 %v4384, 96
    %v4424 = vpop.permute.xlu0 %4423
    %4425 = vrot.lane.b32.xlu0 %v4385, 96
    %v4426 = vpop.permute.xlu0 %4425
    %4427 = vrot.lane.b32.xlu0 %v4386, 96
    %v4428 = vpop.permute.xlu0 %4427
    %v4429 = vsel %vm210, %v4402, %v4404
    %v4430 = vsel %vm210, %v4404, %v4406
    %v4431 = vsel %vm210, %v4406, %v4408
    %v4432 = vsel %vm210, %v4408, %v4410
    %v4433 = vsel %vm210, %v4410, %v4412
    %v4434 = vsel %vm210, %v4412, %v4414
    %v4435 = vsel %vm210, %v4416, %v4418
    %v4436 = vsel %vm210, %v4418, %v4420
    %v4437 = vsel %vm210, %v4420, %v4422
    %v4438 = vsel %vm210, %v4422, %v4424
    %v4439 = vsel %vm210, %v4424, %v4426
    %v4440 = vsel %vm210, %v4426, %v4428
    %v4455 = vmax.f32 %v4373, %v4429
    %v4456 = vmax.f32 %v4374, %v4430
    %v4457 = vmax.f32 %v4375, %v4431
    %v4458 = vmax.f32 %v4376, %v4432
    %v4459 = vmax.f32 %v4377, %v4433
    %v4460 = vmax.f32 %v4378, %v4434
    %v4461 = vmax.f32 %v4379, %v4414
    %v4462 = vmax.f32 %v4380, %v4435
    %v4463 = vmax.f32 %v4381, %v4436
    %v4464 = vmax.f32 %v4382, %v4437
    %v4465 = vmax.f32 %v4383, %v4438
    %v4466 = vmax.f32 %v4384, %v4439
    %v4467 = vmax.f32 %v4385, %v4440
    %v4468 = vmax.f32 %v4386, %v4428
    %v4469 = vld [vmem:[%s3] sm:$0xff]
    %v4470 = vld [vmem:[%s3 + $0x8] sm:$0xff]
    %v4471 = vld [vmem:[%s3 + $0x10] sm:$0xff]
    %v4472 = vld [vmem:[%s3 + $0x18] sm:$0xff]
    %v4473 = vld [vmem:[%s3 + $0x20] sm:$0xff]
    %v4474 = vld [vmem:[%s3 + $0x28] sm:$0xff]
    %v4475 = vld [vmem:[%s3 + $0x30] sm:$0xff]
    %v4476 = vld [vmem:[%s3 + $0x38] sm:$0xff]
    %v4477 = vld [vmem:[%s3 + $0x40] sm:$0xff]
    %v4478 = vld [vmem:[%s3 + $0x48] sm:$0xff]
    %v4479 = vld [vmem:[%s3 + $0x50] sm:$0xff]
    %v4480 = vld [vmem:[%s3 + $0x58] sm:$0xff]
    %v4481 = vld [vmem:[%s3 + $0x60] sm:$0xff]
    %v4482 = vld [vmem:[%s3 + $0x68] sm:$0xff]
    %v4483 = vld [vmem:[%s3 + $0x70] sm:$0xff]
    %v4484 = vld [vmem:[%s3 + $0x78] sm:$0xff]
    %v4485 = vld [vmem:[%s3 + $0x80] sm:$0xff]
    %v4486 = vld [vmem:[%s3 + $0x88] sm:$0xff]
    %v4487 = vld [vmem:[%s3 + $0x90] sm:$0xff]
    %v4488 = vld [vmem:[%s3 + $0x98] sm:$0xff]
    %v4489 = vld [vmem:[%s3 + $0xa0] sm:$0xff]
    %v4490 = vld [vmem:[%s3 + $0xa8] sm:$0xff]
    %v4491 = vld [vmem:[%s3 + $0xb0] sm:$0xff]
    %v4492 = vld [vmem:[%s3 + $0xb8] sm:$0xff]
    %v4493 = vld [vmem:[%s3 + $0xc0] sm:$0xff]
    %v4494 = vld [vmem:[%s3 + $0xc8] sm:$0xff]
    %v4495 = vld [vmem:[%s3 + $0xd0] sm:$0xff]
    %v4496 = vld [vmem:[%s3 + $0xd8] sm:$0xff]
    %v4497 = vld [vmem:[%s3 + $0xe0] sm:$0xff]
    %v4498 = vld [vmem:[%s3 + $0xe8] sm:$0xff]
    %v4499 = vld [vmem:[%s3 + $0xf0] sm:$0xff]
    %v4500 = vld [vmem:[%s3 + $0xf8] sm:$0xff]
    %v4501 = vld [vmem:[%s3 + $0x100] sm:$0xff]
    %v4502 = vld [vmem:[%s3 + $0x108] sm:$0xff]
    %v4503 = vld [vmem:[%s3 + $0x110] sm:$0xff]
    %v4504 = vld [vmem:[%s3 + $0x118] sm:$0xff]
    %v4505 = vld [vmem:[%s3 + $0x120] sm:$0xff]
    %v4506 = vld [vmem:[%s3 + $0x128] sm:$0xff]
    %v4507 = vld [vmem:[%s3 + $0x130] sm:$0xff]
    %v4508 = vld [vmem:[%s3 + $0x138] sm:$0xff]
    %v4509 = vld [vmem:[%s3 + $0x140] sm:$0xff]
    %v4510 = vld [vmem:[%s3 + $0x148] sm:$0xff]
    %v4511 = vld [vmem:[%s3 + $0x150] sm:$0xff]
    %v4512 = vld [vmem:[%s3 + $0x158] sm:$0xff]
    %v4513 = vld [vmem:[%s3 + $0x160] sm:$0xff]
    %v4514 = vld [vmem:[%s3 + $0x168] sm:$0xff]
    %v4515 = vld [vmem:[%s3 + $0x170] sm:$0xff]
    %v4516 = vld [vmem:[%s3 + $0x178] sm:$0xff]
    %v4517 = vld [vmem:[%s3 + $0x180] sm:$0xff]
    %v4518 = vld [vmem:[%s3 + $0x188] sm:$0xff]
    %v4519 = vld [vmem:[%s3 + $0x190] sm:$0xff]
    %v4520 = vld [vmem:[%s3 + $0x198] sm:$0xff]
    %v4521 = vld [vmem:[%s3 + $0x1a0] sm:$0xff]
    %v4522 = vld [vmem:[%s3 + $0x1a8] sm:$0xff]
    %v4523 = vld [vmem:[%s3 + $0x1b0] sm:$0xff]
    %v4524 = vld [vmem:[%s3 + $0x1b8] sm:$0xff]
    %v4525 = vld [vmem:[%s3 + $0x1c0] sm:$0xff]
    %v4526 = vld [vmem:[%s3 + $0x1c8] sm:$0xff]
    %v4527 = vld [vmem:[%s3 + $0x1d0] sm:$0xff]
    %v4528 = vld [vmem:[%s3 + $0x1d8] sm:$0xff]
    %v4529 = vld [vmem:[%s3 + $0x1e0] sm:$0xff]
    %v4530 = vld [vmem:[%s3 + $0x1e8] sm:$0xff]
    %v4531 = vld [vmem:[%s3 + $0x1f0] sm:$0xff]
    %v4532 = vld [vmem:[%s3 + $0x1f8] sm:$0xff]
    %v4533 = vld [vmem:[%s3 + $0x200] sm:$0xff]
    %v4534 = vld [vmem:[%s3 + $0x208] sm:$0xff]
    %v4535 = vld [vmem:[%s3 + $0x210] sm:$0xff]
    %v4536 = vld [vmem:[%s3 + $0x218] sm:$0xff]
    %v4537 = vld [vmem:[%s3 + $0x220] sm:$0xff]
    %v4538 = vld [vmem:[%s3 + $0x228] sm:$0xff]
    %v4539 = vld [vmem:[%s3 + $0x230] sm:$0xff]
    %v4540 = vld [vmem:[%s3 + $0x238] sm:$0xff]
    %v4541 = vld [vmem:[%s3 + $0x240] sm:$0xff]
    %v4542 = vld [vmem:[%s3 + $0x248] sm:$0xff]
    %v4543 = vld [vmem:[%s3 + $0x250] sm:$0xff]
    %v4544 = vld [vmem:[%s3 + $0x258] sm:$0xff]
    %v4545 = vld [vmem:[%s3 + $0x260] sm:$0xff]
    %v4546 = vld [vmem:[%s3 + $0x268] sm:$0xff]
    %v4547 = vld [vmem:[%s3 + $0x270] sm:$0xff]
    %v4548 = vld [vmem:[%s3 + $0x278] sm:$0xff]
    %v4549 = vld [vmem:[%s3 + $0x280] sm:$0xff]
    %v4550 = vld [vmem:[%s3 + $0x288] sm:$0xff]
    %v4551 = vld [vmem:[%s3 + $0x290] sm:$0xff]
    %v4552 = vld [vmem:[%s3 + $0x298] sm:$0xff]
    %v4553 = vld [vmem:[%s3 + $0x2a0] sm:$0xff]
    %v4554 = vld [vmem:[%s3 + $0x2a8] sm:$0xff]
    %v4555 = vld [vmem:[%s3 + $0x2b0] sm:$0xff]
    %v4556 = vld [vmem:[%s3 + $0x2b8] sm:$0xff]
    %v4557 = vld [vmem:[%s3 + $0x2c0] sm:$0xff]
    %v4558 = vld [vmem:[%s3 + $0x2c8] sm:$0xff]
    %v4559 = vld [vmem:[%s3 + $0x2d0] sm:$0xff]
    %v4560 = vld [vmem:[%s3 + $0x2d8] sm:$0xff]
    %v4561 = vld [vmem:[%s3 + $0x2e0] sm:$0xff]
    %v4562 = vld [vmem:[%s3 + $0x2e8] sm:$0xff]
    %v4563 = vld [vmem:[%s3 + $0x2f0] sm:$0xff]
    %v4564 = vld [vmem:[%s3 + $0x2f8] sm:$0xff]
    %v4565 = vld [vmem:[%s3 + $0x300] sm:$0xff]
    %v4566 = vld [vmem:[%s3 + $0x308] sm:$0xff]
    %v4567 = vld [vmem:[%s3 + $0x310] sm:$0xff]
    %v4568 = vld [vmem:[%s3 + $0x318] sm:$0xff]
    %v4569 = vld [vmem:[%s3 + $0x320] sm:$0xff]
    %v4570 = vld [vmem:[%s3 + $0x328] sm:$0xff]
    %v4571 = vld [vmem:[%s3 + $0x330] sm:$0xff]
    %v4572 = vld [vmem:[%s3 + $0x338] sm:$0xff]
    %v4573 = vld [vmem:[%s3 + $0x340] sm:$0xff]
    %v4574 = vld [vmem:[%s3 + $0x348] sm:$0xff]
    %v4575 = vld [vmem:[%s3 + $0x350] sm:$0xff]
    %v4576 = vld [vmem:[%s3 + $0x358] sm:$0xff]
    %v4577 = vld [vmem:[%s3 + $0x360] sm:$0xff]
    %v4578 = vld [vmem:[%s3 + $0x368] sm:$0xff]
    %v4579 = vld [vmem:[%s3 + $0x370] sm:$0xff]
    %v4580 = vld [vmem:[%s3 + $0x378] sm:$0xff]
    %v4581 = vld [vmem:[%s3 + $0x380] sm:$0xff]
    %v4582 = vld [vmem:[%s3 + $0x388] sm:$0xff]
    %v4583 = vld [vmem:[%s3 + $0x390] sm:$0xff]
    %v4584 = vld [vmem:[%s3 + $0x398] sm:$0xff]
    %v4585 = vld [vmem:[%s3 + $0x3a0] sm:$0xff]
    %v4586 = vld [vmem:[%s3 + $0x3a8] sm:$0xff]
    %v4587 = vld [vmem:[%s3 + $0x3b0] sm:$0xff]
    %v4588 = vld [vmem:[%s3 + $0x3b8] sm:$0xff]
    %v4589 = vld [vmem:[%s3 + $0x3c0] sm:$0xff]
    %v4590 = vld [vmem:[%s3 + $0x3c8] sm:$0xff]
    %v4591 = vld [vmem:[%s3 + $0x3d0] sm:$0xff]
    %v4592 = vld [vmem:[%s3 + $0x3d8] sm:$0xff]
    %v4593 = vld [vmem:[%s3 + $0x3e0] sm:$0xff]
    %v4594 = vld [vmem:[%s3 + $0x3e8] sm:$0xff]
    %v4595 = vld [vmem:[%s3 + $0x3f0] sm:$0xff]
    %v4596 = vld [vmem:[%s3 + $0x3f8] sm:$0xff]
    %v4597 = vld [vmem:[%s3 + $0x400] sm:$0xff]
    %v4598 = vld [vmem:[%s3 + $0x408] sm:$0xff]
    %v4599 = vld [vmem:[%s3 + $0x410] sm:$0xff]
    %v4600 = vld [vmem:[%s3 + $0x418] sm:$0xff]
    %v4601 = vld [vmem:[%s3 + $0x420] sm:$0xff]
    %v4602 = vld [vmem:[%s3 + $0x428] sm:$0xff]
    %v4603 = vld [vmem:[%s3 + $0x430] sm:$0xff]
    %v4604 = vld [vmem:[%s3 + $0x438] sm:$0xff]
    %v4605 = vld [vmem:[%s3 + $0x440] sm:$0xff]
    %v4606 = vld [vmem:[%s3 + $0x448] sm:$0xff]
    %v4607 = vld [vmem:[%s3 + $0x450] sm:$0xff]
    %v4608 = vld [vmem:[%s3 + $0x458] sm:$0xff]
    %v4609 = vld [vmem:[%s3 + $0x460] sm:$0xff]
    %v4610 = vld [vmem:[%s3 + $0x468] sm:$0xff]
    %v4611 = vld [vmem:[%s3 + $0x470] sm:$0xff]
    %v4612 = vld [vmem:[%s3 + $0x478] sm:$0xff]
    %v4613 = vld [vmem:[%s3 + $0x480] sm:$0xff]
    %v4614 = vld [vmem:[%s3 + $0x488] sm:$0xff]
    %v4615 = vld [vmem:[%s3 + $0x490] sm:$0xff]
    %v4616 = vld [vmem:[%s3 + $0x498] sm:$0xff]
    %v4617 = vld [vmem:[%s3 + $0x4a0] sm:$0xff]
    %v4618 = vld [vmem:[%s3 + $0x4a8] sm:$0xff]
    %v4619 = vld [vmem:[%s3 + $0x4b0] sm:$0xff]
    %v4620 = vld [vmem:[%s3 + $0x4b8] sm:$0xff]
    %v4621 = vld [vmem:[%s3 + $0x4c0] sm:$0xff]
    %v4622 = vld [vmem:[%s3 + $0x4c8] sm:$0xff]
    %v4623 = vld [vmem:[%s3 + $0x4d0] sm:$0xff]
    %v4624 = vld [vmem:[%s3 + $0x4d8] sm:$0xff]
    %v4625 = vld [vmem:[%s3 + $0x4e0] sm:$0xff]
    %v4626 = vld [vmem:[%s3 + $0x4e8] sm:$0xff]
    %v4627 = vld [vmem:[%s3 + $0x4f0] sm:$0xff]
    %v4628 = vld [vmem:[%s3 + $0x4f8] sm:$0xff]
    %v4629 = vld [vmem:[%s3 + $0x500] sm:$0xff]
    %v4630 = vld [vmem:[%s3 + $0x508] sm:$0xff]
    %v4631 = vld [vmem:[%s3 + $0x510] sm:$0xff]
    %v4632 = vld [vmem:[%s3 + $0x518] sm:$0xff]
    %v4633 = vld [vmem:[%s3 + $0x520] sm:$0xff]
    %v4634 = vld [vmem:[%s3 + $0x528] sm:$0xff]
    %v4635 = vld [vmem:[%s3 + $0x530] sm:$0xff]
    %v4636 = vld [vmem:[%s3 + $0x538] sm:$0xff]
    %v4637 = vld [vmem:[%s3 + $0x540] sm:$0xff]
    %v4638 = vld [vmem:[%s3 + $0x548] sm:$0xff]
    %v4639 = vld [vmem:[%s3 + $0x550] sm:$0xff]
    %v4640 = vld [vmem:[%s3 + $0x558] sm:$0xff]
    %v4641 = vld [vmem:[%s3 + $0x560] sm:$0xff]
    %v4642 = vld [vmem:[%s3 + $0x568] sm:$0xff]
    %v4643 = vld [vmem:[%s3 + $0x570] sm:$0xff]
    %v4644 = vld [vmem:[%s3 + $0x578] sm:$0xff]
    %v4645 = vld [vmem:[%s3 + $0x580] sm:$0xff]
    %v4646 = vld [vmem:[%s3 + $0x588] sm:$0xff]
    %v4647 = vld [vmem:[%s3 + $0x590] sm:$0xff]
    %v4648 = vld [vmem:[%s3 + $0x598] sm:$0xff]
    %v4649 = vld [vmem:[%s3 + $0x5a0] sm:$0xff]
    %v4650 = vld [vmem:[%s3 + $0x5a8] sm:$0xff]
    %v4651 = vld [vmem:[%s3 + $0x5b0] sm:$0xff]
    %v4652 = vld [vmem:[%s3 + $0x5b8] sm:$0xff]
    %v4653 = vld [vmem:[%s3 + $0x5c0] sm:$0xff]
    %v4654 = vld [vmem:[%s3 + $0x5c8] sm:$0xff]
    %v4655 = vld [vmem:[%s3 + $0x5d0] sm:$0xff]
    %v4656 = vld [vmem:[%s3 + $0x5d8] sm:$0xff]
    %v4657 = vld [vmem:[%s3 + $0x5e0] sm:$0xff]
    %v4658 = vld [vmem:[%s3 + $0x5e8] sm:$0xff]
    %v4659 = vld [vmem:[%s3 + $0x5f0] sm:$0xff]
    %v4660 = vld [vmem:[%s3 + $0x5f8] sm:$0xff]
    %v4661 = vld [vmem:[%s3 + $0x600] sm:$0xff]
    %v4662 = vld [vmem:[%s3 + $0x608] sm:$0xff]
    %v4663 = vld [vmem:[%s3 + $0x610] sm:$0xff]
    %v4664 = vld [vmem:[%s3 + $0x618] sm:$0xff]
    %v4665 = vld [vmem:[%s3 + $0x620] sm:$0xff]
    %v4666 = vld [vmem:[%s3 + $0x628] sm:$0xff]
    %v4667 = vld [vmem:[%s3 + $0x630] sm:$0xff]
    %v4668 = vld [vmem:[%s3 + $0x638] sm:$0xff]
    %v4669 = vld [vmem:[%s3 + $0x640] sm:$0xff]
    %v4670 = vld [vmem:[%s3 + $0x648] sm:$0xff]
    %v4671 = vld [vmem:[%s3 + $0x650] sm:$0xff]
    %v4672 = vld [vmem:[%s3 + $0x658] sm:$0xff]
    %v4673 = vld [vmem:[%s3 + $0x660] sm:$0xff]
    %v4674 = vld [vmem:[%s3 + $0x668] sm:$0xff]
    %v4675 = vld [vmem:[%s3 + $0x670] sm:$0xff]
    %v4676 = vld [vmem:[%s3 + $0x678] sm:$0xff]
    %v4677 = vld [vmem:[%s3 + $0x680] sm:$0xff]
    %v4678 = vld [vmem:[%s3 + $0x688] sm:$0xff]
    %v4679 = vld [vmem:[%s3 + $0x690] sm:$0xff]
    %v4680 = vld [vmem:[%s3 + $0x698] sm:$0xff]
    %v4681 = vld [vmem:[%s3 + $0x6a0] sm:$0xff]
    %v4682 = vld [vmem:[%s3 + $0x6a8] sm:$0xff]
    %v4683 = vld [vmem:[%s3 + $0x6b0] sm:$0xff]
    %v4684 = vld [vmem:[%s3 + $0x6b8] sm:$0xff]
    %v4685 = vld [vmem:[%s3 + $0x6c0] sm:$0xff]
    %v4686 = vld [vmem:[%s3 + $0x6c8] sm:$0xff]
    %v4687 = vld [vmem:[%s3 + $0x6d0] sm:$0xff]
    %v4688 = vld [vmem:[%s3 + $0x6d8] sm:$0xff]
    %v4689 = vld [vmem:[%s3 + $0x6e0] sm:$0xff]
    %v4690 = vld [vmem:[%s3 + $0x6e8] sm:$0xff]
    %v4691 = vld [vmem:[%s3 + $0x6f0] sm:$0xff]
    %v4692 = vld [vmem:[%s3 + $0x6f8] sm:$0xff]
    %v4693 = vld [vmem:[%s3 + $0x700] sm:$0xff]
    %v4694 = vld [vmem:[%s3 + $0x708] sm:$0xff]
    %v4695 = vld [vmem:[%s3 + $0x710] sm:$0xff]
    %v4696 = vld [vmem:[%s3 + $0x718] sm:$0xff]
    %v4697 = vld [vmem:[%s3 + $0x720] sm:$0xff]
    %v4698 = vld [vmem:[%s3 + $0x728] sm:$0xff]
    %v4699 = vld [vmem:[%s3 + $0x730] sm:$0xff]
    %v4700 = vld [vmem:[%s3 + $0x738] sm:$0xff]
    %v4701 = vld [vmem:[%s3 + $0x740] sm:$0xff]
    %v4702 = vld [vmem:[%s3 + $0x748] sm:$0xff]
    %v4703 = vld [vmem:[%s3 + $0x750] sm:$0xff]
    %v4704 = vld [vmem:[%s3 + $0x758] sm:$0xff]
    %v4705 = vld [vmem:[%s3 + $0x760] sm:$0xff]
    %v4706 = vld [vmem:[%s3 + $0x768] sm:$0xff]
    %v4707 = vld [vmem:[%s3 + $0x770] sm:$0xff]
    %v4708 = vld [vmem:[%s3 + $0x778] sm:$0xff]
    %v4709 = vld [vmem:[%s3 + $0x780] sm:$0xff]
    %v4710 = vld [vmem:[%s3 + $0x788] sm:$0xff]
    %v4711 = vld [vmem:[%s3 + $0x790] sm:$0xff]
    %v4712 = vld [vmem:[%s3 + $0x798] sm:$0xff]
    %v4713 = vld [vmem:[%s3 + $0x7a0] sm:$0xff]
    %v4714 = vld [vmem:[%s3 + $0x7a8] sm:$0xff]
    %v4715 = vld [vmem:[%s3 + $0x7b0] sm:$0xff]
    %v4716 = vld [vmem:[%s3 + $0x7b8] sm:$0xff]
    %v4717 = vld [vmem:[%s3 + $0x7c0] sm:$0xff]
    %v4718 = vld [vmem:[%s3 + $0x7c8] sm:$0xff]
    %v4719 = vld [vmem:[%s3 + $0x7d0] sm:$0xff]
    %v4720 = vld [vmem:[%s3 + $0x7d8] sm:$0xff]
    %v4721 = vld [vmem:[%s3 + $0x7e0] sm:$0xff]
    %v4722 = vld [vmem:[%s3 + $0x7e8] sm:$0xff]
    %v4723 = vld [vmem:[%s3 + $0x7f0] sm:$0xff]
    %v4724 = vld [vmem:[%s3 + $0x7f8] sm:$0xff]
    %v4725 = vld [vmem:[%s3 + $0x800] sm:$0xff]
    %v4726 = vld [vmem:[%s3 + $0x808] sm:$0xff]
    %v4727 = vld [vmem:[%s3 + $0x810] sm:$0xff]
    %v4728 = vld [vmem:[%s3 + $0x818] sm:$0xff]
    %v4729 = vld [vmem:[%s3 + $0x820] sm:$0xff]
    %v4730 = vld [vmem:[%s3 + $0x828] sm:$0xff]
    %v4731 = vld [vmem:[%s3 + $0x830] sm:$0xff]
    %v4732 = vld [vmem:[%s3 + $0x838] sm:$0xff]
    %v4733 = vld [vmem:[%s3 + $0x840] sm:$0xff]
    %v4734 = vld [vmem:[%s3 + $0x848] sm:$0xff]
    %v4735 = vld [vmem:[%s3 + $0x850] sm:$0xff]
    %v4736 = vld [vmem:[%s3 + $0x858] sm:$0xff]
    %v4737 = vld [vmem:[%s3 + $0x860] sm:$0xff]
    %v4738 = vld [vmem:[%s3 + $0x868] sm:$0xff]
    %v4739 = vld [vmem:[%s3 + $0x870] sm:$0xff]
    %v4740 = vld [vmem:[%s3 + $0x878] sm:$0xff]
    %v4741 = vld [vmem:[%s3 + $0x880] sm:$0xff]
    %v4742 = vld [vmem:[%s3 + $0x888] sm:$0xff]
    %v4743 = vld [vmem:[%s3 + $0x890] sm:$0xff]
    %v4744 = vld [vmem:[%s3 + $0x898] sm:$0xff]
    %v4745 = vld [vmem:[%s3 + $0x8a0] sm:$0xff]
    %v4746 = vld [vmem:[%s3 + $0x8a8] sm:$0xff]
    %v4747 = vld [vmem:[%s3 + $0x8b0] sm:$0xff]
    %v4748 = vld [vmem:[%s3 + $0x8b8] sm:$0xff]
    %v4749 = vld [vmem:[%s3 + $0x8c0] sm:$0xff]
    %v4750 = vld [vmem:[%s3 + $0x8c8] sm:$0xff]
    %v4751 = vld [vmem:[%s3 + $0x8d0] sm:$0xff]
    %v4752 = vld [vmem:[%s3 + $0x8d8] sm:$0xff]
    %v4753 = vld [vmem:[%s3 + $0x8e0] sm:$0xff]
    %v4754 = vld [vmem:[%s3 + $0x8e8] sm:$0xff]
    %v4755 = vld [vmem:[%s3 + $0x8f0] sm:$0xff]
    %v4756 = vld [vmem:[%s3 + $0x8f8] sm:$0xff]
    %v4757 = vld [vmem:[%s3 + $0x900] sm:$0xff]
    %v4758 = vld [vmem:[%s3 + $0x908] sm:$0xff]
    %v4759 = vld [vmem:[%s3 + $0x910] sm:$0xff]
    %v4760 = vld [vmem:[%s3 + $0x918] sm:$0xff]
    %v4761 = vld [vmem:[%s3 + $0x920] sm:$0xff]
    %v4762 = vld [vmem:[%s3 + $0x928] sm:$0xff]
    %v4763 = vld [vmem:[%s3 + $0x930] sm:$0xff]
    %v4764 = vld [vmem:[%s3 + $0x938] sm:$0xff]
    %v4765 = vld [vmem:[%s3 + $0x940] sm:$0xff]
    %v4766 = vld [vmem:[%s3 + $0x948] sm:$0xff]
    %v4767 = vld [vmem:[%s3 + $0x950] sm:$0xff]
    %v4768 = vld [vmem:[%s3 + $0x958] sm:$0xff]
    %v4769 = vld [vmem:[%s3 + $0x960] sm:$0xff]
    %v4770 = vld [vmem:[%s3 + $0x968] sm:$0xff]
    %v4771 = vld [vmem:[%s3 + $0x970] sm:$0xff]
    %v4772 = vld [vmem:[%s3 + $0x978] sm:$0xff]
    %v4773 = vld [vmem:[%s3 + $0x980] sm:$0xff]
    %v4774 = vld [vmem:[%s3 + $0x988] sm:$0xff]
    %v4775 = vld [vmem:[%s3 + $0x990] sm:$0xff]
    %v4776 = vld [vmem:[%s3 + $0x998] sm:$0xff]
    %v4777 = vld [vmem:[%s3 + $0x9a0] sm:$0xff]
    %v4778 = vld [vmem:[%s3 + $0x9a8] sm:$0xff]
    %v4779 = vld [vmem:[%s3 + $0x9b0] sm:$0xff]
    %v4780 = vld [vmem:[%s3 + $0x9b8] sm:$0xff]
    %v4781 = vld [vmem:[%s3 + $0x9c0] sm:$0xff]
    %v4782 = vld [vmem:[%s3 + $0x9c8] sm:$0xff]
    %v4783 = vld [vmem:[%s3 + $0x9d0] sm:$0xff]
    %v4784 = vld [vmem:[%s3 + $0x9d8] sm:$0xff]
    %v4785 = vld [vmem:[%s3 + $0x9e0] sm:$0xff]
    %v4786 = vld [vmem:[%s3 + $0x9e8] sm:$0xff]
    %v4787 = vld [vmem:[%s3 + $0x9f0] sm:$0xff]
    %v4788 = vld [vmem:[%s3 + $0x9f8] sm:$0xff]
    %v4789 = vld [vmem:[%s3 + $0xa00] sm:$0xff]
    %v4790 = vld [vmem:[%s3 + $0xa08] sm:$0x7]
    %v4791 = vld [vmem:[%s3 + $0xa10] sm:$0x7]
    %v4792 = vld [vmem:[%s3 + $0xa18] sm:$0x7]
    %v4794 = vsel %vm1634, %v4461, 0
    %v4797 = vsel %vm1634, %v4468, 0
    %v4800 = vsel %vm551, %v4790, 0
    %v4803 = vsel %vm551, %v4791, 0
    %v4806 = vsel %vm551, %v4792, 0
    %4808 = vmatprep.subr.mxu0 %v4470
    %4809 = vmatpush1.msra.mxu0 %v4469
    %4810 = vmatprep.subr.mxu0 %v4473
    %4811 = vmatpush1.msra.mxu0 %v4472
    %4812 = vmatprep.subr.mxu0 %v4476
    %4813 = vmatpush1.msra.mxu0 %v4475
    %4814 = vmatprep.subr.mxu0 %v4479
    %4815 = vmatpush1.msra.mxu0 %v4478
    %4816 = vmatprep.subr.mxu0 %v4482
    %4817 = vmatpush1.msra.mxu0 %v4481
    %4818 = vmatprep.subr.mxu0 %v4485
    %4819 = vmatpush1.msra.mxu0 %v4484
    %4820 = vmatprep.subr.mxu0 %v4488
    %4821 = vmatpush1.msra.mxu0 %v4487
    %4822 = vmatprep.subr.mxu0 %v4491
    %4823 = vmatpush1.msra.mxu0 %v4490
    %4824 = vmatprep.subr.mxu0 %v4494
    %4825 = vmatpush1.msra.mxu0 %v4493
    %4826 = vmatprep.subr.mxu0 %v4497
    %4827 = vmatpush1.msra.mxu0 %v4496
    %4828 = vmatprep.subr.mxu0 %v4500
    %4829 = vmatpush1.msra.mxu0 %v4499
    %4830 = vmatprep.subr.mxu0 %v4503
    %4831 = vmatpush1.msra.mxu0 %v4502
    %4832 = vmatprep.subr.mxu0 %v4506
    %4833 = vmatpush1.msra.mxu0 %v4505
    %4834 = vmatprep.subr.mxu0 %v4509
    %4835 = vmatpush1.msra.mxu0 %v4508
    %4836 = vmatprep.subr.mxu0 %v4512
    %4837 = vmatpush1.msra.mxu0 %v4511
    %4838 = vmatprep.subr.mxu0 %v4515
    %4839 = vmatpush1.msra.mxu0 %v4514
    %4840 = vmatprep.subr.mxu0 %v4518
    %4841 = vmatpush1.msra.mxu0 %v4517
    %4842 = vmatprep.subr.mxu0 %v4521
    %4843 = vmatpush1.msra.mxu0 %v4520
    %4844 = vmatprep.subr.mxu0 %v4524
    %4845 = vmatpush1.msra.mxu0 %v4523
    %4846 = vmatprep.subr.mxu0 %v4527
    %4847 = vmatpush1.msra.mxu0 %v4526
    %4848 = vmatprep.subr.mxu0 %v4530
    %4849 = vmatpush1.msra.mxu0 %v4529
    %4850 = vmatprep.subr.mxu0 %v4533
    %4851 = vmatpush1.msra.mxu0 %v4532
    %4852 = vmatprep.subr.mxu0 %v4536
    %4853 = vmatpush1.msra.mxu0 %v4535
    %4854 = vmatprep.subr.mxu0 %v4539
    %4855 = vmatpush1.msra.mxu0 %v4538
    %4856 = vmatprep.subr.mxu0 %v4542
    %4857 = vmatpush1.msra.mxu0 %v4541
    %4858 = vmatprep.subr.mxu0 %v4545
    %4859 = vmatpush1.msra.mxu0 %v4544
    %4860 = vmatprep.subr.mxu0 %v4548
    %4861 = vmatpush1.msra.mxu0 %v4547
    %4862 = vmatprep.subr.mxu0 %v4551
    %4863 = vmatpush1.msra.mxu0 %v4550
    %4864 = vmatprep.subr.mxu0 %v4554
    %4865 = vmatpush1.msra.mxu0 %v4553
    %4866 = vmatprep.subr.mxu0 %v4557
    %4867 = vmatpush1.msra.mxu0 %v4556
    %4868 = vmatprep.subr.mxu0 %v4560
    %4869 = vmatpush1.msra.mxu0 %v4559
    %4870 = vmatprep.subr.mxu0 %v4563
    %4871 = vmatpush1.msra.mxu0 %v4562
    %4872 = vmatprep.mubr.f32.mxu0 %v4456
    %4873 = vmatmul.mubr.f32.gmra.mrb[0].mxu0 %v4455
    %v4874 = vpop.f32.mrb[0].mxu0
    %v4875 = vadd.f32 0.0, %v4874
    %v4876 = vpop.f32.mrb[0].mxu0
    %v4877 = vadd.f32 0.0, %v4876
    %4878 = vmatprep.mubr.f32.mxu0 %v4463
    %4879 = vmatmul.mubr.f32.gmra.mrb[0].mxu0 %v4462
    %v4880 = vpop.f32.mrb[0].mxu0
    %v4881 = vadd.f32 0.0, %v4880
    %v4882 = vpop.f32.mrb[0].mxu0
    %v4883 = vadd.f32 0.0, %v4882
    %4884 = vdwg.mxu0
    %4885 = vmatprep.subr.mxu0 %v4566
    %4886 = vmatpush1.msra.mxu0 %v4565
    %4887 = vmatprep.subr.mxu0 %v4569
    %4888 = vmatpush1.msra.mxu0 %v4568
    %4889 = vmatprep.subr.mxu0 %v4572
    %4890 = vmatpush1.msra.mxu0 %v4571
    %4891 = vmatprep.subr.mxu0 %v4575
    %4892 = vmatpush1.msra.mxu0 %v4574
    %4893 = vmatprep.subr.mxu0 %v4578
    %4894 = vmatpush1.msra.mxu0 %v4577
    %4895 = vmatprep.subr.mxu0 %v4581
    %4896 = vmatpush1.msra.mxu0 %v4580
    %4897 = vmatprep.subr.mxu0 %v4584
    %4898 = vmatpush1.msra.mxu0 %v4583
    %4899 = vmatprep.subr.mxu0 %v4587
    %4900 = vmatpush1.msra.mxu0 %v4586
    %4901 = vmatprep.subr.mxu0 %v4590
    %4902 = vmatpush1.msra.mxu0 %v4589
    %4903 = vmatprep.subr.mxu0 %v4593
    %4904 = vmatpush1.msra.mxu0 %v4592
    %4905 = vmatprep.subr.mxu0 %v4596
    %4906 = vmatpush1.msra.mxu0 %v4595
    %4907 = vmatprep.subr.mxu0 %v4599
    %4908 = vmatpush1.msra.mxu0 %v4598
    %4909 = vmatprep.subr.mxu0 %v4602
    %4910 = vmatpush1.msra.mxu0 %v4601
    %4911 = vmatprep.subr.mxu0 %v4605
    %4912 = vmatpush1.msra.mxu0 %v4604
    %4913 = vmatprep.subr.mxu0 %v4608
    %4914 = vmatpush1.msra.mxu0 %v4607
    %4915 = vmatprep.subr.mxu0 %v4611
    %4916 = vmatpush1.msra.mxu0 %v4610
    %4917 = vmatprep.subr.mxu0 %v4614
    %4918 = vmatpush1.msra.mxu0 %v4613
    %4919 = vmatprep.subr.mxu0 %v4617
    %4920 = vmatpush1.msra.mxu0 %v4616
    %4921 = vmatprep.subr.mxu0 %v4620
    %4922 = vmatpush1.msra.mxu0 %v4619
    %4923 = vmatprep.subr.mxu0 %v4623
    %4924 = vmatpush1.msra.mxu0 %v4622
    %4925 = vmatprep.subr.mxu0 %v4626
    %4926 = vmatpush1.msra.mxu0 %v4625
    %4927 = vmatprep.subr.mxu0 %v4629
    %4928 = vmatpush1.msra.mxu0 %v4628
    %4929 = vmatprep.subr.mxu0 %v4632
    %4930 = vmatpush1.msra.mxu0 %v4631
    %4931 = vmatprep.subr.mxu0 %v4635
    %4932 = vmatpush1.msra.mxu0 %v4634
    %4933 = vmatprep.subr.mxu0 %v4638
    %4934 = vmatpush1.msra.mxu0 %v4637
    %4935 = vmatprep.subr.mxu0 %v4641
    %4936 = vmatpush1.msra.mxu0 %v4640
    %4937 = vmatprep.subr.mxu0 %v4644
    %4938 = vmatpush1.msra.mxu0 %v4643
    %4939 = vmatprep.subr.mxu0 %v4647
    %4940 = vmatpush1.msra.mxu0 %v4646
    %4941 = vmatprep.subr.mxu0 %v4650
    %4942 = vmatpush1.msra.mxu0 %v4649
    %4943 = vmatprep.subr.mxu0 %v4653
    %4944 = vmatpush1.msra.mxu0 %v4652
    %4945 = vmatprep.subr.mxu0 %v4656
    %4946 = vmatpush1.msra.mxu0 %v4655
    %4947 = vmatprep.subr.mxu0 %v4659
    %4948 = vmatpush1.msra.mxu0 %v4658
    %4949 = vmatprep.mubr.f32.mxu0 %v4458
    %4950 = vmatmul.mubr.f32.gmra.mrb[0].mxu0 %v4457
    %v4951 = vpop.f32.mrb[0].mxu0
    %v4952 = vadd.f32 %v4875, %v4951
    %v4953 = vpop.f32.mrb[0].mxu0
    %v4954 = vadd.f32 %v4877, %v4953
    %4955 = vmatprep.mubr.f32.mxu0 %v4465
    %4956 = vmatmul.mubr.f32.gmra.mrb[0].mxu0 %v4464
    %v4957 = vpop.f32.mrb[0].mxu0
    %v4958 = vadd.f32 %v4881, %v4957
    %v4959 = vpop.f32.mrb[0].mxu0
    %v4960 = vadd.f32 %v4883, %v4959
    %4961 = vdwg.mxu0
    %4962 = vmatprep.subr.mxu0 %v4662
    %4963 = vmatpush1.msra.mxu0 %v4661
    %4964 = vmatprep.subr.mxu0 %v4665
    %4965 = vmatpush1.msra.mxu0 %v4664
    %4966 = vmatprep.subr.mxu0 %v4668
    %4967 = vmatpush1.msra.mxu0 %v4667
    %4968 = vmatprep.subr.mxu0 %v4671
    %4969 = vmatpush1.msra.mxu0 %v4670
    %4970 = vmatprep.subr.mxu0 %v4674
    %4971 = vmatpush1.msra.mxu0 %v4673
    %4972 = vmatprep.subr.mxu0 %v4677
    %4973 = vmatpush1.msra.mxu0 %v4676
    %4974 = vmatprep.subr.mxu0 %v4680
    %4975 = vmatpush1.msra.mxu0 %v4679
    %4976 = vmatprep.subr.mxu0 %v4683
    %4977 = vmatpush1.msra.mxu0 %v4682
    %4978 = vmatprep.subr.mxu0 %v4686
    %4979 = vmatpush1.msra.mxu0 %v4685
    %4980 = vmatprep.subr.mxu0 %v4689
    %4981 = vmatpush1.msra.mxu0 %v4688
    %4982 = vmatprep.subr.mxu0 %v4692
    %4983 = vmatpush1.msra.mxu0 %v4691
    %4984 = vmatprep.subr.mxu0 %v4695
    %4985 = vmatpush1.msra.mxu0 %v4694
    %4986 = vmatprep.subr.mxu0 %v4698
    %4987 = vmatpush1.msra.mxu0 %v4697
    %4988 = vmatprep.subr.mxu0 %v4701
    %4989 = vmatpush1.msra.mxu0 %v4700
    %4990 = vmatprep.subr.mxu0 %v4704
    %4991 = vmatpush1.msra.mxu0 %v4703
    %4992 = vmatprep.subr.mxu0 %v4707
    %4993 = vmatpush1.msra.mxu0 %v4706
    %4994 = vmatprep.subr.mxu0 %v4710
    %4995 = vmatpush1.msra.mxu0 %v4709
    %4996 = vmatprep.subr.mxu0 %v4713
    %4997 = vmatpush1.msra.mxu0 %v4712
    %4998 = vmatprep.subr.mxu0 %v4716
    %4999 = vmatpush1.msra.mxu0 %v4715
    %5000 = vmatprep.subr.mxu0 %v4719
    %5001 = vmatpush1.msra.mxu0 %v4718
    %5002 = vmatprep.subr.mxu0 %v4722
    %5003 = vmatpush1.msra.mxu0 %v4721
    %5004 = vmatprep.subr.mxu0 %v4725
    %5005 = vmatpush1.msra.mxu0 %v4724
    %5006 = vmatprep.subr.mxu0 %v4728
    %5007 = vmatpush1.msra.mxu0 %v4727
    %5008 = vmatprep.subr.mxu0 %v4731
    %5009 = vmatpush1.msra.mxu0 %v4730
    %5010 = vmatprep.subr.mxu0 %v4734
    %5011 = vmatpush1.msra.mxu0 %v4733
    %5012 = vmatprep.subr.mxu0 %v4737
    %5013 = vmatpush1.msra.mxu0 %v4736
    %5014 = vmatprep.subr.mxu0 %v4740
    %5015 = vmatpush1.msra.mxu0 %v4739
    %5016 = vmatprep.subr.mxu0 %v4743
    %5017 = vmatpush1.msra.mxu0 %v4742
    %5018 = vmatprep.subr.mxu0 %v4746
    %5019 = vmatpush1.msra.mxu0 %v4745
    %5020 = vmatprep.subr.mxu0 %v4749
    %5021 = vmatpush1.msra.mxu0 %v4748
    %5022 = vmatprep.subr.mxu0 %v4752
    %5023 = vmatpush1.msra.mxu0 %v4751
    %5024 = vmatprep.subr.mxu0 %v4755
    %5025 = vmatpush1.msra.mxu0 %v4754
    %5026 = vmatprep.mubr.f32.mxu0 %v4460
    %5027 = vmatmul.mubr.f32.gmra.mrb[0].mxu0 %v4459
    %v5028 = vpop.f32.mrb[0].mxu0
    %v5029 = vadd.f32 %v4952, %v5028
    %v5030 = vpop.f32.mrb[0].mxu0
    %v5031 = vadd.f32 %v4954, %v5030
    %5032 = vmatprep.mubr.f32.mxu0 %v4467
    %5033 = vmatmul.mubr.f32.gmra.mrb[0].mxu0 %v4466
    %v5034 = vpop.f32.mrb[0].mxu0
    %v5035 = vadd.f32 %v4958, %v5034
    %v5036 = vpop.f32.mrb[0].mxu0
    %v5037 = vadd.f32 %v4960, %v5036
    %5038 = vdwg.mxu0
    %5039 = vmatprep.subr.mxu0 %v4758
    %5040 = vmatpush1.msra.mxu0 %v4757
    %5041 = vmatprep.subr.mxu0 %v4761
    %5042 = vmatpush1.msra.mxu0 %v4760
    %5043 = vmatprep.subr.mxu0 %v4764
    %5044 = vmatpush1.msra.mxu0 %v4763
    %5045 = vmatprep.subr.mxu0 %v4767
    %5046 = vmatpush1.msra.mxu0 %v4766
    %5047 = vmatprep.subr.mxu0 %v4770
    %5048 = vmatpush1.msra.mxu0 %v4769
    %5049 = vmatprep.subr.mxu0 %v4773
    %5050 = vmatpush1.msra.mxu0 %v4772
    %5051 = vmatprep.subr.mxu0 %v4776
    %5052 = vmatpush1.msra.mxu0 %v4775
    %5053 = vmatprep.subr.mxu0 %v4779
    %5054 = vmatpush1.msra.mxu0 %v4778
    %5055 = vmatprep.subr.mxu0 %v4782
    %5056 = vmatpush1.msra.mxu0 %v4781
    %5057 = vmatprep.subr.mxu0 %v4785
    %5058 = vmatpush1.msra.mxu0 %v4784
    %5059 = vmatprep.subr.mxu0 %v4788
    %5060 = vmatpush1.msra.mxu0 %v4787
    %5061 = vmatprep.subr.mxu0 %v4803
    %5062 = vmatpush1.msra.mxu0 %v4800
    %5063 = vmatprep.subr.mxu0 0.0
    %5064 = vmatpush1.msra.mxu0 0.0
    %5065 = vmatprep.subr.mxu0 0.0
    %5066 = vmatpush1.msra.mxu0 0.0
    %5067 = vmatprep.subr.mxu0 0.0
    %5068 = vmatpush1.msra.mxu0 0.0
    %5069 = vmatprep.subr.mxu0 0.0
    %5070 = vmatpush1.msra.mxu0 0.0
    %5071 = vmatprep.subr.mxu0 0.0
    %5072 = vmatpush1.msra.mxu0 0.0
    %5073 = vmatprep.subr.mxu0 0.0
    %5074 = vmatpush1.msra.mxu0 0.0
    %5075 = vmatprep.subr.mxu0 0.0
    %5076 = vmatpush1.msra.mxu0 0.0
    %5077 = vmatprep.subr.mxu0 0.0
    %5078 = vmatpush1.msra.mxu0 0.0
    %5079 = vmatprep.subr.mxu0 0.0
    %5080 = vmatpush1.msra.mxu0 0.0
    %5081 = vmatprep.subr.mxu0 0.0
    %5082 = vmatpush1.msra.mxu0 0.0
    %5083 = vmatprep.subr.mxu0 0.0
    %5084 = vmatpush1.msra.mxu0 0.0
    %5085 = vmatprep.subr.mxu0 0.0
    %5086 = vmatpush1.msra.mxu0 0.0
    %5087 = vmatprep.subr.mxu0 0.0
    %5088 = vmatpush1.msra.mxu0 0.0
    %5089 = vmatprep.subr.mxu0 0.0
    %5090 = vmatpush1.msra.mxu0 0.0
    %5091 = vmatprep.subr.mxu0 0.0
    %5092 = vmatpush1.msra.mxu0 0.0
    %5093 = vmatprep.subr.mxu0 0.0
    %5094 = vmatpush1.msra.mxu0 0.0
    %5095 = vmatprep.subr.mxu0 0.0
    %5096 = vmatpush1.msra.mxu0 0.0
    %5097 = vmatprep.subr.mxu0 0.0
    %5098 = vmatpush1.msra.mxu0 0.0
    %5099 = vmatprep.subr.mxu0 0.0
    %5100 = vmatpush1.msra.mxu0 0.0
    %5101 = vmatprep.subr.mxu0 0.0
    %5102 = vmatpush1.msra.mxu0 0.0
    %5103 = vmatprep.mubr.f32.mxu0 0.0
    %5104 = vmatmul.mubr.f32.gmra.mrb[0].mxu0 %v4794
    %v5105 = vpop.f32.mrb[0].mxu0
    %v5106 = vadd.f32 %v5029, %v5105
    %v5107 = vpop.f32.mrb[0].mxu0
    %v5108 = vadd.f32 %v5031, %v5107
    %5109 = vmatprep.mubr.f32.mxu0 0.0
    %5110 = vmatmul.mubr.f32.gmra.mrb[0].mxu0 %v4797
    %v5111 = vpop.f32.mrb[0].mxu0
    %v5112 = vadd.f32 %v5035, %v5111
    %v5113 = vpop.f32.mrb[0].mxu0
    %v5114 = vadd.f32 %v5037, %v5113
    %5115 = vdwg.mxu0
    %5116 = vmatprep.subr.mxu0 0.0
    %5117 = vmatpush1.msra.mxu0 %v4471
    %5118 = vmatprep.subr.mxu0 0.0
    %5119 = vmatpush1.msra.mxu0 %v4474
    %5120 = vmatprep.subr.mxu0 0.0
    %5121 = vmatpush1.msra.mxu0 %v4477
    %5122 = vmatprep.subr.mxu0 0.0
    %5123 = vmatpush1.msra.mxu0 %v4480
    %5124 = vmatprep.subr.mxu0 0.0
    %5125 = vmatpush1.msra.mxu0 %v4483
    %5126 = vmatprep.subr.mxu0 0.0
    %5127 = vmatpush1.msra.mxu0 %v4486
    %5128 = vmatprep.subr.mxu0 0.0
    %5129 = vmatpush1.msra.mxu0 %v4489
    %5130 = vmatprep.subr.mxu0 0.0
    %5131 = vmatpush1.msra.mxu0 %v4492
    %5132 = vmatprep.subr.mxu0 0.0
    %5133 = vmatpush1.msra.mxu0 %v4495
    %5134 = vmatprep.subr.mxu0 0.0
    %5135 = vmatpush1.msra.mxu0 %v4498
    %5136 = vmatprep.subr.mxu0 0.0
    %5137 = vmatpush1.msra.mxu0 %v4501
    %5138 = vmatprep.subr.mxu0 0.0
    %5139 = vmatpush1.msra.mxu0 %v4504
    %5140 = vmatprep.subr.mxu0 0.0
    %5141 = vmatpush1.msra.mxu0 %v4507
    %5142 = vmatprep.subr.mxu0 0.0
    %5143 = vmatpush1.msra.mxu0 %v4510
    %5144 = vmatprep.subr.mxu0 0.0
    %5145 = vmatpush1.msra.mxu0 %v4513
    %5146 = vmatprep.subr.mxu0 0.0
    %5147 = vmatpush1.msra.mxu0 %v4516
    %5148 = vmatprep.subr.mxu0 0.0
    %5149 = vmatpush1.msra.mxu0 %v4519
    %5150 = vmatprep.subr.mxu0 0.0
    %5151 = vmatpush1.msra.mxu0 %v4522
    %5152 = vmatprep.subr.mxu0 0.0
    %5153 = vmatpush1.msra.mxu0 %v4525
    %5154 = vmatprep.subr.mxu0 0.0
    %5155 = vmatpush1.msra.mxu0 %v4528
    %5156 = vmatprep.subr.mxu0 0.0
    %5157 = vmatpush1.msra.mxu0 %v4531
    %5158 = vmatprep.subr.mxu0 0.0
    %5159 = vmatpush1.msra.mxu0 %v4534
    %5160 = vmatprep.subr.mxu0 0.0
    %5161 = vmatpush1.msra.mxu0 %v4537
    %5162 = vmatprep.subr.mxu0 0.0
    %5163 = vmatpush1.msra.mxu0 %v4540
    %5164 = vmatprep.subr.mxu0 0.0
    %5165 = vmatpush1.msra.mxu0 %v4543
    %5166 = vmatprep.subr.mxu0 0.0
    %5167 = vmatpush1.msra.mxu0 %v4546
    %5168 = vmatprep.subr.mxu0 0.0
    %5169 = vmatpush1.msra.mxu0 %v4549
    %5170 = vmatprep.subr.mxu0 0.0
    %5171 = vmatpush1.msra.mxu0 %v4552
    %5172 = vmatprep.subr.mxu0 0.0
    %5173 = vmatpush1.msra.mxu0 %v4555
    %5174 = vmatprep.subr.mxu0 0.0
    %5175 = vmatpush1.msra.mxu0 %v4558
    %5176 = vmatprep.subr.mxu0 0.0
    %5177 = vmatpush1.msra.mxu0 %v4561
    %5178 = vmatprep.subr.mxu0 0.0
    %5179 = vmatpush1.msra.mxu0 %v4564
    %5180 = vmatprep.mubr.f32.mxu0 %v4456
    %5181 = vmatmul.mubr.f32.gmra.mrb[0].mxu0 %v4455
    %v5182 = vpop.f32.mrb[0].mxu0
    %v5183 = vadd.f32 0.0, %v5182
    %v5184 = vpop.f32.mrb[0].mxu0
    %5185 = vmatprep.mubr.f32.mxu0 %v4463
    %5186 = vmatmul.mubr.f32.gmra.mrb[0].mxu0 %v4462
    %v5187 = vpop.f32.mrb[0].mxu0
    %v5188 = vadd.f32 0.0, %v5187
    %v5189 = vpop.f32.mrb[0].mxu0
    %5190 = vdwg.mxu0
    %5191 = vmatprep.subr.mxu0 0.0
    %5192 = vmatpush1.msra.mxu0 %v4567
    %5193 = vmatprep.subr.mxu0 0.0
    %5194 = vmatpush1.msra.mxu0 %v4570
    %5195 = vmatprep.subr.mxu0 0.0
    %5196 = vmatpush1.msra.mxu0 %v4573
    %5197 = vmatprep.subr.mxu0 0.0
    %5198 = vmatpush1.msra.mxu0 %v4576
    %5199 = vmatprep.subr.mxu0 0.0
    %5200 = vmatpush1.msra.mxu0 %v4579
    %5201 = vmatprep.subr.mxu0 0.0
    %5202 = vmatpush1.msra.mxu0 %v4582
    %5203 = vmatprep.subr.mxu0 0.0
    %5204 = vmatpush1.msra.mxu0 %v4585
    %5205 = vmatprep.subr.mxu0 0.0
    %5206 = vmatpush1.msra.mxu0 %v4588
    %5207 = vmatprep.subr.mxu0 0.0
    %5208 = vmatpush1.msra.mxu0 %v4591
    %5209 = vmatprep.subr.mxu0 0.0
    %5210 = vmatpush1.msra.mxu0 %v4594
    %5211 = vmatprep.subr.mxu0 0.0
    %5212 = vmatpush1.msra.mxu0 %v4597
    %5213 = vmatprep.subr.mxu0 0.0
    %5214 = vmatpush1.msra.mxu0 %v4600
    %5215 = vmatprep.subr.mxu0 0.0
    %5216 = vmatpush1.msra.mxu0 %v4603
    %5217 = vmatprep.subr.mxu0 0.0
    %5218 = vmatpush1.msra.mxu0 %v4606
    %5219 = vmatprep.subr.mxu0 0.0
    %5220 = vmatpush1.msra.mxu0 %v4609
    %5221 = vmatprep.subr.mxu0 0.0
    %5222 = vmatpush1.msra.mxu0 %v4612
    %5223 = vmatprep.subr.mxu0 0.0
    %5224 = vmatpush1.msra.mxu0 %v4615
    %5225 = vmatprep.subr.mxu0 0.0
    %5226 = vmatpush1.msra.mxu0 %v4618
    %5227 = vmatprep.subr.mxu0 0.0
    %5228 = vmatpush1.msra.mxu0 %v4621
    %5229 = vmatprep.subr.mxu0 0.0
    %5230 = vmatpush1.msra.mxu0 %v4624
    %5231 = vmatprep.subr.mxu0 0.0
    %5232 = vmatpush1.msra.mxu0 %v4627
    %5233 = vmatprep.subr.mxu0 0.0
    %5234 = vmatpush1.msra.mxu0 %v4630
    %5235 = vmatprep.subr.mxu0 0.0
    %5236 = vmatpush1.msra.mxu0 %v4633
    %5237 = vmatprep.subr.mxu0 0.0
    %5238 = vmatpush1.msra.mxu0 %v4636
    %5239 = vmatprep.subr.mxu0 0.0
    %5240 = vmatpush1.msra.mxu0 %v4639
    %5241 = vmatprep.subr.mxu0 0.0
    %5242 = vmatpush1.msra.mxu0 %v4642
    %5243 = vmatprep.subr.mxu0 0.0
    %5244 = vmatpush1.msra.mxu0 %v4645
    %5245 = vmatprep.subr.mxu0 0.0
    %5246 = vmatpush1.msra.mxu0 %v4648
    %5247 = vmatprep.subr.mxu0 0.0
    %5248 = vmatpush1.msra.mxu0 %v4651
    %5249 = vmatprep.subr.mxu0 0.0
    %5250 = vmatpush1.msra.mxu0 %v4654
    %5251 = vmatprep.subr.mxu0 0.0
    %5252 = vmatpush1.msra.mxu0 %v4657
    %5253 = vmatprep.subr.mxu0 0.0
    %5254 = vmatpush1.msra.mxu0 %v4660
    %5255 = vmatprep.mubr.f32.mxu0 %v4458
    %5256 = vmatmul.mubr.f32.gmra.mrb[0].mxu0 %v4457
    %v5257 = vpop.f32.mrb[0].mxu0
    %v5258 = vadd.f32 %v5183, %v5257
    %v5259 = vpop.f32.mrb[0].mxu0
    %5260 = vmatprep.mubr.f32.mxu0 %v4465
    %5261 = vmatmul.mubr.f32.gmra.mrb[0].mxu0 %v4464
    %v5262 = vpop.f32.mrb[0].mxu0
    %v5263 = vadd.f32 %v5188, %v5262
    %v5264 = vpop.f32.mrb[0].mxu0
    %5265 = vdwg.mxu0
    %5266 = vmatprep.subr.mxu0 0.0
    %5267 = vmatpush1.msra.mxu0 %v4663
    %5268 = vmatprep.subr.mxu0 0.0
    %5269 = vmatpush1.msra.mxu0 %v4666
    %5270 = vmatprep.subr.mxu0 0.0
    %5271 = vmatpush1.msra.mxu0 %v4669
    %5272 = vmatprep.subr.mxu0 0.0
    %5273 = vmatpush1.msra.mxu0 %v4672
    %5274 = vmatprep.subr.mxu0 0.0
    %5275 = vmatpush1.msra.mxu0 %v4675
    %5276 = vmatprep.subr.mxu0 0.0
    %5277 = vmatpush1.msra.mxu0 %v4678
    %5278 = vmatprep.subr.mxu0 0.0
    %5279 = vmatpush1.msra.mxu0 %v4681
    %5280 = vmatprep.subr.mxu0 0.0
    %5281 = vmatpush1.msra.mxu0 %v4684
    %5282 = vmatprep.subr.mxu0 0.0
    %5283 = vmatpush1.msra.mxu0 %v4687
    %5284 = vmatprep.subr.mxu0 0.0
    %5285 = vmatpush1.msra.mxu0 %v4690
    %5286 = vmatprep.subr.mxu0 0.0
    %5287 = vmatpush1.msra.mxu0 %v4693
    %5288 = vmatprep.subr.mxu0 0.0
    %5289 = vmatpush1.msra.mxu0 %v4696
    %5290 = vmatprep.subr.mxu0 0.0
    %5291 = vmatpush1.msra.mxu0 %v4699
    %5292 = vmatprep.subr.mxu0 0.0
    %5293 = vmatpush1.msra.mxu0 %v4702
    %5294 = vmatprep.subr.mxu0 0.0
    %5295 = vmatpush1.msra.mxu0 %v4705
    %5296 = vmatprep.subr.mxu0 0.0
    %5297 = vmatpush1.msra.mxu0 %v4708
    %5298 = vmatprep.subr.mxu0 0.0
    %5299 = vmatpush1.msra.mxu0 %v4711
    %5300 = vmatprep.subr.mxu0 0.0
    %5301 = vmatpush1.msra.mxu0 %v4714
    %5302 = vmatprep.subr.mxu0 0.0
    %5303 = vmatpush1.msra.mxu0 %v4717
    %5304 = vmatprep.subr.mxu0 0.0
    %5305 = vmatpush1.msra.mxu0 %v4720
    %5306 = vmatprep.subr.mxu0 0.0
    %5307 = vmatpush1.msra.mxu0 %v4723
    %5308 = vmatprep.subr.mxu0 0.0
    %5309 = vmatpush1.msra.mxu0 %v4726
    %5310 = vmatprep.subr.mxu0 0.0
    %5311 = vmatpush1.msra.mxu0 %v4729
    %5312 = vmatprep.subr.mxu0 0.0
    %5313 = vmatpush1.msra.mxu0 %v4732
    %5314 = vmatprep.subr.mxu0 0.0
    %5315 = vmatpush1.msra.mxu0 %v4735
    %5316 = vmatprep.subr.mxu0 0.0
    %5317 = vmatpush1.msra.mxu0 %v4738
    %5318 = vmatprep.subr.mxu0 0.0
    %5319 = vmatpush1.msra.mxu0 %v4741
    %5320 = vmatprep.subr.mxu0 0.0
    %5321 = vmatpush1.msra.mxu0 %v4744
    %5322 = vmatprep.subr.mxu0 0.0
    %5323 = vmatpush1.msra.mxu0 %v4747
    %5324 = vmatprep.subr.mxu0 0.0
    %5325 = vmatpush1.msra.mxu0 %v4750
    %5326 = vmatprep.subr.mxu0 0.0
    %5327 = vmatpush1.msra.mxu0 %v4753
    %5328 = vmatprep.subr.mxu0 0.0
    %5329 = vmatpush1.msra.mxu0 %v4756
    %5330 = vmatprep.mubr.f32.mxu0 %v4460
    %5331 = vmatmul.mubr.f32.gmra.mrb[0].mxu0 %v4459
    %v5332 = vpop.f32.mrb[0].mxu0
    %v5333 = vadd.f32 %v5258, %v5332
    %v5334 = vpop.f32.mrb[0].mxu0
    %5335 = vmatprep.mubr.f32.mxu0 %v4467
    %5336 = vmatmul.mubr.f32.gmra.mrb[0].mxu0 %v4466
    %v5337 = vpop.f32.mrb[0].mxu0
    %v5338 = vadd.f32 %v5263, %v5337
    %v5339 = vpop.f32.mrb[0].mxu0
    %5340 = vdwg.mxu0
    %5341 = vmatprep.subr.mxu0 0.0
    %5342 = vmatpush1.msra.mxu0 %v4759
    %5343 = vmatprep.subr.mxu0 0.0
    %5344 = vmatpush1.msra.mxu0 %v4762
    %5345 = vmatprep.subr.mxu0 0.0
    %5346 = vmatpush1.msra.mxu0 %v4765
    %5347 = vmatprep.subr.mxu0 0.0
    %5348 = vmatpush1.msra.mxu0 %v4768
    %5349 = vmatprep.subr.mxu0 0.0
    %5350 = vmatpush1.msra.mxu0 %v4771
    %5351 = vmatprep.subr.mxu0 0.0
    %5352 = vmatpush1.msra.mxu0 %v4774
    %5353 = vmatprep.subr.mxu0 0.0
    %5354 = vmatpush1.msra.mxu0 %v4777
    %5355 = vmatprep.subr.mxu0 0.0
    %5356 = vmatpush1.msra.mxu0 %v4780
    %5357 = vmatprep.subr.mxu0 0.0
    %5358 = vmatpush1.msra.mxu0 %v4783
    %5359 = vmatprep.subr.mxu0 0.0
    %5360 = vmatpush1.msra.mxu0 %v4786
    %5361 = vmatprep.subr.mxu0 0.0
    %5362 = vmatpush1.msra.mxu0 %v4789
    %5363 = vmatprep.subr.mxu0 0.0
    %5364 = vmatpush1.msra.mxu0 %v4806
    %5365 = vmatprep.subr.mxu0 0.0
    %5366 = vmatpush1.msra.mxu0 0.0
    %5367 = vmatprep.subr.mxu0 0.0
    %5368 = vmatpush1.msra.mxu0 0.0
    %5369 = vmatprep.subr.mxu0 0.0
    %5370 = vmatpush1.msra.mxu0 0.0
    %5371 = vmatprep.subr.mxu0 0.0
    %5372 = vmatpush1.msra.mxu0 0.0
    %5373 = vmatprep.subr.mxu0 0.0
    %5374 = vmatpush1.msra.mxu0 0.0
    %5375 = vmatprep.subr.mxu0 0.0
    %5376 = vmatpush1.msra.mxu0 0.0
    %5377 = vmatprep.subr.mxu0 0.0
    %5378 = vmatpush1.msra.mxu0 0.0
    %5379 = vmatprep.subr.mxu0 0.0
    %5380 = vmatpush1.msra.mxu0 0.0
    %5381 = vmatprep.subr.mxu0 0.0
    %5382 = vmatpush1.msra.mxu0 0.0
    %5383 = vmatprep.subr.mxu0 0.0
    %5384 = vmatpush1.msra.mxu0 0.0
    %5385 = vmatprep.subr.mxu0 0.0
    %5386 = vmatpush1.msra.mxu0 0.0
    %5387 = vmatprep.subr.mxu0 0.0
    %5388 = vmatpush1.msra.mxu0 0.0
    %5389 = vmatprep.subr.mxu0 0.0
    %5390 = vmatpush1.msra.mxu0 0.0
    %5391 = vmatprep.subr.mxu0 0.0
    %5392 = vmatpush1.msra.mxu0 0.0
    %5393 = vmatprep.subr.mxu0 0.0
    %5394 = vmatpush1.msra.mxu0 0.0
    %5395 = vmatprep.subr.mxu0 0.0
    %5396 = vmatpush1.msra.mxu0 0.0
    %5397 = vmatprep.subr.mxu0 0.0
    %5398 = vmatpush1.msra.mxu0 0.0
    %5399 = vmatprep.subr.mxu0 0.0
    %5400 = vmatpush1.msra.mxu0 0.0
    %5401 = vmatprep.subr.mxu0 0.0
    %5402 = vmatpush1.msra.mxu0 0.0
    %5403 = vmatprep.subr.mxu0 0.0
    %5404 = vmatpush1.msra.mxu0 0.0
    %5405 = vmatprep.mubr.f32.mxu0 0.0
    %5406 = vmatmul.mubr.f32.gmra.mrb[0].mxu0 %v4794
    %v5407 = vpop.f32.mrb[0].mxu0
    %v5408 = vadd.f32 %v5333, %v5407
    %v5409 = vpop.f32.mrb[0].mxu0
    %5410 = vmatprep.mubr.f32.mxu0 0.0
    %5411 = vmatmul.mubr.f32.gmra.mrb[0].mxu0 %v4797
    %v5412 = vpop.f32.mrb[0].mxu0
    %v5413 = vadd.f32 %v5338, %v5412
    %v5414 = vpop.f32.mrb[0].mxu0
    %5415 = vdwg.mxu0
    %5420 = vrot.lane.b32.xlu0 %v5106, 127
    %v5421 = vpop.permute.xlu0 %5420
    %5422 = vrot.lane.b32.xlu0 %v5108, 127
    %v5423 = vpop.permute.xlu0 %5422
    %5424 = vrot.lane.b32.xlu0 %v5112, 127
    %v5425 = vpop.permute.xlu0 %5424
    %5426 = vrot.lane.b32.xlu0 %v5114, 127
    %v5427 = vpop.permute.xlu0 %5426
    %v5428 = vsel %vm92, %v5421, %v5423
    %v5429 = vsel %vm92, %v5425, %v5427
    %5434 = vrot.lane.b32.xlu0 %v5106, 126
    %v5435 = vpop.permute.xlu0 %5434
    %5436 = vrot.lane.b32.xlu0 %v5108, 126
    %v5437 = vpop.permute.xlu0 %5436
    %5438 = vrot.lane.b32.xlu0 %v5112, 126
    %v5439 = vpop.permute.xlu0 %5438
    %5440 = vrot.lane.b32.xlu0 %v5114, 126
    %v5441 = vpop.permute.xlu0 %5440
    %v5442 = vsel %vm120, %v5435, %v5437
    %v5443 = vsel %vm120, %v5439, %v5441
    %5448 = vrot.lane.b32.xlu0 %v5106, 125
    %v5449 = vpop.permute.xlu0 %5448
    %5450 = vrot.lane.b32.xlu0 %v5108, 125
    %v5451 = vpop.permute.xlu0 %5450
    %5452 = vrot.lane.b32.xlu0 %v5112, 125
    %v5453 = vpop.permute.xlu0 %5452
    %5454 = vrot.lane.b32.xlu0 %v5114, 125
    %v5455 = vpop.permute.xlu0 %5454
    %v5456 = vsel %vm148, %v5449, %v5451
    %v5457 = vsel %vm148, %v5453, %v5455
    %5462 = vrot.lane.b32.xlu0 %v5106, 124
    %v5463 = vpop.permute.xlu0 %5462
    %5464 = vrot.lane.b32.xlu0 %v5108, 124
    %v5465 = vpop.permute.xlu0 %5464
    %5466 = vrot.lane.b32.xlu0 %v5112, 124
    %v5467 = vpop.permute.xlu0 %5466
    %5468 = vrot.lane.b32.xlu0 %v5114, 124
    %v5469 = vpop.permute.xlu0 %5468
    %v5470 = vsel %vm176, %v5463, %v5465
    %v5471 = vsel %vm176, %v5467, %v5469
    %5478 = vrot.lane.b32.xlu0 %v5106, 110
    %v5479 = vpop.permute.xlu0 %5478
    %5480 = vrot.lane.b32.xlu0 %v5108, 110
    %v5481 = vpop.permute.xlu0 %5480
    %5482 = vrot.lane.b32.xlu0 %v5408, 110
    %v5483 = vpop.permute.xlu0 %5482
    %5484 = vrot.lane.b32.xlu0 %v5112, 110
    %v5485 = vpop.permute.xlu0 %5484
    %5486 = vrot.lane.b32.xlu0 %v5114, 110
    %v5487 = vpop.permute.xlu0 %5486
    %5488 = vrot.lane.b32.xlu0 %v5413, 110
    %v5489 = vpop.permute.xlu0 %5488
    %v5490 = vsel %vm2332, %v5479, %v5481
    %v5491 = vsel %vm2332, %v5481, %v5483
    %v5492 = vsel %vm2332, %v5485, %v5487
    %v5493 = vsel %vm2332, %v5487, %v5489
    %5498 = vrot.lane.b32.xlu0 %v5106, 109
    %v5499 = vpop.permute.xlu0 %5498
    %5500 = vrot.lane.b32.xlu0 %v5108, 109
    %v5501 = vpop.permute.xlu0 %5500
    %5502 = vrot.lane.b32.xlu0 %v5408, 109
    %v5503 = vpop.permute.xlu0 %5502
    %5504 = vrot.lane.b32.xlu0 %v5112, 109
    %v5505 = vpop.permute.xlu0 %5504
    %5506 = vrot.lane.b32.xlu0 %v5114, 109
    %v5507 = vpop.permute.xlu0 %5506
    %5508 = vrot.lane.b32.xlu0 %v5413, 109
    %v5509 = vpop.permute.xlu0 %5508
    %v5510 = vsel %vm2353, %v5499, %v5501
    %v5511 = vsel %vm2353, %v5501, %v5503
    %v5512 = vsel %vm2353, %v5505, %v5507
    %v5513 = vsel %vm2353, %v5507, %v5509
    %5518 = vrot.lane.b32.xlu0 %v5106, 108
    %v5519 = vpop.permute.xlu0 %5518
    %5520 = vrot.lane.b32.xlu0 %v5108, 108
    %v5521 = vpop.permute.xlu0 %5520
    %5522 = vrot.lane.b32.xlu0 %v5408, 108
    %v5523 = vpop.permute.xlu0 %5522
    %5524 = vrot.lane.b32.xlu0 %v5112, 108
    %v5525 = vpop.permute.xlu0 %5524
    %5526 = vrot.lane.b32.xlu0 %v5114, 108
    %v5527 = vpop.permute.xlu0 %5526
    %5528 = vrot.lane.b32.xlu0 %v5413, 108
    %v5529 = vpop.permute.xlu0 %5528
    %v5530 = vsel %vm2374, %v5519, %v5521
    %v5531 = vsel %vm2374, %v5521, %v5523
    %v5532 = vsel %vm2374, %v5525, %v5527
    %v5533 = vsel %vm2374, %v5527, %v5529
    %5538 = vrot.lane.b32.xlu0 %v5106, 107
    %v5539 = vpop.permute.xlu0 %5538
    %5540 = vrot.lane.b32.xlu0 %v5108, 107
    %v5541 = vpop.permute.xlu0 %5540
    %5542 = vrot.lane.b32.xlu0 %v5408, 107
    %v5543 = vpop.permute.xlu0 %5542
    %5544 = vrot.lane.b32.xlu0 %v5112, 107
    %v5545 = vpop.permute.xlu0 %5544
    %5546 = vrot.lane.b32.xlu0 %v5114, 107
    %v5547 = vpop.permute.xlu0 %5546
    %5548 = vrot.lane.b32.xlu0 %v5413, 107
    %v5549 = vpop.permute.xlu0 %5548
    %v5550 = vsel %vm2395, %v5539, %v5541
    %v5551 = vsel %vm2395, %v5541, %v5543
    %v5552 = vsel %vm2395, %v5545, %v5547
    %v5553 = vsel %vm2395, %v5547, %v5549
    %5558 = vrot.lane.b32.xlu0 %v5106, 106
    %v5559 = vpop.permute.xlu0 %5558
    %5560 = vrot.lane.b32.xlu0 %v5108, 106
    %v5561 = vpop.permute.xlu0 %5560
    %5562 = vrot.lane.b32.xlu0 %v5408, 106
    %v5563 = vpop.permute.xlu0 %5562
    %5564 = vrot.lane.b32.xlu0 %v5112, 106
    %v5565 = vpop.permute.xlu0 %5564
    %5566 = vrot.lane.b32.xlu0 %v5114, 106
    %v5567 = vpop.permute.xlu0 %5566
    %5568 = vrot.lane.b32.xlu0 %v5413, 106
    %v5569 = vpop.permute.xlu0 %5568
    %v5570 = vsel %vm2416, %v5559, %v5561
    %v5571 = vsel %vm2416, %v5561, %v5563
    %v5572 = vsel %vm2416, %v5565, %v5567
    %v5573 = vsel %vm2416, %v5567, %v5569
    %5578 = vrot.lane.b32.xlu0 %v5106, 92
    %v5579 = vpop.permute.xlu0 %5578
    %5580 = vrot.lane.b32.xlu0 %v5108, 92
    %v5581 = vpop.permute.xlu0 %5580
    %5582 = vrot.lane.b32.xlu0 %v5408, 92
    %v5583 = vpop.permute.xlu0 %5582
    %5584 = vrot.lane.b32.xlu0 %v5112, 92
    %v5585 = vpop.permute.xlu0 %5584
    %5586 = vrot.lane.b32.xlu0 %v5114, 92
    %v5587 = vpop.permute.xlu0 %5586
    %5588 = vrot.lane.b32.xlu0 %v5413, 92
    %v5589 = vpop.permute.xlu0 %5588
    %v5590 = vsel %vm334, %v5579, %v5581
    %v5591 = vsel %vm334, %v5581, %v5583
    %v5592 = vsel %vm334, %v5585, %v5587
    %v5593 = vsel %vm334, %v5587, %v5589
    %5598 = vrot.lane.b32.xlu0 %v5106, 91
    %v5599 = vpop.permute.xlu0 %5598
    %5600 = vrot.lane.b32.xlu0 %v5108, 91
    %v5601 = vpop.permute.xlu0 %5600
    %5602 = vrot.lane.b32.xlu0 %v5408, 91
    %v5603 = vpop.permute.xlu0 %5602
    %5604 = vrot.lane.b32.xlu0 %v5112, 91
    %v5605 = vpop.permute.xlu0 %5604
    %5606 = vrot.lane.b32.xlu0 %v5114, 91
    %v5607 = vpop.permute.xlu0 %5606
    %5608 = vrot.lane.b32.xlu0 %v5413, 91
    %v5609 = vpop.permute.xlu0 %5608
    %v5610 = vsel %vm1634, %v5599, %v5601
    %v5611 = vsel %vm1634, %v5601, %v5603
    %v5612 = vsel %vm1634, %v5605, %v5607
    %v5613 = vsel %vm1634, %v5607, %v5609
    %5618 = vrot.lane.b32.xlu0 %v5106, 90
    %v5619 = vpop.permute.xlu0 %5618
    %5620 = vrot.lane.b32.xlu0 %v5108, 90
    %v5621 = vpop.permute.xlu0 %5620
    %5622 = vrot.lane.b32.xlu0 %v5408, 90
    %v5623 = vpop.permute.xlu0 %5622
    %5624 = vrot.lane.b32.xlu0 %v5112, 90
    %v5625 = vpop.permute.xlu0 %5624
    %5626 = vrot.lane.b32.xlu0 %v5114, 90
    %v5627 = vpop.permute.xlu0 %5626
    %5628 = vrot.lane.b32.xlu0 %v5413, 90
    %v5629 = vpop.permute.xlu0 %5628
    %v5630 = vsel %vm2477, %v5619, %v5621
    %v5631 = vsel %vm2477, %v5621, %v5623
    %v5632 = vsel %vm2477, %v5625, %v5627
    %v5633 = vsel %vm2477, %v5627, %v5629
    %5638 = vrot.lane.b32.xlu0 %v5106, 89
    %v5639 = vpop.permute.xlu0 %5638
    %5640 = vrot.lane.b32.xlu0 %v5108, 89
    %v5641 = vpop.permute.xlu0 %5640
    %5642 = vrot.lane.b32.xlu0 %v5408, 89
    %v5643 = vpop.permute.xlu0 %5642
    %5644 = vrot.lane.b32.xlu0 %v5112, 89
    %v5645 = vpop.permute.xlu0 %5644
    %5646 = vrot.lane.b32.xlu0 %v5114, 89
    %v5647 = vpop.permute.xlu0 %5646
    %5648 = vrot.lane.b32.xlu0 %v5413, 89
    %v5649 = vpop.permute.xlu0 %5648
    %v5650 = vsel %vm2498, %v5639, %v5641
    %v5651 = vsel %vm2498, %v5641, %v5643
    %v5652 = vsel %vm2498, %v5645, %v5647
    %v5653 = vsel %vm2498, %v5647, %v5649
    %5658 = vrot.lane.b32.xlu0 %v5106, 88
    %v5659 = vpop.permute.xlu0 %5658
    %5660 = vrot.lane.b32.xlu0 %v5108, 88
    %v5661 = vpop.permute.xlu0 %5660
    %5662 = vrot.lane.b32.xlu0 %v5408, 88
    %v5663 = vpop.permute.xlu0 %5662
    %5664 = vrot.lane.b32.xlu0 %v5112, 88
    %v5665 = vpop.permute.xlu0 %5664
    %5666 = vrot.lane.b32.xlu0 %v5114, 88
    %v5667 = vpop.permute.xlu0 %5666
    %5668 = vrot.lane.b32.xlu0 %v5413, 88
    %v5669 = vpop.permute.xlu0 %5668
    %v5670 = vsel %vm2519, %v5659, %v5661
    %v5671 = vsel %vm2519, %v5661, %v5663
    %v5672 = vsel %vm2519, %v5665, %v5667
    %v5673 = vsel %vm2519, %v5667, %v5669
    %5678 = vrot.lane.b32.xlu0 %v5106, 74
    %v5679 = vpop.permute.xlu0 %5678
    %5680 = vrot.lane.b32.xlu0 %v5108, 74
    %v5681 = vpop.permute.xlu0 %5680
    %5682 = vrot.lane.b32.xlu0 %v5408, 74
    %v5683 = vpop.permute.xlu0 %5682
    %5684 = vrot.lane.b32.xlu0 %v5112, 74
    %v5685 = vpop.permute.xlu0 %5684
    %5686 = vrot.lane.b32.xlu0 %v5114, 74
    %v5687 = vpop.permute.xlu0 %5686
    %5688 = vrot.lane.b32.xlu0 %v5413, 74
    %v5689 = vpop.permute.xlu0 %5688
    %v5690 = vsel %vm2540, %v5679, %v5681
    %v5691 = vsel %vm2540, %v5681, %v5683
    %v5692 = vsel %vm2540, %v5685, %v5687
    %v5693 = vsel %vm2540, %v5687, %v5689
    %5698 = vrot.lane.b32.xlu0 %v5408, 127
    %v5699 = vpop.permute.xlu0 %5698
    %5700 = vrot.lane.b32.xlu0 %v5413, 127
    %v5701 = vpop.permute.xlu0 %5700
    %v5702 = vsel %vm92, %v5423, %v5699
    %v5703 = vsel %vm92, %v5427, %v5701
    %5704 = vrot.lane.b32.xlu0 %v5408, 126
    %v5705 = vpop.permute.xlu0 %5704
    %5706 = vrot.lane.b32.xlu0 %v5413, 126
    %v5707 = vpop.permute.xlu0 %5706
    %v5708 = vsel %vm120, %v5437, %v5705
    %v5709 = vsel %vm120, %v5441, %v5707
    %5710 = vrot.lane.b32.xlu0 %v5408, 125
    %v5711 = vpop.permute.xlu0 %5710
    %5712 = vrot.lane.b32.xlu0 %v5413, 125
    %v5713 = vpop.permute.xlu0 %5712
    %v5714 = vsel %vm148, %v5451, %v5711
    %v5715 = vsel %vm148, %v5455, %v5713
    %5716 = vrot.lane.b32.xlu0 %v5106, 111
    %v5717 = vpop.permute.xlu0 %5716
    %5718 = vrot.lane.b32.xlu0 %v5108, 111
    %v5719 = vpop.permute.xlu0 %5718
    %5720 = vrot.lane.b32.xlu0 %v5408, 111
    %v5721 = vpop.permute.xlu0 %5720
    %5722 = vrot.lane.b32.xlu0 %v5112, 111
    %v5723 = vpop.permute.xlu0 %5722
    %5724 = vrot.lane.b32.xlu0 %v5114, 111
    %v5725 = vpop.permute.xlu0 %5724
    %5726 = vrot.lane.b32.xlu0 %v5413, 111
    %v5727 = vpop.permute.xlu0 %5726
    %v5728 = vsel %vm2579, %v5717, %v5719
    %v5729 = vsel %vm2579, %v5719, %v5721
    %v5730 = vsel %vm2579, %v5723, %v5725
    %v5731 = vsel %vm2579, %v5725, %v5727
    %5732 = vrot.lane.b32.xlu0 %v5106, 73
    %v5733 = vpop.permute.xlu0 %5732
    %5734 = vrot.lane.b32.xlu0 %v5108, 73
    %v5735 = vpop.permute.xlu0 %5734
    %5736 = vrot.lane.b32.xlu0 %v5408, 73
    %v5737 = vpop.permute.xlu0 %5736
    %5738 = vrot.lane.b32.xlu0 %v5112, 73
    %v5739 = vpop.permute.xlu0 %5738
    %5740 = vrot.lane.b32.xlu0 %v5114, 73
    %v5741 = vpop.permute.xlu0 %5740
    %5742 = vrot.lane.b32.xlu0 %v5413, 73
    %v5743 = vpop.permute.xlu0 %5742
    %5744 = vrot.lane.b32.xlu0 %v5428, 73
    %v5745 = vpop.permute.xlu0 %5744
    %5746 = vrot.lane.b32.xlu0 %v5702, 73
    %v5747 = vpop.permute.xlu0 %5746
    %5748 = vrot.lane.b32.xlu0 %v5699, 73
    %v5749 = vpop.permute.xlu0 %5748
    %5750 = vrot.lane.b32.xlu0 %v5429, 73
    %v5751 = vpop.permute.xlu0 %5750
    %5752 = vrot.lane.b32.xlu0 %v5703, 73
    %v5753 = vpop.permute.xlu0 %5752
    %5754 = vrot.lane.b32.xlu0 %v5701, 73
    %v5755 = vpop.permute.xlu0 %5754
    %5756 = vrot.lane.b32.xlu0 %v5442, 73
    %v5757 = vpop.permute.xlu0 %5756
    %5758 = vrot.lane.b32.xlu0 %v5708, 73
    %v5759 = vpop.permute.xlu0 %5758
    %5760 = vrot.lane.b32.xlu0 %v5705, 73
    %v5761 = vpop.permute.xlu0 %5760
    %5762 = vrot.lane.b32.xlu0 %v5443, 73
    %v5763 = vpop.permute.xlu0 %5762
    %5764 = vrot.lane.b32.xlu0 %v5709, 73
    %v5765 = vpop.permute.xlu0 %5764
    %5766 = vrot.lane.b32.xlu0 %v5707, 73
    %v5767 = vpop.permute.xlu0 %5766
    %5768 = vrot.lane.b32.xlu0 %v5456, 73
    %v5769 = vpop.permute.xlu0 %5768
    %5770 = vrot.lane.b32.xlu0 %v5714, 73
    %v5771 = vpop.permute.xlu0 %5770
    %5772 = vrot.lane.b32.xlu0 %v5711, 73
    %v5773 = vpop.permute.xlu0 %5772
    %5774 = vrot.lane.b32.xlu0 %v5457, 73
    %v5775 = vpop.permute.xlu0 %5774
    %5776 = vrot.lane.b32.xlu0 %v5715, 73
    %v5777 = vpop.permute.xlu0 %5776
    %5778 = vrot.lane.b32.xlu0 %v5713, 73
    %v5779 = vpop.permute.xlu0 %5778
    %5780 = vrot.lane.b32.xlu0 %v5728, 73
    %v5781 = vpop.permute.xlu0 %5780
    %5782 = vrot.lane.b32.xlu0 %v5729, 73
    %v5783 = vpop.permute.xlu0 %5782
    %5784 = vrot.lane.b32.xlu0 %v5721, 73
    %v5785 = vpop.permute.xlu0 %5784
    %5786 = vrot.lane.b32.xlu0 %v5730, 73
    %v5787 = vpop.permute.xlu0 %5786
    %5788 = vrot.lane.b32.xlu0 %v5731, 73
    %v5789 = vpop.permute.xlu0 %5788
    %5790 = vrot.lane.b32.xlu0 %v5727, 73
    %v5791 = vpop.permute.xlu0 %5790
    %5792 = vrot.lane.b32.xlu0 %v5490, 73
    %v5793 = vpop.permute.xlu0 %5792
    %5794 = vrot.lane.b32.xlu0 %v5491, 73
    %v5795 = vpop.permute.xlu0 %5794
    %5796 = vrot.lane.b32.xlu0 %v5483, 73
    %v5797 = vpop.permute.xlu0 %5796
    %5798 = vrot.lane.b32.xlu0 %v5492, 73
    %v5799 = vpop.permute.xlu0 %5798
    %5800 = vrot.lane.b32.xlu0 %v5493, 73
    %v5801 = vpop.permute.xlu0 %5800
    %5802 = vrot.lane.b32.xlu0 %v5489, 73
    %v5803 = vpop.permute.xlu0 %5802
    %5804 = vrot.lane.b32.xlu0 %v5510, 73
    %v5805 = vpop.permute.xlu0 %5804
    %5806 = vrot.lane.b32.xlu0 %v5511, 73
    %v5807 = vpop.permute.xlu0 %5806
    %5808 = vrot.lane.b32.xlu0 %v5503, 73
    %v5809 = vpop.permute.xlu0 %5808
    %5810 = vrot.lane.b32.xlu0 %v5512, 73
    %v5811 = vpop.permute.xlu0 %5810
    %5812 = vrot.lane.b32.xlu0 %v5513, 73
    %v5813 = vpop.permute.xlu0 %5812
    %5814 = vrot.lane.b32.xlu0 %v5509, 73
    %v5815 = vpop.permute.xlu0 %5814
    %5816 = vrot.lane.b32.xlu0 %v5530, 73
    %v5817 = vpop.permute.xlu0 %5816
    %5818 = vrot.lane.b32.xlu0 %v5531, 73
    %v5819 = vpop.permute.xlu0 %5818
    %5820 = vrot.lane.b32.xlu0 %v5523, 73
    %v5821 = vpop.permute.xlu0 %5820
    %5822 = vrot.lane.b32.xlu0 %v5532, 73
    %v5823 = vpop.permute.xlu0 %5822
    %5824 = vrot.lane.b32.xlu0 %v5533, 73
    %v5825 = vpop.permute.xlu0 %5824
    %5826 = vrot.lane.b32.xlu0 %v5529, 73
    %v5827 = vpop.permute.xlu0 %5826
    %5828 = vrot.lane.b32.xlu0 %v5550, 73
    %v5829 = vpop.permute.xlu0 %5828
    %5830 = vrot.lane.b32.xlu0 %v5551, 73
    %v5831 = vpop.permute.xlu0 %5830
    %5832 = vrot.lane.b32.xlu0 %v5543, 73
    %v5833 = vpop.permute.xlu0 %5832
    %5834 = vrot.lane.b32.xlu0 %v5552, 73
    %v5835 = vpop.permute.xlu0 %5834
    %5836 = vrot.lane.b32.xlu0 %v5553, 73
    %v5837 = vpop.permute.xlu0 %5836
    %5838 = vrot.lane.b32.xlu0 %v5549, 73
    %v5839 = vpop.permute.xlu0 %5838
    %v5840 = vsel %vm2692, %v5733, %v5735
    %v5841 = vsel %vm2692, %v5735, %v5737
    %v5842 = vsel %vm2692, %v5739, %v5741
    %v5843 = vsel %vm2692, %v5741, %v5743
    %v5844 = vsel %vm2692, %v5745, %v5747
    %v5845 = vsel %vm2692, %v5747, %v5749
    %v5846 = vsel %vm2692, %v5751, %v5753
    %v5847 = vsel %vm2692, %v5753, %v5755
    %v5848 = vsel %vm2692, %v5757, %v5759
    %v5849 = vsel %vm2692, %v5759, %v5761
    %v5850 = vsel %vm2692, %v5763, %v5765
    %v5851 = vsel %vm2692, %v5765, %v5767
    %v5852 = vsel %vm2692, %v5769, %v5771
    %v5853 = vsel %vm2692, %v5771, %v5773
    %v5854 = vsel %vm2692, %v5775, %v5777
    %v5855 = vsel %vm2692, %v5777, %v5779
    %v5856 = vsel %vm2692, %v5781, %v5783
    %v5857 = vsel %vm2692, %v5783, %v5785
    %v5858 = vsel %vm2692, %v5787, %v5789
    %v5859 = vsel %vm2692, %v5789, %v5791
    %v5860 = vsel %vm2692, %v5793, %v5795
    %v5861 = vsel %vm2692, %v5795, %v5797
    %v5862 = vsel %vm2692, %v5799, %v5801
    %v5863 = vsel %vm2692, %v5801, %v5803
    %v5864 = vsel %vm2692, %v5805, %v5807
    %v5865 = vsel %vm2692, %v5807, %v5809
    %v5866 = vsel %vm2692, %v5811, %v5813
    %v5867 = vsel %vm2692, %v5813, %v5815
    %v5868 = vsel %vm2692, %v5817, %v5819
    %v5869 = vsel %vm2692, %v5819, %v5821
    %v5870 = vsel %vm2692, %v5823, %v5825
    %v5871 = vsel %vm2692, %v5825, %v5827
    %v5872 = vsel %vm2692, %v5829, %v5831
    %v5873 = vsel %vm2692, %v5831, %v5833
    %v5874 = vsel %vm2692, %v5835, %v5837
    %v5875 = vsel %vm2692, %v5837, %v5839
    %v5912 = vld [vmem:[%s4] sm:$0xff]
    %v5913 = vld [vmem:[%s4 + $0x8] sm:$0xff]
    %v5914 = vld [vmem:[%s4 + $0x10] sm:$0xff]
    %v5915 = vld [vmem:[%s4 + $0x18] sm:$0xff]
    %v5916 = vld [vmem:[%s4 + $0x20] sm:$0xff]
    %v5917 = vld [vmem:[%s4 + $0x28] sm:$0xff]
    %v5918 = vld [vmem:[%s4 + $0x30] sm:$0xff]
    %v5919 = vld [vmem:[%s4 + $0x38] sm:$0xff]
    %v5920 = vld [vmem:[%s4 + $0x40] sm:$0xff]
    %v5921 = vld [vmem:[%s4 + $0x48] sm:$0xff]
    %v5922 = vld [vmem:[%s4 + $0x50] sm:$0xff]
    %v5923 = vld [vmem:[%s4 + $0x58] sm:$0xff]
    %v5924 = vld [vmem:[%s4 + $0x60] sm:$0xff]
    %v5925 = vld [vmem:[%s4 + $0x68] sm:$0xff]
    %v5926 = vld [vmem:[%s4 + $0x70] sm:$0xff]
    %v5927 = vld [vmem:[%s4 + $0x78] sm:$0xff]
    %v5928 = vld [vmem:[%s5] sm:$0xff]
    %v5929 = vld [vmem:[%s5 + $0x8] sm:$0xff]
    %v5930 = vld [vmem:[%s5 + $0x10] sm:$0xff]
    %v5931 = vld [vmem:[%s5 + $0x18] sm:$0xff]
    %5933 = vset.pattern.permute.xlu0 0
    %5934 = vperm.xlu0 %5933, %v5928
    %v5935 = vpop.permute.xlu0 %5934
    %5938 = vset.pattern.permute.xlu0 0
    %5939 = vperm.xlu0 %5938, %v5929
    %v5940 = vpop.permute.xlu0 %5939
    %5943 = vset.pattern.permute.xlu0 0
    %5944 = vperm.xlu0 %5943, %v5930
    %v5945 = vpop.permute.xlu0 %5944
    %5948 = vset.pattern.permute.xlu0 0
    %5949 = vperm.xlu0 %5948, %v5931
    %v5950 = vpop.permute.xlu0 %5949
    %v5953 = vsel %vm2805, %v5915, 0
    %v5956 = vsel %vm2805, %v5919, 0
    %v5959 = vsel %vm2805, %v5923, 0
    %v5962 = vsel %vm2805, %v5927, 0
    %5964 = vmatprep.subr.mxu0 %v5108
    %5965 = vmatpush1.msra.mxu0 %v5106
    %5966 = vmatprep.subr.mxu0 %v5114
    %5967 = vmatpush1.msra.mxu0 %v5112
    %5968 = vmatprep.subr.mxu0 %v5423
    %5969 = vmatpush1.msra.mxu0 %v5428
    %5970 = vmatprep.subr.mxu0 %v5427
    %5971 = vmatpush1.msra.mxu0 %v5429
    %5972 = vmatprep.subr.mxu0 %v5437
    %5973 = vmatpush1.msra.mxu0 %v5442
    %5974 = vmatprep.subr.mxu0 %v5441
    %5975 = vmatpush1.msra.mxu0 %v5443
    %5976 = vmatprep.subr.mxu0 %v5451
    %5977 = vmatpush1.msra.mxu0 %v5456
    %5978 = vmatprep.subr.mxu0 %v5455
    %5979 = vmatpush1.msra.mxu0 %v5457
    %5980 = vmatprep.subr.mxu0 %v5465
    %5981 = vmatpush1.msra.mxu0 %v5470
    %5982 = vmatprep.subr.mxu0 %v5469
    %5983 = vmatpush1.msra.mxu0 %v5471
    %5984 = vmatprep.subr.mxu0 %v5491
    %5985 = vmatpush1.msra.mxu0 %v5490
    %5986 = vmatprep.subr.mxu0 %v5493
    %5987 = vmatpush1.msra.mxu0 %v5492
    %5988 = vmatprep.subr.mxu0 %v5511
    %5989 = vmatpush1.msra.mxu0 %v5510
    %5990 = vmatprep.subr.mxu0 %v5513
    %5991 = vmatpush1.msra.mxu0 %v5512
    %5992 = vmatprep.subr.mxu0 %v5531
    %5993 = vmatpush1.msra.mxu0 %v5530
    %5994 = vmatprep.subr.mxu0 %v5533
    %5995 = vmatpush1.msra.mxu0 %v5532
    %5996 = vmatprep.subr.mxu0 %v5551
    %5997 = vmatpush1.msra.mxu0 %v5550
    %5998 = vmatprep.subr.mxu0 %v5553
    %5999 = vmatpush1.msra.mxu0 %v5552
    %6000 = vmatprep.subr.mxu0 %v5571
    %6001 = vmatpush1.msra.mxu0 %v5570
    %6002 = vmatprep.subr.mxu0 %v5573
    %6003 = vmatpush1.msra.mxu0 %v5572
    %6004 = vmatprep.subr.mxu0 %v5591
    %6005 = vmatpush1.msra.mxu0 %v5590
    %6006 = vmatprep.subr.mxu0 %v5593
    %6007 = vmatpush1.msra.mxu0 %v5592
    %6008 = vmatprep.subr.mxu0 %v5611
    %6009 = vmatpush1.msra.mxu0 %v5610
    %6010 = vmatprep.subr.mxu0 %v5613
    %6011 = vmatpush1.msra.mxu0 %v5612
    %6012 = vmatprep.subr.mxu0 %v5631
    %6013 = vmatpush1.msra.mxu0 %v5630
    %6014 = vmatprep.subr.mxu0 %v5633
    %6015 = vmatpush1.msra.mxu0 %v5632
    %6016 = vmatprep.subr.mxu0 %v5651
    %6017 = vmatpush1.msra.mxu0 %v5650
    %6018 = vmatprep.subr.mxu0 %v5653
    %6019 = vmatpush1.msra.mxu0 %v5652
    %6020 = vmatprep.subr.mxu0 %v5671
    %6021 = vmatpush1.msra.mxu0 %v5670
    %6022 = vmatprep.subr.mxu0 %v5673
    %6023 = vmatpush1.msra.mxu0 %v5672
    %6024 = vmatprep.subr.mxu0 %v5691
    %6025 = vmatpush1.msra.mxu0 %v5690
    %6026 = vmatprep.subr.mxu0 %v5693
    %6027 = vmatpush1.msra.mxu0 %v5692
    %6028 = vmatprep.mubr.f32.mxu0 %v5913
    %6029 = vmatmul.mubr.f32.gmra.mrb[0].mxu0 %v5912
    %v6030 = vpop.f32.mrb[0].mxu0
    %v6031 = vadd.f32 %v5935, %v6030
    %v6032 = vpop.f32.mrb[0].mxu0
    %v6033 = vadd.f32 %v5935, %v6032
    %6034 = vmatprep.mubr.f32.mxu0 %v5917
    %6035 = vmatmul.mubr.f32.gmra.mrb[0].mxu0 %v5916
    %v6036 = vpop.f32.mrb[0].mxu0
    %v6037 = vadd.f32 %v5940, %v6036
    %v6038 = vpop.f32.mrb[0].mxu0
    %v6039 = vadd.f32 %v5940, %v6038
    %6040 = vmatprep.mubr.f32.mxu0 %v5921
    %6041 = vmatmul.mubr.f32.gmra.mrb[0].mxu0 %v5920
    %v6042 = vpop.f32.mrb[0].mxu0
    %v6043 = vadd.f32 %v5945, %v6042
    %v6044 = vpop.f32.mrb[0].mxu0
    %v6045 = vadd.f32 %v5945, %v6044
    %6046 = vmatprep.mubr.f32.mxu0 %v5925
    %6047 = vmatmul.mubr.f32.gmra.mrb[0].mxu0 %v5924
    %v6048 = vpop.f32.mrb[0].mxu0
    %v6049 = vadd.f32 %v5950, %v6048
    %v6050 = vpop.f32.mrb[0].mxu0
    %v6051 = vadd.f32 %v5950, %v6050
    %6052 = vdwg.mxu0
    %6053 = vmatprep.subr.mxu0 %v5841
    %6054 = vmatpush1.msra.mxu0 %v5840
    %6055 = vmatprep.subr.mxu0 %v5843
    %6056 = vmatpush1.msra.mxu0 %v5842
    %6057 = vmatprep.subr.mxu0 %v5845
    %6058 = vmatpush1.msra.mxu0 %v5844
    %6059 = vmatprep.subr.mxu0 %v5847
    %6060 = vmatpush1.msra.mxu0 %v5846
    %6061 = vmatprep.subr.mxu0 %v5849
    %6062 = vmatpush1.msra.mxu0 %v5848
    %6063 = vmatprep.subr.mxu0 %v5851
    %6064 = vmatpush1.msra.mxu0 %v5850
    %6065 = vmatprep.subr.mxu0 %v5853
    %6066 = vmatpush1.msra.mxu0 %v5852
    %6067 = vmatprep.subr.mxu0 %v5855
    %6068 = vmatpush1.msra.mxu0 %v5854
    %6069 = vmatprep.subr.mxu0 %v5857
    %6070 = vmatpush1.msra.mxu0 %v5856
    %6071 = vmatprep.subr.mxu0 %v5859
    %6072 = vmatpush1.msra.mxu0 %v5858
    %6073 = vmatprep.subr.mxu0 %v5861
    %6074 = vmatpush1.msra.mxu0 %v5860
    %6075 = vmatprep.subr.mxu0 %v5863
    %6076 = vmatpush1.msra.mxu0 %v5862
    %6077 = vmatprep.subr.mxu0 %v5865
    %6078 = vmatpush1.msra.mxu0 %v5864
    %6079 = vmatprep.subr.mxu0 %v5867
    %6080 = vmatpush1.msra.mxu0 %v5866
    %6081 = vmatprep.subr.mxu0 %v5869
    %6082 = vmatpush1.msra.mxu0 %v5868
    %6083 = vmatprep.subr.mxu0 %v5871
    %6084 = vmatpush1.msra.mxu0 %v5870
    %6085 = vmatprep.subr.mxu0 %v5873
    %6086 = vmatpush1.msra.mxu0 %v5872
    %6087 = vmatprep.subr.mxu0 %v5875
    %6088 = vmatpush1.msra.mxu0 %v5874
    %6089 = vmatprep.subr.mxu0 0.0
    %6090 = vmatpush1.msra.mxu0 0.0
    %6091 = vmatprep.subr.mxu0 0.0
    %6092 = vmatpush1.msra.mxu0 0.0
    %6093 = vmatprep.subr.mxu0 0.0
    %6094 = vmatpush1.msra.mxu0 0.0
    %6095 = vmatprep.subr.mxu0 0.0
    %6096 = vmatpush1.msra.mxu0 0.0
    %6097 = vmatprep.subr.mxu0 0.0
    %6098 = vmatpush1.msra.mxu0 0.0
    %6099 = vmatprep.subr.mxu0 0.0
    %6100 = vmatpush1.msra.mxu0 0.0
    %6101 = vmatprep.subr.mxu0 0.0
    %6102 = vmatpush1.msra.mxu0 0.0
    %6103 = vmatprep.subr.mxu0 0.0
    %6104 = vmatpush1.msra.mxu0 0.0
    %6105 = vmatprep.subr.mxu0 0.0
    %6106 = vmatpush1.msra.mxu0 0.0
    %6107 = vmatprep.subr.mxu0 0.0
    %6108 = vmatpush1.msra.mxu0 0.0
    %6109 = vmatprep.subr.mxu0 0.0
    %6110 = vmatpush1.msra.mxu0 0.0
    %6111 = vmatprep.subr.mxu0 0.0
    %6112 = vmatpush1.msra.mxu0 0.0
    %6113 = vmatprep.subr.mxu0 0.0
    %6114 = vmatpush1.msra.mxu0 0.0
    %6115 = vmatprep.subr.mxu0 0.0
    %6116 = vmatpush1.msra.mxu0 0.0
    %6117 = vmatprep.mubr.f32.mxu0 %v5953
    %6118 = vmatmul.mubr.f32.gmra.mrb[0].mxu0 %v5914
    %v6119 = vpop.f32.mrb[0].mxu0
    %v6120 = vadd.f32 %v6031, %v6119
    %v6121 = vpop.f32.mrb[0].mxu0
    %v6122 = vadd.f32 %v6033, %v6121
    %6123 = vmatprep.mubr.f32.mxu0 %v5956
    %6124 = vmatmul.mubr.f32.gmra.mrb[0].mxu0 %v5918
    %v6125 = vpop.f32.mrb[0].mxu0
    %v6126 = vadd.f32 %v6037, %v6125
    %v6127 = vpop.f32.mrb[0].mxu0
    %v6128 = vadd.f32 %v6039, %v6127
    %6129 = vmatprep.mubr.f32.mxu0 %v5959
    %6130 = vmatmul.mubr.f32.gmra.mrb[0].mxu0 %v5922
    %v6131 = vpop.f32.mrb[0].mxu0
    %v6132 = vadd.f32 %v6043, %v6131
    %v6133 = vpop.f32.mrb[0].mxu0
    %v6134 = vadd.f32 %v6045, %v6133
    %6135 = vmatprep.mubr.f32.mxu0 %v5962
    %6136 = vmatmul.mubr.f32.gmra.mrb[0].mxu0 %v5926
    %v6137 = vpop.f32.mrb[0].mxu0
    %v6138 = vadd.f32 %v6049, %v6137
    %v6139 = vpop.f32.mrb[0].mxu0
    %v6140 = vadd.f32 %v6051, %v6139
    %6141 = vdwg.mxu0
    %v6142 = vmax.f32 %v6120, 0.0
    %v6143 = vmax.f32 %v6122, 0.0
    %v6144 = vmax.f32 %v6126, 0.0
    %v6145 = vmax.f32 %v6128, 0.0
    %v6146 = vmax.f32 %v6132, 0.0
    %v6147 = vmax.f32 %v6134, 0.0
    %v6148 = vmax.f32 %v6138, 0.0
    %v6149 = vmax.f32 %v6140, 0.0
    %6158 = vrot.lane.b32.xlu0 %v6142, 127
    %v6159 = vpop.permute.xlu0 %6158
    %6160 = vrot.lane.b32.xlu0 %v6143, 127
    %v6161 = vpop.permute.xlu0 %6160
    %6162 = vrot.lane.b32.xlu0 %v6144, 127
    %v6163 = vpop.permute.xlu0 %6162
    %6164 = vrot.lane.b32.xlu0 %v6145, 127
    %v6165 = vpop.permute.xlu0 %6164
    %6166 = vrot.lane.b32.xlu0 %v6146, 127
    %v6167 = vpop.permute.xlu0 %6166
    %6168 = vrot.lane.b32.xlu0 %v6147, 127
    %v6169 = vpop.permute.xlu0 %6168
    %6170 = vrot.lane.b32.xlu0 %v6148, 127
    %v6171 = vpop.permute.xlu0 %6170
    %6172 = vrot.lane.b32.xlu0 %v6149, 127
    %v6173 = vpop.permute.xlu0 %6172
    %v6174 = vsel %vm92, %v6159, %v6161
    %v6175 = vsel %vm92, %v6163, %v6165
    %v6176 = vsel %vm92, %v6167, %v6169
    %v6177 = vsel %vm92, %v6171, %v6173
    %v6186 = vmax.f32 %v6142, %v6174
    %v6187 = vmax.f32 %v6143, %v6161
    %v6188 = vmax.f32 %v6144, %v6175
    %v6189 = vmax.f32 %v6145, %v6165
    %v6190 = vmax.f32 %v6146, %v6176
    %v6191 = vmax.f32 %v6147, %v6169
    %v6192 = vmax.f32 %v6148, %v6177
    %v6193 = vmax.f32 %v6149, %v6173
    %6202 = vrot.lane.b32.xlu0 %v6186, 110
    %v6203 = vpop.permute.xlu0 %6202
    %6204 = vrot.lane.b32.xlu0 %v6187, 110
    %v6205 = vpop.permute.xlu0 %6204
    %6206 = vrot.lane.b32.xlu0 %v6188, 110
    %v6207 = vpop.permute.xlu0 %6206
    %6208 = vrot.lane.b32.xlu0 %v6189, 110
    %v6209 = vpop.permute.xlu0 %6208
    %6210 = vrot.lane.b32.xlu0 %v6190, 110
    %v6211 = vpop.permute.xlu0 %6210
    %6212 = vrot.lane.b32.xlu0 %v6191, 110
    %v6213 = vpop.permute.xlu0 %6212
    %6214 = vrot.lane.b32.xlu0 %v6192, 110
    %v6215 = vpop.permute.xlu0 %6214
    %6216 = vrot.lane.b32.xlu0 %v6193, 110
    %v6217 = vpop.permute.xlu0 %6216
    %v6218 = vsel %vm2332, %v6203, %v6205
    %v6219 = vsel %vm2332, %v6207, %v6209
    %v6220 = vsel %vm2332, %v6211, %v6213
    %v6221 = vsel %vm2332, %v6215, %v6217
    %v6230 = vmax.f32 %v6186, %v6218
    %v6231 = vmax.f32 %v6187, %v6205
    %v6232 = vmax.f32 %v6188, %v6219
    %v6233 = vmax.f32 %v6189, %v6209
    %v6234 = vmax.f32 %v6190, %v6220
    %v6235 = vmax.f32 %v6191, %v6213
    %v6236 = vmax.f32 %v6192, %v6221
    %v6237 = vmax.f32 %v6193, %v6217
    %v6238 = vld [vmem:[%s6] sm:$0xff]
    %v6239 = vld [vmem:[%s6 + $0x8] sm:$0xff]
    %v6240 = vld [vmem:[%s6 + $0x10] sm:$0xff]
    %v6241 = vld [vmem:[%s6 + $0x18] sm:$0xff]
    %v6242 = vld [vmem:[%s6 + $0x20] sm:$0xff]
    %v6243 = vld [vmem:[%s6 + $0x28] sm:$0xff]
    %v6244 = vld [vmem:[%s6 + $0x30] sm:$0xff]
    %v6245 = vld [vmem:[%s6 + $0x38] sm:$0xff]
    %v6246 = vld [vmem:[%s6 + $0x40] sm:$0xff]
    %v6247 = vld [vmem:[%s6 + $0x48] sm:$0xff]
    %v6248 = vld [vmem:[%s6 + $0x50] sm:$0xff]
    %v6249 = vld [vmem:[%s6 + $0x58] sm:$0xff]
    %v6250 = vld [vmem:[%s6 + $0x60] sm:$0xff]
    %v6251 = vld [vmem:[%s6 + $0x68] sm:$0xff]
    %v6252 = vld [vmem:[%s6 + $0x70] sm:$0xff]
    %v6253 = vld [vmem:[%s6 + $0x78] sm:$0xff]
    %v6254 = vld [vmem:[%s6 + $0x80] sm:$0xff]
    %v6255 = vld [vmem:[%s6 + $0x88] sm:$0xff]
    %v6256 = vld [vmem:[%s6 + $0x90] sm:$0xff]
    %v6257 = vld [vmem:[%s6 + $0x98] sm:$0xff]
    %v6258 = vld [vmem:[%s6 + $0xa0] sm:$0xff]
    %v6259 = vld [vmem:[%s6 + $0xa8] sm:$0xff]
    %v6260 = vld [vmem:[%s6 + $0xb0] sm:$0xff]
    %v6261 = vld [vmem:[%s6 + $0xb8] sm:$0xff]
    %v6262 = vld [vmem:[%s6 + $0xc0] sm:$0xff]
    %v6263 = vld [vmem:[%s6 + $0xc8] sm:$0xff]
    %v6264 = vld [vmem:[%s6 + $0xd0] sm:$0xff]
    %v6265 = vld [vmem:[%s6 + $0xd8] sm:$0xff]
    %v6266 = vld [vmem:[%s6 + $0xe0] sm:$0x1f]
    %v6268 = vsel %vm3121, %v6231, 0
    %v6271 = vsel %vm3121, %v6233, 0
    %v6274 = vsel %vm3121, %v6235, 0
    %v6277 = vsel %vm3121, %v6237, 0
    %v6280 = vsel %vm567, %v6266, 0
    %6282 = vmatprep.subr.mxu0 0.0
    %6283 = vmatpush1.msra.mxu0 %v6238
    %6284 = vmatprep.subr.mxu0 0.0
    %6285 = vmatpush1.msra.mxu0 %v6239
    %6286 = vmatprep.subr.mxu0 0.0
    %6287 = vmatpush1.msra.mxu0 %v6240
    %6288 = vmatprep.subr.mxu0 0.0
    %6289 = vmatpush1.msra.mxu0 %v6241
    %6290 = vmatprep.subr.mxu0 0.0
    %6291 = vmatpush1.msra.mxu0 %v6242
    %6292 = vmatprep.subr.mxu0 0.0
    %6293 = vmatpush1.msra.mxu0 %v6243
    %6294 = vmatprep.subr.mxu0 0.0
    %6295 = vmatpush1.msra.mxu0 %v6244
    %6296 = vmatprep.subr.mxu0 0.0
    %6297 = vmatpush1.msra.mxu0 %v6245
    %6298 = vmatprep.subr.mxu0 0.0
    %6299 = vmatpush1.msra.mxu0 %v6246
    %6300 = vmatprep.subr.mxu0 0.0
    %6301 = vmatpush1.msra.mxu0 %v6247
    %6302 = vmatprep.subr.mxu0 0.0
    %6303 = vmatpush1.msra.mxu0 %v6248
    %6304 = vmatprep.subr.mxu0 0.0
    %6305 = vmatpush1.msra.mxu0 %v6249
    %6306 = vmatprep.subr.mxu0 0.0
    %6307 = vmatpush1.msra.mxu0 %v6250
    %6308 = vmatprep.subr.mxu0 0.0
    %6309 = vmatpush1.msra.mxu0 %v6251
    %6310 = vmatprep.subr.mxu0 0.0
    %6311 = vmatpush1.msra.mxu0 %v6252
    %6312 = vmatprep.subr.mxu0 0.0
    %6313 = vmatpush1.msra.mxu0 %v6253
    %6314 = vmatprep.subr.mxu0 0.0
    %6315 = vmatpush1.msra.mxu0 %v6254
    %6316 = vmatprep.subr.mxu0 0.0
    %6317 = vmatpush1.msra.mxu0 %v6255
    %6318 = vmatprep.subr.mxu0 0.0
    %6319 = vmatpush1.msra.mxu0 %v6256
    %6320 = vmatprep.subr.mxu0 0.0
    %6321 = vmatpush1.msra.mxu0 %v6257
    %6322 = vmatprep.subr.mxu0 0.0
    %6323 = vmatpush1.msra.mxu0 %v6258
    %6324 = vmatprep.subr.mxu0 0.0
    %6325 = vmatpush1.msra.mxu0 %v6259
    %6326 = vmatprep.subr.mxu0 0.0
    %6327 = vmatpush1.msra.mxu0 %v6260
    %6328 = vmatprep.subr.mxu0 0.0
    %6329 = vmatpush1.msra.mxu0 %v6261
    %6330 = vmatprep.subr.mxu0 0.0
    %6331 = vmatpush1.msra.mxu0 %v6262
    %6332 = vmatprep.subr.mxu0 0.0
    %6333 = vmatpush1.msra.mxu0 %v6263
    %6334 = vmatprep.subr.mxu0 0.0
    %6335 = vmatpush1.msra.mxu0 %v6264
    %6336 = vmatprep.subr.mxu0 0.0
    %6337 = vmatpush1.msra.mxu0 %v6265
    %6338 = vmatprep.subr.mxu0 0.0
    %6339 = vmatpush1.msra.mxu0 %v6280
    %6340 = vmatprep.subr.mxu0 0.0
    %6341 = vmatpush1.msra.mxu0 0.0
    %6342 = vmatprep.subr.mxu0 0.0
    %6343 = vmatpush1.msra.mxu0 0.0
    %6344 = vmatprep.subr.mxu0 0.0
    %6345 = vmatpush1.msra.mxu0 0.0
    %6346 = vmatprep.mubr.f32.mxu0 %v6268
    %6347 = vmatmul.mubr.f32.gmra.mrb[0].mxu0 %v6230
    %v6348 = vpop.f32.mrb[0].mxu0
    %v6349 = vadd.f32 0.0, %v6348
    %v6350 = vpop.f32.mrb[0].mxu0
    %6351 = vmatprep.mubr.f32.mxu0 %v6271
    %6352 = vmatmul.mubr.f32.gmra.mrb[0].mxu0 %v6232
    %v6353 = vpop.f32.mrb[0].mxu0
    %v6354 = vadd.f32 0.0, %v6353
    %v6355 = vpop.f32.mrb[0].mxu0
    %6356 = vmatprep.mubr.f32.mxu0 %v6274
    %6357 = vmatmul.mubr.f32.gmra.mrb[0].mxu0 %v6234
    %v6358 = vpop.f32.mrb[0].mxu0
    %v6359 = vadd.f32 0.0, %v6358
    %v6360 = vpop.f32.mrb[0].mxu0
    %6361 = vmatprep.mubr.f32.mxu0 %v6277
    %6362 = vmatmul.mubr.f32.gmra.mrb[0].mxu0 %v6236
    %v6363 = vpop.f32.mrb[0].mxu0
    %v6364 = vadd.f32 0.0, %v6363
    %v6365 = vpop.f32.mrb[0].mxu0
    %6366 = vdwg.mxu0
    %s6367 = scalar_lea.vmem [#allocation2], 32
    %6368 = vst.msk [vmem:[%s6367] sm:$0xff] %vm3222, %v6349
    %6369 = vst.msk [vmem:[%s6367 + $0x8] sm:$0xff] %vm3222, %v6354
    %6370 = vst.msk [vmem:[%s6367 + $0x10] sm:$0xff] %vm3222, %v6359
    %6371 = vst.msk [vmem:[%s6367 + $0x18] sm:$0xff] %vm3222, %v6364
    %v6372 = vld [vmem:[#allocation2] sm:$0xff]
    %v6373 = vld [vmem:[#allocation2 + $0x8] sm:$0xff]
    %v6374 = vld [vmem:[#allocation2 + $0x10] sm:$0xff]
    %v6375 = vld [vmem:[#allocation2 + $0x18] sm:$0xff]
    %v6376 = vld [vmem:[#allocation2 + $0x20] sm:$0xff]
    %v6377 = vld [vmem:[#allocation2 + $0x28] sm:$0xff]
    %v6378 = vld [vmem:[#allocation2 + $0x30] sm:$0xff]
    %v6379 = vld [vmem:[#allocation2 + $0x38] sm:$0xff]
    %v6380 = vld [vmem:[%s7] sm:$0xff]
    %v6381 = vld [vmem:[%s7 + $0x8] sm:$0xff]
    %v6382 = vld [vmem:[%s7 + $0x10] sm:$0xff]
    %v6383 = vld [vmem:[%s7 + $0x18] sm:$0xff]
    %v6384 = vld [vmem:[%s7 + $0x20] sm:$0xff]
    %v6385 = vld [vmem:[%s7 + $0x28] sm:$0xff]
    %v6386 = vld [vmem:[%s7 + $0x30] sm:$0x1]
    %s6387 = scalar_lea.vmem %s7, 56
    %v6388 = vld [vmem:[%s6387] sm:$0xff]
    %v6389 = vld [vmem:[%s6387 + $0x8] sm:$0xff]
    %v6390 = vld [vmem:[%s6387 + $0x10] sm:$0xff]
    %v6391 = vld [vmem:[%s6387 + $0x18] sm:$0xff]
    %v6392 = vld [vmem:[%s6387 + $0x20] sm:$0xff]
    %v6393 = vld [vmem:[%s6387 + $0x28] sm:$0xff]
    %v6394 = vld [vmem:[%s6387 + $0x30] sm:$0x1]
    %v6397 = vrot.slane %v6372, 1
    %vm6398 = vcmask 1041409
    %v6399 = vsel %vm6398, %v6376, %v6397
    %v6400 = vsel %vm3222, %v6399, 0
    %v6403 = vsel %vm535, %v6394, 0
    %6405 = vmatprep.subr.mxu0 0.0
    %6406 = vmatpush1.msra.mxu0 %v6388
    %6407 = vmatprep.subr.mxu0 0.0
    %6408 = vmatpush1.msra.mxu0 %v6389
    %6409 = vmatprep.subr.mxu0 0.0
    %6410 = vmatpush1.msra.mxu0 %v6390
    %6411 = vmatprep.subr.mxu0 0.0
    %6412 = vmatpush1.msra.mxu0 %v6391
    %6413 = vmatprep.subr.mxu0 0.0
    %6414 = vmatpush1.msra.mxu0 %v6392
    %6415 = vmatprep.subr.mxu0 0.0
    %6416 = vmatpush1.msra.mxu0 %v6393
    %6417 = vmatprep.subr.mxu0 0.0
    %6418 = vmatpush1.msra.mxu0 %v6403
    %6419 = vmatprep.subr.mxu0 0.0
    %6420 = vmatpush1.msra.mxu0 0.0
    %6421 = vmatprep.subr.mxu0 0.0
    %6422 = vmatpush1.msra.mxu0 0.0
    %6423 = vmatprep.subr.mxu0 0.0
    %6424 = vmatpush1.msra.mxu0 0.0
    %6425 = vmatprep.subr.mxu0 0.0
    %6426 = vmatpush1.msra.mxu0 0.0
    %6427 = vmatprep.subr.mxu0 0.0
    %6428 = vmatpush1.msra.mxu0 0.0
    %6429 = vmatprep.subr.mxu0 0.0
    %6430 = vmatpush1.msra.mxu0 0.0
    %6431 = vmatprep.subr.mxu0 0.0
    %6432 = vmatpush1.msra.mxu0 0.0
    %6433 = vmatprep.subr.mxu0 0.0
    %6434 = vmatpush1.msra.mxu0 0.0
    %6435 = vmatprep.subr.mxu0 0.0
    %6436 = vmatpush1.msra.mxu0 0.0
    %6437 = vmatprep.subr.mxu0 0.0
    %6438 = vmatpush1.msra.mxu0 0.0
    %6439 = vmatprep.subr.mxu0 0.0
    %6440 = vmatpush1.msra.mxu0 0.0
    %6441 = vmatprep.subr.mxu0 0.0
    %6442 = vmatpush1.msra.mxu0 0.0
    %6443 = vmatprep.subr.mxu0 0.0
    %6444 = vmatpush1.msra.mxu0 0.0
    %6445 = vmatprep.subr.mxu0 0.0
    %6446 = vmatpush1.msra.mxu0 0.0
    %6447 = vmatprep.subr.mxu0 0.0
    %6448 = vmatpush1.msra.mxu0 0.0
    %6449 = vmatprep.subr.mxu0 0.0
    %6450 = vmatpush1.msra.mxu0 0.0
    %6451 = vmatprep.subr.mxu0 0.0
    %6452 = vmatpush1.msra.mxu0 0.0
    %6453 = vmatprep.subr.mxu0 0.0
    %6454 = vmatpush1.msra.mxu0 0.0
    %6455 = vmatprep.subr.mxu0 0.0
    %6456 = vmatpush1.msra.mxu0 0.0
    %6457 = vmatprep.subr.mxu0 0.0
    %6458 = vmatpush1.msra.mxu0 0.0
    %6459 = vmatprep.subr.mxu0 0.0
    %6460 = vmatpush1.msra.mxu0 0.0
    %6461 = vmatprep.subr.mxu0 0.0
    %6462 = vmatpush1.msra.mxu0 0.0
    %6463 = vmatprep.subr.mxu0 0.0
    %6464 = vmatpush1.msra.mxu0 0.0
    %6465 = vmatprep.subr.mxu0 0.0
    %6466 = vmatpush1.msra.mxu0 0.0
    %6467 = vmatprep.subr.mxu0 0.0
    %6468 = vmatpush1.msra.mxu0 0.0
    %6469 = vmatprep.mubr.f32.mxu0 0.0
    %6470 = vmatmul.mubr.f32.gmra.mrb[0].mxu0 %v6400
    %v6471 = vpop.f32.mrb[0].mxu0
    %v6472 = vadd.f32 0.0, %v6471
    %v6473 = vpop.f32.mrb[0].mxu0
    %6474 = vdwg.mxu0
    %v6475 = vrot.slane %v6376, 7
    %v6476 = vsel %vm6398, %v6475, %v6372
    %v6477 = vsel %vm3222, %v6476, 0
    %v6480 = vsel %vm535, %v6386, 0
    %6482 = vmatprep.subr.mxu0 0.0
    %6483 = vmatpush1.msra.mxu0 %v6380
    %6484 = vmatprep.subr.mxu0 0.0
    %6485 = vmatpush1.msra.mxu0 %v6381
    %6486 = vmatprep.subr.mxu0 0.0
    %6487 = vmatpush1.msra.mxu0 %v6382
    %6488 = vmatprep.subr.mxu0 0.0
    %6489 = vmatpush1.msra.mxu0 %v6383
    %6490 = vmatprep.subr.mxu0 0.0
    %6491 = vmatpush1.msra.mxu0 %v6384
    %6492 = vmatprep.subr.mxu0 0.0
    %6493 = vmatpush1.msra.mxu0 %v6385
    %6494 = vmatprep.subr.mxu0 0.0
    %6495 = vmatpush1.msra.mxu0 %v6480
    %6496 = vmatprep.subr.mxu0 0.0
    %6497 = vmatpush1.msra.mxu0 0.0
    %6498 = vmatprep.subr.mxu0 0.0
    %6499 = vmatpush1.msra.mxu0 0.0
    %6500 = vmatprep.subr.mxu0 0.0
    %6501 = vmatpush1.msra.mxu0 0.0
    %6502 = vmatprep.subr.mxu0 0.0
    %6503 = vmatpush1.msra.mxu0 0.0
    %6504 = vmatprep.subr.mxu0 0.0
    %6505 = vmatpush1.msra.mxu0 0.0
    %6506 = vmatprep.subr.mxu0 0.0
    %6507 = vmatpush1.msra.mxu0 0.0
    %6508 = vmatprep.subr.mxu0 0.0
    %6509 = vmatpush1.msra.mxu0 0.0
    %6510 = vmatprep.subr.mxu0 0.0
    %6511 = vmatpush1.msra.mxu0 0.0
    %6512 = vmatprep.subr.mxu0 0.0
    %6513 = vmatpush1.msra.mxu0 0.0
    %6514 = vmatprep.subr.mxu0 0.0
    %6515 = vmatpush1.msra.mxu0 0.0
    %6516 = vmatprep.subr.mxu0 0.0
    %6517 = vmatpush1.msra.mxu0 0.0
    %6518 = vmatprep.subr.mxu0 0.0
    %6519 = vmatpush1.msra.mxu0 0.0
    %6520 = vmatprep.subr.mxu0 0.0
    %6521 = vmatpush1.msra.mxu0 0.0
    %6522 = vmatprep.subr.mxu0 0.0
    %6523 = vmatpush1.msra.mxu0 0.0
    %6524 = vmatprep.subr.mxu0 0.0
    %6525 = vmatpush1.msra.mxu0 0.0
    %6526 = vmatprep.subr.mxu0 0.0
    %6527 = vmatpush1.msra.mxu0 0.0
    %6528 = vmatprep.subr.mxu0 0.0
    %6529 = vmatpush1.msra.mxu0 0.0
    %6530 = vmatprep.subr.mxu0 0.0
    %6531 = vmatpush1.msra.mxu0 0.0
    %6532 = vmatprep.subr.mxu0 0.0
    %6533 = vmatpush1.msra.mxu0 0.0
    %6534 = vmatprep.subr.mxu0 0.0
    %6535 = vmatpush1.msra.mxu0 0.0
    %6536 = vmatprep.subr.mxu0 0.0
    %6537 = vmatpush1.msra.mxu0 0.0
    %6538 = vmatprep.subr.mxu0 0.0
    %6539 = vmatpush1.msra.mxu0 0.0
    %6540 = vmatprep.subr.mxu0 0.0
    %6541 = vmatpush1.msra.mxu0 0.0
    %6542 = vmatprep.subr.mxu0 0.0
    %6543 = vmatpush1.msra.mxu0 0.0
    %6544 = vmatprep.subr.mxu0 0.0
    %6545 = vmatpush1.msra.mxu0 0.0
    %6546 = vmatprep.mubr.f32.mxu0 0.0
    %6547 = vmatmul.mubr.f32.gmra.mrb[0].mxu0 %v6477
    %v6548 = vpop.f32.mrb[0].mxu0
    %v6549 = vadd.f32 %v6472, %v6548
    %v6550 = vpop.f32.mrb[0].mxu0
    %6551 = vdwg.mxu0
    %s6552 = scalar_lea.vmem %s7, 112
    %v6553 = vld [vmem:[%s6552] sm:$0xff]
    %v6554 = vld [vmem:[%s6552 + $0x8] sm:$0xff]
    %v6555 = vld [vmem:[%s6552 + $0x10] sm:$0xff]
    %v6556 = vld [vmem:[%s6552 + $0x18] sm:$0xff]
    %v6557 = vld [vmem:[%s6552 + $0x20] sm:$0xff]
    %v6558 = vld [vmem:[%s6552 + $0x28] sm:$0xff]
    %v6559 = vld [vmem:[%s6552 + $0x30] sm:$0x1]
    %v6560 = vrot.slane %v6372, 2
    %v6561 = vrot.slane %v6376, 1
    %v6562 = vsel %vm6398, %v6561, %v6560
    %v6563 = vsel %vm3222, %v6562, 0
    %v6566 = vsel %vm535, %v6559, 0
    %6568 = vmatprep.subr.mxu0 0.0
    %6569 = vmatpush1.msra.mxu0 %v6553
    %6570 = vmatprep.subr.mxu0 0.0
    %6571 = vmatpush1.msra.mxu0 %v6554
    %6572 = vmatprep.subr.mxu0 0.0
    %6573 = vmatpush1.msra.mxu0 %v6555
    %6574 = vmatprep.subr.mxu0 0.0
    %6575 = vmatpush1.msra.mxu0 %v6556
    %6576 = vmatprep.subr.mxu0 0.0
    %6577 = vmatpush1.msra.mxu0 %v6557
    %6578 = vmatprep.subr.mxu0 0.0
    %6579 = vmatpush1.msra.mxu0 %v6558
    %6580 = vmatprep.subr.mxu0 0.0
    %6581 = vmatpush1.msra.mxu0 %v6566
    %6582 = vmatprep.subr.mxu0 0.0
    %6583 = vmatpush1.msra.mxu0 0.0
    %6584 = vmatprep.subr.mxu0 0.0
    %6585 = vmatpush1.msra.mxu0 0.0
    %6586 = vmatprep.subr.mxu0 0.0
    %6587 = vmatpush1.msra.mxu0 0.0
    %6588 = vmatprep.subr.mxu0 0.0
    %6589 = vmatpush1.msra.mxu0 0.0
    %6590 = vmatprep.subr.mxu0 0.0
    %6591 = vmatpush1.msra.mxu0 0.0
    %6592 = vmatprep.subr.mxu0 0.0
    %6593 = vmatpush1.msra.mxu0 0.0
    %6594 = vmatprep.subr.mxu0 0.0
    %6595 = vmatpush1.msra.mxu0 0.0
    %6596 = vmatprep.subr.mxu0 0.0
    %6597 = vmatpush1.msra.mxu0 0.0
    %6598 = vmatprep.subr.mxu0 0.0
    %6599 = vmatpush1.msra.mxu0 0.0
    %6600 = vmatprep.subr.mxu0 0.0
    %6601 = vmatpush1.msra.mxu0 0.0
    %6602 = vmatprep.subr.mxu0 0.0
    %6603 = vmatpush1.msra.mxu0 0.0
    %6604 = vmatprep.subr.mxu0 0.0
    %6605 = vmatpush1.msra.mxu0 0.0
    %6606 = vmatprep.subr.mxu0 0.0
    %6607 = vmatpush1.msra.mxu0 0.0
    %6608 = vmatprep.subr.mxu0 0.0
    %6609 = vmatpush1.msra.mxu0 0.0
    %6610 = vmatprep.subr.mxu0 0.0
    %6611 = vmatpush1.msra.mxu0 0.0
    %6612 = vmatprep.subr.mxu0 0.0
    %6613 = vmatpush1.msra.mxu0 0.0
    %6614 = vmatprep.subr.mxu0 0.0
    %6615 = vmatpush1.msra.mxu0 0.0
    %6616 = vmatprep.subr.mxu0 0.0
    %6617 = vmatpush1.msra.mxu0 0.0
    %6618 = vmatprep.subr.mxu0 0.0
    %6619 = vmatpush1.msra.mxu0 0.0
    %6620 = vmatprep.subr.mxu0 0.0
    %6621 = vmatpush1.msra.mxu0 0.0
    %6622 = vmatprep.subr.mxu0 0.0
    %6623 = vmatpush1.msra.mxu0 0.0
    %6624 = vmatprep.subr.mxu0 0.0
    %6625 = vmatpush1.msra.mxu0 0.0
    %6626 = vmatprep.subr.mxu0 0.0
    %6627 = vmatpush1.msra.mxu0 0.0
    %6628 = vmatprep.subr.mxu0 0.0
    %6629 = vmatpush1.msra.mxu0 0.0
    %6630 = vmatprep.subr.mxu0 0.0
    %6631 = vmatpush1.msra.mxu0 0.0
    %6632 = vmatprep.mubr.f32.mxu0 0.0
    %6633 = vmatmul.mubr.f32.gmra.mrb[0].mxu0 %v6563
    %v6634 = vpop.f32.mrb[0].mxu0
    %v6635 = vadd.f32 0.0, %v6634
    %v6636 = vpop.f32.mrb[0].mxu0
    %6637 = vdwg.mxu0
    %v6638 = vadd.f32 %v6549, %v6635
    %s6639 = scalar_lea.vmem %s7, 168
    %v6640 = vld [vmem:[%s6639] sm:$0xff]
    %v6641 = vld [vmem:[%s6639 + $0x8] sm:$0xff]
    %v6642 = vld [vmem:[%s6639 + $0x10] sm:$0xff]
    %v6643 = vld [vmem:[%s6639 + $0x18] sm:$0xff]
    %v6644 = vld [vmem:[%s6639 + $0x20] sm:$0xff]
    %v6645 = vld [vmem:[%s6639 + $0x28] sm:$0xff]
    %v6646 = vld [vmem:[%s6639 + $0x30] sm:$0x1]
    %v6647 = vrot.slane %v6372, 3
    %v6648 = vrot.slane %v6376, 2
    %v6649 = vsel %vm6398, %v6648, %v6647
    %v6650 = vsel %vm3222, %v6649, 0
    %v6653 = vsel %vm535, %v6646, 0
    %6655 = vmatprep.subr.mxu0 0.0
    %6656 = vmatpush1.msra.mxu0 %v6640
    %6657 = vmatprep.subr.mxu0 0.0
    %6658 = vmatpush1.msra.mxu0 %v6641
    %6659 = vmatprep.subr.mxu0 0.0
    %6660 = vmatpush1.msra.mxu0 %v6642
    %6661 = vmatprep.subr.mxu0 0.0
    %6662 = vmatpush1.msra.mxu0 %v6643
    %6663 = vmatprep.subr.mxu0 0.0
    %6664 = vmatpush1.msra.mxu0 %v6644
    %6665 = vmatprep.subr.mxu0 0.0
    %6666 = vmatpush1.msra.mxu0 %v6645
    %6667 = vmatprep.subr.mxu0 0.0
    %6668 = vmatpush1.msra.mxu0 %v6653
    %6669 = vmatprep.subr.mxu0 0.0
    %6670 = vmatpush1.msra.mxu0 0.0
    %6671 = vmatprep.subr.mxu0 0.0
    %6672 = vmatpush1.msra.mxu0 0.0
    %6673 = vmatprep.subr.mxu0 0.0
    %6674 = vmatpush1.msra.mxu0 0.0
    %6675 = vmatprep.subr.mxu0 0.0
    %6676 = vmatpush1.msra.mxu0 0.0
    %6677 = vmatprep.subr.mxu0 0.0
    %6678 = vmatpush1.msra.mxu0 0.0
    %6679 = vmatprep.subr.mxu0 0.0
    %6680 = vmatpush1.msra.mxu0 0.0
    %6681 = vmatprep.subr.mxu0 0.0
    %6682 = vmatpush1.msra.mxu0 0.0
    %6683 = vmatprep.subr.mxu0 0.0
    %6684 = vmatpush1.msra.mxu0 0.0
    %6685 = vmatprep.subr.mxu0 0.0
    %6686 = vmatpush1.msra.mxu0 0.0
    %6687 = vmatprep.subr.mxu0 0.0
    %6688 = vmatpush1.msra.mxu0 0.0
    %6689 = vmatprep.subr.mxu0 0.0
    %6690 = vmatpush1.msra.mxu0 0.0
    %6691 = vmatprep.subr.mxu0 0.0
    %6692 = vmatpush1.msra.mxu0 0.0
    %6693 = vmatprep.subr.mxu0 0.0
    %6694 = vmatpush1.msra.mxu0 0.0
    %6695 = vmatprep.subr.mxu0 0.0
    %6696 = vmatpush1.msra.mxu0 0.0
    %6697 = vmatprep.subr.mxu0 0.0
    %6698 = vmatpush1.msra.mxu0 0.0
    %6699 = vmatprep.subr.mxu0 0.0
    %6700 = vmatpush1.msra.mxu0 0.0
    %6701 = vmatprep.subr.mxu0 0.0
    %6702 = vmatpush1.msra.mxu0 0.0
    %6703 = vmatprep.subr.mxu0 0.0
    %6704 = vmatpush1.msra.mxu0 0.0
    %6705 = vmatprep.subr.mxu0 0.0
    %6706 = vmatpush1.msra.mxu0 0.0
    %6707 = vmatprep.subr.mxu0 0.0
    %6708 = vmatpush1.msra.mxu0 0.0
    %6709 = vmatprep.subr.mxu0 0.0
    %6710 = vmatpush1.msra.mxu0 0.0
    %6711 = vmatprep.subr.mxu0 0.0
    %6712 = vmatpush1.msra.mxu0 0.0
    %6713 = vmatprep.subr.mxu0 0.0
    %6714 = vmatpush1.msra.mxu0 0.0
    %6715 = vmatprep.subr.mxu0 0.0
    %6716 = vmatpush1.msra.mxu0 0.0
    %6717 = vmatprep.subr.mxu0 0.0
    %6718 = vmatpush1.msra.mxu0 0.0
    %6719 = vmatprep.mubr.f32.mxu0 0.0
    %6720 = vmatmul.mubr.f32.gmra.mrb[0].mxu0 %v6650
    %v6721 = vpop.f32.mrb[0].mxu0
    %v6722 = vadd.f32 0.0, %v6721
    %v6723 = vpop.f32.mrb[0].mxu0
    %6724 = vdwg.mxu0
    %v6725 = vadd.f32 %v6638, %v6722
    %s6726 = scalar_lea.vmem %s7, 224
    %v6727 = vld [vmem:[%s6726] sm:$0xff]
    %v6728 = vld [vmem:[%s6726 + $0x8] sm:$0xff]
    %v6729 = vld [vmem:[%s6726 + $0x10] sm:$0xff]
    %v6730 = vld [vmem:[%s6726 + $0x18] sm:$0xff]
    %v6731 = vld [vmem:[%s6726 + $0x20] sm:$0xff]
    %v6732 = vld [vmem:[%s6726 + $0x28] sm:$0xff]
    %v6733 = vld [vmem:[%s6726 + $0x30] sm:$0x1]
    %v6734 = vrot.slane %v6372, 4
    %v6735 = vrot.slane %v6376, 3
    %v6736 = vsel %vm6398, %v6735, %v6734
    %v6737 = vsel %vm3222, %v6736, 0
    %v6740 = vsel %vm535, %v6733, 0
    %6742 = vmatprep.subr.mxu0 0.0
    %6743 = vmatpush1.msra.mxu0 %v6727
    %6744 = vmatprep.subr.mxu0 0.0
    %6745 = vmatpush1.msra.mxu0 %v6728
    %6746 = vmatprep.subr.mxu0 0.0
    %6747 = vmatpush1.msra.mxu0 %v6729
    %6748 = vmatprep.subr.mxu0 0.0
    %6749 = vmatpush1.msra.mxu0 %v6730
    %6750 = vmatprep.subr.mxu0 0.0
    %6751 = vmatpush1.msra.mxu0 %v6731
    %6752 = vmatprep.subr.mxu0 0.0
    %6753 = vmatpush1.msra.mxu0 %v6732
    %6754 = vmatprep.subr.mxu0 0.0
    %6755 = vmatpush1.msra.mxu0 %v6740
    %6756 = vmatprep.subr.mxu0 0.0
    %6757 = vmatpush1.msra.mxu0 0.0
    %6758 = vmatprep.subr.mxu0 0.0
    %6759 = vmatpush1.msra.mxu0 0.0
    %6760 = vmatprep.subr.mxu0 0.0
    %6761 = vmatpush1.msra.mxu0 0.0
    %6762 = vmatprep.subr.mxu0 0.0
    %6763 = vmatpush1.msra.mxu0 0.0
    %6764 = vmatprep.subr.mxu0 0.0
    %6765 = vmatpush1.msra.mxu0 0.0
    %6766 = vmatprep.subr.mxu0 0.0
    %6767 = vmatpush1.msra.mxu0 0.0
    %6768 = vmatprep.subr.mxu0 0.0
    %6769 = vmatpush1.msra.mxu0 0.0
    %6770 = vmatprep.subr.mxu0 0.0
    %6771 = vmatpush1.msra.mxu0 0.0
    %6772 = vmatprep.subr.mxu0 0.0
    %6773 = vmatpush1.msra.mxu0 0.0
    %6774 = vmatprep.subr.mxu0 0.0
    %6775 = vmatpush1.msra.mxu0 0.0
    %6776 = vmatprep.subr.mxu0 0.0
    %6777 = vmatpush1.msra.mxu0 0.0
    %6778 = vmatprep.subr.mxu0 0.0
    %6779 = vmatpush1.msra.mxu0 0.0
    %6780 = vmatprep.subr.mxu0 0.0
    %6781 = vmatpush1.msra.mxu0 0.0
    %6782 = vmatprep.subr.mxu0 0.0
    %6783 = vmatpush1.msra.mxu0 0.0
    %6784 = vmatprep.subr.mxu0 0.0
    %6785 = vmatpush1.msra.mxu0 0.0
    %6786 = vmatprep.subr.mxu0 0.0
    %6787 = vmatpush1.msra.mxu0 0.0
    %6788 = vmatprep.subr.mxu0 0.0
    %6789 = vmatpush1.msra.mxu0 0.0
    %6790 = vmatprep.subr.mxu0 0.0
    %6791 = vmatpush1.msra.mxu0 0.0
    %6792 = vmatprep.subr.mxu0 0.0
    %6793 = vmatpush1.msra.mxu0 0.0
    %6794 = vmatprep.subr.mxu0 0.0
    %6795 = vmatpush1.msra.mxu0 0.0
    %6796 = vmatprep.subr.mxu0 0.0
    %6797 = vmatpush1.msra.mxu0 0.0
    %6798 = vmatprep.subr.mxu0 0.0
    %6799 = vmatpush1.msra.mxu0 0.0
    %6800 = vmatprep.subr.mxu0 0.0
    %6801 = vmatpush1.msra.mxu0 0.0
    %6802 = vmatprep.subr.mxu0 0.0
    %6803 = vmatpush1.msra.mxu0 0.0
    %6804 = vmatprep.subr.mxu0 0.0
    %6805 = vmatpush1.msra.mxu0 0.0
    %6806 = vmatprep.mubr.f32.mxu0 0.0
    %6807 = vmatmul.mubr.f32.gmra.mrb[0].mxu0 %v6737
    %v6808 = vpop.f32.mrb[0].mxu0
    %v6809 = vadd.f32 0.0, %v6808
    %v6810 = vpop.f32.mrb[0].mxu0
    %6811 = vdwg.mxu0
    %v6812 = vadd.f32 %v6725, %v6809
    %s6813 = scalar_lea.vmem %s7, 280
    %v6814 = vld [vmem:[%s6813] sm:$0xff]
    %v6815 = vld [vmem:[%s6813 + $0x8] sm:$0xff]
    %v6816 = vld [vmem:[%s6813 + $0x10] sm:$0xff]
    %v6817 = vld [vmem:[%s6813 + $0x18] sm:$0xff]
    %v6818 = vld [vmem:[%s6813 + $0x20] sm:$0xff]
    %v6819 = vld [vmem:[%s6813 + $0x28] sm:$0xff]
    %v6820 = vld [vmem:[%s6813 + $0x30] sm:$0x1]
    %v6821 = vrot.slane %v6372, 5
    %v6822 = vrot.slane %v6376, 4
    %v6823 = vsel %vm6398, %v6822, %v6821
    %v6824 = vsel %vm3222, %v6823, 0
    %v6827 = vsel %vm535, %v6820, 0
    %6829 = vmatprep.subr.mxu0 0.0
    %6830 = vmatpush1.msra.mxu0 %v6814
    %6831 = vmatprep.subr.mxu0 0.0
    %6832 = vmatpush1.msra.mxu0 %v6815
    %6833 = vmatprep.subr.mxu0 0.0
    %6834 = vmatpush1.msra.mxu0 %v6816
    %6835 = vmatprep.subr.mxu0 0.0
    %6836 = vmatpush1.msra.mxu0 %v6817
    %6837 = vmatprep.subr.mxu0 0.0
    %6838 = vmatpush1.msra.mxu0 %v6818
    %6839 = vmatprep.subr.mxu0 0.0
    %6840 = vmatpush1.msra.mxu0 %v6819
    %6841 = vmatprep.subr.mxu0 0.0
    %6842 = vmatpush1.msra.mxu0 %v6827
    %6843 = vmatprep.subr.mxu0 0.0
    %6844 = vmatpush1.msra.mxu0 0.0
    %6845 = vmatprep.subr.mxu0 0.0
    %6846 = vmatpush1.msra.mxu0 0.0
    %6847 = vmatprep.subr.mxu0 0.0
    %6848 = vmatpush1.msra.mxu0 0.0
    %6849 = vmatprep.subr.mxu0 0.0
    %6850 = vmatpush1.msra.mxu0 0.0
    %6851 = vmatprep.subr.mxu0 0.0
    %6852 = vmatpush1.msra.mxu0 0.0
    %6853 = vmatprep.subr.mxu0 0.0
    %6854 = vmatpush1.msra.mxu0 0.0
    %6855 = vmatprep.subr.mxu0 0.0
    %6856 = vmatpush1.msra.mxu0 0.0
    %6857 = vmatprep.subr.mxu0 0.0
    %6858 = vmatpush1.msra.mxu0 0.0
    %6859 = vmatprep.subr.mxu0 0.0
    %6860 = vmatpush1.msra.mxu0 0.0
    %6861 = vmatprep.subr.mxu0 0.0
    %6862 = vmatpush1.msra.mxu0 0.0
    %6863 = vmatprep.subr.mxu0 0.0
    %6864 = vmatpush1.msra.mxu0 0.0
    %6865 = vmatprep.subr.mxu0 0.0
    %6866 = vmatpush1.msra.mxu0 0.0
    %6867 = vmatprep.subr.mxu0 0.0
    %6868 = vmatpush1.msra.mxu0 0.0
    %6869 = vmatprep.subr.mxu0 0.0
    %6870 = vmatpush1.msra.mxu0 0.0
    %6871 = vmatprep.subr.mxu0 0.0
    %6872 = vmatpush1.msra.mxu0 0.0
    %6873 = vmatprep.subr.mxu0 0.0
    %6874 = vmatpush1.msra.mxu0 0.0
    %6875 = vmatprep.subr.mxu0 0.0
    %6876 = vmatpush1.msra.mxu0 0.0
    %6877 = vmatprep.subr.mxu0 0.0
    %6878 = vmatpush1.msra.mxu0 0.0
    %6879 = vmatprep.subr.mxu0 0.0
    %6880 = vmatpush1.msra.mxu0 0.0
    %6881 = vmatprep.subr.mxu0 0.0
    %6882 = vmatpush1.msra.mxu0 0.0
    %6883 = vmatprep.subr.mxu0 0.0
    %6884 = vmatpush1.msra.mxu0 0.0
    %6885 = vmatprep.subr.mxu0 0.0
    %6886 = vmatpush1.msra.mxu0 0.0
    %6887 = vmatprep.subr.mxu0 0.0
    %6888 = vmatpush1.msra.mxu0 0.0
    %6889 = vmatprep.subr.mxu0 0.0
    %6890 = vmatpush1.msra.mxu0 0.0
    %6891 = vmatprep.subr.mxu0 0.0
    %6892 = vmatpush1.msra.mxu0 0.0
    %6893 = vmatprep.mubr.f32.mxu0 0.0
    %6894 = vmatmul.mubr.f32.gmra.mrb[0].mxu0 %v6824
    %v6895 = vpop.f32.mrb[0].mxu0
    %v6896 = vadd.f32 0.0, %v6895
    %v6897 = vpop.f32.mrb[0].mxu0
    %6898 = vdwg.mxu0
    %v6899 = vadd.f32 %v6812, %v6896
    %s6900 = scalar_lea.vmem %s7, 336
    %v6901 = vld [vmem:[%s6900] sm:$0xff]
    %v6902 = vld [vmem:[%s6900 + $0x8] sm:$0xff]
    %v6903 = vld [vmem:[%s6900 + $0x10] sm:$0xff]
    %v6904 = vld [vmem:[%s6900 + $0x18] sm:$0xff]
    %v6905 = vld [vmem:[%s6900 + $0x20] sm:$0xff]
    %v6906 = vld [vmem:[%s6900 + $0x28] sm:$0xff]
    %v6907 = vld [vmem:[%s6900 + $0x30] sm:$0x1]
    %v6908 = vrot.slane %v6372, 6
    %v6909 = vrot.slane %v6376, 5
    %v6910 = vsel %vm6398, %v6909, %v6908
    %v6911 = vsel %vm3222, %v6910, 0
    %v6914 = vsel %vm535, %v6907, 0
    %6916 = vmatprep.subr.mxu0 0.0
    %6917 = vmatpush1.msra.mxu0 %v6901
    %6918 = vmatprep.subr.mxu0 0.0
    %6919 = vmatpush1.msra.mxu0 %v6902
    %6920 = vmatprep.subr.mxu0 0.0
    %6921 = vmatpush1.msra.mxu0 %v6903
    %6922 = vmatprep.subr.mxu0 0.0
    %6923 = vmatpush1.msra.mxu0 %v6904
    %6924 = vmatprep.subr.mxu0 0.0
    %6925 = vmatpush1.msra.mxu0 %v6905
    %6926 = vmatprep.subr.mxu0 0.0
    %6927 = vmatpush1.msra.mxu0 %v6906
    %6928 = vmatprep.subr.mxu0 0.0
    %6929 = vmatpush1.msra.mxu0 %v6914
    %6930 = vmatprep.subr.mxu0 0.0
    %6931 = vmatpush1.msra.mxu0 0.0
    %6932 = vmatprep.subr.mxu0 0.0
    %6933 = vmatpush1.msra.mxu0 0.0
    %6934 = vmatprep.subr.mxu0 0.0
    %6935 = vmatpush1.msra.mxu0 0.0
    %6936 = vmatprep.subr.mxu0 0.0
    %6937 = vmatpush1.msra.mxu0 0.0
    %6938 = vmatprep.subr.mxu0 0.0
    %6939 = vmatpush1.msra.mxu0 0.0
    %6940 = vmatprep.subr.mxu0 0.0
    %6941 = vmatpush1.msra.mxu0 0.0
    %6942 = vmatprep.subr.mxu0 0.0
    %6943 = vmatpush1.msra.mxu0 0.0
    %6944 = vmatprep.subr.mxu0 0.0
    %6945 = vmatpush1.msra.mxu0 0.0
    %6946 = vmatprep.subr.mxu0 0.0
    %6947 = vmatpush1.msra.mxu0 0.0
    %6948 = vmatprep.subr.mxu0 0.0
    %6949 = vmatpush1.msra.mxu0 0.0
    %6950 = vmatprep.subr.mxu0 0.0
    %6951 = vmatpush1.msra.mxu0 0.0
    %6952 = vmatprep.subr.mxu0 0.0
    %6953 = vmatpush1.msra.mxu0 0.0
    %6954 = vmatprep.subr.mxu0 0.0
    %6955 = vmatpush1.msra.mxu0 0.0
    %6956 = vmatprep.subr.mxu0 0.0
    %6957 = vmatpush1.msra.mxu0 0.0
    %6958 = vmatprep.subr.mxu0 0.0
    %6959 = vmatpush1.msra.mxu0 0.0
    %6960 = vmatprep.subr.mxu0 0.0
    %6961 = vmatpush1.msra.mxu0 0.0
    %6962 = vmatprep.subr.mxu0 0.0
    %6963 = vmatpush1.msra.mxu0 0.0
    %6964 = vmatprep.subr.mxu0 0.0
    %6965 = vmatpush1.msra.mxu0 0.0
    %6966 = vmatprep.subr.mxu0 0.0
    %6967 = vmatpush1.msra.mxu0 0.0
    %6968 = vmatprep.subr.mxu0 0.0
    %6969 = vmatpush1.msra.mxu0 0.0
    %6970 = vmatprep.subr.mxu0 0.0
    %6971 = vmatpush1.msra.mxu0 0.0
    %6972 = vmatprep.subr.mxu0 0.0
    %6973 = vmatpush1.msra.mxu0 0.0
    %6974 = vmatprep.subr.mxu0 0.0
    %6975 = vmatpush1.msra.mxu0 0.0
    %6976 = vmatprep.subr.mxu0 0.0
    %6977 = vmatpush1.msra.mxu0 0.0
    %6978 = vmatprep.subr.mxu0 0.0
    %6979 = vmatpush1.msra.mxu0 0.0
    %6980 = vmatprep.mubr.f32.mxu0 0.0
    %6981 = vmatmul.mubr.f32.gmra.mrb[0].mxu0 %v6911
    %v6982 = vpop.f32.mrb[0].mxu0
    %v6983 = vadd.f32 0.0, %v6982
    %v6984 = vpop.f32.mrb[0].mxu0
    %6985 = vdwg.mxu0
    %v6986 = vadd.f32 %v6899, %v6983
    %s6987 = scalar_lea.vmem %s7, 392
    %v6988 = vld [vmem:[%s6987] sm:$0xff]
    %v6989 = vld [vmem:[%s6987 + $0x8] sm:$0xff]
    %v6990 = vld [vmem:[%s6987 + $0x10] sm:$0xff]
    %v6991 = vld [vmem:[%s6987 + $0x18] sm:$0xff]
    %v6992 = vld [vmem:[%s6987 + $0x20] sm:$0xff]
    %v6993 = vld [vmem:[%s6987 + $0x28] sm:$0xff]
    %v6994 = vld [vmem:[%s6987 + $0x30] sm:$0x1]
    %v6995 = vrot.slane %v6372, 7
    %v6996 = vrot.slane %v6376, 6
    %v6997 = vsel %vm6398, %v6996, %v6995
    %v6998 = vsel %vm3222, %v6997, 0
    %v7001 = vsel %vm535, %v6994, 0
    %7003 = vmatprep.subr.mxu0 0.0
    %7004 = vmatpush1.msra.mxu0 %v6988
    %7005 = vmatprep.subr.mxu0 0.0
    %7006 = vmatpush1.msra.mxu0 %v6989
    %7007 = vmatprep.subr.mxu0 0.0
    %7008 = vmatpush1.msra.mxu0 %v6990
    %7009 = vmatprep.subr.mxu0 0.0
    %7010 = vmatpush1.msra.mxu0 %v6991
    %7011 = vmatprep.subr.mxu0 0.0
    %7012 = vmatpush1.msra.mxu0 %v6992
    %7013 = vmatprep.subr.mxu0 0.0
    %7014 = vmatpush1.msra.mxu0 %v6993
    %7015 = vmatprep.subr.mxu0 0.0
    %7016 = vmatpush1.msra.mxu0 %v7001
    %7017 = vmatprep.subr.mxu0 0.0
    %7018 = vmatpush1.msra.mxu0 0.0
    %7019 = vmatprep.subr.mxu0 0.0
    %7020 = vmatpush1.msra.mxu0 0.0
    %7021 = vmatprep.subr.mxu0 0.0
    %7022 = vmatpush1.msra.mxu0 0.0
    %7023 = vmatprep.subr.mxu0 0.0
    %7024 = vmatpush1.msra.mxu0 0.0
    %7025 = vmatprep.subr.mxu0 0.0
    %7026 = vmatpush1.msra.mxu0 0.0
    %7027 = vmatprep.subr.mxu0 0.0
    %7028 = vmatpush1.msra.mxu0 0.0
    %7029 = vmatprep.subr.mxu0 0.0
    %7030 = vmatpush1.msra.mxu0 0.0
    %7031 = vmatprep.subr.mxu0 0.0
    %7032 = vmatpush1.msra.mxu0 0.0
    %7033 = vmatprep.subr.mxu0 0.0
    %7034 = vmatpush1.msra.mxu0 0.0
    %7035 = vmatprep.subr.mxu0 0.0
    %7036 = vmatpush1.msra.mxu0 0.0
    %7037 = vmatprep.subr.mxu0 0.0
    %7038 = vmatpush1.msra.mxu0 0.0
    %7039 = vmatprep.subr.mxu0 0.0
    %7040 = vmatpush1.msra.mxu0 0.0
    %7041 = vmatprep.subr.mxu0 0.0
    %7042 = vmatpush1.msra.mxu0 0.0
    %7043 = vmatprep.subr.mxu0 0.0
    %7044 = vmatpush1.msra.mxu0 0.0
    %7045 = vmatprep.subr.mxu0 0.0
    %7046 = vmatpush1.msra.mxu0 0.0
    %7047 = vmatprep.subr.mxu0 0.0
    %7048 = vmatpush1.msra.mxu0 0.0
    %7049 = vmatprep.subr.mxu0 0.0
    %7050 = vmatpush1.msra.mxu0 0.0
    %7051 = vmatprep.subr.mxu0 0.0
    %7052 = vmatpush1.msra.mxu0 0.0
    %7053 = vmatprep.subr.mxu0 0.0
    %7054 = vmatpush1.msra.mxu0 0.0
    %7055 = vmatprep.subr.mxu0 0.0
    %7056 = vmatpush1.msra.mxu0 0.0
    %7057 = vmatprep.subr.mxu0 0.0
    %7058 = vmatpush1.msra.mxu0 0.0
    %7059 = vmatprep.subr.mxu0 0.0
    %7060 = vmatpush1.msra.mxu0 0.0
    %7061 = vmatprep.subr.mxu0 0.0
    %7062 = vmatpush1.msra.mxu0 0.0
    %7063 = vmatprep.subr.mxu0 0.0
    %7064 = vmatpush1.msra.mxu0 0.0
    %7065 = vmatprep.subr.mxu0 0.0
    %7066 = vmatpush1.msra.mxu0 0.0
    %7067 = vmatprep.mubr.f32.mxu0 0.0
    %7068 = vmatmul.mubr.f32.gmra.mrb[0].mxu0 %v6998
    %v7069 = vpop.f32.mrb[0].mxu0
    %v7070 = vadd.f32 0.0, %v7069
    %v7071 = vpop.f32.mrb[0].mxu0
    %7072 = vdwg.mxu0
    %v7073 = vadd.f32 %v6986, %v7070
    %s7074 = scalar_lea.vmem %s7, 448
    %v7075 = vld [vmem:[%s7074] sm:$0xff]
    %v7076 = vld [vmem:[%s7074 + $0x8] sm:$0xff]
    %v7077 = vld [vmem:[%s7074 + $0x10] sm:$0xff]
    %v7078 = vld [vmem:[%s7074 + $0x18] sm:$0xff]
    %v7079 = vld [vmem:[%s7074 + $0x20] sm:$0xff]
    %v7080 = vld [vmem:[%s7074 + $0x28] sm:$0xff]
    %v7081 = vld [vmem:[%s7074 + $0x30] sm:$0x1]
    %v7084 = vrot.slane %v6377, 7
    %v7085 = vsel %vm6398, %v7084, %v6373
    %v7086 = vsel %vm3222, %v7085, 0
    %v7089 = vsel %vm535, %v7081, 0
    %7091 = vmatprep.subr.mxu0 0.0
    %7092 = vmatpush1.msra.mxu0 %v7075
    %7093 = vmatprep.subr.mxu0 0.0
    %7094 = vmatpush1.msra.mxu0 %v7076
    %7095 = vmatprep.subr.mxu0 0.0
    %7096 = vmatpush1.msra.mxu0 %v7077
    %7097 = vmatprep.subr.mxu0 0.0
    %7098 = vmatpush1.msra.mxu0 %v7078
    %7099 = vmatprep.subr.mxu0 0.0
    %7100 = vmatpush1.msra.mxu0 %v7079
    %7101 = vmatprep.subr.mxu0 0.0
    %7102 = vmatpush1.msra.mxu0 %v7080
    %7103 = vmatprep.subr.mxu0 0.0
    %7104 = vmatpush1.msra.mxu0 %v7089
    %7105 = vmatprep.subr.mxu0 0.0
    %7106 = vmatpush1.msra.mxu0 0.0
    %7107 = vmatprep.subr.mxu0 0.0
    %7108 = vmatpush1.msra.mxu0 0.0
    %7109 = vmatprep.subr.mxu0 0.0
    %7110 = vmatpush1.msra.mxu0 0.0
    %7111 = vmatprep.subr.mxu0 0.0
    %7112 = vmatpush1.msra.mxu0 0.0
    %7113 = vmatprep.subr.mxu0 0.0
    %7114 = vmatpush1.msra.mxu0 0.0
    %7115 = vmatprep.subr.mxu0 0.0
    %7116 = vmatpush1.msra.mxu0 0.0
    %7117 = vmatprep.subr.mxu0 0.0
    %7118 = vmatpush1.msra.mxu0 0.0
    %7119 = vmatprep.subr.mxu0 0.0
    %7120 = vmatpush1.msra.mxu0 0.0
    %7121 = vmatprep.subr.mxu0 0.0
    %7122 = vmatpush1.msra.mxu0 0.0
    %7123 = vmatprep.subr.mxu0 0.0
    %7124 = vmatpush1.msra.mxu0 0.0
    %7125 = vmatprep.subr.mxu0 0.0
    %7126 = vmatpush1.msra.mxu0 0.0
    %7127 = vmatprep.subr.mxu0 0.0
    %7128 = vmatpush1.msra.mxu0 0.0
    %7129 = vmatprep.subr.mxu0 0.0
    %7130 = vmatpush1.msra.mxu0 0.0
    %7131 = vmatprep.subr.mxu0 0.0
    %7132 = vmatpush1.msra.mxu0 0.0
    %7133 = vmatprep.subr.mxu0 0.0
    %7134 = vmatpush1.msra.mxu0 0.0
    %7135 = vmatprep.subr.mxu0 0.0
    %7136 = vmatpush1.msra.mxu0 0.0
    %7137 = vmatprep.subr.mxu0 0.0
    %7138 = vmatpush1.msra.mxu0 0.0
    %7139 = vmatprep.subr.mxu0 0.0
    %7140 = vmatpush1.msra.mxu0 0.0
    %7141 = vmatprep.subr.mxu0 0.0
    %7142 = vmatpush1.msra.mxu0 0.0
    %7143 = vmatprep.subr.mxu0 0.0
    %7144 = vmatpush1.msra.mxu0 0.0
    %7145 = vmatprep.subr.mxu0 0.0
    %7146 = vmatpush1.msra.mxu0 0.0
    %7147 = vmatprep.subr.mxu0 0.0
    %7148 = vmatpush1.msra.mxu0 0.0
    %7149 = vmatprep.subr.mxu0 0.0
    %7150 = vmatpush1.msra.mxu0 0.0
    %7151 = vmatprep.subr.mxu0 0.0
    %7152 = vmatpush1.msra.mxu0 0.0
    %7153 = vmatprep.subr.mxu0 0.0
    %7154 = vmatpush1.msra.mxu0 0.0
    %7155 = vmatprep.mubr.f32.mxu0 0.0
    %7156 = vmatmul.mubr.f32.gmra.mrb[0].mxu0 %v7086
    %v7157 = vpop.f32.mrb[0].mxu0
    %v7158 = vadd.f32 0.0, %v7157
    %v7159 = vpop.f32.mrb[0].mxu0
    %7160 = vdwg.mxu0
    %v7161 = vadd.f32 %v7073, %v7158
    %s7162 = scalar_lea.vmem %s7, 504
    %v7163 = vld [vmem:[%s7162] sm:$0xff]
    %v7164 = vld [vmem:[%s7162 + $0x8] sm:$0xff]
    %v7165 = vld [vmem:[%s7162 + $0x10] sm:$0xff]
    %v7166 = vld [vmem:[%s7162 + $0x18] sm:$0xff]
    %v7167 = vld [vmem:[%s7162 + $0x20] sm:$0xff]
    %v7168 = vld [vmem:[%s7162 + $0x28] sm:$0xff]
    %v7169 = vld [vmem:[%s7162 + $0x30] sm:$0x1]
    %v7170 = vrot.slane %v6373, 1
    %v7171 = vsel %vm6398, %v6377, %v7170
    %v7172 = vsel %vm3222, %v7171, 0
    %v7175 = vsel %vm535, %v7169, 0
    %7177 = vmatprep.subr.mxu0 0.0
    %7178 = vmatpush1.msra.mxu0 %v7163
    %7179 = vmatprep.subr.mxu0 0.0
    %7180 = vmatpush1.msra.mxu0 %v7164
    %7181 = vmatprep.subr.mxu0 0.0
    %7182 = vmatpush1.msra.mxu0 %v7165
    %7183 = vmatprep.subr.mxu0 0.0
    %7184 = vmatpush1.msra.mxu0 %v7166
    %7185 = vmatprep.subr.mxu0 0.0
    %7186 = vmatpush1.msra.mxu0 %v7167
    %7187 = vmatprep.subr.mxu0 0.0
    %7188 = vmatpush1.msra.mxu0 %v7168
    %7189 = vmatprep.subr.mxu0 0.0
    %7190 = vmatpush1.msra.mxu0 %v7175
    %7191 = vmatprep.subr.mxu0 0.0
    %7192 = vmatpush1.msra.mxu0 0.0
    %7193 = vmatprep.subr.mxu0 0.0
    %7194 = vmatpush1.msra.mxu0 0.0
    %7195 = vmatprep.subr.mxu0 0.0
    %7196 = vmatpush1.msra.mxu0 0.0
    %7197 = vmatprep.subr.mxu0 0.0
    %7198 = vmatpush1.msra.mxu0 0.0
    %7199 = vmatprep.subr.mxu0 0.0
    %7200 = vmatpush1.msra.mxu0 0.0
    %7201 = vmatprep.subr.mxu0 0.0
    %7202 = vmatpush1.msra.mxu0 0.0
    %7203 = vmatprep.subr.mxu0 0.0
    %7204 = vmatpush1.msra.mxu0 0.0
    %7205 = vmatprep.subr.mxu0 0.0
    %7206 = vmatpush1.msra.mxu0 0.0
    %7207 = vmatprep.subr.mxu0 0.0
    %7208 = vmatpush1.msra.mxu0 0.0
    %7209 = vmatprep.subr.mxu0 0.0
    %7210 = vmatpush1.msra.mxu0 0.0
    %7211 = vmatprep.subr.mxu0 0.0
    %7212 = vmatpush1.msra.mxu0 0.0
    %7213 = vmatprep.subr.mxu0 0.0
    %7214 = vmatpush1.msra.mxu0 0.0
    %7215 = vmatprep.subr.mxu0 0.0
    %7216 = vmatpush1.msra.mxu0 0.0
    %7217 = vmatprep.subr.mxu0 0.0
    %7218 = vmatpush1.msra.mxu0 0.0
    %7219 = vmatprep.subr.mxu0 0.0
    %7220 = vmatpush1.msra.mxu0 0.0
    %7221 = vmatprep.subr.mxu0 0.0
    %7222 = vmatpush1.msra.mxu0 0.0
    %7223 = vmatprep.subr.mxu0 0.0
    %7224 = vmatpush1.msra.mxu0 0.0
    %7225 = vmatprep.subr.mxu0 0.0
    %7226 = vmatpush1.msra.mxu0 0.0
    %7227 = vmatprep.subr.mxu0 0.0
    %7228 = vmatpush1.msra.mxu0 0.0
    %7229 = vmatprep.subr.mxu0 0.0
    %7230 = vmatpush1.msra.mxu0 0.0
    %7231 = vmatprep.subr.mxu0 0.0
    %7232 = vmatpush1.msra.mxu0 0.0
    %7233 = vmatprep.subr.mxu0 0.0
    %7234 = vmatpush1.msra.mxu0 0.0
    %7235 = vmatprep.subr.mxu0 0.0
    %7236 = vmatpush1.msra.mxu0 0.0
    %7237 = vmatprep.subr.mxu0 0.0
    %7238 = vmatpush1.msra.mxu0 0.0
    %7239 = vmatprep.subr.mxu0 0.0
    %7240 = vmatpush1.msra.mxu0 0.0
    %7241 = vmatprep.mubr.f32.mxu0 0.0
    %7242 = vmatmul.mubr.f32.gmra.mrb[0].mxu0 %v7172
    %v7243 = vpop.f32.mrb[0].mxu0
    %v7244 = vadd.f32 0.0, %v7243
    %v7245 = vpop.f32.mrb[0].mxu0
    %7246 = vdwg.mxu0
    %v7247 = vadd.f32 %v7161, %v7244
    %s7248 = scalar_lea.vmem %s7, 560
    %v7249 = vld [vmem:[%s7248] sm:$0xff]
    %v7250 = vld [vmem:[%s7248 + $0x8] sm:$0xff]
    %v7251 = vld [vmem:[%s7248 + $0x10] sm:$0xff]
    %v7252 = vld [vmem:[%s7248 + $0x18] sm:$0xff]
    %v7253 = vld [vmem:[%s7248 + $0x20] sm:$0xff]
    %v7254 = vld [vmem:[%s7248 + $0x28] sm:$0xff]
    %v7255 = vld [vmem:[%s7248 + $0x30] sm:$0x1]
    %v7256 = vrot.slane %v6373, 2
    %v7257 = vrot.slane %v6377, 1
    %v7258 = vsel %vm6398, %v7257, %v7256
    %v7259 = vsel %vm3222, %v7258, 0
    %v7262 = vsel %vm535, %v7255, 0
    %7264 = vmatprep.subr.mxu0 0.0
    %7265 = vmatpush1.msra.mxu0 %v7249
    %7266 = vmatprep.subr.mxu0 0.0
    %7267 = vmatpush1.msra.mxu0 %v7250
    %7268 = vmatprep.subr.mxu0 0.0
    %7269 = vmatpush1.msra.mxu0 %v7251
    %7270 = vmatprep.subr.mxu0 0.0
    %7271 = vmatpush1.msra.mxu0 %v7252
    %7272 = vmatprep.subr.mxu0 0.0
    %7273 = vmatpush1.msra.mxu0 %v7253
    %7274 = vmatprep.subr.mxu0 0.0
    %7275 = vmatpush1.msra.mxu0 %v7254
    %7276 = vmatprep.subr.mxu0 0.0
    %7277 = vmatpush1.msra.mxu0 %v7262
    %7278 = vmatprep.subr.mxu0 0.0
    %7279 = vmatpush1.msra.mxu0 0.0
    %7280 = vmatprep.subr.mxu0 0.0
    %7281 = vmatpush1.msra.mxu0 0.0
    %7282 = vmatprep.subr.mxu0 0.0
    %7283 = vmatpush1.msra.mxu0 0.0
    %7284 = vmatprep.subr.mxu0 0.0
    %7285 = vmatpush1.msra.mxu0 0.0
    %7286 = vmatprep.subr.mxu0 0.0
    %7287 = vmatpush1.msra.mxu0 0.0
    %7288 = vmatprep.subr.mxu0 0.0
    %7289 = vmatpush1.msra.mxu0 0.0
    %7290 = vmatprep.subr.mxu0 0.0
    %7291 = vmatpush1.msra.mxu0 0.0
    %7292 = vmatprep.subr.mxu0 0.0
    %7293 = vmatpush1.msra.mxu0 0.0
    %7294 = vmatprep.subr.mxu0 0.0
    %7295 = vmatpush1.msra.mxu0 0.0
    %7296 = vmatprep.subr.mxu0 0.0
    %7297 = vmatpush1.msra.mxu0 0.0
    %7298 = vmatprep.subr.mxu0 0.0
    %7299 = vmatpush1.msra.mxu0 0.0
    %7300 = vmatprep.subr.mxu0 0.0
    %7301 = vmatpush1.msra.mxu0 0.0
    %7302 = vmatprep.subr.mxu0 0.0
    %7303 = vmatpush1.msra.mxu0 0.0
    %7304 = vmatprep.subr.mxu0 0.0
    %7305 = vmatpush1.msra.mxu0 0.0
    %7306 = vmatprep.subr.mxu0 0.0
    %7307 = vmatpush1.msra.mxu0 0.0
    %7308 = vmatprep.subr.mxu0 0.0
    %7309 = vmatpush1.msra.mxu0 0.0
    %7310 = vmatprep.subr.mxu0 0.0
    %7311 = vmatpush1.msra.mxu0 0.0
    %7312 = vmatprep.subr.mxu0 0.0
    %7313 = vmatpush1.msra.mxu0 0.0
    %7314 = vmatprep.subr.mxu0 0.0
    %7315 = vmatpush1.msra.mxu0 0.0
    %7316 = vmatprep.subr.mxu0 0.0
    %7317 = vmatpush1.msra.mxu0 0.0
    %7318 = vmatprep.subr.mxu0 0.0
    %7319 = vmatpush1.msra.mxu0 0.0
    %7320 = vmatprep.subr.mxu0 0.0
    %7321 = vmatpush1.msra.mxu0 0.0
    %7322 = vmatprep.subr.mxu0 0.0
    %7323 = vmatpush1.msra.mxu0 0.0
    %7324 = vmatprep.subr.mxu0 0.0
    %7325 = vmatpush1.msra.mxu0 0.0
    %7326 = vmatprep.subr.mxu0 0.0
    %7327 = vmatpush1.msra.mxu0 0.0
    %7328 = vmatprep.mubr.f32.mxu0 0.0
    %7329 = vmatmul.mubr.f32.gmra.mrb[0].mxu0 %v7259
    %v7330 = vpop.f32.mrb[0].mxu0
    %v7331 = vadd.f32 0.0, %v7330
    %v7332 = vpop.f32.mrb[0].mxu0
    %7333 = vdwg.mxu0
    %v7334 = vadd.f32 %v7247, %v7331
    %s7335 = scalar_lea.vmem %s7, 616
    %v7336 = vld [vmem:[%s7335] sm:$0xff]
    %v7337 = vld [vmem:[%s7335 + $0x8] sm:$0xff]
    %v7338 = vld [vmem:[%s7335 + $0x10] sm:$0xff]
    %v7339 = vld [vmem:[%s7335 + $0x18] sm:$0xff]
    %v7340 = vld [vmem:[%s7335 + $0x20] sm:$0xff]
    %v7341 = vld [vmem:[%s7335 + $0x28] sm:$0xff]
    %v7342 = vld [vmem:[%s7335 + $0x30] sm:$0x1]
    %v7343 = vrot.slane %v6373, 3
    %v7344 = vrot.slane %v6377, 2
    %v7345 = vsel %vm6398, %v7344, %v7343
    %v7346 = vsel %vm3222, %v7345, 0
    %v7349 = vsel %vm535, %v7342, 0
    %7351 = vmatprep.subr.mxu0 0.0
    %7352 = vmatpush1.msra.mxu0 %v7336
    %7353 = vmatprep.subr.mxu0 0.0
    %7354 = vmatpush1.msra.mxu0 %v7337
    %7355 = vmatprep.subr.mxu0 0.0
    %7356 = vmatpush1.msra.mxu0 %v7338
    %7357 = vmatprep.subr.mxu0 0.0
    %7358 = vmatpush1.msra.mxu0 %v7339
    %7359 = vmatprep.subr.mxu0 0.0
    %7360 = vmatpush1.msra.mxu0 %v7340
    %7361 = vmatprep.subr.mxu0 0.0
    %7362 = vmatpush1.msra.mxu0 %v7341
    %7363 = vmatprep.subr.mxu0 0.0
    %7364 = vmatpush1.msra.mxu0 %v7349
    %7365 = vmatprep.subr.mxu0 0.0
    %7366 = vmatpush1.msra.mxu0 0.0
    %7367 = vmatprep.subr.mxu0 0.0
    %7368 = vmatpush1.msra.mxu0 0.0
    %7369 = vmatprep.subr.mxu0 0.0
    %7370 = vmatpush1.msra.mxu0 0.0
    %7371 = vmatprep.subr.mxu0 0.0
    %7372 = vmatpush1.msra.mxu0 0.0
    %7373 = vmatprep.subr.mxu0 0.0
    %7374 = vmatpush1.msra.mxu0 0.0
    %7375 = vmatprep.subr.mxu0 0.0
    %7376 = vmatpush1.msra.mxu0 0.0
    %7377 = vmatprep.subr.mxu0 0.0
    %7378 = vmatpush1.msra.mxu0 0.0
    %7379 = vmatprep.subr.mxu0 0.0
    %7380 = vmatpush1.msra.mxu0 0.0
    %7381 = vmatprep.subr.mxu0 0.0
    %7382 = vmatpush1.msra.mxu0 0.0
    %7383 = vmatprep.subr.mxu0 0.0
    %7384 = vmatpush1.msra.mxu0 0.0
    %7385 = vmatprep.subr.mxu0 0.0
    %7386 = vmatpush1.msra.mxu0 0.0
    %7387 = vmatprep.subr.mxu0 0.0
    %7388 = vmatpush1.msra.mxu0 0.0
    %7389 = vmatprep.subr.mxu0 0.0
    %7390 = vmatpush1.msra.mxu0 0.0
    %7391 = vmatprep.subr.mxu0 0.0
    %7392 = vmatpush1.msra.mxu0 0.0
    %7393 = vmatprep.subr.mxu0 0.0
    %7394 = vmatpush1.msra.mxu0 0.0
    %7395 = vmatprep.subr.mxu0 0.0
    %7396 = vmatpush1.msra.mxu0 0.0
    %7397 = vmatprep.subr.mxu0 0.0
    %7398 = vmatpush1.msra.mxu0 0.0
    %7399 = vmatprep.subr.mxu0 0.0
    %7400 = vmatpush1.msra.mxu0 0.0
    %7401 = vmatprep.subr.mxu0 0.0
    %7402 = vmatpush1.msra.mxu0 0.0
    %7403 = vmatprep.subr.mxu0 0.0
    %7404 = vmatpush1.msra.mxu0 0.0
    %7405 = vmatprep.subr.mxu0 0.0
    %7406 = vmatpush1.msra.mxu0 0.0
    %7407 = vmatprep.subr.mxu0 0.0
    %7408 = vmatpush1.msra.mxu0 0.0
    %7409 = vmatprep.subr.mxu0 0.0
    %7410 = vmatpush1.msra.mxu0 0.0
    %7411 = vmatprep.subr.mxu0 0.0
    %7412 = vmatpush1.msra.mxu0 0.0
    %7413 = vmatprep.subr.mxu0 0.0
    %7414 = vmatpush1.msra.mxu0 0.0
    %7415 = vmatprep.mubr.f32.mxu0 0.0
    %7416 = vmatmul.mubr.f32.gmra.mrb[0].mxu0 %v7346
    %v7417 = vpop.f32.mrb[0].mxu0
    %v7418 = vadd.f32 0.0, %v7417
    %v7419 = vpop.f32.mrb[0].mxu0
    %7420 = vdwg.mxu0
    %v7421 = vadd.f32 %v7334, %v7418
    %s7422 = scalar_lea.vmem %s7, 672
    %v7423 = vld [vmem:[%s7422] sm:$0xff]
    %v7424 = vld [vmem:[%s7422 + $0x8] sm:$0xff]
    %v7425 = vld [vmem:[%s7422 + $0x10] sm:$0xff]
    %v7426 = vld [vmem:[%s7422 + $0x18] sm:$0xff]
    %v7427 = vld [vmem:[%s7422 + $0x20] sm:$0xff]
    %v7428 = vld [vmem:[%s7422 + $0x28] sm:$0xff]
    %v7429 = vld [vmem:[%s7422 + $0x30] sm:$0x1]
    %v7430 = vrot.slane %v6373, 4
    %v7431 = vrot.slane %v6377, 3
    %v7432 = vsel %vm6398, %v7431, %v7430
    %v7433 = vsel %vm3222, %v7432, 0
    %v7436 = vsel %vm535, %v7429, 0
    %7438 = vmatprep.subr.mxu0 0.0
    %7439 = vmatpush1.msra.mxu0 %v7423
    %7440 = vmatprep.subr.mxu0 0.0
    %7441 = vmatpush1.msra.mxu0 %v7424
    %7442 = vmatprep.subr.mxu0 0.0
    %7443 = vmatpush1.msra.mxu0 %v7425
    %7444 = vmatprep.subr.mxu0 0.0
    %7445 = vmatpush1.msra.mxu0 %v7426
    %7446 = vmatprep.subr.mxu0 0.0
    %7447 = vmatpush1.msra.mxu0 %v7427
    %7448 = vmatprep.subr.mxu0 0.0
    %7449 = vmatpush1.msra.mxu0 %v7428
    %7450 = vmatprep.subr.mxu0 0.0
    %7451 = vmatpush1.msra.mxu0 %v7436
    %7452 = vmatprep.subr.mxu0 0.0
    %7453 = vmatpush1.msra.mxu0 0.0
    %7454 = vmatprep.subr.mxu0 0.0
    %7455 = vmatpush1.msra.mxu0 0.0
    %7456 = vmatprep.subr.mxu0 0.0
    %7457 = vmatpush1.msra.mxu0 0.0
    %7458 = vmatprep.subr.mxu0 0.0
    %7459 = vmatpush1.msra.mxu0 0.0
    %7460 = vmatprep.subr.mxu0 0.0
    %7461 = vmatpush1.msra.mxu0 0.0
    %7462 = vmatprep.subr.mxu0 0.0
    %7463 = vmatpush1.msra.mxu0 0.0
    %7464 = vmatprep.subr.mxu0 0.0
    %7465 = vmatpush1.msra.mxu0 0.0
    %7466 = vmatprep.subr.mxu0 0.0
    %7467 = vmatpush1.msra.mxu0 0.0
    %7468 = vmatprep.subr.mxu0 0.0
    %7469 = vmatpush1.msra.mxu0 0.0
    %7470 = vmatprep.subr.mxu0 0.0
    %7471 = vmatpush1.msra.mxu0 0.0
    %7472 = vmatprep.subr.mxu0 0.0
    %7473 = vmatpush1.msra.mxu0 0.0
    %7474 = vmatprep.subr.mxu0 0.0
    %7475 = vmatpush1.msra.mxu0 0.0
    %7476 = vmatprep.subr.mxu0 0.0
    %7477 = vmatpush1.msra.mxu0 0.0
    %7478 = vmatprep.subr.mxu0 0.0
    %7479 = vmatpush1.msra.mxu0 0.0
    %7480 = vmatprep.subr.mxu0 0.0
    %7481 = vmatpush1.msra.mxu0 0.0
    %7482 = vmatprep.subr.mxu0 0.0
    %7483 = vmatpush1.msra.mxu0 0.0
    %7484 = vmatprep.subr.mxu0 0.0
    %7485 = vmatpush1.msra.mxu0 0.0
    %7486 = vmatprep.subr.mxu0 0.0
    %7487 = vmatpush1.msra.mxu0 0.0
    %7488 = vmatprep.subr.mxu0 0.0
    %7489 = vmatpush1.msra.mxu0 0.0
    %7490 = vmatprep.subr.mxu0 0.0
    %7491 = vmatpush1.msra.mxu0 0.0
    %7492 = vmatprep.subr.mxu0 0.0
    %7493 = vmatpush1.msra.mxu0 0.0
    %7494 = vmatprep.subr.mxu0 0.0
    %7495 = vmatpush1.msra.mxu0 0.0
    %7496 = vmatprep.subr.mxu0 0.0
    %7497 = vmatpush1.msra.mxu0 0.0
    %7498 = vmatprep.subr.mxu0 0.0
    %7499 = vmatpush1.msra.mxu0 0.0
    %7500 = vmatprep.subr.mxu0 0.0
    %7501 = vmatpush1.msra.mxu0 0.0
    %7502 = vmatprep.mubr.f32.mxu0 0.0
    %7503 = vmatmul.mubr.f32.gmra.mrb[0].mxu0 %v7433
    %v7504 = vpop.f32.mrb[0].mxu0
    %v7505 = vadd.f32 0.0, %v7504
    %v7506 = vpop.f32.mrb[0].mxu0
    %7507 = vdwg.mxu0
    %v7508 = vadd.f32 %v7421, %v7505
    %s7509 = scalar_lea.vmem %s7, 728
    %v7510 = vld [vmem:[%s7509] sm:$0xff]
    %v7511 = vld [vmem:[%s7509 + $0x8] sm:$0xff]
    %v7512 = vld [vmem:[%s7509 + $0x10] sm:$0xff]
    %v7513 = vld [vmem:[%s7509 + $0x18] sm:$0xff]
    %v7514 = vld [vmem:[%s7509 + $0x20] sm:$0xff]
    %v7515 = vld [vmem:[%s7509 + $0x28] sm:$0xff]
    %v7516 = vld [vmem:[%s7509 + $0x30] sm:$0x1]
    %v7517 = vrot.slane %v6373, 5
    %v7518 = vrot.slane %v6377, 4
    %v7519 = vsel %vm6398, %v7518, %v7517
    %v7520 = vsel %vm3222, %v7519, 0
    %v7523 = vsel %vm535, %v7516, 0
    %7525 = vmatprep.subr.mxu0 0.0
    %7526 = vmatpush1.msra.mxu0 %v7510
    %7527 = vmatprep.subr.mxu0 0.0
    %7528 = vmatpush1.msra.mxu0 %v7511
    %7529 = vmatprep.subr.mxu0 0.0
    %7530 = vmatpush1.msra.mxu0 %v7512
    %7531 = vmatprep.subr.mxu0 0.0
    %7532 = vmatpush1.msra.mxu0 %v7513
    %7533 = vmatprep.subr.mxu0 0.0
    %7534 = vmatpush1.msra.mxu0 %v7514
    %7535 = vmatprep.subr.mxu0 0.0
    %7536 = vmatpush1.msra.mxu0 %v7515
    %7537 = vmatprep.subr.mxu0 0.0
    %7538 = vmatpush1.msra.mxu0 %v7523
    %7539 = vmatprep.subr.mxu0 0.0
    %7540 = vmatpush1.msra.mxu0 0.0
    %7541 = vmatprep.subr.mxu0 0.0
    %7542 = vmatpush1.msra.mxu0 0.0
    %7543 = vmatprep.subr.mxu0 0.0
    %7544 = vmatpush1.msra.mxu0 0.0
    %7545 = vmatprep.subr.mxu0 0.0
    %7546 = vmatpush1.msra.mxu0 0.0
    %7547 = vmatprep.subr.mxu0 0.0
    %7548 = vmatpush1.msra.mxu0 0.0
    %7549 = vmatprep.subr.mxu0 0.0
    %7550 = vmatpush1.msra.mxu0 0.0
    %7551 = vmatprep.subr.mxu0 0.0
    %7552 = vmatpush1.msra.mxu0 0.0
    %7553 = vmatprep.subr.mxu0 0.0
    %7554 = vmatpush1.msra.mxu0 0.0
    %7555 = vmatprep.subr.mxu0 0.0
    %7556 = vmatpush1.msra.mxu0 0.0
    %7557 = vmatprep.subr.mxu0 0.0
    %7558 = vmatpush1.msra.mxu0 0.0
    %7559 = vmatprep.subr.mxu0 0.0
    %7560 = vmatpush1.msra.mxu0 0.0
    %7561 = vmatprep.subr.mxu0 0.0
    %7562 = vmatpush1.msra.mxu0 0.0
    %7563 = vmatprep.subr.mxu0 0.0
    %7564 = vmatpush1.msra.mxu0 0.0
    %7565 = vmatprep.subr.mxu0 0.0
    %7566 = vmatpush1.msra.mxu0 0.0
    %7567 = vmatprep.subr.mxu0 0.0
    %7568 = vmatpush1.msra.mxu0 0.0
    %7569 = vmatprep.subr.mxu0 0.0
    %7570 = vmatpush1.msra.mxu0 0.0
    %7571 = vmatprep.subr.mxu0 0.0
    %7572 = vmatpush1.msra.mxu0 0.0
    %7573 = vmatprep.subr.mxu0 0.0
    %7574 = vmatpush1.msra.mxu0 0.0
    %7575 = vmatprep.subr.mxu0 0.0
    %7576 = vmatpush1.msra.mxu0 0.0
    %7577 = vmatprep.subr.mxu0 0.0
    %7578 = vmatpush1.msra.mxu0 0.0
    %7579 = vmatprep.subr.mxu0 0.0
    %7580 = vmatpush1.msra.mxu0 0.0
    %7581 = vmatprep.subr.mxu0 0.0
    %7582 = vmatpush1.msra.mxu0 0.0
    %7583 = vmatprep.subr.mxu0 0.0
    %7584 = vmatpush1.msra.mxu0 0.0
    %7585 = vmatprep.subr.mxu0 0.0
    %7586 = vmatpush1.msra.mxu0 0.0
    %7587 = vmatprep.subr.mxu0 0.0
    %7588 = vmatpush1.msra.mxu0 0.0
    %7589 = vmatprep.mubr.f32.mxu0 0.0
    %7590 = vmatmul.mubr.f32.gmra.mrb[0].mxu0 %v7520
    %v7591 = vpop.f32.mrb[0].mxu0
    %v7592 = vadd.f32 0.0, %v7591
    %v7593 = vpop.f32.mrb[0].mxu0
    %7594 = vdwg.mxu0
    %v7595 = vadd.f32 %v7508, %v7592
    %s7596 = scalar_lea.vmem %s7, 784
    %v7597 = vld [vmem:[%s7596] sm:$0xff]
    %v7598 = vld [vmem:[%s7596 + $0x8] sm:$0xff]
    %v7599 = vld [vmem:[%s7596 + $0x10] sm:$0xff]
    %v7600 = vld [vmem:[%s7596 + $0x18] sm:$0xff]
    %v7601 = vld [vmem:[%s7596 + $0x20] sm:$0xff]
    %v7602 = vld [vmem:[%s7596 + $0x28] sm:$0xff]
    %v7603 = vld [vmem:[%s7596 + $0x30] sm:$0x1]
    %v7604 = vrot.slane %v6373, 6
    %v7605 = vrot.slane %v6377, 5
    %v7606 = vsel %vm6398, %v7605, %v7604
    %v7607 = vsel %vm3222, %v7606, 0
    %v7610 = vsel %vm535, %v7603, 0
    %7612 = vmatprep.subr.mxu0 0.0
    %7613 = vmatpush1.msra.mxu0 %v7597
    %7614 = vmatprep.subr.mxu0 0.0
    %7615 = vmatpush1.msra.mxu0 %v7598
    %7616 = vmatprep.subr.mxu0 0.0
    %7617 = vmatpush1.msra.mxu0 %v7599
    %7618 = vmatprep.subr.mxu0 0.0
    %7619 = vmatpush1.msra.mxu0 %v7600
    %7620 = vmatprep.subr.mxu0 0.0
    %7621 = vmatpush1.msra.mxu0 %v7601
    %7622 = vmatprep.subr.mxu0 0.0
    %7623 = vmatpush1.msra.mxu0 %v7602
    %7624 = vmatprep.subr.mxu0 0.0
    %7625 = vmatpush1.msra.mxu0 %v7610
    %7626 = vmatprep.subr.mxu0 0.0
    %7627 = vmatpush1.msra.mxu0 0.0
    %7628 = vmatprep.subr.mxu0 0.0
    %7629 = vmatpush1.msra.mxu0 0.0
    %7630 = vmatprep.subr.mxu0 0.0
    %7631 = vmatpush1.msra.mxu0 0.0
    %7632 = vmatprep.subr.mxu0 0.0
    %7633 = vmatpush1.msra.mxu0 0.0
    %7634 = vmatprep.subr.mxu0 0.0
    %7635 = vmatpush1.msra.mxu0 0.0
    %7636 = vmatprep.subr.mxu0 0.0
    %7637 = vmatpush1.msra.mxu0 0.0
    %7638 = vmatprep.subr.mxu0 0.0
    %7639 = vmatpush1.msra.mxu0 0.0
    %7640 = vmatprep.subr.mxu0 0.0
    %7641 = vmatpush1.msra.mxu0 0.0
    %7642 = vmatprep.subr.mxu0 0.0
    %7643 = vmatpush1.msra.mxu0 0.0
    %7644 = vmatprep.subr.mxu0 0.0
    %7645 = vmatpush1.msra.mxu0 0.0
    %7646 = vmatprep.subr.mxu0 0.0
    %7647 = vmatpush1.msra.mxu0 0.0
    %7648 = vmatprep.subr.mxu0 0.0
    %7649 = vmatpush1.msra.mxu0 0.0
    %7650 = vmatprep.subr.mxu0 0.0
    %7651 = vmatpush1.msra.mxu0 0.0
    %7652 = vmatprep.subr.mxu0 0.0
    %7653 = vmatpush1.msra.mxu0 0.0
    %7654 = vmatprep.subr.mxu0 0.0
    %7655 = vmatpush1.msra.mxu0 0.0
    %7656 = vmatprep.subr.mxu0 0.0
    %7657 = vmatpush1.msra.mxu0 0.0
    %7658 = vmatprep.subr.mxu0 0.0
    %7659 = vmatpush1.msra.mxu0 0.0
    %7660 = vmatprep.subr.mxu0 0.0
    %7661 = vmatpush1.msra.mxu0 0.0
    %7662 = vmatprep.subr.mxu0 0.0
    %7663 = vmatpush1.msra.mxu0 0.0
    %7664 = vmatprep.subr.mxu0 0.0
    %7665 = vmatpush1.msra.mxu0 0.0
    %7666 = vmatprep.subr.mxu0 0.0
    %7667 = vmatpush1.msra.mxu0 0.0
    %7668 = vmatprep.subr.mxu0 0.0
    %7669 = vmatpush1.msra.mxu0 0.0
    %7670 = vmatprep.subr.mxu0 0.0
    %7671 = vmatpush1.msra.mxu0 0.0
    %7672 = vmatprep.subr.mxu0 0.0
    %7673 = vmatpush1.msra.mxu0 0.0
    %7674 = vmatprep.subr.mxu0 0.0
    %7675 = vmatpush1.msra.mxu0 0.0
    %7676 = vmatprep.mubr.f32.mxu0 0.0
    %7677 = vmatmul.mubr.f32.gmra.mrb[0].mxu0 %v7607
    %v7678 = vpop.f32.mrb[0].mxu0
    %v7679 = vadd.f32 0.0, %v7678
    %v7680 = vpop.f32.mrb[0].mxu0
    %7681 = vdwg.mxu0
    %v7682 = vadd.f32 %v7595, %v7679
    %s7683 = scalar_lea.vmem %s7, 840
    %v7684 = vld [vmem:[%s7683] sm:$0xff]
    %v7685 = vld [vmem:[%s7683 + $0x8] sm:$0xff]
    %v7686 = vld [vmem:[%s7683 + $0x10] sm:$0xff]
    %v7687 = vld [vmem:[%s7683 + $0x18] sm:$0xff]
    %v7688 = vld [vmem:[%s7683 + $0x20] sm:$0xff]
    %v7689 = vld [vmem:[%s7683 + $0x28] sm:$0xff]
    %v7690 = vld [vmem:[%s7683 + $0x30] sm:$0x1]
    %v7691 = vrot.slane %v6373, 7
    %v7692 = vrot.slane %v6377, 6
    %v7693 = vsel %vm6398, %v7692, %v7691
    %v7694 = vsel %vm3222, %v7693, 0
    %v7697 = vsel %vm535, %v7690, 0
    %7699 = vmatprep.subr.mxu0 0.0
    %7700 = vmatpush1.msra.mxu0 %v7684
    %7701 = vmatprep.subr.mxu0 0.0
    %7702 = vmatpush1.msra.mxu0 %v7685
    %7703 = vmatprep.subr.mxu0 0.0
    %7704 = vmatpush1.msra.mxu0 %v7686
    %7705 = vmatprep.subr.mxu0 0.0
    %7706 = vmatpush1.msra.mxu0 %v7687
    %7707 = vmatprep.subr.mxu0 0.0
    %7708 = vmatpush1.msra.mxu0 %v7688
    %7709 = vmatprep.subr.mxu0 0.0
    %7710 = vmatpush1.msra.mxu0 %v7689
    %7711 = vmatprep.subr.mxu0 0.0
    %7712 = vmatpush1.msra.mxu0 %v7697
    %7713 = vmatprep.subr.mxu0 0.0
    %7714 = vmatpush1.msra.mxu0 0.0
    %7715 = vmatprep.subr.mxu0 0.0
    %7716 = vmatpush1.msra.mxu0 0.0
    %7717 = vmatprep.subr.mxu0 0.0
    %7718 = vmatpush1.msra.mxu0 0.0
    %7719 = vmatprep.subr.mxu0 0.0
    %7720 = vmatpush1.msra.mxu0 0.0
    %7721 = vmatprep.subr.mxu0 0.0
    %7722 = vmatpush1.msra.mxu0 0.0
    %7723 = vmatprep.subr.mxu0 0.0
    %7724 = vmatpush1.msra.mxu0 0.0
    %7725 = vmatprep.subr.mxu0 0.0
    %7726 = vmatpush1.msra.mxu0 0.0
    %7727 = vmatprep.subr.mxu0 0.0
    %7728 = vmatpush1.msra.mxu0 0.0
    %7729 = vmatprep.subr.mxu0 0.0
    %7730 = vmatpush1.msra.mxu0 0.0
    %7731 = vmatprep.subr.mxu0 0.0
    %7732 = vmatpush1.msra.mxu0 0.0
    %7733 = vmatprep.subr.mxu0 0.0
    %7734 = vmatpush1.msra.mxu0 0.0
    %7735 = vmatprep.subr.mxu0 0.0
    %7736 = vmatpush1.msra.mxu0 0.0
    %7737 = vmatprep.subr.mxu0 0.0
    %7738 = vmatpush1.msra.mxu0 0.0
    %7739 = vmatprep.subr.mxu0 0.0
    %7740 = vmatpush1.msra.mxu0 0.0
    %7741 = vmatprep.subr.mxu0 0.0
    %7742 = vmatpush1.msra.mxu0 0.0
    %7743 = vmatprep.subr.mxu0 0.0
    %7744 = vmatpush1.msra.mxu0 0.0
    %7745 = vmatprep.subr.mxu0 0.0
    %7746 = vmatpush1.msra.mxu0 0.0
    %7747 = vmatprep.subr.mxu0 0.0
    %7748 = vmatpush1.msra.mxu0 0.0
    %7749 = vmatprep.subr.mxu0 0.0
    %7750 = vmatpush1.msra.mxu0 0.0
    %7751 = vmatprep.subr.mxu0 0.0
    %7752 = vmatpush1.msra.mxu0 0.0
    %7753 = vmatprep.subr.mxu0 0.0
    %7754 = vmatpush1.msra.mxu0 0.0
    %7755 = vmatprep.subr.mxu0 0.0
    %7756 = vmatpush1.msra.mxu0 0.0
    %7757 = vmatprep.subr.mxu0 0.0
    %7758 = vmatpush1.msra.mxu0 0.0
    %7759 = vmatprep.subr.mxu0 0.0
    %7760 = vmatpush1.msra.mxu0 0.0
    %7761 = vmatprep.subr.mxu0 0.0
    %7762 = vmatpush1.msra.mxu0 0.0
    %7763 = vmatprep.mubr.f32.mxu0 0.0
    %7764 = vmatmul.mubr.f32.gmra.mrb[0].mxu0 %v7694
    %v7765 = vpop.f32.mrb[0].mxu0
    %v7766 = vadd.f32 0.0, %v7765
    %v7767 = vpop.f32.mrb[0].mxu0
    %7768 = vdwg.mxu0
    %v7769 = vadd.f32 %v7682, %v7766
    %s7770 = scalar_lea.vmem %s7, 896
    %v7771 = vld [vmem:[%s7770] sm:$0xff]
    %v7772 = vld [vmem:[%s7770 + $0x8] sm:$0xff]
    %v7773 = vld [vmem:[%s7770 + $0x10] sm:$0xff]
    %v7774 = vld [vmem:[%s7770 + $0x18] sm:$0xff]
    %v7775 = vld [vmem:[%s7770 + $0x20] sm:$0xff]
    %v7776 = vld [vmem:[%s7770 + $0x28] sm:$0xff]
    %v7777 = vld [vmem:[%s7770 + $0x30] sm:$0x1]
    %v7780 = vrot.slane %v6378, 7
    %v7781 = vsel %vm6398, %v7780, %v6374
    %v7782 = vsel %vm3222, %v7781, 0
    %v7785 = vsel %vm535, %v7777, 0
    %7787 = vmatprep.subr.mxu0 0.0
    %7788 = vmatpush1.msra.mxu0 %v7771
    %7789 = vmatprep.subr.mxu0 0.0
    %7790 = vmatpush1.msra.mxu0 %v7772
    %7791 = vmatprep.subr.mxu0 0.0
    %7792 = vmatpush1.msra.mxu0 %v7773
    %7793 = vmatprep.subr.mxu0 0.0
    %7794 = vmatpush1.msra.mxu0 %v7774
    %7795 = vmatprep.subr.mxu0 0.0
    %7796 = vmatpush1.msra.mxu0 %v7775
    %7797 = vmatprep.subr.mxu0 0.0
    %7798 = vmatpush1.msra.mxu0 %v7776
    %7799 = vmatprep.subr.mxu0 0.0
    %7800 = vmatpush1.msra.mxu0 %v7785
    %7801 = vmatprep.subr.mxu0 0.0
    %7802 = vmatpush1.msra.mxu0 0.0
    %7803 = vmatprep.subr.mxu0 0.0
    %7804 = vmatpush1.msra.mxu0 0.0
    %7805 = vmatprep.subr.mxu0 0.0
    %7806 = vmatpush1.msra.mxu0 0.0
    %7807 = vmatprep.subr.mxu0 0.0
    %7808 = vmatpush1.msra.mxu0 0.0
    %7809 = vmatprep.subr.mxu0 0.0
    %7810 = vmatpush1.msra.mxu0 0.0
    %7811 = vmatprep.subr.mxu0 0.0
    %7812 = vmatpush1.msra.mxu0 0.0
    %7813 = vmatprep.subr.mxu0 0.0
    %7814 = vmatpush1.msra.mxu0 0.0
    %7815 = vmatprep.subr.mxu0 0.0
    %7816 = vmatpush1.msra.mxu0 0.0
    %7817 = vmatprep.subr.mxu0 0.0
    %7818 = vmatpush1.msra.mxu0 0.0
    %7819 = vmatprep.subr.mxu0 0.0
    %7820 = vmatpush1.msra.mxu0 0.0
    %7821 = vmatprep.subr.mxu0 0.0
    %7822 = vmatpush1.msra.mxu0 0.0
    %7823 = vmatprep.subr.mxu0 0.0
    %7824 = vmatpush1.msra.mxu0 0.0
    %7825 = vmatprep.subr.mxu0 0.0
    %7826 = vmatpush1.msra.mxu0 0.0
    %7827 = vmatprep.subr.mxu0 0.0
    %7828 = vmatpush1.msra.mxu0 0.0
    %7829 = vmatprep.subr.mxu0 0.0
    %7830 = vmatpush1.msra.mxu0 0.0
    %7831 = vmatprep.subr.mxu0 0.0
    %7832 = vmatpush1.msra.mxu0 0.0
    %7833 = vmatprep.subr.mxu0 0.0
    %7834 = vmatpush1.msra.mxu0 0.0
    %7835 = vmatprep.subr.mxu0 0.0
    %7836 = vmatpush1.msra.mxu0 0.0
    %7837 = vmatprep.subr.mxu0 0.0
    %7838 = vmatpush1.msra.mxu0 0.0
    %7839 = vmatprep.subr.mxu0 0.0
    %7840 = vmatpush1.msra.mxu0 0.0
    %7841 = vmatprep.subr.mxu0 0.0
    %7842 = vmatpush1.msra.mxu0 0.0
    %7843 = vmatprep.subr.mxu0 0.0
    %7844 = vmatpush1.msra.mxu0 0.0
    %7845 = vmatprep.subr.mxu0 0.0
    %7846 = vmatpush1.msra.mxu0 0.0
    %7847 = vmatprep.subr.mxu0 0.0
    %7848 = vmatpush1.msra.mxu0 0.0
    %7849 = vmatprep.subr.mxu0 0.0
    %7850 = vmatpush1.msra.mxu0 0.0
    %7851 = vmatprep.mubr.f32.mxu0 0.0
    %7852 = vmatmul.mubr.f32.gmra.mrb[0].mxu0 %v7782
    %v7853 = vpop.f32.mrb[0].mxu0
    %v7854 = vadd.f32 0.0, %v7853
    %v7855 = vpop.f32.mrb[0].mxu0
    %7856 = vdwg.mxu0
    %v7857 = vadd.f32 %v7769, %v7854
    %s7858 = scalar_lea.vmem %s7, 952
    %v7859 = vld [vmem:[%s7858] sm:$0xff]
    %v7860 = vld [vmem:[%s7858 + $0x8] sm:$0xff]
    %v7861 = vld [vmem:[%s7858 + $0x10] sm:$0xff]
    %v7862 = vld [vmem:[%s7858 + $0x18] sm:$0xff]
    %v7863 = vld [vmem:[%s7858 + $0x20] sm:$0xff]
    %v7864 = vld [vmem:[%s7858 + $0x28] sm:$0xff]
    %v7865 = vld [vmem:[%s7858 + $0x30] sm:$0x1]
    %v7866 = vrot.slane %v6374, 1
    %v7867 = vsel %vm6398, %v6378, %v7866
    %v7868 = vsel %vm3222, %v7867, 0
    %v7871 = vsel %vm535, %v7865, 0
    %7873 = vmatprep.subr.mxu0 0.0
    %7874 = vmatpush1.msra.mxu0 %v7859
    %7875 = vmatprep.subr.mxu0 0.0
    %7876 = vmatpush1.msra.mxu0 %v7860
    %7877 = vmatprep.subr.mxu0 0.0
    %7878 = vmatpush1.msra.mxu0 %v7861
    %7879 = vmatprep.subr.mxu0 0.0
    %7880 = vmatpush1.msra.mxu0 %v7862
    %7881 = vmatprep.subr.mxu0 0.0
    %7882 = vmatpush1.msra.mxu0 %v7863
    %7883 = vmatprep.subr.mxu0 0.0
    %7884 = vmatpush1.msra.mxu0 %v7864
    %7885 = vmatprep.subr.mxu0 0.0
    %7886 = vmatpush1.msra.mxu0 %v7871
    %7887 = vmatprep.subr.mxu0 0.0
    %7888 = vmatpush1.msra.mxu0 0.0
    %7889 = vmatprep.subr.mxu0 0.0
    %7890 = vmatpush1.msra.mxu0 0.0
    %7891 = vmatprep.subr.mxu0 0.0
    %7892 = vmatpush1.msra.mxu0 0.0
    %7893 = vmatprep.subr.mxu0 0.0
    %7894 = vmatpush1.msra.mxu0 0.0
    %7895 = vmatprep.subr.mxu0 0.0
    %7896 = vmatpush1.msra.mxu0 0.0
    %7897 = vmatprep.subr.mxu0 0.0
    %7898 = vmatpush1.msra.mxu0 0.0
    %7899 = vmatprep.subr.mxu0 0.0
    %7900 = vmatpush1.msra.mxu0 0.0
    %7901 = vmatprep.subr.mxu0 0.0
    %7902 = vmatpush1.msra.mxu0 0.0
    %7903 = vmatprep.subr.mxu0 0.0
    %7904 = vmatpush1.msra.mxu0 0.0
    %7905 = vmatprep.subr.mxu0 0.0
    %7906 = vmatpush1.msra.mxu0 0.0
    %7907 = vmatprep.subr.mxu0 0.0
    %7908 = vmatpush1.msra.mxu0 0.0
    %7909 = vmatprep.subr.mxu0 0.0
    %7910 = vmatpush1.msra.mxu0 0.0
    %7911 = vmatprep.subr.mxu0 0.0
    %7912 = vmatpush1.msra.mxu0 0.0
    %7913 = vmatprep.subr.mxu0 0.0
    %7914 = vmatpush1.msra.mxu0 0.0
    %7915 = vmatprep.subr.mxu0 0.0
    %7916 = vmatpush1.msra.mxu0 0.0
    %7917 = vmatprep.subr.mxu0 0.0
    %7918 = vmatpush1.msra.mxu0 0.0
    %7919 = vmatprep.subr.mxu0 0.0
    %7920 = vmatpush1.msra.mxu0 0.0
    %7921 = vmatprep.subr.mxu0 0.0
    %7922 = vmatpush1.msra.mxu0 0.0
    %7923 = vmatprep.subr.mxu0 0.0
    %7924 = vmatpush1.msra.mxu0 0.0
    %7925 = vmatprep.subr.mxu0 0.0
    %7926 = vmatpush1.msra.mxu0 0.0
    %7927 = vmatprep.subr.mxu0 0.0
    %7928 = vmatpush1.msra.mxu0 0.0
    %7929 = vmatprep.subr.mxu0 0.0
    %7930 = vmatpush1.msra.mxu0 0.0
    %7931 = vmatprep.subr.mxu0 0.0
    %7932 = vmatpush1.msra.mxu0 0.0
    %7933 = vmatprep.subr.mxu0 0.0
    %7934 = vmatpush1.msra.mxu0 0.0
    %7935 = vmatprep.subr.mxu0 0.0
    %7936 = vmatpush1.msra.mxu0 0.0
    %7937 = vmatprep.mubr.f32.mxu0 0.0
    %7938 = vmatmul.mubr.f32.gmra.mrb[0].mxu0 %v7868
    %v7939 = vpop.f32.mrb[0].mxu0
    %v7940 = vadd.f32 0.0, %v7939
    %v7941 = vpop.f32.mrb[0].mxu0
    %7942 = vdwg.mxu0
    %v7943 = vadd.f32 %v7857, %v7940
    %s7944 = scalar_lea.vmem %s7, 1008
    %v7945 = vld [vmem:[%s7944] sm:$0xff]
    %v7946 = vld [vmem:[%s7944 + $0x8] sm:$0xff]
    %v7947 = vld [vmem:[%s7944 + $0x10] sm:$0xff]
    %v7948 = vld [vmem:[%s7944 + $0x18] sm:$0xff]
    %v7949 = vld [vmem:[%s7944 + $0x20] sm:$0xff]
    %v7950 = vld [vmem:[%s7944 + $0x28] sm:$0xff]
    %v7951 = vld [vmem:[%s7944 + $0x30] sm:$0x1]
    %v7952 = vrot.slane %v6374, 2
    %v7953 = vrot.slane %v6378, 1
    %v7954 = vsel %vm6398, %v7953, %v7952
    %v7955 = vsel %vm3222, %v7954, 0
    %v7958 = vsel %vm535, %v7951, 0
    %7960 = vmatprep.subr.mxu0 0.0
    %7961 = vmatpush1.msra.mxu0 %v7945
    %7962 = vmatprep.subr.mxu0 0.0
    %7963 = vmatpush1.msra.mxu0 %v7946
    %7964 = vmatprep.subr.mxu0 0.0
    %7965 = vmatpush1.msra.mxu0 %v7947
    %7966 = vmatprep.subr.mxu0 0.0
    %7967 = vmatpush1.msra.mxu0 %v7948
    %7968 = vmatprep.subr.mxu0 0.0
    %7969 = vmatpush1.msra.mxu0 %v7949
    %7970 = vmatprep.subr.mxu0 0.0
    %7971 = vmatpush1.msra.mxu0 %v7950
    %7972 = vmatprep.subr.mxu0 0.0
    %7973 = vmatpush1.msra.mxu0 %v7958
    %7974 = vmatprep.subr.mxu0 0.0
    %7975 = vmatpush1.msra.mxu0 0.0
    %7976 = vmatprep.subr.mxu0 0.0
    %7977 = vmatpush1.msra.mxu0 0.0
    %7978 = vmatprep.subr.mxu0 0.0
    %7979 = vmatpush1.msra.mxu0 0.0
    %7980 = vmatprep.subr.mxu0 0.0
    %7981 = vmatpush1.msra.mxu0 0.0
    %7982 = vmatprep.subr.mxu0 0.0
    %7983 = vmatpush1.msra.mxu0 0.0
    %7984 = vmatprep.subr.mxu0 0.0
    %7985 = vmatpush1.msra.mxu0 0.0
    %7986 = vmatprep.subr.mxu0 0.0
    %7987 = vmatpush1.msra.mxu0 0.0
    %7988 = vmatprep.subr.mxu0 0.0
    %7989 = vmatpush1.msra.mxu0 0.0
    %7990 = vmatprep.subr.mxu0 0.0
    %7991 = vmatpush1.msra.mxu0 0.0
    %7992 = vmatprep.subr.mxu0 0.0
    %7993 = vmatpush1.msra.mxu0 0.0
    %7994 = vmatprep.subr.mxu0 0.0
    %7995 = vmatpush1.msra.mxu0 0.0
    %7996 = vmatprep.subr.mxu0 0.0
    %7997 = vmatpush1.msra.mxu0 0.0
    %7998 = vmatprep.subr.mxu0 0.0
    %7999 = vmatpush1.msra.mxu0 0.0
    %8000 = vmatprep.subr.mxu0 0.0
    %8001 = vmatpush1.msra.mxu0 0.0
    %8002 = vmatprep.subr.mxu0 0.0
    %8003 = vmatpush1.msra.mxu0 0.0
    %8004 = vmatprep.subr.mxu0 0.0
    %8005 = vmatpush1.msra.mxu0 0.0
    %8006 = vmatprep.subr.mxu0 0.0
    %8007 = vmatpush1.msra.mxu0 0.0
    %8008 = vmatprep.subr.mxu0 0.0
    %8009 = vmatpush1.msra.mxu0 0.0
    %8010 = vmatprep.subr.mxu0 0.0
    %8011 = vmatpush1.msra.mxu0 0.0
    %8012 = vmatprep.subr.mxu0 0.0
    %8013 = vmatpush1.msra.mxu0 0.0
    %8014 = vmatprep.subr.mxu0 0.0
    %8015 = vmatpush1.msra.mxu0 0.0
    %8016 = vmatprep.subr.mxu0 0.0
    %8017 = vmatpush1.msra.mxu0 0.0
    %8018 = vmatprep.subr.mxu0 0.0
    %8019 = vmatpush1.msra.mxu0 0.0
    %8020 = vmatprep.subr.mxu0 0.0
    %8021 = vmatpush1.msra.mxu0 0.0
    %8022 = vmatprep.subr.mxu0 0.0
    %8023 = vmatpush1.msra.mxu0 0.0
    %8024 = vmatprep.mubr.f32.mxu0 0.0
    %8025 = vmatmul.mubr.f32.gmra.mrb[0].mxu0 %v7955
    %v8026 = vpop.f32.mrb[0].mxu0
    %v8027 = vadd.f32 0.0, %v8026
    %v8028 = vpop.f32.mrb[0].mxu0
    %8029 = vdwg.mxu0
    %v8030 = vadd.f32 %v7943, %v8027
    %s8031 = scalar_lea.vmem %s7, 1064
    %v8032 = vld [vmem:[%s8031] sm:$0xff]
    %v8033 = vld [vmem:[%s8031 + $0x8] sm:$0xff]
    %v8034 = vld [vmem:[%s8031 + $0x10] sm:$0xff]
    %v8035 = vld [vmem:[%s8031 + $0x18] sm:$0xff]
    %v8036 = vld [vmem:[%s8031 + $0x20] sm:$0xff]
    %v8037 = vld [vmem:[%s8031 + $0x28] sm:$0xff]
    %v8038 = vld [vmem:[%s8031 + $0x30] sm:$0x1]
    %v8039 = vrot.slane %v6374, 3
    %v8040 = vrot.slane %v6378, 2
    %v8041 = vsel %vm6398, %v8040, %v8039
    %v8042 = vsel %vm3222, %v8041, 0
    %v8045 = vsel %vm535, %v8038, 0
    %8047 = vmatprep.subr.mxu0 0.0
    %8048 = vmatpush1.msra.mxu0 %v8032
    %8049 = vmatprep.subr.mxu0 0.0
    %8050 = vmatpush1.msra.mxu0 %v8033
    %8051 = vmatprep.subr.mxu0 0.0
    %8052 = vmatpush1.msra.mxu0 %v8034
    %8053 = vmatprep.subr.mxu0 0.0
    %8054 = vmatpush1.msra.mxu0 %v8035
    %8055 = vmatprep.subr.mxu0 0.0
    %8056 = vmatpush1.msra.mxu0 %v8036
    %8057 = vmatprep.subr.mxu0 0.0
    %8058 = vmatpush1.msra.mxu0 %v8037
    %8059 = vmatprep.subr.mxu0 0.0
    %8060 = vmatpush1.msra.mxu0 %v8045
    %8061 = vmatprep.subr.mxu0 0.0
    %8062 = vmatpush1.msra.mxu0 0.0
    %8063 = vmatprep.subr.mxu0 0.0
    %8064 = vmatpush1.msra.mxu0 0.0
    %8065 = vmatprep.subr.mxu0 0.0
    %8066 = vmatpush1.msra.mxu0 0.0
    %8067 = vmatprep.subr.mxu0 0.0
    %8068 = vmatpush1.msra.mxu0 0.0
    %8069 = vmatprep.subr.mxu0 0.0
    %8070 = vmatpush1.msra.mxu0 0.0
    %8071 = vmatprep.subr.mxu0 0.0
    %8072 = vmatpush1.msra.mxu0 0.0
    %8073 = vmatprep.subr.mxu0 0.0
    %8074 = vmatpush1.msra.mxu0 0.0
    %8075 = vmatprep.subr.mxu0 0.0
    %8076 = vmatpush1.msra.mxu0 0.0
    %8077 = vmatprep.subr.mxu0 0.0
    %8078 = vmatpush1.msra.mxu0 0.0
    %8079 = vmatprep.subr.mxu0 0.0
    %8080 = vmatpush1.msra.mxu0 0.0
    %8081 = vmatprep.subr.mxu0 0.0
    %8082 = vmatpush1.msra.mxu0 0.0
    %8083 = vmatprep.subr.mxu0 0.0
    %8084 = vmatpush1.msra.mxu0 0.0
    %8085 = vmatprep.subr.mxu0 0.0
    %8086 = vmatpush1.msra.mxu0 0.0
    %8087 = vmatprep.subr.mxu0 0.0
    %8088 = vmatpush1.msra.mxu0 0.0
    %8089 = vmatprep.subr.mxu0 0.0
    %8090 = vmatpush1.msra.mxu0 0.0
    %8091 = vmatprep.subr.mxu0 0.0
    %8092 = vmatpush1.msra.mxu0 0.0
    %8093 = vmatprep.subr.mxu0 0.0
    %8094 = vmatpush1.msra.mxu0 0.0
    %8095 = vmatprep.subr.mxu0 0.0
    %8096 = vmatpush1.msra.mxu0 0.0
    %8097 = vmatprep.subr.mxu0 0.0
    %8098 = vmatpush1.msra.mxu0 0.0
    %8099 = vmatprep.subr.mxu0 0.0
    %8100 = vmatpush1.msra.mxu0 0.0
    %8101 = vmatprep.subr.mxu0 0.0
    %8102 = vmatpush1.msra.mxu0 0.0
    %8103 = vmatprep.subr.mxu0 0.0
    %8104 = vmatpush1.msra.mxu0 0.0
    %8105 = vmatprep.subr.mxu0 0.0
    %8106 = vmatpush1.msra.mxu0 0.0
    %8107 = vmatprep.subr.mxu0 0.0
    %8108 = vmatpush1.msra.mxu0 0.0
    %8109 = vmatprep.subr.mxu0 0.0
    %8110 = vmatpush1.msra.mxu0 0.0
    %8111 = vmatprep.mubr.f32.mxu0 0.0
    %8112 = vmatmul.mubr.f32.gmra.mrb[0].mxu0 %v8042
    %v8113 = vpop.f32.mrb[0].mxu0
    %v8114 = vadd.f32 0.0, %v8113
    %v8115 = vpop.f32.mrb[0].mxu0
    %8116 = vdwg.mxu0
    %v8117 = vadd.f32 %v8030, %v8114
    %s8118 = scalar_lea.vmem %s7, 1120
    %v8119 = vld [vmem:[%s8118] sm:$0xff]
    %v8120 = vld [vmem:[%s8118 + $0x8] sm:$0xff]
    %v8121 = vld [vmem:[%s8118 + $0x10] sm:$0xff]
    %v8122 = vld [vmem:[%s8118 + $0x18] sm:$0xff]
    %v8123 = vld [vmem:[%s8118 + $0x20] sm:$0xff]
    %v8124 = vld [vmem:[%s8118 + $0x28] sm:$0xff]
    %v8125 = vld [vmem:[%s8118 + $0x30] sm:$0x1]
    %v8126 = vrot.slane %v6374, 4
    %v8127 = vrot.slane %v6378, 3
    %v8128 = vsel %vm6398, %v8127, %v8126
    %v8129 = vsel %vm3222, %v8128, 0
    %v8132 = vsel %vm535, %v8125, 0
    %8134 = vmatprep.subr.mxu0 0.0
    %8135 = vmatpush1.msra.mxu0 %v8119
    %8136 = vmatprep.subr.mxu0 0.0
    %8137 = vmatpush1.msra.mxu0 %v8120
    %8138 = vmatprep.subr.mxu0 0.0
    %8139 = vmatpush1.msra.mxu0 %v8121
    %8140 = vmatprep.subr.mxu0 0.0
    %8141 = vmatpush1.msra.mxu0 %v8122
    %8142 = vmatprep.subr.mxu0 0.0
    %8143 = vmatpush1.msra.mxu0 %v8123
    %8144 = vmatprep.subr.mxu0 0.0
    %8145 = vmatpush1.msra.mxu0 %v8124
    %8146 = vmatprep.subr.mxu0 0.0
    %8147 = vmatpush1.msra.mxu0 %v8132
    %8148 = vmatprep.subr.mxu0 0.0
    %8149 = vmatpush1.msra.mxu0 0.0
    %8150 = vmatprep.subr.mxu0 0.0
    %8151 = vmatpush1.msra.mxu0 0.0
    %8152 = vmatprep.subr.mxu0 0.0
    %8153 = vmatpush1.msra.mxu0 0.0
    %8154 = vmatprep.subr.mxu0 0.0
    %8155 = vmatpush1.msra.mxu0 0.0
    %8156 = vmatprep.subr.mxu0 0.0
    %8157 = vmatpush1.msra.mxu0 0.0
    %8158 = vmatprep.subr.mxu0 0.0
    %8159 = vmatpush1.msra.mxu0 0.0
    %8160 = vmatprep.subr.mxu0 0.0
    %8161 = vmatpush1.msra.mxu0 0.0
    %8162 = vmatprep.subr.mxu0 0.0
    %8163 = vmatpush1.msra.mxu0 0.0
    %8164 = vmatprep.subr.mxu0 0.0
    %8165 = vmatpush1.msra.mxu0 0.0
    %8166 = vmatprep.subr.mxu0 0.0
    %8167 = vmatpush1.msra.mxu0 0.0
    %8168 = vmatprep.subr.mxu0 0.0
    %8169 = vmatpush1.msra.mxu0 0.0
    %8170 = vmatprep.subr.mxu0 0.0
    %8171 = vmatpush1.msra.mxu0 0.0
    %8172 = vmatprep.subr.mxu0 0.0
    %8173 = vmatpush1.msra.mxu0 0.0
    %8174 = vmatprep.subr.mxu0 0.0
    %8175 = vmatpush1.msra.mxu0 0.0
    %8176 = vmatprep.subr.mxu0 0.0
    %8177 = vmatpush1.msra.mxu0 0.0
    %8178 = vmatprep.subr.mxu0 0.0
    %8179 = vmatpush1.msra.mxu0 0.0
    %8180 = vmatprep.subr.mxu0 0.0
    %8181 = vmatpush1.msra.mxu0 0.0
    %8182 = vmatprep.subr.mxu0 0.0
    %8183 = vmatpush1.msra.mxu0 0.0
    %8184 = vmatprep.subr.mxu0 0.0
    %8185 = vmatpush1.msra.mxu0 0.0
    %8186 = vmatprep.subr.mxu0 0.0
    %8187 = vmatpush1.msra.mxu0 0.0
    %8188 = vmatprep.subr.mxu0 0.0
    %8189 = vmatpush1.msra.mxu0 0.0
    %8190 = vmatprep.subr.mxu0 0.0
    %8191 = vmatpush1.msra.mxu0 0.0
    %8192 = vmatprep.subr.mxu0 0.0
    %8193 = vmatpush1.msra.mxu0 0.0
    %8194 = vmatprep.subr.mxu0 0.0
    %8195 = vmatpush1.msra.mxu0 0.0
    %8196 = vmatprep.subr.mxu0 0.0
    %8197 = vmatpush1.msra.mxu0 0.0
    %8198 = vmatprep.mubr.f32.mxu0 0.0
    %8199 = vmatmul.mubr.f32.gmra.mrb[0].mxu0 %v8129
    %v8200 = vpop.f32.mrb[0].mxu0
    %v8201 = vadd.f32 0.0, %v8200
    %v8202 = vpop.f32.mrb[0].mxu0
    %8203 = vdwg.mxu0
    %v8204 = vadd.f32 %v8117, %v8201
    %s8205 = scalar_lea.vmem %s7, 1176
    %v8206 = vld [vmem:[%s8205] sm:$0xff]
    %v8207 = vld [vmem:[%s8205 + $0x8] sm:$0xff]
    %v8208 = vld [vmem:[%s8205 + $0x10] sm:$0xff]
    %v8209 = vld [vmem:[%s8205 + $0x18] sm:$0xff]
    %v8210 = vld [vmem:[%s8205 + $0x20] sm:$0xff]
    %v8211 = vld [vmem:[%s8205 + $0x28] sm:$0xff]
    %v8212 = vld [vmem:[%s8205 + $0x30] sm:$0x1]
    %v8213 = vrot.slane %v6374, 5
    %v8214 = vrot.slane %v6378, 4
    %v8215 = vsel %vm6398, %v8214, %v8213
    %v8216 = vsel %vm3222, %v8215, 0
    %v8219 = vsel %vm535, %v8212, 0
    %8221 = vmatprep.subr.mxu0 0.0
    %8222 = vmatpush1.msra.mxu0 %v8206
    %8223 = vmatprep.subr.mxu0 0.0
    %8224 = vmatpush1.msra.mxu0 %v8207
    %8225 = vmatprep.subr.mxu0 0.0
    %8226 = vmatpush1.msra.mxu0 %v8208
    %8227 = vmatprep.subr.mxu0 0.0
    %8228 = vmatpush1.msra.mxu0 %v8209
    %8229 = vmatprep.subr.mxu0 0.0
    %8230 = vmatpush1.msra.mxu0 %v8210
    %8231 = vmatprep.subr.mxu0 0.0
    %8232 = vmatpush1.msra.mxu0 %v8211
    %8233 = vmatprep.subr.mxu0 0.0
    %8234 = vmatpush1.msra.mxu0 %v8219
    %8235 = vmatprep.subr.mxu0 0.0
    %8236 = vmatpush1.msra.mxu0 0.0
    %8237 = vmatprep.subr.mxu0 0.0
    %8238 = vmatpush1.msra.mxu0 0.0
    %8239 = vmatprep.subr.mxu0 0.0
    %8240 = vmatpush1.msra.mxu0 0.0
    %8241 = vmatprep.subr.mxu0 0.0
    %8242 = vmatpush1.msra.mxu0 0.0
    %8243 = vmatprep.subr.mxu0 0.0
    %8244 = vmatpush1.msra.mxu0 0.0
    %8245 = vmatprep.subr.mxu0 0.0
    %8246 = vmatpush1.msra.mxu0 0.0
    %8247 = vmatprep.subr.mxu0 0.0
    %8248 = vmatpush1.msra.mxu0 0.0
    %8249 = vmatprep.subr.mxu0 0.0
    %8250 = vmatpush1.msra.mxu0 0.0
    %8251 = vmatprep.subr.mxu0 0.0
    %8252 = vmatpush1.msra.mxu0 0.0
    %8253 = vmatprep.subr.mxu0 0.0
    %8254 = vmatpush1.msra.mxu0 0.0
    %8255 = vmatprep.subr.mxu0 0.0
    %8256 = vmatpush1.msra.mxu0 0.0
    %8257 = vmatprep.subr.mxu0 0.0
    %8258 = vmatpush1.msra.mxu0 0.0
    %8259 = vmatprep.subr.mxu0 0.0
    %8260 = vmatpush1.msra.mxu0 0.0
    %8261 = vmatprep.subr.mxu0 0.0
    %8262 = vmatpush1.msra.mxu0 0.0
    %8263 = vmatprep.subr.mxu0 0.0
    %8264 = vmatpush1.msra.mxu0 0.0
    %8265 = vmatprep.subr.mxu0 0.0
    %8266 = vmatpush1.msra.mxu0 0.0
    %8267 = vmatprep.subr.mxu0 0.0
    %8268 = vmatpush1.msra.mxu0 0.0
    %8269 = vmatprep.subr.mxu0 0.0
    %8270 = vmatpush1.msra.mxu0 0.0
    %8271 = vmatprep.subr.mxu0 0.0
    %8272 = vmatpush1.msra.mxu0 0.0
    %8273 = vmatprep.subr.mxu0 0.0
    %8274 = vmatpush1.msra.mxu0 0.0
    %8275 = vmatprep.subr.mxu0 0.0
    %8276 = vmatpush1.msra.mxu0 0.0
    %8277 = vmatprep.subr.mxu0 0.0
    %8278 = vmatpush1.msra.mxu0 0.0
    %8279 = vmatprep.subr.mxu0 0.0
    %8280 = vmatpush1.msra.mxu0 0.0
    %8281 = vmatprep.subr.mxu0 0.0
    %8282 = vmatpush1.msra.mxu0 0.0
    %8283 = vmatprep.subr.mxu0 0.0
    %8284 = vmatpush1.msra.mxu0 0.0
    %8285 = vmatprep.mubr.f32.mxu0 0.0
    %8286 = vmatmul.mubr.f32.gmra.mrb[0].mxu0 %v8216
    %v8287 = vpop.f32.mrb[0].mxu0
    %v8288 = vadd.f32 0.0, %v8287
    %v8289 = vpop.f32.mrb[0].mxu0
    %8290 = vdwg.mxu0
    %v8291 = vadd.f32 %v8204, %v8288
    %s8292 = scalar_lea.vmem %s7, 1232
    %v8293 = vld [vmem:[%s8292] sm:$0xff]
    %v8294 = vld [vmem:[%s8292 + $0x8] sm:$0xff]
    %v8295 = vld [vmem:[%s8292 + $0x10] sm:$0xff]
    %v8296 = vld [vmem:[%s8292 + $0x18] sm:$0xff]
    %v8297 = vld [vmem:[%s8292 + $0x20] sm:$0xff]
    %v8298 = vld [vmem:[%s8292 + $0x28] sm:$0xff]
    %v8299 = vld [vmem:[%s8292 + $0x30] sm:$0x1]
    %v8300 = vrot.slane %v6374, 6
    %v8301 = vrot.slane %v6378, 5
    %v8302 = vsel %vm6398, %v8301, %v8300
    %v8303 = vsel %vm3222, %v8302, 0
    %v8306 = vsel %vm535, %v8299, 0
    %8308 = vmatprep.subr.mxu0 0.0
    %8309 = vmatpush1.msra.mxu0 %v8293
    %8310 = vmatprep.subr.mxu0 0.0
    %8311 = vmatpush1.msra.mxu0 %v8294
    %8312 = vmatprep.subr.mxu0 0.0
    %8313 = vmatpush1.msra.mxu0 %v8295
    %8314 = vmatprep.subr.mxu0 0.0
    %8315 = vmatpush1.msra.mxu0 %v8296
    %8316 = vmatprep.subr.mxu0 0.0
    %8317 = vmatpush1.msra.mxu0 %v8297
    %8318 = vmatprep.subr.mxu0 0.0
    %8319 = vmatpush1.msra.mxu0 %v8298
    %8320 = vmatprep.subr.mxu0 0.0
    %8321 = vmatpush1.msra.mxu0 %v8306
    %8322 = vmatprep.subr.mxu0 0.0
    %8323 = vmatpush1.msra.mxu0 0.0
    %8324 = vmatprep.subr.mxu0 0.0
    %8325 = vmatpush1.msra.mxu0 0.0
    %8326 = vmatprep.subr.mxu0 0.0
    %8327 = vmatpush1.msra.mxu0 0.0
    %8328 = vmatprep.subr.mxu0 0.0
    %8329 = vmatpush1.msra.mxu0 0.0
    %8330 = vmatprep.subr.mxu0 0.0
    %8331 = vmatpush1.msra.mxu0 0.0
    %8332 = vmatprep.subr.mxu0 0.0
    %8333 = vmatpush1.msra.mxu0 0.0
    %8334 = vmatprep.subr.mxu0 0.0
    %8335 = vmatpush1.msra.mxu0 0.0
    %8336 = vmatprep.subr.mxu0 0.0
    %8337 = vmatpush1.msra.mxu0 0.0
    %8338 = vmatprep.subr.mxu0 0.0
    %8339 = vmatpush1.msra.mxu0 0.0
    %8340 = vmatprep.subr.mxu0 0.0
    %8341 = vmatpush1.msra.mxu0 0.0
    %8342 = vmatprep.subr.mxu0 0.0
    %8343 = vmatpush1.msra.mxu0 0.0
    %8344 = vmatprep.subr.mxu0 0.0
    %8345 = vmatpush1.msra.mxu0 0.0
    %8346 = vmatprep.subr.mxu0 0.0
    %8347 = vmatpush1.msra.mxu0 0.0
    %8348 = vmatprep.subr.mxu0 0.0
    %8349 = vmatpush1.msra.mxu0 0.0
    %8350 = vmatprep.subr.mxu0 0.0
    %8351 = vmatpush1.msra.mxu0 0.0
    %8352 = vmatprep.subr.mxu0 0.0
    %8353 = vmatpush1.msra.mxu0 0.0
    %8354 = vmatprep.subr.mxu0 0.0
    %8355 = vmatpush1.msra.mxu0 0.0
    %8356 = vmatprep.subr.mxu0 0.0
    %8357 = vmatpush1.msra.mxu0 0.0
    %8358 = vmatprep.subr.mxu0 0.0
    %8359 = vmatpush1.msra.mxu0 0.0
    %8360 = vmatprep.subr.mxu0 0.0
    %8361 = vmatpush1.msra.mxu0 0.0
    %8362 = vmatprep.subr.mxu0 0.0
    %8363 = vmatpush1.msra.mxu0 0.0
    %8364 = vmatprep.subr.mxu0 0.0
    %8365 = vmatpush1.msra.mxu0 0.0
    %8366 = vmatprep.subr.mxu0 0.0
    %8367 = vmatpush1.msra.mxu0 0.0
    %8368 = vmatprep.subr.mxu0 0.0
    %8369 = vmatpush1.msra.mxu0 0.0
    %8370 = vmatprep.subr.mxu0 0.0
    %8371 = vmatpush1.msra.mxu0 0.0
    %8372 = vmatprep.mubr.f32.mxu0 0.0
    %8373 = vmatmul.mubr.f32.gmra.mrb[0].mxu0 %v8303
    %v8374 = vpop.f32.mrb[0].mxu0
    %v8375 = vadd.f32 0.0, %v8374
    %v8376 = vpop.f32.mrb[0].mxu0
    %8377 = vdwg.mxu0
    %v8378 = vadd.f32 %v8291, %v8375
    %s8379 = scalar_lea.vmem %s7, 1288
    %v8380 = vld [vmem:[%s8379] sm:$0xff]
    %v8381 = vld [vmem:[%s8379 + $0x8] sm:$0xff]
    %v8382 = vld [vmem:[%s8379 + $0x10] sm:$0xff]
    %v8383 = vld [vmem:[%s8379 + $0x18] sm:$0xff]
    %v8384 = vld [vmem:[%s8379 + $0x20] sm:$0xff]
    %v8385 = vld [vmem:[%s8379 + $0x28] sm:$0xff]
    %v8386 = vld [vmem:[%s8379 + $0x30] sm:$0x1]
    %v8387 = vrot.slane %v6374, 7
    %v8388 = vrot.slane %v6378, 6
    %v8389 = vsel %vm6398, %v8388, %v8387
    %v8390 = vsel %vm3222, %v8389, 0
    %v8393 = vsel %vm535, %v8386, 0
    %8395 = vmatprep.subr.mxu0 0.0
    %8396 = vmatpush1.msra.mxu0 %v8380
    %8397 = vmatprep.subr.mxu0 0.0
    %8398 = vmatpush1.msra.mxu0 %v8381
    %8399 = vmatprep.subr.mxu0 0.0
    %8400 = vmatpush1.msra.mxu0 %v8382
    %8401 = vmatprep.subr.mxu0 0.0
    %8402 = vmatpush1.msra.mxu0 %v8383
    %8403 = vmatprep.subr.mxu0 0.0
    %8404 = vmatpush1.msra.mxu0 %v8384
    %8405 = vmatprep.subr.mxu0 0.0
    %8406 = vmatpush1.msra.mxu0 %v8385
    %8407 = vmatprep.subr.mxu0 0.0
    %8408 = vmatpush1.msra.mxu0 %v8393
    %8409 = vmatprep.subr.mxu0 0.0
    %8410 = vmatpush1.msra.mxu0 0.0
    %8411 = vmatprep.subr.mxu0 0.0
    %8412 = vmatpush1.msra.mxu0 0.0
    %8413 = vmatprep.subr.mxu0 0.0
    %8414 = vmatpush1.msra.mxu0 0.0
    %8415 = vmatprep.subr.mxu0 0.0
    %8416 = vmatpush1.msra.mxu0 0.0
    %8417 = vmatprep.subr.mxu0 0.0
    %8418 = vmatpush1.msra.mxu0 0.0
    %8419 = vmatprep.subr.mxu0 0.0
    %8420 = vmatpush1.msra.mxu0 0.0
    %8421 = vmatprep.subr.mxu0 0.0
    %8422 = vmatpush1.msra.mxu0 0.0
    %8423 = vmatprep.subr.mxu0 0.0
    %8424 = vmatpush1.msra.mxu0 0.0
    %8425 = vmatprep.subr.mxu0 0.0
    %8426 = vmatpush1.msra.mxu0 0.0
    %8427 = vmatprep.subr.mxu0 0.0
    %8428 = vmatpush1.msra.mxu0 0.0
    %8429 = vmatprep.subr.mxu0 0.0
    %8430 = vmatpush1.msra.mxu0 0.0
    %8431 = vmatprep.subr.mxu0 0.0
    %8432 = vmatpush1.msra.mxu0 0.0
    %8433 = vmatprep.subr.mxu0 0.0
    %8434 = vmatpush1.msra.mxu0 0.0
    %8435 = vmatprep.subr.mxu0 0.0
    %8436 = vmatpush1.msra.mxu0 0.0
    %8437 = vmatprep.subr.mxu0 0.0
    %8438 = vmatpush1.msra.mxu0 0.0
    %8439 = vmatprep.subr.mxu0 0.0
    %8440 = vmatpush1.msra.mxu0 0.0
    %8441 = vmatprep.subr.mxu0 0.0
    %8442 = vmatpush1.msra.mxu0 0.0
    %8443 = vmatprep.subr.mxu0 0.0
    %8444 = vmatpush1.msra.mxu0 0.0
    %8445 = vmatprep.subr.mxu0 0.0
    %8446 = vmatpush1.msra.mxu0 0.0
    %8447 = vmatprep.subr.mxu0 0.0
    %8448 = vmatpush1.msra.mxu0 0.0
    %8449 = vmatprep.subr.mxu0 0.0
    %8450 = vmatpush1.msra.mxu0 0.0
    %8451 = vmatprep.subr.mxu0 0.0
    %8452 = vmatpush1.msra.mxu0 0.0
    %8453 = vmatprep.subr.mxu0 0.0
    %8454 = vmatpush1.msra.mxu0 0.0
    %8455 = vmatprep.subr.mxu0 0.0
    %8456 = vmatpush1.msra.mxu0 0.0
    %8457 = vmatprep.subr.mxu0 0.0
    %8458 = vmatpush1.msra.mxu0 0.0
    %8459 = vmatprep.mubr.f32.mxu0 0.0
    %8460 = vmatmul.mubr.f32.gmra.mrb[0].mxu0 %v8390
    %v8461 = vpop.f32.mrb[0].mxu0
    %v8462 = vadd.f32 0.0, %v8461
    %v8463 = vpop.f32.mrb[0].mxu0
    %8464 = vdwg.mxu0
    %v8465 = vadd.f32 %v8378, %v8462
    %s8466 = scalar_lea.vmem %s7, 1344
    %v8467 = vld [vmem:[%s8466] sm:$0xff]
    %v8468 = vld [vmem:[%s8466 + $0x8] sm:$0xff]
    %v8469 = vld [vmem:[%s8466 + $0x10] sm:$0xff]
    %v8470 = vld [vmem:[%s8466 + $0x18] sm:$0xff]
    %v8471 = vld [vmem:[%s8466 + $0x20] sm:$0xff]
    %v8472 = vld [vmem:[%s8466 + $0x28] sm:$0xff]
    %v8473 = vld [vmem:[%s8466 + $0x30] sm:$0x1]
    %v8476 = vrot.slane %v6379, 7
    %v8477 = vsel %vm6398, %v8476, %v6375
    %v8478 = vsel %vm3222, %v8477, 0
    %v8481 = vsel %vm535, %v8473, 0
    %8483 = vmatprep.subr.mxu0 0.0
    %8484 = vmatpush1.msra.mxu0 %v8467
    %8485 = vmatprep.subr.mxu0 0.0
    %8486 = vmatpush1.msra.mxu0 %v8468
    %8487 = vmatprep.subr.mxu0 0.0
    %8488 = vmatpush1.msra.mxu0 %v8469
    %8489 = vmatprep.subr.mxu0 0.0
    %8490 = vmatpush1.msra.mxu0 %v8470
    %8491 = vmatprep.subr.mxu0 0.0
    %8492 = vmatpush1.msra.mxu0 %v8471
    %8493 = vmatprep.subr.mxu0 0.0
    %8494 = vmatpush1.msra.mxu0 %v8472
    %8495 = vmatprep.subr.mxu0 0.0
    %8496 = vmatpush1.msra.mxu0 %v8481
    %8497 = vmatprep.subr.mxu0 0.0
    %8498 = vmatpush1.msra.mxu0 0.0
    %8499 = vmatprep.subr.mxu0 0.0
    %8500 = vmatpush1.msra.mxu0 0.0
    %8501 = vmatprep.subr.mxu0 0.0
    %8502 = vmatpush1.msra.mxu0 0.0
    %8503 = vmatprep.subr.mxu0 0.0
    %8504 = vmatpush1.msra.mxu0 0.0
    %8505 = vmatprep.subr.mxu0 0.0
    %8506 = vmatpush1.msra.mxu0 0.0
    %8507 = vmatprep.subr.mxu0 0.0
    %8508 = vmatpush1.msra.mxu0 0.0
    %8509 = vmatprep.subr.mxu0 0.0
    %8510 = vmatpush1.msra.mxu0 0.0
    %8511 = vmatprep.subr.mxu0 0.0
    %8512 = vmatpush1.msra.mxu0 0.0
    %8513 = vmatprep.subr.mxu0 0.0
    %8514 = vmatpush1.msra.mxu0 0.0
    %8515 = vmatprep.subr.mxu0 0.0
    %8516 = vmatpush1.msra.mxu0 0.0
    %8517 = vmatprep.subr.mxu0 0.0
    %8518 = vmatpush1.msra.mxu0 0.0
    %8519 = vmatprep.subr.mxu0 0.0
    %8520 = vmatpush1.msra.mxu0 0.0
    %8521 = vmatprep.subr.mxu0 0.0
    %8522 = vmatpush1.msra.mxu0 0.0
    %8523 = vmatprep.subr.mxu0 0.0
    %8524 = vmatpush1.msra.mxu0 0.0
    %8525 = vmatprep.subr.mxu0 0.0
    %8526 = vmatpush1.msra.mxu0 0.0
    %8527 = vmatprep.subr.mxu0 0.0
    %8528 = vmatpush1.msra.mxu0 0.0
    %8529 = vmatprep.subr.mxu0 0.0
    %8530 = vmatpush1.msra.mxu0 0.0
    %8531 = vmatprep.subr.mxu0 0.0
    %8532 = vmatpush1.msra.mxu0 0.0
    %8533 = vmatprep.subr.mxu0 0.0
    %8534 = vmatpush1.msra.mxu0 0.0
    %8535 = vmatprep.subr.mxu0 0.0
    %8536 = vmatpush1.msra.mxu0 0.0
    %8537 = vmatprep.subr.mxu0 0.0
    %8538 = vmatpush1.msra.mxu0 0.0
    %8539 = vmatprep.subr.mxu0 0.0
    %8540 = vmatpush1.msra.mxu0 0.0
    %8541 = vmatprep.subr.mxu0 0.0
    %8542 = vmatpush1.msra.mxu0 0.0
    %8543 = vmatprep.subr.mxu0 0.0
    %8544 = vmatpush1.msra.mxu0 0.0
    %8545 = vmatprep.subr.mxu0 0.0
    %8546 = vmatpush1.msra.mxu0 0.0
    %8547 = vmatprep.mubr.f32.mxu0 0.0
    %8548 = vmatmul.mubr.f32.gmra.mrb[0].mxu0 %v8478
    %v8549 = vpop.f32.mrb[0].mxu0
    %v8550 = vadd.f32 0.0, %v8549
    %v8551 = vpop.f32.mrb[0].mxu0
    %8552 = vdwg.mxu0
    %v8553 = vadd.f32 %v8465, %v8550
    %s8554 = scalar_lea.vmem %s7, 1400
    %v8555 = vld [vmem:[%s8554] sm:$0xff]
    %v8556 = vld [vmem:[%s8554 + $0x8] sm:$0xff]
    %v8557 = vld [vmem:[%s8554 + $0x10] sm:$0xff]
    %v8558 = vld [vmem:[%s8554 + $0x18] sm:$0xff]
    %v8559 = vld [vmem:[%s8554 + $0x20] sm:$0xff]
    %v8560 = vld [vmem:[%s8554 + $0x28] sm:$0xff]
    %v8561 = vld [vmem:[%s8554 + $0x30] sm:$0x1]
    %v8562 = vrot.slane %v6375, 1
    %v8563 = vsel %vm6398, %v6379, %v8562
    %v8564 = vsel %vm3222, %v8563, 0
    %v8567 = vsel %vm535, %v8561, 0
    %8569 = vmatprep.subr.mxu0 0.0
    %8570 = vmatpush1.msra.mxu0 %v8555
    %8571 = vmatprep.subr.mxu0 0.0
    %8572 = vmatpush1.msra.mxu0 %v8556
    %8573 = vmatprep.subr.mxu0 0.0
    %8574 = vmatpush1.msra.mxu0 %v8557
    %8575 = vmatprep.subr.mxu0 0.0
    %8576 = vmatpush1.msra.mxu0 %v8558
    %8577 = vmatprep.subr.mxu0 0.0
    %8578 = vmatpush1.msra.mxu0 %v8559
    %8579 = vmatprep.subr.mxu0 0.0
    %8580 = vmatpush1.msra.mxu0 %v8560
    %8581 = vmatprep.subr.mxu0 0.0
    %8582 = vmatpush1.msra.mxu0 %v8567
    %8583 = vmatprep.subr.mxu0 0.0
    %8584 = vmatpush1.msra.mxu0 0.0
    %8585 = vmatprep.subr.mxu0 0.0
    %8586 = vmatpush1.msra.mxu0 0.0
    %8587 = vmatprep.subr.mxu0 0.0
    %8588 = vmatpush1.msra.mxu0 0.0
    %8589 = vmatprep.subr.mxu0 0.0
    %8590 = vmatpush1.msra.mxu0 0.0
    %8591 = vmatprep.subr.mxu0 0.0
    %8592 = vmatpush1.msra.mxu0 0.0
    %8593 = vmatprep.subr.mxu0 0.0
    %8594 = vmatpush1.msra.mxu0 0.0
    %8595 = vmatprep.subr.mxu0 0.0
    %8596 = vmatpush1.msra.mxu0 0.0
    %8597 = vmatprep.subr.mxu0 0.0
    %8598 = vmatpush1.msra.mxu0 0.0
    %8599 = vmatprep.subr.mxu0 0.0
    %8600 = vmatpush1.msra.mxu0 0.0
    %8601 = vmatprep.subr.mxu0 0.0
    %8602 = vmatpush1.msra.mxu0 0.0
    %8603 = vmatprep.subr.mxu0 0.0
    %8604 = vmatpush1.msra.mxu0 0.0
    %8605 = vmatprep.subr.mxu0 0.0
    %8606 = vmatpush1.msra.mxu0 0.0
    %8607 = vmatprep.subr.mxu0 0.0
    %8608 = vmatpush1.msra.mxu0 0.0
    %8609 = vmatprep.subr.mxu0 0.0
    %8610 = vmatpush1.msra.mxu0 0.0
    %8611 = vmatprep.subr.mxu0 0.0
    %8612 = vmatpush1.msra.mxu0 0.0
    %8613 = vmatprep.subr.mxu0 0.0
    %8614 = vmatpush1.msra.mxu0 0.0
    %8615 = vmatprep.subr.mxu0 0.0
    %8616 = vmatpush1.msra.mxu0 0.0
    %8617 = vmatprep.subr.mxu0 0.0
    %8618 = vmatpush1.msra.mxu0 0.0
    %8619 = vmatprep.subr.mxu0 0.0
    %8620 = vmatpush1.msra.mxu0 0.0
    %8621 = vmatprep.subr.mxu0 0.0
    %8622 = vmatpush1.msra.mxu0 0.0
    %8623 = vmatprep.subr.mxu0 0.0
    %8624 = vmatpush1.msra.mxu0 0.0
    %8625 = vmatprep.subr.mxu0 0.0
    %8626 = vmatpush1.msra.mxu0 0.0
    %8627 = vmatprep.subr.mxu0 0.0
    %8628 = vmatpush1.msra.mxu0 0.0
    %8629 = vmatprep.subr.mxu0 0.0
    %8630 = vmatpush1.msra.mxu0 0.0
    %8631 = vmatprep.subr.mxu0 0.0
    %8632 = vmatpush1.msra.mxu0 0.0
    %8633 = vmatprep.mubr.f32.mxu0 0.0
    %8634 = vmatmul.mubr.f32.gmra.mrb[0].mxu0 %v8564
    %v8635 = vpop.f32.mrb[0].mxu0
    %v8636 = vadd.f32 0.0, %v8635
    %v8637 = vpop.f32.mrb[0].mxu0
    %8638 = vdwg.mxu0
    %v8639 = vadd.f32 %v8553, %v8636
    %s8640 = scalar_lea.vmem %s7, 1456
    %v8641 = vld [vmem:[%s8640] sm:$0xff]
    %v8642 = vld [vmem:[%s8640 + $0x8] sm:$0xff]
    %v8643 = vld [vmem:[%s8640 + $0x10] sm:$0xff]
    %v8644 = vld [vmem:[%s8640 + $0x18] sm:$0xff]
    %v8645 = vld [vmem:[%s8640 + $0x20] sm:$0xff]
    %v8646 = vld [vmem:[%s8640 + $0x28] sm:$0xff]
    %v8647 = vld [vmem:[%s8640 + $0x30] sm:$0x1]
    %v8648 = vrot.slane %v6375, 2
    %v8649 = vrot.slane %v6379, 1
    %v8650 = vsel %vm6398, %v8649, %v8648
    %v8651 = vsel %vm3222, %v8650, 0
    %v8654 = vsel %vm535, %v8647, 0
    %8656 = vmatprep.subr.mxu0 0.0
    %8657 = vmatpush1.msra.mxu0 %v8641
    %8658 = vmatprep.subr.mxu0 0.0
    %8659 = vmatpush1.msra.mxu0 %v8642
    %8660 = vmatprep.subr.mxu0 0.0
    %8661 = vmatpush1.msra.mxu0 %v8643
    %8662 = vmatprep.subr.mxu0 0.0
    %8663 = vmatpush1.msra.mxu0 %v8644
    %8664 = vmatprep.subr.mxu0 0.0
    %8665 = vmatpush1.msra.mxu0 %v8645
    %8666 = vmatprep.subr.mxu0 0.0
    %8667 = vmatpush1.msra.mxu0 %v8646
    %8668 = vmatprep.subr.mxu0 0.0
    %8669 = vmatpush1.msra.mxu0 %v8654
    %8670 = vmatprep.subr.mxu0 0.0
    %8671 = vmatpush1.msra.mxu0 0.0
    %8672 = vmatprep.subr.mxu0 0.0
    %8673 = vmatpush1.msra.mxu0 0.0
    %8674 = vmatprep.subr.mxu0 0.0
    %8675 = vmatpush1.msra.mxu0 0.0
    %8676 = vmatprep.subr.mxu0 0.0
    %8677 = vmatpush1.msra.mxu0 0.0
    %8678 = vmatprep.subr.mxu0 0.0
    %8679 = vmatpush1.msra.mxu0 0.0
    %8680 = vmatprep.subr.mxu0 0.0
    %8681 = vmatpush1.msra.mxu0 0.0
    %8682 = vmatprep.subr.mxu0 0.0
    %8683 = vmatpush1.msra.mxu0 0.0
    %8684 = vmatprep.subr.mxu0 0.0
    %8685 = vmatpush1.msra.mxu0 0.0
    %8686 = vmatprep.subr.mxu0 0.0
    %8687 = vmatpush1.msra.mxu0 0.0
    %8688 = vmatprep.subr.mxu0 0.0
    %8689 = vmatpush1.msra.mxu0 0.0
    %8690 = vmatprep.subr.mxu0 0.0
    %8691 = vmatpush1.msra.mxu0 0.0
    %8692 = vmatprep.subr.mxu0 0.0
    %8693 = vmatpush1.msra.mxu0 0.0
    %8694 = vmatprep.subr.mxu0 0.0
    %8695 = vmatpush1.msra.mxu0 0.0
    %8696 = vmatprep.subr.mxu0 0.0
    %8697 = vmatpush1.msra.mxu0 0.0
    %8698 = vmatprep.subr.mxu0 0.0
    %8699 = vmatpush1.msra.mxu0 0.0
    %8700 = vmatprep.subr.mxu0 0.0
    %8701 = vmatpush1.msra.mxu0 0.0
    %8702 = vmatprep.subr.mxu0 0.0
    %8703 = vmatpush1.msra.mxu0 0.0
    %8704 = vmatprep.subr.mxu0 0.0
    %8705 = vmatpush1.msra.mxu0 0.0
    %8706 = vmatprep.subr.mxu0 0.0
    %8707 = vmatpush1.msra.mxu0 0.0
    %8708 = vmatprep.subr.mxu0 0.0
    %8709 = vmatpush1.msra.mxu0 0.0
    %8710 = vmatprep.subr.mxu0 0.0
    %8711 = vmatpush1.msra.mxu0 0.0
    %8712 = vmatprep.subr.mxu0 0.0
    %8713 = vmatpush1.msra.mxu0 0.0
    %8714 = vmatprep.subr.mxu0 0.0
    %8715 = vmatpush1.msra.mxu0 0.0
    %8716 = vmatprep.subr.mxu0 0.0
    %8717 = vmatpush1.msra.mxu0 0.0
    %8718 = vmatprep.subr.mxu0 0.0
    %8719 = vmatpush1.msra.mxu0 0.0
    %8720 = vmatprep.mubr.f32.mxu0 0.0
    %8721 = vmatmul.mubr.f32.gmra.mrb[0].mxu0 %v8651
    %v8722 = vpop.f32.mrb[0].mxu0
    %v8723 = vadd.f32 0.0, %v8722
    %v8724 = vpop.f32.mrb[0].mxu0
    %8725 = vdwg.mxu0
    %v8726 = vadd.f32 %v8639, %v8723
    %s8727 = scalar_lea.vmem %s7, 1512
    %v8728 = vld [vmem:[%s8727] sm:$0xff]
    %v8729 = vld [vmem:[%s8727 + $0x8] sm:$0xff]
    %v8730 = vld [vmem:[%s8727 + $0x10] sm:$0xff]
    %v8731 = vld [vmem:[%s8727 + $0x18] sm:$0xff]
    %v8732 = vld [vmem:[%s8727 + $0x20] sm:$0xff]
    %v8733 = vld [vmem:[%s8727 + $0x28] sm:$0xff]
    %v8734 = vld [vmem:[%s8727 + $0x30] sm:$0x1]
    %v8735 = vrot.slane %v6375, 3
    %v8736 = vrot.slane %v6379, 2
    %v8737 = vsel %vm6398, %v8736, %v8735
    %v8738 = vsel %vm3222, %v8737, 0
    %v8741 = vsel %vm535, %v8734, 0
    %8743 = vmatprep.subr.mxu0 0.0
    %8744 = vmatpush1.msra.mxu0 %v8728
    %8745 = vmatprep.subr.mxu0 0.0
    %8746 = vmatpush1.msra.mxu0 %v8729
    %8747 = vmatprep.subr.mxu0 0.0
    %8748 = vmatpush1.msra.mxu0 %v8730
    %8749 = vmatprep.subr.mxu0 0.0
    %8750 = vmatpush1.msra.mxu0 %v8731
    %8751 = vmatprep.subr.mxu0 0.0
    %8752 = vmatpush1.msra.mxu0 %v8732
    %8753 = vmatprep.subr.mxu0 0.0
    %8754 = vmatpush1.msra.mxu0 %v8733
    %8755 = vmatprep.subr.mxu0 0.0
    %8756 = vmatpush1.msra.mxu0 %v8741
    %8757 = vmatprep.subr.mxu0 0.0
    %8758 = vmatpush1.msra.mxu0 0.0
    %8759 = vmatprep.subr.mxu0 0.0
    %8760 = vmatpush1.msra.mxu0 0.0
    %8761 = vmatprep.subr.mxu0 0.0
    %8762 = vmatpush1.msra.mxu0 0.0
    %8763 = vmatprep.subr.mxu0 0.0
    %8764 = vmatpush1.msra.mxu0 0.0
    %8765 = vmatprep.subr.mxu0 0.0
    %8766 = vmatpush1.msra.mxu0 0.0
    %8767 = vmatprep.subr.mxu0 0.0
    %8768 = vmatpush1.msra.mxu0 0.0
    %8769 = vmatprep.subr.mxu0 0.0
    %8770 = vmatpush1.msra.mxu0 0.0
    %8771 = vmatprep.subr.mxu0 0.0
    %8772 = vmatpush1.msra.mxu0 0.0
    %8773 = vmatprep.subr.mxu0 0.0
    %8774 = vmatpush1.msra.mxu0 0.0
    %8775 = vmatprep.subr.mxu0 0.0
    %8776 = vmatpush1.msra.mxu0 0.0
    %8777 = vmatprep.subr.mxu0 0.0
    %8778 = vmatpush1.msra.mxu0 0.0
    %8779 = vmatprep.subr.mxu0 0.0
    %8780 = vmatpush1.msra.mxu0 0.0
    %8781 = vmatprep.subr.mxu0 0.0
    %8782 = vmatpush1.msra.mxu0 0.0
    %8783 = vmatprep.subr.mxu0 0.0
    %8784 = vmatpush1.msra.mxu0 0.0
    %8785 = vmatprep.subr.mxu0 0.0
    %8786 = vmatpush1.msra.mxu0 0.0
    %8787 = vmatprep.subr.mxu0 0.0
    %8788 = vmatpush1.msra.mxu0 0.0
    %8789 = vmatprep.subr.mxu0 0.0
    %8790 = vmatpush1.msra.mxu0 0.0
    %8791 = vmatprep.subr.mxu0 0.0
    %8792 = vmatpush1.msra.mxu0 0.0
    %8793 = vmatprep.subr.mxu0 0.0
    %8794 = vmatpush1.msra.mxu0 0.0
    %8795 = vmatprep.subr.mxu0 0.0
    %8796 = vmatpush1.msra.mxu0 0.0
    %8797 = vmatprep.subr.mxu0 0.0
    %8798 = vmatpush1.msra.mxu0 0.0
    %8799 = vmatprep.subr.mxu0 0.0
    %8800 = vmatpush1.msra.mxu0 0.0
    %8801 = vmatprep.subr.mxu0 0.0
    %8802 = vmatpush1.msra.mxu0 0.0
    %8803 = vmatprep.subr.mxu0 0.0
    %8804 = vmatpush1.msra.mxu0 0.0
    %8805 = vmatprep.subr.mxu0 0.0
    %8806 = vmatpush1.msra.mxu0 0.0
    %8807 = vmatprep.mubr.f32.mxu0 0.0
    %8808 = vmatmul.mubr.f32.gmra.mrb[0].mxu0 %v8738
    %v8809 = vpop.f32.mrb[0].mxu0
    %v8810 = vadd.f32 0.0, %v8809
    %v8811 = vpop.f32.mrb[0].mxu0
    %8812 = vdwg.mxu0
    %v8813 = vadd.f32 %v8726, %v8810
    %s8814 = scalar_lea.vmem %s7, 1568
    %v8815 = vld [vmem:[%s8814] sm:$0xff]
    %v8816 = vld [vmem:[%s8814 + $0x8] sm:$0xff]
    %v8817 = vld [vmem:[%s8814 + $0x10] sm:$0xff]
    %v8818 = vld [vmem:[%s8814 + $0x18] sm:$0xff]
    %v8819 = vld [vmem:[%s8814 + $0x20] sm:$0xff]
    %v8820 = vld [vmem:[%s8814 + $0x28] sm:$0xff]
    %v8821 = vld [vmem:[%s8814 + $0x30] sm:$0x1]
    %v8822 = vrot.slane %v6375, 4
    %v8823 = vrot.slane %v6379, 3
    %v8824 = vsel %vm6398, %v8823, %v8822
    %v8825 = vsel %vm3222, %v8824, 0
    %v8828 = vsel %vm535, %v8821, 0
    %8830 = vmatprep.subr.mxu0 0.0
    %8831 = vmatpush1.msra.mxu0 %v8815
    %8832 = vmatprep.subr.mxu0 0.0
    %8833 = vmatpush1.msra.mxu0 %v8816
    %8834 = vmatprep.subr.mxu0 0.0
    %8835 = vmatpush1.msra.mxu0 %v8817
    %8836 = vmatprep.subr.mxu0 0.0
    %8837 = vmatpush1.msra.mxu0 %v8818
    %8838 = vmatprep.subr.mxu0 0.0
    %8839 = vmatpush1.msra.mxu0 %v8819
    %8840 = vmatprep.subr.mxu0 0.0
    %8841 = vmatpush1.msra.mxu0 %v8820
    %8842 = vmatprep.subr.mxu0 0.0
    %8843 = vmatpush1.msra.mxu0 %v8828
    %8844 = vmatprep.subr.mxu0 0.0
    %8845 = vmatpush1.msra.mxu0 0.0
    %8846 = vmatprep.subr.mxu0 0.0
    %8847 = vmatpush1.msra.mxu0 0.0
    %8848 = vmatprep.subr.mxu0 0.0
    %8849 = vmatpush1.msra.mxu0 0.0
    %8850 = vmatprep.subr.mxu0 0.0
    %8851 = vmatpush1.msra.mxu0 0.0
    %8852 = vmatprep.subr.mxu0 0.0
    %8853 = vmatpush1.msra.mxu0 0.0
    %8854 = vmatprep.subr.mxu0 0.0
    %8855 = vmatpush1.msra.mxu0 0.0
    %8856 = vmatprep.subr.mxu0 0.0
    %8857 = vmatpush1.msra.mxu0 0.0
    %8858 = vmatprep.subr.mxu0 0.0
    %8859 = vmatpush1.msra.mxu0 0.0
    %8860 = vmatprep.subr.mxu0 0.0
    %8861 = vmatpush1.msra.mxu0 0.0
    %8862 = vmatprep.subr.mxu0 0.0
    %8863 = vmatpush1.msra.mxu0 0.0
    %8864 = vmatprep.subr.mxu0 0.0
    %8865 = vmatpush1.msra.mxu0 0.0
    %8866 = vmatprep.subr.mxu0 0.0
    %8867 = vmatpush1.msra.mxu0 0.0
    %8868 = vmatprep.subr.mxu0 0.0
    %8869 = vmatpush1.msra.mxu0 0.0
    %8870 = vmatprep.subr.mxu0 0.0
    %8871 = vmatpush1.msra.mxu0 0.0
    %8872 = vmatprep.subr.mxu0 0.0
    %8873 = vmatpush1.msra.mxu0 0.0
    %8874 = vmatprep.subr.mxu0 0.0
    %8875 = vmatpush1.msra.mxu0 0.0
    %8876 = vmatprep.subr.mxu0 0.0
    %8877 = vmatpush1.msra.mxu0 0.0
    %8878 = vmatprep.subr.mxu0 0.0
    %8879 = vmatpush1.msra.mxu0 0.0
    %8880 = vmatprep.subr.mxu0 0.0
    %8881 = vmatpush1.msra.mxu0 0.0
    %8882 = vmatprep.subr.mxu0 0.0
    %8883 = vmatpush1.msra.mxu0 0.0
    %8884 = vmatprep.subr.mxu0 0.0
    %8885 = vmatpush1.msra.mxu0 0.0
    %8886 = vmatprep.subr.mxu0 0.0
    %8887 = vmatpush1.msra.mxu0 0.0
    %8888 = vmatprep.subr.mxu0 0.0
    %8889 = vmatpush1.msra.mxu0 0.0
    %8890 = vmatprep.subr.mxu0 0.0
    %8891 = vmatpush1.msra.mxu0 0.0
    %8892 = vmatprep.subr.mxu0 0.0
    %8893 = vmatpush1.msra.mxu0 0.0
    %8894 = vmatprep.mubr.f32.mxu0 0.0
    %8895 = vmatmul.mubr.f32.gmra.mrb[0].mxu0 %v8825
    %v8896 = vpop.f32.mrb[0].mxu0
    %v8897 = vadd.f32 0.0, %v8896
    %v8898 = vpop.f32.mrb[0].mxu0
    %8899 = vdwg.mxu0
    %v8900 = vadd.f32 %v8813, %v8897
    %s8901 = scalar_lea.vmem %s7, 1624
    %v8902 = vld [vmem:[%s8901] sm:$0xff]
    %v8903 = vld [vmem:[%s8901 + $0x8] sm:$0xff]
    %v8904 = vld [vmem:[%s8901 + $0x10] sm:$0xff]
    %v8905 = vld [vmem:[%s8901 + $0x18] sm:$0xff]
    %v8906 = vld [vmem:[%s8901 + $0x20] sm:$0xff]
    %v8907 = vld [vmem:[%s8901 + $0x28] sm:$0xff]
    %v8908 = vld [vmem:[%s8901 + $0x30] sm:$0x1]
    %v8909 = vrot.slane %v6375, 5
    %v8910 = vrot.slane %v6379, 4
    %v8911 = vsel %vm6398, %v8910, %v8909
    %v8912 = vsel %vm3222, %v8911, 0
    %v8915 = vsel %vm535, %v8908, 0
    %8917 = vmatprep.subr.mxu0 0.0
    %8918 = vmatpush1.msra.mxu0 %v8902
    %8919 = vmatprep.subr.mxu0 0.0
    %8920 = vmatpush1.msra.mxu0 %v8903
    %8921 = vmatprep.subr.mxu0 0.0
    %8922 = vmatpush1.msra.mxu0 %v8904
    %8923 = vmatprep.subr.mxu0 0.0
    %8924 = vmatpush1.msra.mxu0 %v8905
    %8925 = vmatprep.subr.mxu0 0.0
    %8926 = vmatpush1.msra.mxu0 %v8906
    %8927 = vmatprep.subr.mxu0 0.0
    %8928 = vmatpush1.msra.mxu0 %v8907
    %8929 = vmatprep.subr.mxu0 0.0
    %8930 = vmatpush1.msra.mxu0 %v8915
    %8931 = vmatprep.subr.mxu0 0.0
    %8932 = vmatpush1.msra.mxu0 0.0
    %8933 = vmatprep.subr.mxu0 0.0
    %8934 = vmatpush1.msra.mxu0 0.0
    %8935 = vmatprep.subr.mxu0 0.0
    %8936 = vmatpush1.msra.mxu0 0.0
    %8937 = vmatprep.subr.mxu0 0.0
    %8938 = vmatpush1.msra.mxu0 0.0
    %8939 = vmatprep.subr.mxu0 0.0
    %8940 = vmatpush1.msra.mxu0 0.0
    %8941 = vmatprep.subr.mxu0 0.0
    %8942 = vmatpush1.msra.mxu0 0.0
    %8943 = vmatprep.subr.mxu0 0.0
    %8944 = vmatpush1.msra.mxu0 0.0
    %8945 = vmatprep.subr.mxu0 0.0
    %8946 = vmatpush1.msra.mxu0 0.0
    %8947 = vmatprep.subr.mxu0 0.0
    %8948 = vmatpush1.msra.mxu0 0.0
    %8949 = vmatprep.subr.mxu0 0.0
    %8950 = vmatpush1.msra.mxu0 0.0
    %8951 = vmatprep.subr.mxu0 0.0
    %8952 = vmatpush1.msra.mxu0 0.0
    %8953 = vmatprep.subr.mxu0 0.0
    %8954 = vmatpush1.msra.mxu0 0.0
    %8955 = vmatprep.subr.mxu0 0.0
    %8956 = vmatpush1.msra.mxu0 0.0
    %8957 = vmatprep.subr.mxu0 0.0
    %8958 = vmatpush1.msra.mxu0 0.0
    %8959 = vmatprep.subr.mxu0 0.0
    %8960 = vmatpush1.msra.mxu0 0.0
    %8961 = vmatprep.subr.mxu0 0.0
    %8962 = vmatpush1.msra.mxu0 0.0
    %8963 = vmatprep.subr.mxu0 0.0
    %8964 = vmatpush1.msra.mxu0 0.0
    %8965 = vmatprep.subr.mxu0 0.0
    %8966 = vmatpush1.msra.mxu0 0.0
    %8967 = vmatprep.subr.mxu0 0.0
    %8968 = vmatpush1.msra.mxu0 0.0
    %8969 = vmatprep.subr.mxu0 0.0
    %8970 = vmatpush1.msra.mxu0 0.0
    %8971 = vmatprep.subr.mxu0 0.0
    %8972 = vmatpush1.msra.mxu0 0.0
    %8973 = vmatprep.subr.mxu0 0.0
    %8974 = vmatpush1.msra.mxu0 0.0
    %8975 = vmatprep.subr.mxu0 0.0
    %8976 = vmatpush1.msra.mxu0 0.0
    %8977 = vmatprep.subr.mxu0 0.0
    %8978 = vmatpush1.msra.mxu0 0.0
    %8979 = vmatprep.subr.mxu0 0.0
    %8980 = vmatpush1.msra.mxu0 0.0
    %8981 = vmatprep.mubr.f32.mxu0 0.0
    %8982 = vmatmul.mubr.f32.gmra.mrb[0].mxu0 %v8912
    %v8983 = vpop.f32.mrb[0].mxu0
    %v8984 = vadd.f32 0.0, %v8983
    %v8985 = vpop.f32.mrb[0].mxu0
    %8986 = vdwg.mxu0
    %v8987 = vadd.f32 %v8900, %v8984
    %s8988 = scalar_lea.vmem %s7, 1680
    %v8989 = vld [vmem:[%s8988] sm:$0xff]
    %v8990 = vld [vmem:[%s8988 + $0x8] sm:$0xff]
    %v8991 = vld [vmem:[%s8988 + $0x10] sm:$0xff]
    %v8992 = vld [vmem:[%s8988 + $0x18] sm:$0xff]
    %v8993 = vld [vmem:[%s8988 + $0x20] sm:$0xff]
    %v8994 = vld [vmem:[%s8988 + $0x28] sm:$0xff]
    %v8995 = vld [vmem:[%s8988 + $0x30] sm:$0x1]
    %v8996 = vrot.slane %v6375, 6
    %v8997 = vrot.slane %v6379, 5
    %v8998 = vsel %vm6398, %v8997, %v8996
    %v8999 = vsel %vm3222, %v8998, 0
    %v9002 = vsel %vm535, %v8995, 0
    %9004 = vmatprep.subr.mxu0 0.0
    %9005 = vmatpush1.msra.mxu0 %v8989
    %9006 = vmatprep.subr.mxu0 0.0
    %9007 = vmatpush1.msra.mxu0 %v8990
    %9008 = vmatprep.subr.mxu0 0.0
    %9009 = vmatpush1.msra.mxu0 %v8991
    %9010 = vmatprep.subr.mxu0 0.0
    %9011 = vmatpush1.msra.mxu0 %v8992
    %9012 = vmatprep.subr.mxu0 0.0
    %9013 = vmatpush1.msra.mxu0 %v8993
    %9014 = vmatprep.subr.mxu0 0.0
    %9015 = vmatpush1.msra.mxu0 %v8994
    %9016 = vmatprep.subr.mxu0 0.0
    %9017 = vmatpush1.msra.mxu0 %v9002
    %9018 = vmatprep.subr.mxu0 0.0
    %9019 = vmatpush1.msra.mxu0 0.0
    %9020 = vmatprep.subr.mxu0 0.0
    %9021 = vmatpush1.msra.mxu0 0.0
    %9022 = vmatprep.subr.mxu0 0.0
    %9023 = vmatpush1.msra.mxu0 0.0
    %9024 = vmatprep.subr.mxu0 0.0
    %9025 = vmatpush1.msra.mxu0 0.0
    %9026 = vmatprep.subr.mxu0 0.0
    %9027 = vmatpush1.msra.mxu0 0.0
    %9028 = vmatprep.subr.mxu0 0.0
    %9029 = vmatpush1.msra.mxu0 0.0
    %9030 = vmatprep.subr.mxu0 0.0
    %9031 = vmatpush1.msra.mxu0 0.0
    %9032 = vmatprep.subr.mxu0 0.0
    %9033 = vmatpush1.msra.mxu0 0.0
    %9034 = vmatprep.subr.mxu0 0.0
    %9035 = vmatpush1.msra.mxu0 0.0
    %9036 = vmatprep.subr.mxu0 0.0
    %9037 = vmatpush1.msra.mxu0 0.0
    %9038 = vmatprep.subr.mxu0 0.0
    %9039 = vmatpush1.msra.mxu0 0.0
    %9040 = vmatprep.subr.mxu0 0.0
    %9041 = vmatpush1.msra.mxu0 0.0
    %9042 = vmatprep.subr.mxu0 0.0
    %9043 = vmatpush1.msra.mxu0 0.0
    %9044 = vmatprep.subr.mxu0 0.0
    %9045 = vmatpush1.msra.mxu0 0.0
    %9046 = vmatprep.subr.mxu0 0.0
    %9047 = vmatpush1.msra.mxu0 0.0
    %9048 = vmatprep.subr.mxu0 0.0
    %9049 = vmatpush1.msra.mxu0 0.0
    %9050 = vmatprep.subr.mxu0 0.0
    %9051 = vmatpush1.msra.mxu0 0.0
    %9052 = vmatprep.subr.mxu0 0.0
    %9053 = vmatpush1.msra.mxu0 0.0
    %9054 = vmatprep.subr.mxu0 0.0
    %9055 = vmatpush1.msra.mxu0 0.0
    %9056 = vmatprep.subr.mxu0 0.0
    %9057 = vmatpush1.msra.mxu0 0.0
    %9058 = vmatprep.subr.mxu0 0.0
    %9059 = vmatpush1.msra.mxu0 0.0
    %9060 = vmatprep.subr.mxu0 0.0
    %9061 = vmatpush1.msra.mxu0 0.0
    %9062 = vmatprep.subr.mxu0 0.0
    %9063 = vmatpush1.msra.mxu0 0.0
    %9064 = vmatprep.subr.mxu0 0.0
    %9065 = vmatpush1.msra.mxu0 0.0
    %9066 = vmatprep.subr.mxu0 0.0
    %9067 = vmatpush1.msra.mxu0 0.0
    %9068 = vmatprep.mubr.f32.mxu0 0.0
    %9069 = vmatmul.mubr.f32.gmra.mrb[0].mxu0 %v8999
    %v9070 = vpop.f32.mrb[0].mxu0
    %v9071 = vadd.f32 0.0, %v9070
    %v9072 = vpop.f32.mrb[0].mxu0
    %9073 = vdwg.mxu0
    %v9074 = vadd.f32 %v8987, %v9071
    %s9075 = scalar_lea.vmem %s7, 1736
    %v9076 = vld [vmem:[%s9075] sm:$0xff]
    %v9077 = vld [vmem:[%s9075 + $0x8] sm:$0xff]
    %v9078 = vld [vmem:[%s9075 + $0x10] sm:$0xff]
    %v9079 = vld [vmem:[%s9075 + $0x18] sm:$0xff]
    %v9080 = vld [vmem:[%s9075 + $0x20] sm:$0xff]
    %v9081 = vld [vmem:[%s9075 + $0x28] sm:$0xff]
    %v9082 = vld [vmem:[%s9075 + $0x30] sm:$0x1]
    %v9083 = vrot.slane %v6375, 7
    %v9084 = vrot.slane %v6379, 6
    %v9085 = vsel %vm6398, %v9084, %v9083
    %v9086 = vsel %vm3222, %v9085, 0
    %v9089 = vsel %vm535, %v9082, 0
    %9091 = vmatprep.subr.mxu0 0.0
    %9092 = vmatpush1.msra.mxu0 %v9076
    %9093 = vmatprep.subr.mxu0 0.0
    %9094 = vmatpush1.msra.mxu0 %v9077
    %9095 = vmatprep.subr.mxu0 0.0
    %9096 = vmatpush1.msra.mxu0 %v9078
    %9097 = vmatprep.subr.mxu0 0.0
    %9098 = vmatpush1.msra.mxu0 %v9079
    %9099 = vmatprep.subr.mxu0 0.0
    %9100 = vmatpush1.msra.mxu0 %v9080
    %9101 = vmatprep.subr.mxu0 0.0
    %9102 = vmatpush1.msra.mxu0 %v9081
    %9103 = vmatprep.subr.mxu0 0.0
    %9104 = vmatpush1.msra.mxu0 %v9089
    %9105 = vmatprep.subr.mxu0 0.0
    %9106 = vmatpush1.msra.mxu0 0.0
    %9107 = vmatprep.subr.mxu0 0.0
    %9108 = vmatpush1.msra.mxu0 0.0
    %9109 = vmatprep.subr.mxu0 0.0
    %9110 = vmatpush1.msra.mxu0 0.0
    %9111 = vmatprep.subr.mxu0 0.0
    %9112 = vmatpush1.msra.mxu0 0.0
    %9113 = vmatprep.subr.mxu0 0.0
    %9114 = vmatpush1.msra.mxu0 0.0
    %9115 = vmatprep.subr.mxu0 0.0
    %9116 = vmatpush1.msra.mxu0 0.0
    %9117 = vmatprep.subr.mxu0 0.0
    %9118 = vmatpush1.msra.mxu0 0.0
    %9119 = vmatprep.subr.mxu0 0.0
    %9120 = vmatpush1.msra.mxu0 0.0
    %9121 = vmatprep.subr.mxu0 0.0
    %9122 = vmatpush1.msra.mxu0 0.0
    %9123 = vmatprep.subr.mxu0 0.0
    %9124 = vmatpush1.msra.mxu0 0.0
    %9125 = vmatprep.subr.mxu0 0.0
    %9126 = vmatpush1.msra.mxu0 0.0
    %9127 = vmatprep.subr.mxu0 0.0
    %9128 = vmatpush1.msra.mxu0 0.0
    %9129 = vmatprep.subr.mxu0 0.0
    %9130 = vmatpush1.msra.mxu0 0.0
    %9131 = vmatprep.subr.mxu0 0.0
    %9132 = vmatpush1.msra.mxu0 0.0
    %9133 = vmatprep.subr.mxu0 0.0
    %9134 = vmatpush1.msra.mxu0 0.0
    %9135 = vmatprep.subr.mxu0 0.0
    %9136 = vmatpush1.msra.mxu0 0.0
    %9137 = vmatprep.subr.mxu0 0.0
    %9138 = vmatpush1.msra.mxu0 0.0
    %9139 = vmatprep.subr.mxu0 0.0
    %9140 = vmatpush1.msra.mxu0 0.0
    %9141 = vmatprep.subr.mxu0 0.0
    %9142 = vmatpush1.msra.mxu0 0.0
    %9143 = vmatprep.subr.mxu0 0.0
    %9144 = vmatpush1.msra.mxu0 0.0
    %9145 = vmatprep.subr.mxu0 0.0
    %9146 = vmatpush1.msra.mxu0 0.0
    %9147 = vmatprep.subr.mxu0 0.0
    %9148 = vmatpush1.msra.mxu0 0.0
    %9149 = vmatprep.subr.mxu0 0.0
    %9150 = vmatpush1.msra.mxu0 0.0
    %9151 = vmatprep.subr.mxu0 0.0
    %9152 = vmatpush1.msra.mxu0 0.0
    %9153 = vmatprep.subr.mxu0 0.0
    %9154 = vmatpush1.msra.mxu0 0.0
    %9155 = vmatprep.mubr.f32.mxu0 0.0
    %9156 = vmatmul.mubr.f32.gmra.mrb[0].mxu0 %v9086
    %v9157 = vpop.f32.mrb[0].mxu0
    %v9158 = vadd.f32 0.0, %v9157
    %v9159 = vpop.f32.mrb[0].mxu0
    %9160 = vdwg.mxu0
    %v9161 = vadd.f32 %v9074, %v9158
    %v9162 = vld [vmem:[%s8] sm:$0x1]
    %v9164 = vlaneseq
    %v9165 = vshrl.u32 %v9164, 7
    %v9166 = vsub.s32 0, %v9165
    %v9167 = vrot.slane %v9162, %v9166
    %v9169 = vadd.f32 %v9161, %v9167
    %v9170 = vmax.f32 %v9169, 0.0
    %v9171 = vld [vmem:[%s9] sm:$0xff]
    %v9172 = vld [vmem:[%s9 + $0x8] sm:$0xff]
    %v9173 = vld [vmem:[%s9 + $0x10] sm:$0xff]
    %v9174 = vld [vmem:[%s9 + $0x18] sm:$0xff]
    %v9175 = vld [vmem:[%s9 + $0x20] sm:$0xff]
    %v9176 = vld [vmem:[%s9 + $0x28] sm:$0xff]
    %v9177 = vld [vmem:[%s9 + $0x30] sm:$0xff]
    %v9178 = vld [vmem:[%s9 + $0x38] sm:$0xff]
    %v9179 = vld [vmem:[%s9 + $0x40] sm:$0xff]
    %v9180 = vld [vmem:[%s9 + $0x48] sm:$0xff]
    %v9181 = vld [vmem:[%s9 + $0x50] sm:$0xff]
    %v9182 = vld [vmem:[%s9 + $0x58] sm:$0xff]
    %v9183 = vld [vmem:[%s9 + $0x60] sm:$0xff]
    %v9184 = vld [vmem:[%s9 + $0x68] sm:$0xff]
    %v9185 = vld [vmem:[%s9 + $0x70] sm:$0xff]
    %v9186 = vld [vmem:[%s9 + $0x78] sm:$0xff]
    %v9187 = vld [vmem:[%s10] sm:$0x1]
    %v9189 = vlaneseq
    %v9190 = vshrl.u32 %v9189, 7
    %v9191 = vsub.s32 0, %v9190
    %v9192 = vrot.slane %v9187, %v9191
    %9194 = vmatprep.subr.mxu0 0.0
    %9195 = vmatpush1.msra.mxu0 %v9171
    %9196 = vmatprep.subr.mxu0 0.0
    %9197 = vmatpush1.msra.mxu0 %v9172
    %9198 = vmatprep.subr.mxu0 0.0
    %9199 = vmatpush1.msra.mxu0 %v9173
    %9200 = vmatprep.subr.mxu0 0.0
    %9201 = vmatpush1.msra.mxu0 %v9174
    %9202 = vmatprep.subr.mxu0 0.0
    %9203 = vmatpush1.msra.mxu0 %v9175
    %9204 = vmatprep.subr.mxu0 0.0
    %9205 = vmatpush1.msra.mxu0 %v9176
    %9206 = vmatprep.subr.mxu0 0.0
    %9207 = vmatpush1.msra.mxu0 %v9177
    %9208 = vmatprep.subr.mxu0 0.0
    %9209 = vmatpush1.msra.mxu0 %v9178
    %9210 = vmatprep.subr.mxu0 0.0
    %9211 = vmatpush1.msra.mxu0 %v9179
    %9212 = vmatprep.subr.mxu0 0.0
    %9213 = vmatpush1.msra.mxu0 %v9180
    %9214 = vmatprep.subr.mxu0 0.0
    %9215 = vmatpush1.msra.mxu0 %v9181
    %9216 = vmatprep.subr.mxu0 0.0
    %9217 = vmatpush1.msra.mxu0 %v9182
    %9218 = vmatprep.subr.mxu0 0.0
    %9219 = vmatpush1.msra.mxu0 %v9183
    %9220 = vmatprep.subr.mxu0 0.0
    %9221 = vmatpush1.msra.mxu0 %v9184
    %9222 = vmatprep.subr.mxu0 0.0
    %9223 = vmatpush1.msra.mxu0 %v9185
    %9224 = vmatprep.subr.mxu0 0.0
    %9225 = vmatpush1.msra.mxu0 %v9186
    %9226 = vmatprep.subr.mxu0 0.0
    %9227 = vmatpush1.msra.mxu0 0.0
    %9228 = vmatprep.subr.mxu0 0.0
    %9229 = vmatpush1.msra.mxu0 0.0
    %9230 = vmatprep.subr.mxu0 0.0
    %9231 = vmatpush1.msra.mxu0 0.0
    %9232 = vmatprep.subr.mxu0 0.0
    %9233 = vmatpush1.msra.mxu0 0.0
    %9234 = vmatprep.subr.mxu0 0.0
    %9235 = vmatpush1.msra.mxu0 0.0
    %9236 = vmatprep.subr.mxu0 0.0
    %9237 = vmatpush1.msra.mxu0 0.0
    %9238 = vmatprep.subr.mxu0 0.0
    %9239 = vmatpush1.msra.mxu0 0.0
    %9240 = vmatprep.subr.mxu0 0.0
    %9241 = vmatpush1.msra.mxu0 0.0
    %9242 = vmatprep.subr.mxu0 0.0
    %9243 = vmatpush1.msra.mxu0 0.0
    %9244 = vmatprep.subr.mxu0 0.0
    %9245 = vmatpush1.msra.mxu0 0.0
    %9246 = vmatprep.subr.mxu0 0.0
    %9247 = vmatpush1.msra.mxu0 0.0
    %9248 = vmatprep.subr.mxu0 0.0
    %9249 = vmatpush1.msra.mxu0 0.0
    %9250 = vmatprep.subr.mxu0 0.0
    %9251 = vmatpush1.msra.mxu0 0.0
    %9252 = vmatprep.subr.mxu0 0.0
    %9253 = vmatpush1.msra.mxu0 0.0
    %9254 = vmatprep.subr.mxu0 0.0
    %9255 = vmatpush1.msra.mxu0 0.0
    %9256 = vmatprep.subr.mxu0 0.0
    %9257 = vmatpush1.msra.mxu0 0.0
    %9258 = vmatprep.mubr.f32.mxu0 0.0
    %9259 = vmatmul.mubr.f32.gmra.mrb[0].mxu0 %v9170
    %v9260 = vpop.f32.mrb[0].mxu0
    %v9261 = vadd.f32 %v9192, %v9260
    %v9262 = vpop.f32.mrb[0].mxu0
    %9263 = vdwg.mxu0
    %vm9264 = vcmask 74752
    %9265 = vst.msk [vmem:[#allocation3] sm:$0x3] %vm9264, %v9261
    // Predicated region
    $region46: #{net_forward.1} parent=1 // pred_check
      _
    $region47: #{net_forward.1} parent=1 // pred_check_branch
      %9267 = sbr.rel (0) target = $region49
    $region48: #{net_forward.1} parent=1 // pred_region
      %s9269 = ssub.s32 32, 32
      %9270 = vsyncadd [#allocation4], %s9269
      %s9272 = sshll.u32 [#allocation3], 4
      %s9273 = int_to_ptr.vmem [resolvable:$true] %s9272
      %9275 = dma.vmem_to_hbm [thread:$0]  %s9273, 32, %s11, [#allocation4]
    $region49: #{net_forward.1} parent=1 // pred_fallthru
      _
    // Predicated region
    $region50: #{net_forward.1} parent=1 // pred_check
      _
    $region51: #{net_forward.1} parent=1 // pred_check_branch
      %9277 = sbr.rel (0) target = $region53
    $region52: #{net_forward.1} parent=1 // pred_region
      %9278 = dma.done [#allocation4], 32
    $region53: #{net_forward.1} parent=1 // pred_fallthru
      _
    %9279 = vsyncpa [#allocation4], 1

</llo_original>
